<compile_context>
chip_gen: v7x
topology: tpu7x:2x2x1
jax: 0.10.0
libtpu: 0.0.40
codegen_flags: <defaults>
</compile_context>

<pallas_src>
import functools

import numpy as np
import jax
import jax.numpy as jnp
from jax.experimental import pallas as pl
from jax.experimental.pallas import tpu as pltpu


_VMEM = pl.BlockSpec(memory_space=pltpu.MemorySpace.VMEM)
_OUT_PAD = 128  # lane-dense classifier width; real classes live in [:, :3]


# ------------------------------ fused kernel --------------------------------


def _fused_kernel(x_ref, g_ref, sel_ref,
                  w1_ref, b1_ref, w2_ref, b2_ref, w3_ref, b3_ref,
                  fc1_ref, fb1_ref, fc2_ref, fb2_ref, fc3_ref, fb3_ref,
                  fc4_ref, fb4_ref, o_ref, *, mode):
    """Whole ConvNetBig forward in one kernel.

    x:   (M, Cin)       bf16, M = N*H*W, rows ordered (n, y, x)
    g:   (9, M, M)      bf16, block-diag 3x3 spatial-shift matrices (padding=1)
    sel: (9, Nb, M)     bf16, sel[s] @ a picks spatial position s of every sample
    wL:  (9, Cin, Cout) bf16 per-tap conv weights; bL: (1, Cout) f32 biases
    fc1: (1152, 512)    bf16, rows ordered s*128+c (PyTorch NCHW flatten regrouped)
    fc2/fc3: (in, out)  bf16; fc4: (32, 128) bf16 zero-padded, fb4 padded -1e30
    o:   (Nb, 128)      f32 (softmax / log_softmax / logits, padded lanes)
    """
    f32 = jnp.float32
    bf16 = jnp.bfloat16

    def conv3x3_relu(a_bf16, w_ref, b_ref):
        acc = None
        for k in range(9):  # static unroll: 9 shifted matmuls, f32 accumulation
            shifted = jnp.dot(g_ref[k], a_bf16,
                              preferred_element_type=f32).astype(bf16)
            t = jnp.dot(shifted, w_ref[k], preferred_element_type=f32)
            acc = t if acc is None else acc + t
        acc = acc + b_ref[...]
        return jnp.maximum(acc, 0.0).astype(bf16)

    a = conv3x3_relu(x_ref[...], w1_ref, b1_ref)   # (M, 32)
    a = conv3x3_relu(a, w2_ref, b2_ref)            # (M, 64)
    a = conv3x3_relu(a, w3_ref, b3_ref)            # (M, 128)
    # dropout_conv (p=0.1) -> identity at inference.

    # fc1 consumes the PyTorch NCHW flatten with no transpose/reshape:
    # flat[n, s*128 + c] == a[n*9 + s, c].  Gather the 9 per-tap row blocks
    # (each exactly 128 lanes wide), lane-concat them (vreg-granular, no lane
    # shifts) and run fc1 as a single wide matmul with a 1152-deep contraction.
    rows = [jnp.dot(sel_ref[s], a, preferred_element_type=f32).astype(bf16)
            for s in range(9)]                                             # 9 x (Nb,128)
    flat = jnp.concatenate(rows, axis=-1)                                  # (Nb, 1152)
    h = jnp.dot(flat, fc1_ref[...], preferred_element_type=f32)
    h = jnp.maximum(h + fb1_ref[...], 0.0).astype(bf16)                    # (Nb, 512)

    h = jnp.maximum(jnp.dot(h, fc2_ref[...], preferred_element_type=f32)
                    + fb2_ref[...], 0.0).astype(bf16)                      # (Nb, 128)
    h = jnp.maximum(jnp.dot(h, fc3_ref[...], preferred_element_type=f32)
                    + fb3_ref[...], 0.0).astype(bf16)                      # (Nb, 32)
    # dropout_fcn (p=0.0) -> identity.

    logits = jnp.dot(h, fc4_ref[...], preferred_element_type=f32) + fb4_ref[...]

    if mode == "log_softmax":
        m = jnp.max(logits, axis=-1, keepdims=True)
        sh = logits - m
        out = sh - jnp.log(jnp.sum(jnp.exp(sh), axis=-1, keepdims=True))
    elif mode == "softmax":
        m = jnp.max(logits, axis=-1, keepdims=True)
        e = jnp.exp(logits - m)
        s = jnp.sum(e, axis=-1, keepdims=True)
        out = e * pl.reciprocal(s, approx=True)   # divide on the EUP slot
    else:
        out = logits
    o_ref[...] = out.astype(o_ref.dtype)


# ------------------------- constant conv/gather graphs ----------------------


@functools.lru_cache(maxsize=None)
def _conv_graph_constants(n, h, w):
    """G_k spatial-shift matrices (padding=1) and per-position row selectors."""
    hw = h * w
    m = n * hw
    g = np.zeros((9, m, m), np.float32)
    for k in range(9):
        dy, dx = k // 3 - 1, k % 3 - 1
        for b in range(n):
            for y in range(h):
                for x in range(w):
                    sy, sx = y + dy, x + dx
                    if 0 <= sy < h and 0 <= sx < w:
                        g[k, b * hw + y * w + x, b * hw + sy * w + sx] = 1.0
    sel = np.zeros((hw, n, m), np.float32)
    for s in range(hw):
        for b in range(n):
            sel[s, b, b * hw + s] = 1.0
    return jnp.asarray(g, jnp.bfloat16), jnp.asarray(sel, jnp.bfloat16)


# ------------------------------ parameter init ------------------------------


def _uniform(key, shape, bound):
    return jax.random.uniform(key, shape, jnp.float32, minval=-bound, maxval=bound)


def init_params(key, channels=3):
    """PyTorch-style default init (uniform +/- 1/sqrt(fan_in)), canonical layouts."""
    keys = jax.random.split(key, 14)
    p = {}

    def conv_init(kw, kb, cin, cout):
        bound = 1.0 / float(np.sqrt(cin * 9))
        return _uniform(kw, (3, 3, cin, cout), bound), _uniform(kb, (cout,), bound)

    def fc_init(kw, kb, fin, fout):
        bound = 1.0 / float(np.sqrt(fin))
        # stored (in, out), i.e. transpose of PyTorch's (out, in)
        return _uniform(kw, (fin, fout), bound), _uniform(kb, (fout,), bound)

    p["conv1_w"], p["conv1_b"] = conv_init(keys[0], keys[1], channels, 32)
    p["conv2_w"], p["conv2_b"] = conv_init(keys[2], keys[3], 32, 64)
    p["conv3_w"], p["conv3_b"] = conv_init(keys[4], keys[5], 64, 128)
    p["fc1_w"], p["fc1_b"] = fc_init(keys[6], keys[7], 128 * 3 * 3, 512)
    p["fc2_w"], p["fc2_b"] = fc_init(keys[8], keys[9], 512, 128)
    p["fc3_w"], p["fc3_b"] = fc_init(keys[10], keys[11], 128, 32)
    p["fc4_w"], p["fc4_b"] = fc_init(keys[12], keys[13], 32, 3)
    return p


def prepare_kernel_params(params):
    """One-time repack: per-tap conv weights, fc1 flatten permutation, bf16 casts,
    lane-dense padded fc4.  Run once at init, outside the hot path."""
    bf16, f32 = jnp.bfloat16, jnp.float32
    kp = {}
    for i in (1, 2, 3):
        w = params[f"conv{i}_w"]                                 # (3,3,Cin,Cout)
        cin, cout = w.shape[2], w.shape[3]
        kp[f"w{i}"] = w.reshape(9, cin, cout).astype(bf16)
        kp[f"b{i}"] = params[f"conv{i}_b"].reshape(1, cout).astype(f32)
    # fc1 rows are indexed c*9 + s (PyTorch NCHW flatten); regroup tap-major so
    # the kernel's lane-concatenated gather (index s*128 + c) hits the right row.
    fc1 = params["fc1_w"]                                        # (1152, 512)
    kp["fc1"] = (fc1.reshape(128, 9, 512).transpose(1, 0, 2)
                 .reshape(9 * 128, 512).astype(bf16))            # (1152, 512), s-major
    kp["fb1"] = params["fc1_b"].reshape(1, -1).astype(f32)
    kp["fc2"] = params["fc2_w"].astype(bf16)
    kp["fb2"] = params["fc2_b"].reshape(1, -1).astype(f32)
    kp["fc3"] = params["fc3_w"].astype(bf16)
    kp["fb3"] = params["fc3_b"].reshape(1, -1).astype(f32)
    w4 = jnp.zeros((32, _OUT_PAD), f32).at[:, :3].set(params["fc4_w"])
    b4 = jnp.full((_OUT_PAD,), -1e30, f32).at[:3].set(params["fc4_b"])
    kp["fc4"] = w4.astype(bf16)
    kp["fb4"] = b4.reshape(1, _OUT_PAD)
    return kp


# -------------------------------- forward pass -------------------------------


def convnet_big_forward(x_nchw, kp, log_softmax=False, softmax=True):
    n, c, h, w = x_nchw.shape
    assert h == 3 and w == 3, "fc1 expects 128*3*3 features -> spatial must be 3x3"
    m = n * h * w
    # Single tiny (216 B) layout op: NCHW -> (N*H*W, C).  Everything else is in-kernel.
    x = jnp.transpose(x_nchw, (0, 2, 3, 1)).reshape(m, c).astype(jnp.bfloat16)
    g, sel = _conv_graph_constants(n, h, w)

    mode = "log_softmax" if log_softmax else ("softmax" if softmax else "logits")
    kern = functools.partial(_fused_kernel, mode=mode)
    out = pl.pallas_call(
        kern,
        out_shape=jax.ShapeDtypeStruct((n, _OUT_PAD), jnp.float32),
        in_specs=[_VMEM] * 17,
        out_specs=_VMEM,
    )(x, g, sel,
      kp["w1"], kp["b1"], kp["w2"], kp["b2"], kp["w3"], kp["b3"],
      kp["fc1"], kp["fb1"], kp["fc2"], kp["fb2"], kp["fc3"], kp["fb3"],
      kp["fc4"], kp["fb4"])
    # TODO(synk): activations_hook/get_activations_gradient (autograd capture) has
    # no equivalent in a forward-only inference kernel.
    return out[:, :3]


# ------------------------------ pure-JAX reference ---------------------------


def _reference_forward(x_nchw, params, log_softmax=False, softmax=True):
    x = jnp.transpose(x_nchw, (0, 2, 3, 1)).astype(jnp.float32)

    def conv(x, w, b):
        nb, hh, ww, ci = x.shape
        xp = jnp.pad(x, ((0, 0), (1, 1), (1, 1), (0, 0)))
        cols = [xp[:, dy:dy + hh, dx:dx + ww, :] for dy in range(3) for dx in range(3)]
        p = jnp.concatenate(cols, axis=-1).reshape(nb * hh * ww, 9 * ci)
        o = p @ w.reshape(9 * ci, -1) + b
        return jnp.maximum(o, 0.0).reshape(nb, hh, ww, -1)

    x = conv(x, params["conv1_w"], params["conv1_b"])
    x = conv(x, params["conv2_w"], params["conv2_b"])
    x = conv(x, params["conv3_w"], params["conv3_b"])
    n = x.shape[0]
    flat = jnp.transpose(x, (0, 3, 1, 2)).reshape(n, -1)   # PyTorch NCHW flatten
    h = jnp.maximum(flat @ params["fc1_w"] + params["fc1_b"], 0.0)
    h = jnp.maximum(h @ params["fc2_w"] + params["fc2_b"], 0.0)
    h = jnp.maximum(h @ params["fc3_w"] + params["fc3_b"], 0.0)
    logits = h @ params["fc4_w"] + params["fc4_b"]
    if log_softmax:
        return jax.nn.log_softmax(logits, axis=1)
    if softmax:
        return jax.nn.softmax(logits, axis=1)
    return logits


# ----------------------------------- main ------------------------------------


if __name__ == "__main__":
    key = jax.random.PRNGKey(0)
    k_params, k_input = jax.random.split(key)

    channels, batch = 3, 2
    x = jax.random.normal(k_input, (batch, channels, 3, 3), jnp.float32)

    params = init_params(k_params, channels=channels)
    kp = prepare_kernel_params(params)

    out = jax.jit(convnet_big_forward)(x, kp)
    out = jax.block_until_ready(out)

    assert out.shape == (batch, 3), out.shape
    # softmax rows must sum to ~1 (approx-reciprocal + bf16 MXU operands)
    assert bool(jnp.all(jnp.abs(jnp.sum(out, axis=1) - 1.0) < 1e-2)), jnp.sum(out, axis=1)
    # match the f32 pure-JAX reference within bf16-accumulation tolerance
    ref = _reference_forward(x, params)
    assert bool(jnp.all(jnp.abs(out - ref) < 5e-2)), (out, ref)

    print("KERNEL_OK")
</pallas_src>

<mosaic_0001>
module attributes {stable_mosaic.version = 11 : i64} {
  func.func @_fused_kernel(%arg0: memref<18x3xbf16, #tpu.memory_space<vmem>>, %arg1: memref<9x18x18xbf16, #tpu.memory_space<vmem>>, %arg2: memref<9x2x18xbf16, #tpu.memory_space<vmem>>, %arg3: memref<9x3x32xbf16, #tpu.memory_space<vmem>>, %arg4: memref<1x32xf32, #tpu.memory_space<vmem>>, %arg5: memref<9x32x64xbf16, #tpu.memory_space<vmem>>, %arg6: memref<1x64xf32, #tpu.memory_space<vmem>>, %arg7: memref<9x64x128xbf16, #tpu.memory_space<vmem>>, %arg8: memref<1x128xf32, #tpu.memory_space<vmem>>, %arg9: memref<1152x512xbf16, #tpu.memory_space<vmem>>, %arg10: memref<1x512xf32, #tpu.memory_space<vmem>>, %arg11: memref<512x128xbf16, #tpu.memory_space<vmem>>, %arg12: memref<1x128xf32, #tpu.memory_space<vmem>>, %arg13: memref<128x32xbf16, #tpu.memory_space<vmem>>, %arg14: memref<1x32xf32, #tpu.memory_space<vmem>>, %arg15: memref<32x128xbf16, #tpu.memory_space<vmem>>, %arg16: memref<1x128xf32, #tpu.memory_space<vmem>>, %arg17: memref<2x128xf32, #tpu.memory_space<vmem>>) attributes {dimension_semantics = [], scalar_prefetch = 0 : i64, scratch_operands = 0 : i64, tpu.core_type = #tpu.core_type<tc>} {
    %c0 = arith.constant 0 : index
    %c0_0 = arith.constant 0 : index
    %0 = vector.load %arg0[%c0, %c0_0] : memref<18x3xbf16, #tpu.memory_space<vmem>>, vector<18x3xbf16>
    %c0_1 = arith.constant 0 : index
    %c0_2 = arith.constant 0 : index
    %c0_3 = arith.constant 0 : index
    %1 = vector.load %arg1[%c0_1, %c0_2, %c0_3] : memref<9x18x18xbf16, #tpu.memory_space<vmem>>, vector<1x18x18xbf16>
    %2 = vector.shape_cast %1 : vector<1x18x18xbf16> to vector<18x18xbf16>
    %cst = arith.constant dense<0.000000e+00> : vector<18x3xf32>
    %3 = tpu.matmul %2, %0, %cst {dimension_numbers = #tpu.dot_dimension_numbers<[1], [0], [0], [1], [0, 0, 1, 1], [], []>} : vector<18x18xbf16>, vector<18x3xbf16>, vector<18x3xf32> -> vector<18x3xf32>
    %4 = arith.truncf %3 : vector<18x3xf32> to vector<18x3xbf16>
    %c0_4 = arith.constant 0 : index
    %c0_5 = arith.constant 0 : index
    %c0_6 = arith.constant 0 : index
    %5 = vector.load %arg3[%c0_4, %c0_5, %c0_6] : memref<9x3x32xbf16, #tpu.memory_space<vmem>>, vector<1x3x32xbf16>
    %6 = vector.shape_cast %5 : vector<1x3x32xbf16> to vector<3x32xbf16>
    %cst_7 = arith.constant dense<0.000000e+00> : vector<18x32xf32>
    %7 = tpu.matmul %4, %6, %cst_7 {dimension_numbers = #tpu.dot_dimension_numbers<[1], [0], [0], [1], [0, 0, 1, 1], [], []>} : vector<18x3xbf16>, vector<3x32xbf16>, vector<18x32xf32> -> vector<18x32xf32>
    %c1 = arith.constant 1 : index
    %c0_8 = arith.constant 0 : index
    %c0_9 = arith.constant 0 : index
    %8 = vector.load %arg1[%c1, %c0_8, %c0_9] : memref<9x18x18xbf16, #tpu.memory_space<vmem>>, vector<1x18x18xbf16>
    %9 = vector.shape_cast %8 : vector<1x18x18xbf16> to vector<18x18xbf16>
    %cst_10 = arith.constant dense<0.000000e+00> : vector<18x3xf32>
    %10 = tpu.matmul %9, %0, %cst_10 {dimension_numbers = #tpu.dot_dimension_numbers<[1], [0], [0], [1], [0, 0, 1, 1], [], []>} : vector<18x18xbf16>, vector<18x3xbf16>, vector<18x3xf32> -> vector<18x3xf32>
    %11 = arith.truncf %10 : vector<18x3xf32> to vector<18x3xbf16>
    %c1_11 = arith.constant 1 : index
    %c0_12 = arith.constant 0 : index
    %c0_13 = arith.constant 0 : index
    %12 = vector.load %arg3[%c1_11, %c0_12, %c0_13] : memref<9x3x32xbf16, #tpu.memory_space<vmem>>, vector<1x3x32xbf16>
    %13 = vector.shape_cast %12 : vector<1x3x32xbf16> to vector<3x32xbf16>
    %cst_14 = arith.constant dense<0.000000e+00> : vector<18x32xf32>
    %14 = tpu.matmul %11, %13, %cst_14 {dimension_numbers = #tpu.dot_dimension_numbers<[1], [0], [0], [1], [0, 0, 1, 1], [], []>} : vector<18x3xbf16>, vector<3x32xbf16>, vector<18x32xf32> -> vector<18x32xf32>
    %15 = arith.addf %7, %14 : vector<18x32xf32>
    %c2 = arith.constant 2 : index
    %c0_15 = arith.constant 0 : index
    %c0_16 = arith.constant 0 : index
    %16 = vector.load %arg1[%c2, %c0_15, %c0_16] : memref<9x18x18xbf16, #tpu.memory_space<vmem>>, vector<1x18x18xbf16>
    %17 = vector.shape_cast %16 : vector<1x18x18xbf16> to vector<18x18xbf16>
    %cst_17 = arith.constant dense<0.000000e+00> : vector<18x3xf32>
    %18 = tpu.matmul %17, %0, %cst_17 {dimension_numbers = #tpu.dot_dimension_numbers<[1], [0], [0], [1], [0, 0, 1, 1], [], []>} : vector<18x18xbf16>, vector<18x3xbf16>, vector<18x3xf32> -> vector<18x3xf32>
    %19 = arith.truncf %18 : vector<18x3xf32> to vector<18x3xbf16>
    %c2_18 = arith.constant 2 : index
    %c0_19 = arith.constant 0 : index
    %c0_20 = arith.constant 0 : index
    %20 = vector.load %arg3[%c2_18, %c0_19, %c0_20] : memref<9x3x32xbf16, #tpu.memory_space<vmem>>, vector<1x3x32xbf16>
    %21 = vector.shape_cast %20 : vector<1x3x32xbf16> to vector<3x32xbf16>
    %cst_21 = arith.constant dense<0.000000e+00> : vector<18x32xf32>
    %22 = tpu.matmul %19, %21, %cst_21 {dimension_numbers = #tpu.dot_dimension_numbers<[1], [0], [0], [1], [0, 0, 1, 1], [], []>} : vector<18x3xbf16>, vector<3x32xbf16>, vector<18x32xf32> -> vector<18x32xf32>
    %23 = arith.addf %15, %22 : vector<18x32xf32>
    %c3 = arith.constant 3 : index
    %c0_22 = arith.constant 0 : index
    %c0_23 = arith.constant 0 : index
    %24 = vector.load %arg1[%c3, %c0_22, %c0_23] : memref<9x18x18xbf16, #tpu.memory_space<vmem>>, vector<1x18x18xbf16>
    %25 = vector.shape_cast %24 : vector<1x18x18xbf16> to vector<18x18xbf16>
    %cst_24 = arith.constant dense<0.000000e+00> : vector<18x3xf32>
    %26 = tpu.matmul %25, %0, %cst_24 {dimension_numbers = #tpu.dot_dimension_numbers<[1], [0], [0], [1], [0, 0, 1, 1], [], []>} : vector<18x18xbf16>, vector<18x3xbf16>, vector<18x3xf32> -> vector<18x3xf32>
    %27 = arith.truncf %26 : vector<18x3xf32> to vector<18x3xbf16>
    %c3_25 = arith.constant 3 : index
    %c0_26 = arith.constant 0 : index
    %c0_27 = arith.constant 0 : index
    %28 = vector.load %arg3[%c3_25, %c0_26, %c0_27] : memref<9x3x32xbf16, #tpu.memory_space<vmem>>, vector<1x3x32xbf16>
    %29 = vector.shape_cast %28 : vector<1x3x32xbf16> to vector<3x32xbf16>
    %cst_28 = arith.constant dense<0.000000e+00> : vector<18x32xf32>
    %30 = tpu.matmul %27, %29, %cst_28 {dimension_numbers = #tpu.dot_dimension_numbers<[1], [0], [0], [1], [0, 0, 1, 1], [], []>} : vector<18x3xbf16>, vector<3x32xbf16>, vector<18x32xf32> -> vector<18x32xf32>
    %31 = arith.addf %23, %30 : vector<18x32xf32>
    %c4 = arith.constant 4 : index
    %c0_29 = arith.constant 0 : index
    %c0_30 = arith.constant 0 : index
    %32 = vector.load %arg1[%c4, %c0_29, %c0_30] : memref<9x18x18xbf16, #tpu.memory_space<vmem>>, vector<1x18x18xbf16>
    %33 = vector.shape_cast %32 : vector<1x18x18xbf16> to vector<18x18xbf16>
    %cst_31 = arith.constant dense<0.000000e+00> : vector<18x3xf32>
    %34 = tpu.matmul %33, %0, %cst_31 {dimension_numbers = #tpu.dot_dimension_numbers<[1], [0], [0], [1], [0, 0, 1, 1], [], []>} : vector<18x18xbf16>, vector<18x3xbf16>, vector<18x3xf32> -> vector<18x3xf32>
    %35 = arith.truncf %34 : vector<18x3xf32> to vector<18x3xbf16>
    %c4_32 = arith.constant 4 : index
    %c0_33 = arith.constant 0 : index
    %c0_34 = arith.constant 0 : index
    %36 = vector.load %arg3[%c4_32, %c0_33, %c0_34] : memref<9x3x32xbf16, #tpu.memory_space<vmem>>, vector<1x3x32xbf16>
    %37 = vector.shape_cast %36 : vector<1x3x32xbf16> to vector<3x32xbf16>
    %cst_35 = arith.constant dense<0.000000e+00> : vector<18x32xf32>
    %38 = tpu.matmul %35, %37, %cst_35 {dimension_numbers = #tpu.dot_dimension_numbers<[1], [0], [0], [1], [0, 0, 1, 1], [], []>} : vector<18x3xbf16>, vector<3x32xbf16>, vector<18x32xf32> -> vector<18x32xf32>
    %39 = arith.addf %31, %38 : vector<18x32xf32>
    %c5 = arith.constant 5 : index
    %c0_36 = arith.constant 0 : index
    %c0_37 = arith.constant 0 : index
    %40 = vector.load %arg1[%c5, %c0_36, %c0_37] : memref<9x18x18xbf16, #tpu.memory_space<vmem>>, vector<1x18x18xbf16>
    %41 = vector.shape_cast %40 : vector<1x18x18xbf16> to vector<18x18xbf16>
    %cst_38 = arith.constant dense<0.000000e+00> : vector<18x3xf32>
    %42 = tpu.matmul %41, %0, %cst_38 {dimension_numbers = #tpu.dot_dimension_numbers<[1], [0], [0], [1], [0, 0, 1, 1], [], []>} : vector<18x18xbf16>, vector<18x3xbf16>, vector<18x3xf32> -> vector<18x3xf32>
    %43 = arith.truncf %42 : vector<18x3xf32> to vector<18x3xbf16>
    %c5_39 = arith.constant 5 : index
    %c0_40 = arith.constant 0 : index
    %c0_41 = arith.constant 0 : index
    %44 = vector.load %arg3[%c5_39, %c0_40, %c0_41] : memref<9x3x32xbf16, #tpu.memory_space<vmem>>, vector<1x3x32xbf16>
    %45 = vector.shape_cast %44 : vector<1x3x32xbf16> to vector<3x32xbf16>
    %cst_42 = arith.constant dense<0.000000e+00> : vector<18x32xf32>
    %46 = tpu.matmul %43, %45, %cst_42 {dimension_numbers = #tpu.dot_dimension_numbers<[1], [0], [0], [1], [0, 0, 1, 1], [], []>} : vector<18x3xbf16>, vector<3x32xbf16>, vector<18x32xf32> -> vector<18x32xf32>
    %47 = arith.addf %39, %46 : vector<18x32xf32>
    %c6 = arith.constant 6 : index
    %c0_43 = arith.constant 0 : index
    %c0_44 = arith.constant 0 : index
    %48 = vector.load %arg1[%c6, %c0_43, %c0_44] : memref<9x18x18xbf16, #tpu.memory_space<vmem>>, vector<1x18x18xbf16>
    %49 = vector.shape_cast %48 : vector<1x18x18xbf16> to vector<18x18xbf16>
    %cst_45 = arith.constant dense<0.000000e+00> : vector<18x3xf32>
    %50 = tpu.matmul %49, %0, %cst_45 {dimension_numbers = #tpu.dot_dimension_numbers<[1], [0], [0], [1], [0, 0, 1, 1], [], []>} : vector<18x18xbf16>, vector<18x3xbf16>, vector<18x3xf32> -> vector<18x3xf32>
    %51 = arith.truncf %50 : vector<18x3xf32> to vector<18x3xbf16>
    %c6_46 = arith.constant 6 : index
    %c0_47 = arith.constant 0 : index
    %c0_48 = arith.constant 0 : index
    %52 = vector.load %arg3[%c6_46, %c0_47, %c0_48] : memref<9x3x32xbf16, #tpu.memory_space<vmem>>, vector<1x3x32xbf16>
    %53 = vector.shape_cast %52 : vector<1x3x32xbf16> to vector<3x32xbf16>
    %cst_49 = arith.constant dense<0.000000e+00> : vector<18x32xf32>
    %54 = tpu.matmul %51, %53, %cst_49 {dimension_numbers = #tpu.dot_dimension_numbers<[1], [0], [0], [1], [0, 0, 1, 1], [], []>} : vector<18x3xbf16>, vector<3x32xbf16>, vector<18x32xf32> -> vector<18x32xf32>
    %55 = arith.addf %47, %54 : vector<18x32xf32>
    %c7 = arith.constant 7 : index
    %c0_50 = arith.constant 0 : index
    %c0_51 = arith.constant 0 : index
    %56 = vector.load %arg1[%c7, %c0_50, %c0_51] : memref<9x18x18xbf16, #tpu.memory_space<vmem>>, vector<1x18x18xbf16>
    %57 = vector.shape_cast %56 : vector<1x18x18xbf16> to vector<18x18xbf16>
    %cst_52 = arith.constant dense<0.000000e+00> : vector<18x3xf32>
    %58 = tpu.matmul %57, %0, %cst_52 {dimension_numbers = #tpu.dot_dimension_numbers<[1], [0], [0], [1], [0, 0, 1, 1], [], []>} : vector<18x18xbf16>, vector<18x3xbf16>, vector<18x3xf32> -> vector<18x3xf32>
    %59 = arith.truncf %58 : vector<18x3xf32> to vector<18x3xbf16>
    %c7_53 = arith.constant 7 : index
    %c0_54 = arith.constant 0 : index
    %c0_55 = arith.constant 0 : index
    %60 = vector.load %arg3[%c7_53, %c0_54, %c0_55] : memref<9x3x32xbf16, #tpu.memory_space<vmem>>, vector<1x3x32xbf16>
    %61 = vector.shape_cast %60 : vector<1x3x32xbf16> to vector<3x32xbf16>
    %cst_56 = arith.constant dense<0.000000e+00> : vector<18x32xf32>
    %62 = tpu.matmul %59, %61, %cst_56 {dimension_numbers = #tpu.dot_dimension_numbers<[1], [0], [0], [1], [0, 0, 1, 1], [], []>} : vector<18x3xbf16>, vector<3x32xbf16>, vector<18x32xf32> -> vector<18x32xf32>
    %63 = arith.addf %55, %62 : vector<18x32xf32>
    %c8 = arith.constant 8 : index
    %c0_57 = arith.constant 0 : index
    %c0_58 = arith.constant 0 : index
    %64 = vector.load %arg1[%c8, %c0_57, %c0_58] : memref<9x18x18xbf16, #tpu.memory_space<vmem>>, vector<1x18x18xbf16>
    %65 = vector.shape_cast %64 : vector<1x18x18xbf16> to vector<18x18xbf16>
    %cst_59 = arith.constant dense<0.000000e+00> : vector<18x3xf32>
    %66 = tpu.matmul %65, %0, %cst_59 {dimension_numbers = #tpu.dot_dimension_numbers<[1], [0], [0], [1], [0, 0, 1, 1], [], []>} : vector<18x18xbf16>, vector<18x3xbf16>, vector<18x3xf32> -> vector<18x3xf32>
    %67 = arith.truncf %66 : vector<18x3xf32> to vector<18x3xbf16>
    %c8_60 = arith.constant 8 : index
    %c0_61 = arith.constant 0 : index
    %c0_62 = arith.constant 0 : index
    %68 = vector.load %arg3[%c8_60, %c0_61, %c0_62] : memref<9x3x32xbf16, #tpu.memory_space<vmem>>, vector<1x3x32xbf16>
    %69 = vector.shape_cast %68 : vector<1x3x32xbf16> to vector<3x32xbf16>
    %cst_63 = arith.constant dense<0.000000e+00> : vector<18x32xf32>
    %70 = tpu.matmul %67, %69, %cst_63 {dimension_numbers = #tpu.dot_dimension_numbers<[1], [0], [0], [1], [0, 0, 1, 1], [], []>} : vector<18x3xbf16>, vector<3x32xbf16>, vector<18x32xf32> -> vector<18x32xf32>
    %71 = arith.addf %63, %70 : vector<18x32xf32>
    %c0_64 = arith.constant 0 : index
    %c0_65 = arith.constant 0 : index
    %72 = vector.load %arg4[%c0_64, %c0_65] : memref<1x32xf32, #tpu.memory_space<vmem>>, vector<1x32xf32>
    %73 = vector.broadcast %72 : vector<1x32xf32> to vector<18x32xf32>
    %74 = arith.addf %71, %73 : vector<18x32xf32>
    %cst_66 = arith.constant 0.000000e+00 : f32
    %75 = vector.broadcast %cst_66 : f32 to vector<18x32xf32>
    %76 = arith.maximumf %74, %75 : vector<18x32xf32>
    %77 = arith.truncf %76 : vector<18x32xf32> to vector<18x32xbf16>
    %c0_67 = arith.constant 0 : index
    %c0_68 = arith.constant 0 : index
    %c0_69 = arith.constant 0 : index
    %78 = vector.load %arg1[%c0_67, %c0_68, %c0_69] : memref<9x18x18xbf16, #tpu.memory_space<vmem>>, vector<1x18x18xbf16>
    %79 = vector.shape_cast %78 : vector<1x18x18xbf16> to vector<18x18xbf16>
    %cst_70 = arith.constant dense<0.000000e+00> : vector<18x32xf32>
    %80 = tpu.matmul %79, %77, %cst_70 {dimension_numbers = #tpu.dot_dimension_numbers<[1], [0], [0], [1], [0, 0, 1, 1], [], []>} : vector<18x18xbf16>, vector<18x32xbf16>, vector<18x32xf32> -> vector<18x32xf32>
    %81 = arith.truncf %80 : vector<18x32xf32> to vector<18x32xbf16>
    %c0_71 = arith.constant 0 : index
    %c0_72 = arith.constant 0 : index
    %c0_73 = arith.constant 0 : index
    %82 = vector.load %arg5[%c0_71, %c0_72, %c0_73] : memref<9x32x64xbf16, #tpu.memory_space<vmem>>, vector<1x32x64xbf16>
    %83 = vector.shape_cast %82 : vector<1x32x64xbf16> to vector<32x64xbf16>
    %cst_74 = arith.constant dense<0.000000e+00> : vector<18x64xf32>
    %84 = tpu.matmul %81, %83, %cst_74 {dimension_numbers = #tpu.dot_dimension_numbers<[1], [0], [0], [1], [0, 0, 1, 1], [], []>} : vector<18x32xbf16>, vector<32x64xbf16>, vector<18x64xf32> -> vector<18x64xf32>
    %c1_75 = arith.constant 1 : index
    %c0_76 = arith.constant 0 : index
    %c0_77 = arith.constant 0 : index
    %85 = vector.load %arg1[%c1_75, %c0_76, %c0_77] : memref<9x18x18xbf16, #tpu.memory_space<vmem>>, vector<1x18x18xbf16>
    %86 = vector.shape_cast %85 : vector<1x18x18xbf16> to vector<18x18xbf16>
    %cst_78 = arith.constant dense<0.000000e+00> : vector<18x32xf32>
    %87 = tpu.matmul %86, %77, %cst_78 {dimension_numbers = #tpu.dot_dimension_numbers<[1], [0], [0], [1], [0, 0, 1, 1], [], []>} : vector<18x18xbf16>, vector<18x32xbf16>, vector<18x32xf32> -> vector<18x32xf32>
    %88 = arith.truncf %87 : vector<18x32xf32> to vector<18x32xbf16>
    %c1_79 = arith.constant 1 : index
    %c0_80 = arith.constant 0 : index
    %c0_81 = arith.constant 0 : index
    %89 = vector.load %arg5[%c1_79, %c0_80, %c0_81] : memref<9x32x64xbf16, #tpu.memory_space<vmem>>, vector<1x32x64xbf16>
    %90 = vector.shape_cast %89 : vector<1x32x64xbf16> to vector<32x64xbf16>
    %cst_82 = arith.constant dense<0.000000e+00> : vector<18x64xf32>
    %91 = tpu.matmul %88, %90, %cst_82 {dimension_numbers = #tpu.dot_dimension_numbers<[1], [0], [0], [1], [0, 0, 1, 1], [], []>} : vector<18x32xbf16>, vector<32x64xbf16>, vector<18x64xf32> -> vector<18x64xf32>
    %92 = arith.addf %84, %91 : vector<18x64xf32>
    %c2_83 = arith.constant 2 : index
    %c0_84 = arith.constant 0 : index
    %c0_85 = arith.constant 0 : index
    %93 = vector.load %arg1[%c2_83, %c0_84, %c0_85] : memref<9x18x18xbf16, #tpu.memory_space<vmem>>, vector<1x18x18xbf16>
    %94 = vector.shape_cast %93 : vector<1x18x18xbf16> to vector<18x18xbf16>
    %cst_86 = arith.constant dense<0.000000e+00> : vector<18x32xf32>
    %95 = tpu.matmul %94, %77, %cst_86 {dimension_numbers = #tpu.dot_dimension_numbers<[1], [0], [0], [1], [0, 0, 1, 1], [], []>} : vector<18x18xbf16>, vector<18x32xbf16>, vector<18x32xf32> -> vector<18x32xf32>
    %96 = arith.truncf %95 : vector<18x32xf32> to vector<18x32xbf16>
    %c2_87 = arith.constant 2 : index
    %c0_88 = arith.constant 0 : index
    %c0_89 = arith.constant 0 : index
    %97 = vector.load %arg5[%c2_87, %c0_88, %c0_89] : memref<9x32x64xbf16, #tpu.memory_space<vmem>>, vector<1x32x64xbf16>
    %98 = vector.shape_cast %97 : vector<1x32x64xbf16> to vector<32x64xbf16>
    %cst_90 = arith.constant dense<0.000000e+00> : vector<18x64xf32>
    %99 = tpu.matmul %96, %98, %cst_90 {dimension_numbers = #tpu.dot_dimension_numbers<[1], [0], [0], [1], [0, 0, 1, 1], [], []>} : vector<18x32xbf16>, vector<32x64xbf16>, vector<18x64xf32> -> vector<18x64xf32>
    %100 = arith.addf %92, %99 : vector<18x64xf32>
    %c3_91 = arith.constant 3 : index
    %c0_92 = arith.constant 0 : index
    %c0_93 = arith.constant 0 : index
    %101 = vector.load %arg1[%c3_91, %c0_92, %c0_93] : memref<9x18x18xbf16, #tpu.memory_space<vmem>>, vector<1x18x18xbf16>
    %102 = vector.shape_cast %101 : vector<1x18x18xbf16> to vector<18x18xbf16>
    %cst_94 = arith.constant dense<0.000000e+00> : vector<18x32xf32>
    %103 = tpu.matmul %102, %77, %cst_94 {dimension_numbers = #tpu.dot_dimension_numbers<[1], [0], [0], [1], [0, 0, 1, 1], [], []>} : vector<18x18xbf16>, vector<18x32xbf16>, vector<18x32xf32> -> vector<18x32xf32>
    %104 = arith.truncf %103 : vector<18x32xf32> to vector<18x32xbf16>
    %c3_95 = arith.constant 3 : index
    %c0_96 = arith.constant 0 : index
    %c0_97 = arith.constant 0 : index
    %105 = vector.load %arg5[%c3_95, %c0_96, %c0_97] : memref<9x32x64xbf16, #tpu.memory_space<vmem>>, vector<1x32x64xbf16>
    %106 = vector.shape_cast %105 : vector<1x32x64xbf16> to vector<32x64xbf16>
    %cst_98 = arith.constant dense<0.000000e+00> : vector<18x64xf32>
    %107 = tpu.matmul %104, %106, %cst_98 {dimension_numbers = #tpu.dot_dimension_numbers<[1], [0], [0], [1], [0, 0, 1, 1], [], []>} : vector<18x32xbf16>, vector<32x64xbf16>, vector<18x64xf32> -> vector<18x64xf32>
    %108 = arith.addf %100, %107 : vector<18x64xf32>
    %c4_99 = arith.constant 4 : index
    %c0_100 = arith.constant 0 : index
    %c0_101 = arith.constant 0 : index
    %109 = vector.load %arg1[%c4_99, %c0_100, %c0_101] : memref<9x18x18xbf16, #tpu.memory_space<vmem>>, vector<1x18x18xbf16>
    %110 = vector.shape_cast %109 : vector<1x18x18xbf16> to vector<18x18xbf16>
    %cst_102 = arith.constant dense<0.000000e+00> : vector<18x32xf32>
    %111 = tpu.matmul %110, %77, %cst_102 {dimension_numbers = #tpu.dot_dimension_numbers<[1], [0], [0], [1], [0, 0, 1, 1], [], []>} : vector<18x18xbf16>, vector<18x32xbf16>, vector<18x32xf32> -> vector<18x32xf32>
    %112 = arith.truncf %111 : vector<18x32xf32> to vector<18x32xbf16>
    %c4_103 = arith.constant 4 : index
    %c0_104 = arith.constant 0 : index
    %c0_105 = arith.constant 0 : index
    %113 = vector.load %arg5[%c4_103, %c0_104, %c0_105] : memref<9x32x64xbf16, #tpu.memory_space<vmem>>, vector<1x32x64xbf16>
    %114 = vector.shape_cast %113 : vector<1x32x64xbf16> to vector<32x64xbf16>
    %cst_106 = arith.constant dense<0.000000e+00> : vector<18x64xf32>
    %115 = tpu.matmul %112, %114, %cst_106 {dimension_numbers = #tpu.dot_dimension_numbers<[1], [0], [0], [1], [0, 0, 1, 1], [], []>} : vector<18x32xbf16>, vector<32x64xbf16>, vector<18x64xf32> -> vector<18x64xf32>
    %116 = arith.addf %108, %115 : vector<18x64xf32>
    %c5_107 = arith.constant 5 : index
    %c0_108 = arith.constant 0 : index
    %c0_109 = arith.constant 0 : index
    %117 = vector.load %arg1[%c5_107, %c0_108, %c0_109] : memref<9x18x18xbf16, #tpu.memory_space<vmem>>, vector<1x18x18xbf16>
    %118 = vector.shape_cast %117 : vector<1x18x18xbf16> to vector<18x18xbf16>
    %cst_110 = arith.constant dense<0.000000e+00> : vector<18x32xf32>
    %119 = tpu.matmul %118, %77, %cst_110 {dimension_numbers = #tpu.dot_dimension_numbers<[1], [0], [0], [1], [0, 0, 1, 1], [], []>} : vector<18x18xbf16>, vector<18x32xbf16>, vector<18x32xf32> -> vector<18x32xf32>
    %120 = arith.truncf %119 : vector<18x32xf32> to vector<18x32xbf16>
    %c5_111 = arith.constant 5 : index
    %c0_112 = arith.constant 0 : index
    %c0_113 = arith.constant 0 : index
    %121 = vector.load %arg5[%c5_111, %c0_112, %c0_113] : memref<9x32x64xbf16, #tpu.memory_space<vmem>>, vector<1x32x64xbf16>
    %122 = vector.shape_cast %121 : vector<1x32x64xbf16> to vector<32x64xbf16>
    %cst_114 = arith.constant dense<0.000000e+00> : vector<18x64xf32>
    %123 = tpu.matmul %120, %122, %cst_114 {dimension_numbers = #tpu.dot_dimension_numbers<[1], [0], [0], [1], [0, 0, 1, 1], [], []>} : vector<18x32xbf16>, vector<32x64xbf16>, vector<18x64xf32> -> vector<18x64xf32>
    %124 = arith.addf %116, %123 : vector<18x64xf32>
    %c6_115 = arith.constant 6 : index
    %c0_116 = arith.constant 0 : index
    %c0_117 = arith.constant 0 : index
    %125 = vector.load %arg1[%c6_115, %c0_116, %c0_117] : memref<9x18x18xbf16, #tpu.memory_space<vmem>>, vector<1x18x18xbf16>
    %126 = vector.shape_cast %125 : vector<1x18x18xbf16> to vector<18x18xbf16>
    %cst_118 = arith.constant dense<0.000000e+00> : vector<18x32xf32>
    %127 = tpu.matmul %126, %77, %cst_118 {dimension_numbers = #tpu.dot_dimension_numbers<[1], [0], [0], [1], [0, 0, 1, 1], [], []>} : vector<18x18xbf16>, vector<18x32xbf16>, vector<18x32xf32> -> vector<18x32xf32>
    %128 = arith.truncf %127 : vector<18x32xf32> to vector<18x32xbf16>
    %c6_119 = arith.constant 6 : index
    %c0_120 = arith.constant 0 : index
    %c0_121 = arith.constant 0 : index
    %129 = vector.load %arg5[%c6_119, %c0_120, %c0_121] : memref<9x32x64xbf16, #tpu.memory_space<vmem>>, vector<1x32x64xbf16>
    %130 = vector.shape_cast %129 : vector<1x32x64xbf16> to vector<32x64xbf16>
    %cst_122 = arith.constant dense<0.000000e+00> : vector<18x64xf32>
    %131 = tpu.matmul %128, %130, %cst_122 {dimension_numbers = #tpu.dot_dimension_numbers<[1], [0], [0], [1], [0, 0, 1, 1], [], []>} : vector<18x32xbf16>, vector<32x64xbf16>, vector<18x64xf32> -> vector<18x64xf32>
    %132 = arith.addf %124, %131 : vector<18x64xf32>
    %c7_123 = arith.constant 7 : index
    %c0_124 = arith.constant 0 : index
    %c0_125 = arith.constant 0 : index
    %133 = vector.load %arg1[%c7_123, %c0_124, %c0_125] : memref<9x18x18xbf16, #tpu.memory_space<vmem>>, vector<1x18x18xbf16>
    %134 = vector.shape_cast %133 : vector<1x18x18xbf16> to vector<18x18xbf16>
    %cst_126 = arith.constant dense<0.000000e+00> : vector<18x32xf32>
    %135 = tpu.matmul %134, %77, %cst_126 {dimension_numbers = #tpu.dot_dimension_numbers<[1], [0], [0], [1], [0, 0, 1, 1], [], []>} : vector<18x18xbf16>, vector<18x32xbf16>, vector<18x32xf32> -> vector<18x32xf32>
    %136 = arith.truncf %135 : vector<18x32xf32> to vector<18x32xbf16>
    %c7_127 = arith.constant 7 : index
    %c0_128 = arith.constant 0 : index
    %c0_129 = arith.constant 0 : index
    %137 = vector.load %arg5[%c7_127, %c0_128, %c0_129] : memref<9x32x64xbf16, #tpu.memory_space<vmem>>, vector<1x32x64xbf16>
    %138 = vector.shape_cast %137 : vector<1x32x64xbf16> to vector<32x64xbf16>
    %cst_130 = arith.constant dense<0.000000e+00> : vector<18x64xf32>
    %139 = tpu.matmul %136, %138, %cst_130 {dimension_numbers = #tpu.dot_dimension_numbers<[1], [0], [0], [1], [0, 0, 1, 1], [], []>} : vector<18x32xbf16>, vector<32x64xbf16>, vector<18x64xf32> -> vector<18x64xf32>
    %140 = arith.addf %132, %139 : vector<18x64xf32>
    %c8_131 = arith.constant 8 : index
    %c0_132 = arith.constant 0 : index
    %c0_133 = arith.constant 0 : index
    %141 = vector.load %arg1[%c8_131, %c0_132, %c0_133] : memref<9x18x18xbf16, #tpu.memory_space<vmem>>, vector<1x18x18xbf16>
    %142 = vector.shape_cast %141 : vector<1x18x18xbf16> to vector<18x18xbf16>
    %cst_134 = arith.constant dense<0.000000e+00> : vector<18x32xf32>
    %143 = tpu.matmul %142, %77, %cst_134 {dimension_numbers = #tpu.dot_dimension_numbers<[1], [0], [0], [1], [0, 0, 1, 1], [], []>} : vector<18x18xbf16>, vector<18x32xbf16>, vector<18x32xf32> -> vector<18x32xf32>
    %144 = arith.truncf %143 : vector<18x32xf32> to vector<18x32xbf16>
    %c8_135 = arith.constant 8 : index
    %c0_136 = arith.constant 0 : index
    %c0_137 = arith.constant 0 : index
    %145 = vector.load %arg5[%c8_135, %c0_136, %c0_137] : memref<9x32x64xbf16, #tpu.memory_space<vmem>>, vector<1x32x64xbf16>
    %146 = vector.shape_cast %145 : vector<1x32x64xbf16> to vector<32x64xbf16>
    %cst_138 = arith.constant dense<0.000000e+00> : vector<18x64xf32>
    %147 = tpu.matmul %144, %146, %cst_138 {dimension_numbers = #tpu.dot_dimension_numbers<[1], [0], [0], [1], [0, 0, 1, 1], [], []>} : vector<18x32xbf16>, vector<32x64xbf16>, vector<18x64xf32> -> vector<18x64xf32>
    %148 = arith.addf %140, %147 : vector<18x64xf32>
    %c0_139 = arith.constant 0 : index
    %c0_140 = arith.constant 0 : index
    %149 = vector.load %arg6[%c0_139, %c0_140] : memref<1x64xf32, #tpu.memory_space<vmem>>, vector<1x64xf32>
    %150 = vector.broadcast %149 : vector<1x64xf32> to vector<18x64xf32>
    %151 = arith.addf %148, %150 : vector<18x64xf32>
    %cst_141 = arith.constant 0.000000e+00 : f32
    %152 = vector.broadcast %cst_141 : f32 to vector<18x64xf32>
    %153 = arith.maximumf %151, %152 : vector<18x64xf32>
    %154 = arith.truncf %153 : vector<18x64xf32> to vector<18x64xbf16>
    %c0_142 = arith.constant 0 : index
    %c0_143 = arith.constant 0 : index
    %c0_144 = arith.constant 0 : index
    %155 = vector.load %arg1[%c0_142, %c0_143, %c0_144] : memref<9x18x18xbf16, #tpu.memory_space<vmem>>, vector<1x18x18xbf16>
    %156 = vector.shape_cast %155 : vector<1x18x18xbf16> to vector<18x18xbf16>
    %cst_145 = arith.constant dense<0.000000e+00> : vector<18x64xf32>
    %157 = tpu.matmul %156, %154, %cst_145 {dimension_numbers = #tpu.dot_dimension_numbers<[1], [0], [0], [1], [0, 0, 1, 1], [], []>} : vector<18x18xbf16>, vector<18x64xbf16>, vector<18x64xf32> -> vector<18x64xf32>
    %158 = arith.truncf %157 : vector<18x64xf32> to vector<18x64xbf16>
    %c0_146 = arith.constant 0 : index
    %c0_147 = arith.constant 0 : index
    %c0_148 = arith.constant 0 : index
    %159 = vector.load %arg7[%c0_146, %c0_147, %c0_148] : memref<9x64x128xbf16, #tpu.memory_space<vmem>>, vector<1x64x128xbf16>
    %160 = vector.shape_cast %159 : vector<1x64x128xbf16> to vector<64x128xbf16>
    %cst_149 = arith.constant dense<0.000000e+00> : vector<18x128xf32>
    %161 = tpu.matmul %158, %160, %cst_149 {dimension_numbers = #tpu.dot_dimension_numbers<[1], [0], [0], [1], [0, 0, 1, 1], [], []>} : vector<18x64xbf16>, vector<64x128xbf16>, vector<18x128xf32> -> vector<18x128xf32>
    %c1_150 = arith.constant 1 : index
    %c0_151 = arith.constant 0 : index
    %c0_152 = arith.constant 0 : index
    %162 = vector.load %arg1[%c1_150, %c0_151, %c0_152] : memref<9x18x18xbf16, #tpu.memory_space<vmem>>, vector<1x18x18xbf16>
    %163 = vector.shape_cast %162 : vector<1x18x18xbf16> to vector<18x18xbf16>
    %cst_153 = arith.constant dense<0.000000e+00> : vector<18x64xf32>
    %164 = tpu.matmul %163, %154, %cst_153 {dimension_numbers = #tpu.dot_dimension_numbers<[1], [0], [0], [1], [0, 0, 1, 1], [], []>} : vector<18x18xbf16>, vector<18x64xbf16>, vector<18x64xf32> -> vector<18x64xf32>
    %165 = arith.truncf %164 : vector<18x64xf32> to vector<18x64xbf16>
    %c1_154 = arith.constant 1 : index
    %c0_155 = arith.constant 0 : index
    %c0_156 = arith.constant 0 : index
    %166 = vector.load %arg7[%c1_154, %c0_155, %c0_156] : memref<9x64x128xbf16, #tpu.memory_space<vmem>>, vector<1x64x128xbf16>
    %167 = vector.shape_cast %166 : vector<1x64x128xbf16> to vector<64x128xbf16>
    %cst_157 = arith.constant dense<0.000000e+00> : vector<18x128xf32>
    %168 = tpu.matmul %165, %167, %cst_157 {dimension_numbers = #tpu.dot_dimension_numbers<[1], [0], [0], [1], [0, 0, 1, 1], [], []>} : vector<18x64xbf16>, vector<64x128xbf16>, vector<18x128xf32> -> vector<18x128xf32>
    %169 = arith.addf %161, %168 : vector<18x128xf32>
    %c2_158 = arith.constant 2 : index
    %c0_159 = arith.constant 0 : index
    %c0_160 = arith.constant 0 : index
    %170 = vector.load %arg1[%c2_158, %c0_159, %c0_160] : memref<9x18x18xbf16, #tpu.memory_space<vmem>>, vector<1x18x18xbf16>
    %171 = vector.shape_cast %170 : vector<1x18x18xbf16> to vector<18x18xbf16>
    %cst_161 = arith.constant dense<0.000000e+00> : vector<18x64xf32>
    %172 = tpu.matmul %171, %154, %cst_161 {dimension_numbers = #tpu.dot_dimension_numbers<[1], [0], [0], [1], [0, 0, 1, 1], [], []>} : vector<18x18xbf16>, vector<18x64xbf16>, vector<18x64xf32> -> vector<18x64xf32>
    %173 = arith.truncf %172 : vector<18x64xf32> to vector<18x64xbf16>
    %c2_162 = arith.constant 2 : index
    %c0_163 = arith.constant 0 : index
    %c0_164 = arith.constant 0 : index
    %174 = vector.load %arg7[%c2_162, %c0_163, %c0_164] : memref<9x64x128xbf16, #tpu.memory_space<vmem>>, vector<1x64x128xbf16>
    %175 = vector.shape_cast %174 : vector<1x64x128xbf16> to vector<64x128xbf16>
    %cst_165 = arith.constant dense<0.000000e+00> : vector<18x128xf32>
    %176 = tpu.matmul %173, %175, %cst_165 {dimension_numbers = #tpu.dot_dimension_numbers<[1], [0], [0], [1], [0, 0, 1, 1], [], []>} : vector<18x64xbf16>, vector<64x128xbf16>, vector<18x128xf32> -> vector<18x128xf32>
    %177 = arith.addf %169, %176 : vector<18x128xf32>
    %c3_166 = arith.constant 3 : index
    %c0_167 = arith.constant 0 : index
    %c0_168 = arith.constant 0 : index
    %178 = vector.load %arg1[%c3_166, %c0_167, %c0_168] : memref<9x18x18xbf16, #tpu.memory_space<vmem>>, vector<1x18x18xbf16>
    %179 = vector.shape_cast %178 : vector<1x18x18xbf16> to vector<18x18xbf16>
    %cst_169 = arith.constant dense<0.000000e+00> : vector<18x64xf32>
    %180 = tpu.matmul %179, %154, %cst_169 {dimension_numbers = #tpu.dot_dimension_numbers<[1], [0], [0], [1], [0, 0, 1, 1], [], []>} : vector<18x18xbf16>, vector<18x64xbf16>, vector<18x64xf32> -> vector<18x64xf32>
    %181 = arith.truncf %180 : vector<18x64xf32> to vector<18x64xbf16>
    %c3_170 = arith.constant 3 : index
    %c0_171 = arith.constant 0 : index
    %c0_172 = arith.constant 0 : index
    %182 = vector.load %arg7[%c3_170, %c0_171, %c0_172] : memref<9x64x128xbf16, #tpu.memory_space<vmem>>, vector<1x64x128xbf16>
    %183 = vector.shape_cast %182 : vector<1x64x128xbf16> to vector<64x128xbf16>
    %cst_173 = arith.constant dense<0.000000e+00> : vector<18x128xf32>
    %184 = tpu.matmul %181, %183, %cst_173 {dimension_numbers = #tpu.dot_dimension_numbers<[1], [0], [0], [1], [0, 0, 1, 1], [], []>} : vector<18x64xbf16>, vector<64x128xbf16>, vector<18x128xf32> -> vector<18x128xf32>
    %185 = arith.addf %177, %184 : vector<18x128xf32>
    %c4_174 = arith.constant 4 : index
    %c0_175 = arith.constant 0 : index
    %c0_176 = arith.constant 0 : index
    %186 = vector.load %arg1[%c4_174, %c0_175, %c0_176] : memref<9x18x18xbf16, #tpu.memory_space<vmem>>, vector<1x18x18xbf16>
    %187 = vector.shape_cast %186 : vector<1x18x18xbf16> to vector<18x18xbf16>
    %cst_177 = arith.constant dense<0.000000e+00> : vector<18x64xf32>
    %188 = tpu.matmul %187, %154, %cst_177 {dimension_numbers = #tpu.dot_dimension_numbers<[1], [0], [0], [1], [0, 0, 1, 1], [], []>} : vector<18x18xbf16>, vector<18x64xbf16>, vector<18x64xf32> -> vector<18x64xf32>
    %189 = arith.truncf %188 : vector<18x64xf32> to vector<18x64xbf16>
    %c4_178 = arith.constant 4 : index
    %c0_179 = arith.constant 0 : index
    %c0_180 = arith.constant 0 : index
    %190 = vector.load %arg7[%c4_178, %c0_179, %c0_180] : memref<9x64x128xbf16, #tpu.memory_space<vmem>>, vector<1x64x128xbf16>
    %191 = vector.shape_cast %190 : vector<1x64x128xbf16> to vector<64x128xbf16>
    %cst_181 = arith.constant dense<0.000000e+00> : vector<18x128xf32>
    %192 = tpu.matmul %189, %191, %cst_181 {dimension_numbers = #tpu.dot_dimension_numbers<[1], [0], [0], [1], [0, 0, 1, 1], [], []>} : vector<18x64xbf16>, vector<64x128xbf16>, vector<18x128xf32> -> vector<18x128xf32>
    %193 = arith.addf %185, %192 : vector<18x128xf32>
    %c5_182 = arith.constant 5 : index
    %c0_183 = arith.constant 0 : index
    %c0_184 = arith.constant 0 : index
    %194 = vector.load %arg1[%c5_182, %c0_183, %c0_184] : memref<9x18x18xbf16, #tpu.memory_space<vmem>>, vector<1x18x18xbf16>
    %195 = vector.shape_cast %194 : vector<1x18x18xbf16> to vector<18x18xbf16>
    %cst_185 = arith.constant dense<0.000000e+00> : vector<18x64xf32>
    %196 = tpu.matmul %195, %154, %cst_185 {dimension_numbers = #tpu.dot_dimension_numbers<[1], [0], [0], [1], [0, 0, 1, 1], [], []>} : vector<18x18xbf16>, vector<18x64xbf16>, vector<18x64xf32> -> vector<18x64xf32>
    %197 = arith.truncf %196 : vector<18x64xf32> to vector<18x64xbf16>
    %c5_186 = arith.constant 5 : index
    %c0_187 = arith.constant 0 : index
    %c0_188 = arith.constant 0 : index
    %198 = vector.load %arg7[%c5_186, %c0_187, %c0_188] : memref<9x64x128xbf16, #tpu.memory_space<vmem>>, vector<1x64x128xbf16>
    %199 = vector.shape_cast %198 : vector<1x64x128xbf16> to vector<64x128xbf16>
    %cst_189 = arith.constant dense<0.000000e+00> : vector<18x128xf32>
    %200 = tpu.matmul %197, %199, %cst_189 {dimension_numbers = #tpu.dot_dimension_numbers<[1], [0], [0], [1], [0, 0, 1, 1], [], []>} : vector<18x64xbf16>, vector<64x128xbf16>, vector<18x128xf32> -> vector<18x128xf32>
    %201 = arith.addf %193, %200 : vector<18x128xf32>
    %c6_190 = arith.constant 6 : index
    %c0_191 = arith.constant 0 : index
    %c0_192 = arith.constant 0 : index
    %202 = vector.load %arg1[%c6_190, %c0_191, %c0_192] : memref<9x18x18xbf16, #tpu.memory_space<vmem>>, vector<1x18x18xbf16>
    %203 = vector.shape_cast %202 : vector<1x18x18xbf16> to vector<18x18xbf16>
    %cst_193 = arith.constant dense<0.000000e+00> : vector<18x64xf32>
    %204 = tpu.matmul %203, %154, %cst_193 {dimension_numbers = #tpu.dot_dimension_numbers<[1], [0], [0], [1], [0, 0, 1, 1], [], []>} : vector<18x18xbf16>, vector<18x64xbf16>, vector<18x64xf32> -> vector<18x64xf32>
    %205 = arith.truncf %204 : vector<18x64xf32> to vector<18x64xbf16>
    %c6_194 = arith.constant 6 : index
    %c0_195 = arith.constant 0 : index
    %c0_196 = arith.constant 0 : index
    %206 = vector.load %arg7[%c6_194, %c0_195, %c0_196] : memref<9x64x128xbf16, #tpu.memory_space<vmem>>, vector<1x64x128xbf16>
    %207 = vector.shape_cast %206 : vector<1x64x128xbf16> to vector<64x128xbf16>
    %cst_197 = arith.constant dense<0.000000e+00> : vector<18x128xf32>
    %208 = tpu.matmul %205, %207, %cst_197 {dimension_numbers = #tpu.dot_dimension_numbers<[1], [0], [0], [1], [0, 0, 1, 1], [], []>} : vector<18x64xbf16>, vector<64x128xbf16>, vector<18x128xf32> -> vector<18x128xf32>
    %209 = arith.addf %201, %208 : vector<18x128xf32>
    %c7_198 = arith.constant 7 : index
    %c0_199 = arith.constant 0 : index
    %c0_200 = arith.constant 0 : index
    %210 = vector.load %arg1[%c7_198, %c0_199, %c0_200] : memref<9x18x18xbf16, #tpu.memory_space<vmem>>, vector<1x18x18xbf16>
    %211 = vector.shape_cast %210 : vector<1x18x18xbf16> to vector<18x18xbf16>
    %cst_201 = arith.constant dense<0.000000e+00> : vector<18x64xf32>
    %212 = tpu.matmul %211, %154, %cst_201 {dimension_numbers = #tpu.dot_dimension_numbers<[1], [0], [0], [1], [0, 0, 1, 1], [], []>} : vector<18x18xbf16>, vector<18x64xbf16>, vector<18x64xf32> -> vector<18x64xf32>
    %213 = arith.truncf %212 : vector<18x64xf32> to vector<18x64xbf16>
    %c7_202 = arith.constant 7 : index
    %c0_203 = arith.constant 0 : index
    %c0_204 = arith.constant 0 : index
    %214 = vector.load %arg7[%c7_202, %c0_203, %c0_204] : memref<9x64x128xbf16, #tpu.memory_space<vmem>>, vector<1x64x128xbf16>
    %215 = vector.shape_cast %214 : vector<1x64x128xbf16> to vector<64x128xbf16>
    %cst_205 = arith.constant dense<0.000000e+00> : vector<18x128xf32>
    %216 = tpu.matmul %213, %215, %cst_205 {dimension_numbers = #tpu.dot_dimension_numbers<[1], [0], [0], [1], [0, 0, 1, 1], [], []>} : vector<18x64xbf16>, vector<64x128xbf16>, vector<18x128xf32> -> vector<18x128xf32>
    %217 = arith.addf %209, %216 : vector<18x128xf32>
    %c8_206 = arith.constant 8 : index
    %c0_207 = arith.constant 0 : index
    %c0_208 = arith.constant 0 : index
    %218 = vector.load %arg1[%c8_206, %c0_207, %c0_208] : memref<9x18x18xbf16, #tpu.memory_space<vmem>>, vector<1x18x18xbf16>
    %219 = vector.shape_cast %218 : vector<1x18x18xbf16> to vector<18x18xbf16>
    %cst_209 = arith.constant dense<0.000000e+00> : vector<18x64xf32>
    %220 = tpu.matmul %219, %154, %cst_209 {dimension_numbers = #tpu.dot_dimension_numbers<[1], [0], [0], [1], [0, 0, 1, 1], [], []>} : vector<18x18xbf16>, vector<18x64xbf16>, vector<18x64xf32> -> vector<18x64xf32>
    %221 = arith.truncf %220 : vector<18x64xf32> to vector<18x64xbf16>
    %c8_210 = arith.constant 8 : index
    %c0_211 = arith.constant 0 : index
    %c0_212 = arith.constant 0 : index
    %222 = vector.load %arg7[%c8_210, %c0_211, %c0_212] : memref<9x64x128xbf16, #tpu.memory_space<vmem>>, vector<1x64x128xbf16>
    %223 = vector.shape_cast %222 : vector<1x64x128xbf16> to vector<64x128xbf16>
    %cst_213 = arith.constant dense<0.000000e+00> : vector<18x128xf32>
    %224 = tpu.matmul %221, %223, %cst_213 {dimension_numbers = #tpu.dot_dimension_numbers<[1], [0], [0], [1], [0, 0, 1, 1], [], []>} : vector<18x64xbf16>, vector<64x128xbf16>, vector<18x128xf32> -> vector<18x128xf32>
    %225 = arith.addf %217, %224 : vector<18x128xf32>
    %c0_214 = arith.constant 0 : index
    %c0_215 = arith.constant 0 : index
    %226 = vector.load %arg8[%c0_214, %c0_215] : memref<1x128xf32, #tpu.memory_space<vmem>>, vector<1x128xf32>
    %227 = vector.broadcast %226 : vector<1x128xf32> to vector<18x128xf32>
    %228 = arith.addf %225, %227 : vector<18x128xf32>
    %cst_216 = arith.constant 0.000000e+00 : f32
    %229 = vector.broadcast %cst_216 : f32 to vector<18x128xf32>
    %230 = arith.maximumf %228, %229 : vector<18x128xf32>
    %231 = arith.truncf %230 : vector<18x128xf32> to vector<18x128xbf16>
    %c0_217 = arith.constant 0 : index
    %c0_218 = arith.constant 0 : index
    %c0_219 = arith.constant 0 : index
    %232 = vector.load %arg2[%c0_217, %c0_218, %c0_219] : memref<9x2x18xbf16, #tpu.memory_space<vmem>>, vector<1x2x18xbf16>
    %233 = vector.shape_cast %232 : vector<1x2x18xbf16> to vector<2x18xbf16>
    %cst_220 = arith.constant dense<0.000000e+00> : vector<2x128xf32>
    %234 = tpu.matmul %233, %231, %cst_220 {dimension_numbers = #tpu.dot_dimension_numbers<[1], [0], [0], [1], [0, 0, 1, 1], [], []>} : vector<2x18xbf16>, vector<18x128xbf16>, vector<2x128xf32> -> vector<2x128xf32>
    %235 = arith.truncf %234 : vector<2x128xf32> to vector<2x128xbf16>
    %c1_221 = arith.constant 1 : index
    %c0_222 = arith.constant 0 : index
    %c0_223 = arith.constant 0 : index
    %236 = vector.load %arg2[%c1_221, %c0_222, %c0_223] : memref<9x2x18xbf16, #tpu.memory_space<vmem>>, vector<1x2x18xbf16>
    %237 = vector.shape_cast %236 : vector<1x2x18xbf16> to vector<2x18xbf16>
    %cst_224 = arith.constant dense<0.000000e+00> : vector<2x128xf32>
    %238 = tpu.matmul %237, %231, %cst_224 {dimension_numbers = #tpu.dot_dimension_numbers<[1], [0], [0], [1], [0, 0, 1, 1], [], []>} : vector<2x18xbf16>, vector<18x128xbf16>, vector<2x128xf32> -> vector<2x128xf32>
    %239 = arith.truncf %238 : vector<2x128xf32> to vector<2x128xbf16>
    %c2_225 = arith.constant 2 : index
    %c0_226 = arith.constant 0 : index
    %c0_227 = arith.constant 0 : index
    %240 = vector.load %arg2[%c2_225, %c0_226, %c0_227] : memref<9x2x18xbf16, #tpu.memory_space<vmem>>, vector<1x2x18xbf16>
    %241 = vector.shape_cast %240 : vector<1x2x18xbf16> to vector<2x18xbf16>
    %cst_228 = arith.constant dense<0.000000e+00> : vector<2x128xf32>
    %242 = tpu.matmul %241, %231, %cst_228 {dimension_numbers = #tpu.dot_dimension_numbers<[1], [0], [0], [1], [0, 0, 1, 1], [], []>} : vector<2x18xbf16>, vector<18x128xbf16>, vector<2x128xf32> -> vector<2x128xf32>
    %243 = arith.truncf %242 : vector<2x128xf32> to vector<2x128xbf16>
    %c3_229 = arith.constant 3 : index
    %c0_230 = arith.constant 0 : index
    %c0_231 = arith.constant 0 : index
    %244 = vector.load %arg2[%c3_229, %c0_230, %c0_231] : memref<9x2x18xbf16, #tpu.memory_space<vmem>>, vector<1x2x18xbf16>
    %245 = vector.shape_cast %244 : vector<1x2x18xbf16> to vector<2x18xbf16>
    %cst_232 = arith.constant dense<0.000000e+00> : vector<2x128xf32>
    %246 = tpu.matmul %245, %231, %cst_232 {dimension_numbers = #tpu.dot_dimension_numbers<[1], [0], [0], [1], [0, 0, 1, 1], [], []>} : vector<2x18xbf16>, vector<18x128xbf16>, vector<2x128xf32> -> vector<2x128xf32>
    %247 = arith.truncf %246 : vector<2x128xf32> to vector<2x128xbf16>
    %c4_233 = arith.constant 4 : index
    %c0_234 = arith.constant 0 : index
    %c0_235 = arith.constant 0 : index
    %248 = vector.load %arg2[%c4_233, %c0_234, %c0_235] : memref<9x2x18xbf16, #tpu.memory_space<vmem>>, vector<1x2x18xbf16>
    %249 = vector.shape_cast %248 : vector<1x2x18xbf16> to vector<2x18xbf16>
    %cst_236 = arith.constant dense<0.000000e+00> : vector<2x128xf32>
    %250 = tpu.matmul %249, %231, %cst_236 {dimension_numbers = #tpu.dot_dimension_numbers<[1], [0], [0], [1], [0, 0, 1, 1], [], []>} : vector<2x18xbf16>, vector<18x128xbf16>, vector<2x128xf32> -> vector<2x128xf32>
    %251 = arith.truncf %250 : vector<2x128xf32> to vector<2x128xbf16>
    %c5_237 = arith.constant 5 : index
    %c0_238 = arith.constant 0 : index
    %c0_239 = arith.constant 0 : index
    %252 = vector.load %arg2[%c5_237, %c0_238, %c0_239] : memref<9x2x18xbf16, #tpu.memory_space<vmem>>, vector<1x2x18xbf16>
    %253 = vector.shape_cast %252 : vector<1x2x18xbf16> to vector<2x18xbf16>
    %cst_240 = arith.constant dense<0.000000e+00> : vector<2x128xf32>
    %254 = tpu.matmul %253, %231, %cst_240 {dimension_numbers = #tpu.dot_dimension_numbers<[1], [0], [0], [1], [0, 0, 1, 1], [], []>} : vector<2x18xbf16>, vector<18x128xbf16>, vector<2x128xf32> -> vector<2x128xf32>
    %255 = arith.truncf %254 : vector<2x128xf32> to vector<2x128xbf16>
    %c6_241 = arith.constant 6 : index
    %c0_242 = arith.constant 0 : index
    %c0_243 = arith.constant 0 : index
    %256 = vector.load %arg2[%c6_241, %c0_242, %c0_243] : memref<9x2x18xbf16, #tpu.memory_space<vmem>>, vector<1x2x18xbf16>
    %257 = vector.shape_cast %256 : vector<1x2x18xbf16> to vector<2x18xbf16>
    %cst_244 = arith.constant dense<0.000000e+00> : vector<2x128xf32>
    %258 = tpu.matmul %257, %231, %cst_244 {dimension_numbers = #tpu.dot_dimension_numbers<[1], [0], [0], [1], [0, 0, 1, 1], [], []>} : vector<2x18xbf16>, vector<18x128xbf16>, vector<2x128xf32> -> vector<2x128xf32>
    %259 = arith.truncf %258 : vector<2x128xf32> to vector<2x128xbf16>
    %c7_245 = arith.constant 7 : index
    %c0_246 = arith.constant 0 : index
    %c0_247 = arith.constant 0 : index
    %260 = vector.load %arg2[%c7_245, %c0_246, %c0_247] : memref<9x2x18xbf16, #tpu.memory_space<vmem>>, vector<1x2x18xbf16>
    %261 = vector.shape_cast %260 : vector<1x2x18xbf16> to vector<2x18xbf16>
    %cst_248 = arith.constant dense<0.000000e+00> : vector<2x128xf32>
    %262 = tpu.matmul %261, %231, %cst_248 {dimension_numbers = #tpu.dot_dimension_numbers<[1], [0], [0], [1], [0, 0, 1, 1], [], []>} : vector<2x18xbf16>, vector<18x128xbf16>, vector<2x128xf32> -> vector<2x128xf32>
    %263 = arith.truncf %262 : vector<2x128xf32> to vector<2x128xbf16>
    %c8_249 = arith.constant 8 : index
    %c0_250 = arith.constant 0 : index
    %c0_251 = arith.constant 0 : index
    %264 = vector.load %arg2[%c8_249, %c0_250, %c0_251] : memref<9x2x18xbf16, #tpu.memory_space<vmem>>, vector<1x2x18xbf16>
    %265 = vector.shape_cast %264 : vector<1x2x18xbf16> to vector<2x18xbf16>
    %cst_252 = arith.constant dense<0.000000e+00> : vector<2x128xf32>
    %266 = tpu.matmul %265, %231, %cst_252 {dimension_numbers = #tpu.dot_dimension_numbers<[1], [0], [0], [1], [0, 0, 1, 1], [], []>} : vector<2x18xbf16>, vector<18x128xbf16>, vector<2x128xf32> -> vector<2x128xf32>
    %267 = arith.truncf %266 : vector<2x128xf32> to vector<2x128xbf16>
    %268 = tpu.concatenate %235, %239, %243, %247, %251, %255, %259, %263, %267 in 1 : vector<2x128xbf16>, vector<2x128xbf16>, vector<2x128xbf16>, vector<2x128xbf16>, vector<2x128xbf16>, vector<2x128xbf16>, vector<2x128xbf16>, vector<2x128xbf16>, vector<2x128xbf16> -> vector<2x1152xbf16>
    %c0_253 = arith.constant 0 : index
    %c0_254 = arith.constant 0 : index
    %269 = vector.load %arg9[%c0_253, %c0_254] : memref<1152x512xbf16, #tpu.memory_space<vmem>>, vector<1152x512xbf16>
    %cst_255 = arith.constant dense<0.000000e+00> : vector<2x512xf32>
    %270 = tpu.matmul %268, %269, %cst_255 {dimension_numbers = #tpu.dot_dimension_numbers<[1], [0], [0], [1], [0, 0, 1, 1], [], []>} : vector<2x1152xbf16>, vector<1152x512xbf16>, vector<2x512xf32> -> vector<2x512xf32>
    %c0_256 = arith.constant 0 : index
    %c0_257 = arith.constant 0 : index
    %271 = vector.load %arg10[%c0_256, %c0_257] : memref<1x512xf32, #tpu.memory_space<vmem>>, vector<1x512xf32>
    %272 = vector.broadcast %271 : vector<1x512xf32> to vector<2x512xf32>
    %273 = arith.addf %270, %272 : vector<2x512xf32>
    %cst_258 = arith.constant 0.000000e+00 : f32
    %274 = vector.broadcast %cst_258 : f32 to vector<2x512xf32>
    %275 = arith.maximumf %273, %274 : vector<2x512xf32>
    %276 = arith.truncf %275 : vector<2x512xf32> to vector<2x512xbf16>
    %c0_259 = arith.constant 0 : index
    %c0_260 = arith.constant 0 : index
    %277 = vector.load %arg11[%c0_259, %c0_260] : memref<512x128xbf16, #tpu.memory_space<vmem>>, vector<512x128xbf16>
    %cst_261 = arith.constant dense<0.000000e+00> : vector<2x128xf32>
    %278 = tpu.matmul %276, %277, %cst_261 {dimension_numbers = #tpu.dot_dimension_numbers<[1], [0], [0], [1], [0, 0, 1, 1], [], []>} : vector<2x512xbf16>, vector<512x128xbf16>, vector<2x128xf32> -> vector<2x128xf32>
    %c0_262 = arith.constant 0 : index
    %c0_263 = arith.constant 0 : index
    %279 = vector.load %arg12[%c0_262, %c0_263] : memref<1x128xf32, #tpu.memory_space<vmem>>, vector<1x128xf32>
    %280 = vector.broadcast %279 : vector<1x128xf32> to vector<2x128xf32>
    %281 = arith.addf %278, %280 : vector<2x128xf32>
    %cst_264 = arith.constant 0.000000e+00 : f32
    %282 = vector.broadcast %cst_264 : f32 to vector<2x128xf32>
    %283 = arith.maximumf %281, %282 : vector<2x128xf32>
    %284 = arith.truncf %283 : vector<2x128xf32> to vector<2x128xbf16>
    %c0_265 = arith.constant 0 : index
    %c0_266 = arith.constant 0 : index
    %285 = vector.load %arg13[%c0_265, %c0_266] : memref<128x32xbf16, #tpu.memory_space<vmem>>, vector<128x32xbf16>
    %cst_267 = arith.constant dense<0.000000e+00> : vector<2x32xf32>
    %286 = tpu.matmul %284, %285, %cst_267 {dimension_numbers = #tpu.dot_dimension_numbers<[1], [0], [0], [1], [0, 0, 1, 1], [], []>} : vector<2x128xbf16>, vector<128x32xbf16>, vector<2x32xf32> -> vector<2x32xf32>
    %c0_268 = arith.constant 0 : index
    %c0_269 = arith.constant 0 : index
    %287 = vector.load %arg14[%c0_268, %c0_269] : memref<1x32xf32, #tpu.memory_space<vmem>>, vector<1x32xf32>
    %288 = vector.broadcast %287 : vector<1x32xf32> to vector<2x32xf32>
    %289 = arith.addf %286, %288 : vector<2x32xf32>
    %cst_270 = arith.constant 0.000000e+00 : f32
    %290 = vector.broadcast %cst_270 : f32 to vector<2x32xf32>
    %291 = arith.maximumf %289, %290 : vector<2x32xf32>
    %292 = arith.truncf %291 : vector<2x32xf32> to vector<2x32xbf16>
    %c0_271 = arith.constant 0 : index
    %c0_272 = arith.constant 0 : index
    %293 = vector.load %arg15[%c0_271, %c0_272] : memref<32x128xbf16, #tpu.memory_space<vmem>>, vector<32x128xbf16>
    %cst_273 = arith.constant dense<0.000000e+00> : vector<2x128xf32>
    %294 = tpu.matmul %292, %293, %cst_273 {dimension_numbers = #tpu.dot_dimension_numbers<[1], [0], [0], [1], [0, 0, 1, 1], [], []>} : vector<2x32xbf16>, vector<32x128xbf16>, vector<2x128xf32> -> vector<2x128xf32>
    %c0_274 = arith.constant 0 : index
    %c0_275 = arith.constant 0 : index
    %295 = vector.load %arg16[%c0_274, %c0_275] : memref<1x128xf32, #tpu.memory_space<vmem>>, vector<1x128xf32>
    %296 = vector.broadcast %295 : vector<1x128xf32> to vector<2x128xf32>
    %297 = arith.addf %294, %296 : vector<2x128xf32>
    %cst_276 = arith.constant dense<0xFF800000> : vector<2xf32>
    %298 = vector.multi_reduction <maximumf>, %297, %cst_276 [1] : vector<2x128xf32> to vector<2xf32>
    %299 = vector.shape_cast %298 : vector<2xf32> to vector<2x1xf32>
    %300 = vector.broadcast %299 : vector<2x1xf32> to vector<2x128xf32>
    %301 = arith.subf %297, %300 : vector<2x128xf32>
    %302 = math.exp %301 : vector<2x128xf32>
    %cst_277 = arith.constant dense<0.000000e+00> : vector<2xf32>
    %303 = vector.multi_reduction <add>, %302, %cst_277 [1] : vector<2x128xf32> to vector<2xf32>
    %304 = vector.shape_cast %303 : vector<2xf32> to vector<2x1xf32>
    %305 = tpu.reciprocal %304 {approx = true} : vector<2x1xf32> -> vector<2x1xf32>
    %306 = vector.broadcast %305 : vector<2x1xf32> to vector<2x128xf32>
    %307 = arith.mulf %302, %306 : vector<2x128xf32>
    %c0_278 = arith.constant 0 : index
    %c0_279 = arith.constant 0 : index
    %308 = vector.load %arg17[%c0_278, %c0_279] : memref<2x128xf32, #tpu.memory_space<vmem>>, vector<2x128xf32>
    tpu.vector_store %arg17[%c0_278, %c0_279], %307 {strides = array<i32>} : memref<2x128xf32, #tpu.memory_space<vmem>>, vector<2x128xf32>,
    return
  }
}

</mosaic_0001>

<llo_original>
// kernel: convnet_big_forward.1
$region0: #{convnet_big_forward.1}
  #allocation0 [shape = 'u32[]', space=smem, size = 0x4, offset = 0x4, fixed_abs, tag = 'smem constant byte address 0x4 - core index']
  #allocation1 [shape = 'u32[144,128]{1,0:T(1,128)}', space=vmem, size = 0x12000, scoped, tag = 'internal scratch']
  %s0 = inlined_call_operand.vmem [shape: bf16[18,3], index: 0, kind: input, shape index: {}]
  %s1 = inlined_call_operand.hbm [shape: bf16[9,18,18], index: 1, kind: input, shape index: {}]
  %s2 = inlined_call_operand.hbm [shape: bf16[9,2,18], index: 2, kind: input, shape index: {}]
  %s3 = inlined_call_operand.hbm [shape: bf16[9,3,32], index: 3, kind: input, shape index: {}]
  %s4 = inlined_call_operand.hbm [shape: f32[1,32], index: 4, kind: input, shape index: {}]
  %s5 = inlined_call_operand.hbm [shape: bf16[9,32,64], index: 5, kind: input, shape index: {}]
  %s6 = inlined_call_operand.hbm [shape: f32[1,64], index: 6, kind: input, shape index: {}]
  %s7 = inlined_call_operand.hbm [shape: bf16[9,64,128], index: 7, kind: input, shape index: {}]
  %s8 = inlined_call_operand.hbm [shape: f32[1,128], index: 8, kind: input, shape index: {}]
  %s9 = inlined_call_operand.hbm [shape: bf16[1152,512], index: 9, kind: input, shape index: {}]
  %s10 = inlined_call_operand.hbm [shape: f32[1,512], index: 10, kind: input, shape index: {}]
  %s11 = inlined_call_operand.hbm [shape: bf16[512,128], index: 11, kind: input, shape index: {}]
  %s12 = inlined_call_operand.hbm [shape: f32[1,128], index: 12, kind: input, shape index: {}]
  %s13 = inlined_call_operand.vmem [shape: bf16[128,32], index: 13, kind: input, shape index: {}]
  %s14 = inlined_call_operand.hbm [shape: f32[1,32], index: 14, kind: input, shape index: {}]
  %s15 = inlined_call_operand.hbm [shape: bf16[32,128], index: 15, kind: input, shape index: {}]
  %s16 = inlined_call_operand.hbm [shape: f32[1,128], index: 16, kind: input, shape index: {}]
  %s17 = inlined_call_operand.hbm [shape: f32[2,128], index: 17, kind: output, shape index: {}]
  %s18 = sld [smem:[#allocation0]]
  $region138: #{convnet_big_forward.1} parent=0
    _
  %s20 = ssub.s32 1, %s18
  %s21 = scalar_select 0, %s20, %s18
  $region1: #{convnet_big_forward.1} parent=0
    #allocation2 [shape = 'u8[55296]{0}', space=vmem, size = 0xd800, scoped, tag = 'input window, operand 1, single buffered']
    #allocation3 [shape = 's32[1]{0}', space=sflag, size = 0x4, scoped, tag = 'scoped memory for convnet_big_forward.1']
    #allocation4 [shape = 's32[1]{0}', space=sflag, size = 0x4, scoped, tag = 'scoped memory for convnet_big_forward.1']
    #allocation5 [shape = 'u8[4608]{0}', space=vmem, size = 0x1400, scoped, tag = 'input window, operand 2, single buffered']
    #allocation6 [shape = 's32[1]{0}', space=sflag, size = 0x4, scoped, tag = 'scoped memory for convnet_big_forward.1']
    #allocation7 [shape = 'u8[9216]{0}', space=vmem, size = 0x2400, scoped, tag = 'input window, operand 3, single buffered']
    #allocation8 [shape = 'u8[512]{0}', space=vmem, size = 0x400, scoped, tag = 'input window, operand 4, single buffered']
    #allocation9 [shape = 's32[1]{0}', space=sflag, size = 0x4, scoped, tag = 'scoped memory for convnet_big_forward.1']
    #allocation10 [shape = 'u8[73728]{0}', space=vmem, size = 0x12000, scoped, tag = 'input window, operand 5, single buffered']
    #allocation11 [shape = 'u8[512]{0}', space=vmem, size = 0x400, scoped, tag = 'input window, operand 6, single buffered']
    #allocation12 [shape = 's32[1]{0}', space=sflag, size = 0x4, scoped, tag = 'scoped memory for convnet_big_forward.1']
    #allocation13 [shape = 'u8[147456]{0}', space=vmem, size = 0x24000, scoped, tag = 'input window, operand 7, single buffered']
    #allocation14 [shape = 'u8[512]{0}', space=vmem, size = 0x400, scoped, tag = 'input window, operand 8, single buffered']
    #allocation15 [shape = 's32[1]{0}', space=sflag, size = 0x4, scoped, tag = 'scoped memory for convnet_big_forward.1']
    #allocation16 [shape = 'u8[1179648]{0}', space=vmem, size = 0x120000, scoped, tag = 'input window, operand 9, single buffered']
    #allocation17 [shape = 'u8[2048]{0}', space=vmem, size = 0x800, scoped, tag = 'input window, operand 10, single buffered']
    #allocation18 [shape = 's32[1]{0}', space=sflag, size = 0x4, scoped, tag = 'scoped memory for convnet_big_forward.1']
    #allocation19 [shape = 'u8[131072]{0}', space=vmem, size = 0x20000, scoped, tag = 'input window, operand 11, single buffered']
    #allocation20 [shape = 'u8[512]{0}', space=vmem, size = 0x400, scoped, tag = 'input window, operand 12, single buffered']
    #allocation21 [shape = 's32[1]{0}', space=sflag, size = 0x4, scoped, tag = 'scoped memory for convnet_big_forward.1']
    #allocation22 [shape = 'u8[512]{0}', space=vmem, size = 0x400, scoped, tag = 'input window, operand 14, single buffered']
    #allocation23 [shape = 'u8[8192]{0}', space=vmem, size = 0x2000, scoped, tag = 'input window, operand 15, single buffered']
    #allocation24 [shape = 's32[1]{0}', space=sflag, size = 0x4, scoped, tag = 'scoped memory for convnet_big_forward.1']
    #allocation25 [shape = 'u8[512]{0}', space=vmem, size = 0x400, scoped, tag = 'input window, operand 16, single buffered']
    #allocation26 [shape = 'u8[1024]{0}', space=vmem, size = 0x400, scoped, tag = 'output window, operand 0, single buffered']
    %22 = vsyncpa [#allocation3], 0
    %23 = vsyncpa [#allocation6], 0
    %24 = vsyncpa [#allocation9], 0
    %25 = vsyncpa [#allocation12], 0
    %26 = vsyncpa [#allocation15], 0
    %27 = vsyncpa [#allocation18], 0
    %28 = vsyncpa [#allocation21], 0
    %29 = vsyncpa [#allocation24], 0
    %30 = vsyncpa [#allocation4], 0
    // Predicated region
    $region2: #{convnet_big_forward.1} parent=1 // pred_check
      _
    $region3: #{convnet_big_forward.1} parent=1 // pred_check_branch
      %32 = sbr.rel (0) target = $region5
    $region4: #{convnet_big_forward.1} parent=1 // pred_region
      _
    $region5: #{convnet_big_forward.1} parent=1 // pred_fallthru
      _
    // Predicated region
    $region6: #{convnet_big_forward.1} parent=1 // pred_check
      _
    $region7: #{convnet_big_forward.1} parent=1 // pred_check_branch
      %34 = sbr.rel (0) target = $region9
    $region8: #{convnet_big_forward.1} parent=1 // pred_region
      %s36 = ssub.s32 1728, 1728
      %37 = vsyncadd [#allocation3], %s36
      %s38 = sshll.u32 [#allocation2], 4
      %s39 = int_to_ptr.vmem [resolvable:$true] %s38
      %44 = dma.hbm_to_vmem [thread:$0]  %s1, 1728, %s39, [#allocation3], 64, 64, 4
    $region9: #{convnet_big_forward.1} parent=1 // pred_fallthru
      _
    // Predicated region
    $region10: #{convnet_big_forward.1} parent=1 // pred_check
      _
    $region11: #{convnet_big_forward.1} parent=1 // pred_check_branch
      %46 = sbr.rel (0) target = $region13
    $region12: #{convnet_big_forward.1} parent=1 // pred_region
      %s48 = ssub.s32 144, 144
      %49 = vsyncadd [#allocation6], %s48
      %s50 = sshll.u32 [#allocation5], 4
      %s51 = int_to_ptr.vmem [resolvable:$true] %s50
      %56 = dma.hbm_to_vmem [thread:$0]  %s2, 144, %s51, [#allocation6], 16, 16, 1
    $region13: #{convnet_big_forward.1} parent=1 // pred_fallthru
      _
    // Predicated region
    $region14: #{convnet_big_forward.1} parent=1 // pred_check
      _
    $region15: #{convnet_big_forward.1} parent=1 // pred_check_branch
      %58 = sbr.rel (0) target = $region17
    $region16: #{convnet_big_forward.1} parent=1 // pred_region
      %s60 = ssub.s32 288, 288
      %61 = vsyncadd [#allocation6], %s60
      %s62 = sshll.u32 [#allocation7], 4
      %s63 = int_to_ptr.vmem [resolvable:$true] %s62
      %68 = dma.hbm_to_vmem [thread:$0]  %s3, 288, %s63, [#allocation6], 32, 32, 2
    $region17: #{convnet_big_forward.1} parent=1 // pred_fallthru
      _
    // Predicated region
    $region18: #{convnet_big_forward.1} parent=1 // pred_check
      _
    $region19: #{convnet_big_forward.1} parent=1 // pred_check_branch
      %70 = sbr.rel (0) target = $region21
    $region20: #{convnet_big_forward.1} parent=1 // pred_region
      %s72 = ssub.s32 16, 16
      %73 = vsyncadd [#allocation9], %s72
      %s75 = sshll.u32 [#allocation8], 4
      %s76 = int_to_ptr.vmem [resolvable:$true] %s75
      %78 = dma.hbm_to_vmem [thread:$0]  %s4, 16, %s76, [#allocation9]
    $region21: #{convnet_big_forward.1} parent=1 // pred_fallthru
      _
    // Predicated region
    $region22: #{convnet_big_forward.1} parent=1 // pred_check
      _
    $region23: #{convnet_big_forward.1} parent=1 // pred_check_branch
      %80 = sbr.rel (0) target = $region25
    $region24: #{convnet_big_forward.1} parent=1 // pred_region
      %s82 = ssub.s32 2304, 2304
      %83 = vsyncadd [#allocation9], %s82
      %s84 = sshll.u32 [#allocation10], 4
      %s85 = int_to_ptr.vmem [resolvable:$true] %s84
      %90 = dma.hbm_to_vmem [thread:$0]  %s5, 2304, %s85, [#allocation9], 64, 64, 4
    $region25: #{convnet_big_forward.1} parent=1 // pred_fallthru
      _
    // Predicated region
    $region26: #{convnet_big_forward.1} parent=1 // pred_check
      _
    $region27: #{convnet_big_forward.1} parent=1 // pred_check_branch
      %92 = sbr.rel (0) target = $region29
    $region28: #{convnet_big_forward.1} parent=1 // pred_region
      %s94 = ssub.s32 16, 16
      %95 = vsyncadd [#allocation12], %s94
      %s97 = sshll.u32 [#allocation11], 4
      %s98 = int_to_ptr.vmem [resolvable:$true] %s97
      %100 = dma.hbm_to_vmem [thread:$0]  %s6, 16, %s98, [#allocation12]
    $region29: #{convnet_big_forward.1} parent=1 // pred_fallthru
      _
    // Predicated region
    $region30: #{convnet_big_forward.1} parent=1 // pred_check
      _
    $region31: #{convnet_big_forward.1} parent=1 // pred_check_branch
      %102 = sbr.rel (0) target = $region33
    $region32: #{convnet_big_forward.1} parent=1 // pred_region
      %s104 = ssub.s32 4608, 4608
      %105 = vsyncadd [#allocation12], %s104
      %s106 = sshll.u32 [#allocation13], 4
      %s107 = int_to_ptr.vmem [resolvable:$true] %s106
      %112 = dma.hbm_to_vmem [thread:$0]  %s7, 4608, %s107, [#allocation12], 64, 64, 4
    $region33: #{convnet_big_forward.1} parent=1 // pred_fallthru
      _
    // Predicated region
    $region34: #{convnet_big_forward.1} parent=1 // pred_check
      _
    $region35: #{convnet_big_forward.1} parent=1 // pred_check_branch
      %114 = sbr.rel (0) target = $region37
    $region36: #{convnet_big_forward.1} parent=1 // pred_region
      %s116 = ssub.s32 16, 16
      %117 = vsyncadd [#allocation15], %s116
      %s119 = sshll.u32 [#allocation14], 4
      %s120 = int_to_ptr.vmem [resolvable:$true] %s119
      %122 = dma.hbm_to_vmem [thread:$0]  %s8, 16, %s120, [#allocation15]
    $region37: #{convnet_big_forward.1} parent=1 // pred_fallthru
      _
    // Predicated region
    $region38: #{convnet_big_forward.1} parent=1 // pred_check
      _
    $region39: #{convnet_big_forward.1} parent=1 // pred_check_branch
      %124 = sbr.rel (0) target = $region41
    $region40: #{convnet_big_forward.1} parent=1 // pred_region
      %s126 = ssub.s32 36864, 36864
      %127 = vsyncadd [#allocation15], %s126
      %s128 = sshll.u32 [#allocation16], 4
      %s129 = int_to_ptr.vmem [resolvable:$true] %s128
      %134 = dma.hbm_to_vmem [thread:$0]  %s9, 36864, %s129, [#allocation15], 256, 256, 16
    $region41: #{convnet_big_forward.1} parent=1 // pred_fallthru
      _
    // Predicated region
    $region42: #{convnet_big_forward.1} parent=1 // pred_check
      _
    $region43: #{convnet_big_forward.1} parent=1 // pred_check_branch
      %136 = sbr.rel (0) target = $region45
    $region44: #{convnet_big_forward.1} parent=1 // pred_region
      %s138 = ssub.s32 64, 64
      %139 = vsyncadd [#allocation18], %s138
      %s141 = sshll.u32 [#allocation17], 4
      %s142 = int_to_ptr.vmem [resolvable:$true] %s141
      %144 = dma.hbm_to_vmem [thread:$0]  %s10, 64, %s142, [#allocation18]
    $region45: #{convnet_big_forward.1} parent=1 // pred_fallthru
      _
    // Predicated region
    $region46: #{convnet_big_forward.1} parent=1 // pred_check
      _
    $region47: #{convnet_big_forward.1} parent=1 // pred_check_branch
      %146 = sbr.rel (0) target = $region49
    $region48: #{convnet_big_forward.1} parent=1 // pred_region
      %s148 = ssub.s32 4096, 4096
      %149 = vsyncadd [#allocation18], %s148
      %s150 = sshll.u32 [#allocation19], 4
      %s151 = int_to_ptr.vmem [resolvable:$true] %s150
      %156 = dma.hbm_to_vmem [thread:$0]  %s11, 4096, %s151, [#allocation18], 64, 64, 4
    $region49: #{convnet_big_forward.1} parent=1 // pred_fallthru
      _
    // Predicated region
    $region50: #{convnet_big_forward.1} parent=1 // pred_check
      _
    $region51: #{convnet_big_forward.1} parent=1 // pred_check_branch
      %158 = sbr.rel (0) target = $region53
    $region52: #{convnet_big_forward.1} parent=1 // pred_region
      %s160 = ssub.s32 16, 16
      %161 = vsyncadd [#allocation21], %s160
      %s163 = sshll.u32 [#allocation20], 4
      %s164 = int_to_ptr.vmem [resolvable:$true] %s163
      %166 = dma.hbm_to_vmem [thread:$0]  %s12, 16, %s164, [#allocation21]
    $region53: #{convnet_big_forward.1} parent=1 // pred_fallthru
      _
    // Predicated region
    $region54: #{convnet_big_forward.1} parent=1 // pred_check
      _
    $region55: #{convnet_big_forward.1} parent=1 // pred_check_branch
      %168 = sbr.rel (0) target = $region57
    $region56: #{convnet_big_forward.1} parent=1 // pred_region
      _
    $region57: #{convnet_big_forward.1} parent=1 // pred_fallthru
      _
    // Predicated region
    $region58: #{convnet_big_forward.1} parent=1 // pred_check
      _
    $region59: #{convnet_big_forward.1} parent=1 // pred_check_branch
      %170 = sbr.rel (0) target = $region61
    $region60: #{convnet_big_forward.1} parent=1 // pred_region
      %s172 = ssub.s32 16, 16
      %173 = vsyncadd [#allocation21], %s172
      %s175 = sshll.u32 [#allocation22], 4
      %s176 = int_to_ptr.vmem [resolvable:$true] %s175
      %178 = dma.hbm_to_vmem [thread:$0]  %s14, 16, %s176, [#allocation21]
    $region61: #{convnet_big_forward.1} parent=1 // pred_fallthru
      _
    // Predicated region
    $region62: #{convnet_big_forward.1} parent=1 // pred_check
      _
    $region63: #{convnet_big_forward.1} parent=1 // pred_check_branch
      %180 = sbr.rel (0) target = $region65
    $region64: #{convnet_big_forward.1} parent=1 // pred_region
      %s182 = ssub.s32 256, 256
      %183 = vsyncadd [#allocation24], %s182
      %s184 = sshll.u32 [#allocation23], 4
      %s185 = int_to_ptr.vmem [resolvable:$true] %s184
      %190 = dma.hbm_to_vmem [thread:$0]  %s15, 256, %s185, [#allocation24], 64, 64, 4
    $region65: #{convnet_big_forward.1} parent=1 // pred_fallthru
      _
    // Predicated region
    $region66: #{convnet_big_forward.1} parent=1 // pred_check
      _
    $region67: #{convnet_big_forward.1} parent=1 // pred_check_branch
      %192 = sbr.rel (0) target = $region69
    $region68: #{convnet_big_forward.1} parent=1 // pred_region
      %s194 = ssub.s32 16, 16
      %195 = vsyncadd [#allocation24], %s194
      %s197 = sshll.u32 [#allocation25], 4
      %s198 = int_to_ptr.vmem [resolvable:$true] %s197
      %200 = dma.hbm_to_vmem [thread:$0]  %s16, 16, %s198, [#allocation24]
    $region69: #{convnet_big_forward.1} parent=1 // pred_fallthru
      _
    // Predicated region
    $region70: #{convnet_big_forward.1} parent=1 // pred_check
      _
    $region71: #{convnet_big_forward.1} parent=1 // pred_check_branch
      %202 = sbr.rel (0) target = $region73
    $region72: #{convnet_big_forward.1} parent=1 // pred_region
      %203 = dma.done [#allocation3], 1728
    $region73: #{convnet_big_forward.1} parent=1 // pred_fallthru
      _
    // Predicated region
    $region74: #{convnet_big_forward.1} parent=1 // pred_check
      _
    $region75: #{convnet_big_forward.1} parent=1 // pred_check_branch
      %205 = sbr.rel (0) target = $region77
    $region76: #{convnet_big_forward.1} parent=1 // pred_region
      %206 = dma.done [#allocation6], 144
    $region77: #{convnet_big_forward.1} parent=1 // pred_fallthru
      _
    // Predicated region
    $region78: #{convnet_big_forward.1} parent=1 // pred_check
      _
    $region79: #{convnet_big_forward.1} parent=1 // pred_check_branch
      %208 = sbr.rel (0) target = $region81
    $region80: #{convnet_big_forward.1} parent=1 // pred_region
      %209 = dma.done [#allocation6], 288
    $region81: #{convnet_big_forward.1} parent=1 // pred_fallthru
      _
    // Predicated region
    $region82: #{convnet_big_forward.1} parent=1 // pred_check
      _
    $region83: #{convnet_big_forward.1} parent=1 // pred_check_branch
      %211 = sbr.rel (0) target = $region85
    $region84: #{convnet_big_forward.1} parent=1 // pred_region
      %212 = dma.done [#allocation9], 16
    $region85: #{convnet_big_forward.1} parent=1 // pred_fallthru
      _
    // Predicated region
    $region86: #{convnet_big_forward.1} parent=1 // pred_check
      _
    $region87: #{convnet_big_forward.1} parent=1 // pred_check_branch
      %214 = sbr.rel (0) target = $region89
    $region88: #{convnet_big_forward.1} parent=1 // pred_region
      %215 = dma.done [#allocation9], 2304
    $region89: #{convnet_big_forward.1} parent=1 // pred_fallthru
      _
    // Predicated region
    $region90: #{convnet_big_forward.1} parent=1 // pred_check
      _
    $region91: #{convnet_big_forward.1} parent=1 // pred_check_branch
      %217 = sbr.rel (0) target = $region93
    $region92: #{convnet_big_forward.1} parent=1 // pred_region
      %218 = dma.done [#allocation12], 16
    $region93: #{convnet_big_forward.1} parent=1 // pred_fallthru
      _
    // Predicated region
    $region94: #{convnet_big_forward.1} parent=1 // pred_check
      _
    $region95: #{convnet_big_forward.1} parent=1 // pred_check_branch
      %220 = sbr.rel (0) target = $region97
    $region96: #{convnet_big_forward.1} parent=1 // pred_region
      %221 = dma.done [#allocation12], 4608
    $region97: #{convnet_big_forward.1} parent=1 // pred_fallthru
      _
    // Predicated region
    $region98: #{convnet_big_forward.1} parent=1 // pred_check
      _
    $region99: #{convnet_big_forward.1} parent=1 // pred_check_branch
      %223 = sbr.rel (0) target = $region101
    $region100: #{convnet_big_forward.1} parent=1 // pred_region
      %224 = dma.done [#allocation15], 16
    $region101: #{convnet_big_forward.1} parent=1 // pred_fallthru
      _
    // Predicated region
    $region102: #{convnet_big_forward.1} parent=1 // pred_check
      _
    $region103: #{convnet_big_forward.1} parent=1 // pred_check_branch
      %226 = sbr.rel (0) target = $region105
    $region104: #{convnet_big_forward.1} parent=1 // pred_region
      %227 = dma.done [#allocation15], 36864
    $region105: #{convnet_big_forward.1} parent=1 // pred_fallthru
      _
    // Predicated region
    $region106: #{convnet_big_forward.1} parent=1 // pred_check
      _
    $region107: #{convnet_big_forward.1} parent=1 // pred_check_branch
      %229 = sbr.rel (0) target = $region109
    $region108: #{convnet_big_forward.1} parent=1 // pred_region
      %230 = dma.done [#allocation18], 64
    $region109: #{convnet_big_forward.1} parent=1 // pred_fallthru
      _
    // Predicated region
    $region110: #{convnet_big_forward.1} parent=1 // pred_check
      _
    $region111: #{convnet_big_forward.1} parent=1 // pred_check_branch
      %232 = sbr.rel (0) target = $region113
    $region112: #{convnet_big_forward.1} parent=1 // pred_region
      %233 = dma.done [#allocation18], 4096
    $region113: #{convnet_big_forward.1} parent=1 // pred_fallthru
      _
    // Predicated region
    $region114: #{convnet_big_forward.1} parent=1 // pred_check
      _
    $region115: #{convnet_big_forward.1} parent=1 // pred_check_branch
      %235 = sbr.rel (0) target = $region117
    $region116: #{convnet_big_forward.1} parent=1 // pred_region
      %236 = dma.done [#allocation21], 16
    $region117: #{convnet_big_forward.1} parent=1 // pred_fallthru
      _
    // Predicated region
    $region118: #{convnet_big_forward.1} parent=1 // pred_check
      _
    $region119: #{convnet_big_forward.1} parent=1 // pred_check_branch
      %238 = sbr.rel (0) target = $region121
    $region120: #{convnet_big_forward.1} parent=1 // pred_region
      %239 = dma.done [#allocation21], 16
    $region121: #{convnet_big_forward.1} parent=1 // pred_fallthru
      _
    // Predicated region
    $region122: #{convnet_big_forward.1} parent=1 // pred_check
      _
    $region123: #{convnet_big_forward.1} parent=1 // pred_check_branch
      %241 = sbr.rel (0) target = $region125
    $region124: #{convnet_big_forward.1} parent=1 // pred_region
      %242 = dma.done [#allocation24], 256
    $region125: #{convnet_big_forward.1} parent=1 // pred_fallthru
      _
    // Predicated region
    $region126: #{convnet_big_forward.1} parent=1 // pred_check
      _
    $region127: #{convnet_big_forward.1} parent=1 // pred_check_branch
      %244 = sbr.rel (0) target = $region129
    $region128: #{convnet_big_forward.1} parent=1 // pred_region
      %245 = dma.done [#allocation24], 16
    $region129: #{convnet_big_forward.1} parent=1 // pred_fallthru
      _
    %v247 = vld [vmem:[%s0] sm:$0xf]
    %v248 = vld [vmem:[%s0 + $0x4] sm:$0xf]
    %v249 = vld [vmem:[%s0 + $0x8] sm:$0x1]
    %v250 = vld [vmem:[#allocation2] sm:$0xf]
    %v251 = vld [vmem:[#allocation2 + $0x4] sm:$0xf]
    %v252 = vld [vmem:[#allocation2 + $0x8] sm:$0x1]
    %v256 = vunpack.c.l.b16 %v250
    %v257 = vunpack.c.l.b16 %v251
    %v258 = vunpack.c.l.b16 %v252
    %v259 = vpack.c.b16 %v257, %v256
    %v260 = vpack.c.b16 %v258, %v258
    %v264 = vunpack.c.l.b16 %v247
    %v265 = vunpack.c.l.b16 %v248
    %v266 = vunpack.c.l.b16 %v249
    %v267 = vpack.c.b16 %v265, %v264
    %v268 = vpack.c.b16 %v266, %v266
    %vm270 = vcmask 146432
    %v272 = vsel %vm270, %v259, 0
    %v275 = vsel %vm270, %v260, 0
    %vm277 = vcmask 1040384
    %v279 = vsel %vm277, %v268, 0
    %281 = vmatprep.subr.bf16.mxu0 0
    %282 = vmatpush1.bf16.msra.mxu0 %v267
    %283 = vmatprep.subr.bf16.mxu0 0
    %284 = vmatpush1.bf16.msra.mxu0 %v279
    %285 = vmatprep.subr.bf16.mxu0 0
    %286 = vmatpush1.bf16.msra.mxu0 0
    %287 = vmatprep.subr.bf16.mxu0 0
    %288 = vmatpush1.bf16.msra.mxu0 0
    %289 = vmatprep.subr.bf16.mxu0 0
    %290 = vmatpush1.bf16.msra.mxu0 0
    %291 = vmatprep.subr.bf16.mxu0 0
    %292 = vmatpush1.bf16.msra.mxu0 0
    %293 = vmatprep.subr.bf16.mxu0 0
    %294 = vmatpush1.bf16.msra.mxu0 0
    %295 = vmatprep.subr.bf16.mxu0 0
    %296 = vmatpush1.bf16.msra.mxu0 0
    %297 = vmatprep.subr.bf16.mxu0 0
    %298 = vmatpush1.bf16.msra.mxu0 0
    %299 = vmatprep.subr.bf16.mxu0 0
    %300 = vmatpush1.bf16.msra.mxu0 0
    %301 = vmatprep.subr.bf16.mxu0 0
    %302 = vmatpush1.bf16.msra.mxu0 0
    %303 = vmatprep.subr.bf16.mxu0 0
    %304 = vmatpush1.bf16.msra.mxu0 0
    %305 = vmatprep.subr.bf16.mxu0 0
    %306 = vmatpush1.bf16.msra.mxu0 0
    %307 = vmatprep.subr.bf16.mxu0 0
    %308 = vmatpush1.bf16.msra.mxu0 0
    %309 = vmatprep.subr.bf16.mxu0 0
    %310 = vmatpush1.bf16.msra.mxu0 0
    %311 = vmatprep.subr.bf16.mxu0 0
    %312 = vmatpush1.bf16.msra.mxu0 0
    %313 = vmatprep.mubr.bf16.mxu0 0
    %314 = vmatmul.mubr.bf16.gmra.mrb[0].mxu0 %v272
    %v315 = vpop.f32.mrb[0].mxu0
    %v316 = vadd.f32 0.0, %v315
    %v317 = vpop.f32.mrb[0].mxu0
    %v318 = vpop.f32.mrb[0].mxu0
    %v319 = vadd.f32 0.0, %v318
    %v320 = vpop.f32.mrb[0].mxu0
    %321 = vmatprep.mubr.bf16.mxu0 0
    %322 = vmatmul.mubr.bf16.gmra.mrb[0].mxu0 %v275
    %v323 = vpop.f32.mrb[0].mxu0
    %v324 = vadd.f32 0.0, %v323
    %v325 = vpop.f32.mrb[0].mxu0
    %v326 = vpop.f32.mrb[0].mxu0
    %v327 = vpop.f32.mrb[0].mxu0
    %328 = vdwg.mxu0
    %v329 = vpack.c.bf16 %v319, %v316
    %v330 = vpack.c.bf16 %v324, %v324
    %v331 = vld [vmem:[#allocation7] sm:$0x3]
    %s332 = scalar_lea.vmem [#allocation2], 12
    %v333 = vld [vmem:[%s332] sm:$0xf]
    %v334 = vld [vmem:[%s332 + $0x4] sm:$0xf]
    %v335 = vld [vmem:[%s332 + $0x8] sm:$0x1]
    %v339 = vunpack.c.l.b16 %v333
    %v340 = vunpack.c.l.b16 %v334
    %v341 = vunpack.c.l.b16 %v335
    %v342 = vpack.c.b16 %v340, %v339
    %v343 = vpack.c.b16 %v341, %v341
    %v345 = vsel %vm270, %v342, 0
    %v348 = vsel %vm270, %v343, 0
    %350 = vmatprep.subr.bf16.mxu0 0
    %351 = vmatpush1.bf16.msra.mxu0 %v267
    %352 = vmatprep.subr.bf16.mxu0 0
    %353 = vmatpush1.bf16.msra.mxu0 %v279
    %354 = vmatprep.subr.bf16.mxu0 0
    %355 = vmatpush1.bf16.msra.mxu0 0
    %356 = vmatprep.subr.bf16.mxu0 0
    %357 = vmatpush1.bf16.msra.mxu0 0
    %358 = vmatprep.subr.bf16.mxu0 0
    %359 = vmatpush1.bf16.msra.mxu0 0
    %360 = vmatprep.subr.bf16.mxu0 0
    %361 = vmatpush1.bf16.msra.mxu0 0
    %362 = vmatprep.subr.bf16.mxu0 0
    %363 = vmatpush1.bf16.msra.mxu0 0
    %364 = vmatprep.subr.bf16.mxu0 0
    %365 = vmatpush1.bf16.msra.mxu0 0
    %366 = vmatprep.subr.bf16.mxu0 0
    %367 = vmatpush1.bf16.msra.mxu0 0
    %368 = vmatprep.subr.bf16.mxu0 0
    %369 = vmatpush1.bf16.msra.mxu0 0
    %370 = vmatprep.subr.bf16.mxu0 0
    %371 = vmatpush1.bf16.msra.mxu0 0
    %372 = vmatprep.subr.bf16.mxu0 0
    %373 = vmatpush1.bf16.msra.mxu0 0
    %374 = vmatprep.subr.bf16.mxu0 0
    %375 = vmatpush1.bf16.msra.mxu0 0
    %376 = vmatprep.subr.bf16.mxu0 0
    %377 = vmatpush1.bf16.msra.mxu0 0
    %378 = vmatprep.subr.bf16.mxu0 0
    %379 = vmatpush1.bf16.msra.mxu0 0
    %380 = vmatprep.subr.bf16.mxu0 0
    %381 = vmatpush1.bf16.msra.mxu0 0
    %382 = vmatprep.mubr.bf16.mxu0 0
    %383 = vmatmul.mubr.bf16.gmra.mrb[0].mxu0 %v345
    %v384 = vpop.f32.mrb[0].mxu0
    %v385 = vadd.f32 0.0, %v384
    %v386 = vpop.f32.mrb[0].mxu0
    %v387 = vpop.f32.mrb[0].mxu0
    %v388 = vadd.f32 0.0, %v387
    %v389 = vpop.f32.mrb[0].mxu0
    %390 = vmatprep.mubr.bf16.mxu0 0
    %391 = vmatmul.mubr.bf16.gmra.mrb[0].mxu0 %v348
    %v392 = vpop.f32.mrb[0].mxu0
    %v393 = vadd.f32 0.0, %v392
    %v394 = vpop.f32.mrb[0].mxu0
    %v395 = vpop.f32.mrb[0].mxu0
    %v396 = vpop.f32.mrb[0].mxu0
    %397 = vdwg.mxu0
    %v398 = vpack.c.bf16 %v388, %v385
    %v399 = vpack.c.bf16 %v393, %v393
    %s400 = scalar_lea.vmem [#allocation7], 2
    %v401 = vld [vmem:[%s400] sm:$0x3]
    %vm402 = vcmask 23552
    %v404 = vsel %vm402, %v398, 0
    %v407 = vsel %vm402, %v399, 0
    %vm409 = vcmask 1041408
    %v410 = vsel %vm277, 4294967295, 65535
    %v411 = vsel %vm409, %v410, 0
    %v413 = vand.u32 %v401, %v411
    %415 = vmatprep.subr.bf16.mxu0 0
    %416 = vmatpush1.bf16.msra.mxu0 %v413
    %417 = vmatprep.subr.bf16.mxu0 0
    %418 = vmatpush1.bf16.msra.mxu0 0
    %419 = vmatprep.subr.bf16.mxu0 0
    %420 = vmatpush1.bf16.msra.mxu0 0
    %421 = vmatprep.subr.bf16.mxu0 0
    %422 = vmatpush1.bf16.msra.mxu0 0
    %423 = vmatprep.subr.bf16.mxu0 0
    %424 = vmatpush1.bf16.msra.mxu0 0
    %425 = vmatprep.subr.bf16.mxu0 0
    %426 = vmatpush1.bf16.msra.mxu0 0
    %427 = vmatprep.subr.bf16.mxu0 0
    %428 = vmatpush1.bf16.msra.mxu0 0
    %429 = vmatprep.subr.bf16.mxu0 0
    %430 = vmatpush1.bf16.msra.mxu0 0
    %431 = vmatprep.subr.bf16.mxu0 0
    %432 = vmatpush1.bf16.msra.mxu0 0
    %433 = vmatprep.subr.bf16.mxu0 0
    %434 = vmatpush1.bf16.msra.mxu0 0
    %435 = vmatprep.subr.bf16.mxu0 0
    %436 = vmatpush1.bf16.msra.mxu0 0
    %437 = vmatprep.subr.bf16.mxu0 0
    %438 = vmatpush1.bf16.msra.mxu0 0
    %439 = vmatprep.subr.bf16.mxu0 0
    %440 = vmatpush1.bf16.msra.mxu0 0
    %441 = vmatprep.subr.bf16.mxu0 0
    %442 = vmatpush1.bf16.msra.mxu0 0
    %443 = vmatprep.subr.bf16.mxu0 0
    %444 = vmatpush1.bf16.msra.mxu0 0
    %445 = vmatprep.subr.bf16.mxu0 0
    %446 = vmatpush1.bf16.msra.mxu0 0
    %447 = vmatprep.mubr.bf16.mxu0 0
    %448 = vmatmul.mubr.bf16.gmra.mrb[0].mxu0 %v404
    %v449 = vpop.f32.mrb[0].mxu0
    %v450 = vadd.f32 0.0, %v449
    %v451 = vpop.f32.mrb[0].mxu0
    %v452 = vpop.f32.mrb[0].mxu0
    %v453 = vadd.f32 0.0, %v452
    %v454 = vpop.f32.mrb[0].mxu0
    %455 = vmatprep.mubr.bf16.mxu0 0
    %456 = vmatmul.mubr.bf16.gmra.mrb[0].mxu0 %v407
    %v457 = vpop.f32.mrb[0].mxu0
    %v458 = vadd.f32 0.0, %v457
    %v459 = vpop.f32.mrb[0].mxu0
    %v460 = vpop.f32.mrb[0].mxu0
    %v461 = vpop.f32.mrb[0].mxu0
    %462 = vdwg.mxu0
    %v464 = vsel %vm402, %v329, 0
    %v467 = vsel %vm402, %v330, 0
    %v470 = vand.u32 %v331, %v411
    %472 = vmatprep.subr.bf16.mxu0 0
    %473 = vmatpush1.bf16.msra.mxu0 %v470
    %474 = vmatprep.subr.bf16.mxu0 0
    %475 = vmatpush1.bf16.msra.mxu0 0
    %476 = vmatprep.subr.bf16.mxu0 0
    %477 = vmatpush1.bf16.msra.mxu0 0
    %478 = vmatprep.subr.bf16.mxu0 0
    %479 = vmatpush1.bf16.msra.mxu0 0
    %480 = vmatprep.subr.bf16.mxu0 0
    %481 = vmatpush1.bf16.msra.mxu0 0
    %482 = vmatprep.subr.bf16.mxu0 0
    %483 = vmatpush1.bf16.msra.mxu0 0
    %484 = vmatprep.subr.bf16.mxu0 0
    %485 = vmatpush1.bf16.msra.mxu0 0
    %486 = vmatprep.subr.bf16.mxu0 0
    %487 = vmatpush1.bf16.msra.mxu0 0
    %488 = vmatprep.subr.bf16.mxu0 0
    %489 = vmatpush1.bf16.msra.mxu0 0
    %490 = vmatprep.subr.bf16.mxu0 0
    %491 = vmatpush1.bf16.msra.mxu0 0
    %492 = vmatprep.subr.bf16.mxu0 0
    %493 = vmatpush1.bf16.msra.mxu0 0
    %494 = vmatprep.subr.bf16.mxu0 0
    %495 = vmatpush1.bf16.msra.mxu0 0
    %496 = vmatprep.subr.bf16.mxu0 0
    %497 = vmatpush1.bf16.msra.mxu0 0
    %498 = vmatprep.subr.bf16.mxu0 0
    %499 = vmatpush1.bf16.msra.mxu0 0
    %500 = vmatprep.subr.bf16.mxu0 0
    %501 = vmatpush1.bf16.msra.mxu0 0
    %502 = vmatprep.subr.bf16.mxu0 0
    %503 = vmatpush1.bf16.msra.mxu0 0
    %504 = vmatprep.mubr.bf16.mxu0 0
    %505 = vmatmul.mubr.bf16.gmra.mrb[0].mxu0 %v464
    %v506 = vpop.f32.mrb[0].mxu0
    %v507 = vadd.f32 %v450, %v506
    %v508 = vpop.f32.mrb[0].mxu0
    %v509 = vpop.f32.mrb[0].mxu0
    %v510 = vadd.f32 %v453, %v509
    %v511 = vpop.f32.mrb[0].mxu0
    %512 = vmatprep.mubr.bf16.mxu0 0
    %513 = vmatmul.mubr.bf16.gmra.mrb[0].mxu0 %v467
    %v514 = vpop.f32.mrb[0].mxu0
    %v515 = vadd.f32 %v458, %v514
    %v516 = vpop.f32.mrb[0].mxu0
    %v517 = vpop.f32.mrb[0].mxu0
    %v518 = vpop.f32.mrb[0].mxu0
    %519 = vdwg.mxu0
    %s520 = scalar_lea.vmem [#allocation2], 24
    %v521 = vld [vmem:[%s520] sm:$0xf]
    %v522 = vld [vmem:[%s520 + $0x4] sm:$0xf]
    %v523 = vld [vmem:[%s520 + $0x8] sm:$0x1]
    %v527 = vunpack.c.l.b16 %v521
    %v528 = vunpack.c.l.b16 %v522
    %v529 = vunpack.c.l.b16 %v523
    %v530 = vpack.c.b16 %v528, %v527
    %v531 = vpack.c.b16 %v529, %v529
    %v533 = vsel %vm270, %v530, 0
    %v536 = vsel %vm270, %v531, 0
    %538 = vmatprep.subr.bf16.mxu0 0
    %539 = vmatpush1.bf16.msra.mxu0 %v267
    %540 = vmatprep.subr.bf16.mxu0 0
    %541 = vmatpush1.bf16.msra.mxu0 %v279
    %542 = vmatprep.subr.bf16.mxu0 0
    %543 = vmatpush1.bf16.msra.mxu0 0
    %544 = vmatprep.subr.bf16.mxu0 0
    %545 = vmatpush1.bf16.msra.mxu0 0
    %546 = vmatprep.subr.bf16.mxu0 0
    %547 = vmatpush1.bf16.msra.mxu0 0
    %548 = vmatprep.subr.bf16.mxu0 0
    %549 = vmatpush1.bf16.msra.mxu0 0
    %550 = vmatprep.subr.bf16.mxu0 0
    %551 = vmatpush1.bf16.msra.mxu0 0
    %552 = vmatprep.subr.bf16.mxu0 0
    %553 = vmatpush1.bf16.msra.mxu0 0
    %554 = vmatprep.subr.bf16.mxu0 0
    %555 = vmatpush1.bf16.msra.mxu0 0
    %556 = vmatprep.subr.bf16.mxu0 0
    %557 = vmatpush1.bf16.msra.mxu0 0
    %558 = vmatprep.subr.bf16.mxu0 0
    %559 = vmatpush1.bf16.msra.mxu0 0
    %560 = vmatprep.subr.bf16.mxu0 0
    %561 = vmatpush1.bf16.msra.mxu0 0
    %562 = vmatprep.subr.bf16.mxu0 0
    %563 = vmatpush1.bf16.msra.mxu0 0
    %564 = vmatprep.subr.bf16.mxu0 0
    %565 = vmatpush1.bf16.msra.mxu0 0
    %566 = vmatprep.subr.bf16.mxu0 0
    %567 = vmatpush1.bf16.msra.mxu0 0
    %568 = vmatprep.subr.bf16.mxu0 0
    %569 = vmatpush1.bf16.msra.mxu0 0
    %570 = vmatprep.mubr.bf16.mxu0 0
    %571 = vmatmul.mubr.bf16.gmra.mrb[0].mxu0 %v533
    %v572 = vpop.f32.mrb[0].mxu0
    %v573 = vadd.f32 0.0, %v572
    %v574 = vpop.f32.mrb[0].mxu0
    %v575 = vpop.f32.mrb[0].mxu0
    %v576 = vadd.f32 0.0, %v575
    %v577 = vpop.f32.mrb[0].mxu0
    %578 = vmatprep.mubr.bf16.mxu0 0
    %579 = vmatmul.mubr.bf16.gmra.mrb[0].mxu0 %v536
    %v580 = vpop.f32.mrb[0].mxu0
    %v581 = vadd.f32 0.0, %v580
    %v582 = vpop.f32.mrb[0].mxu0
    %v583 = vpop.f32.mrb[0].mxu0
    %v584 = vpop.f32.mrb[0].mxu0
    %585 = vdwg.mxu0
    %v586 = vpack.c.bf16 %v576, %v573
    %v587 = vpack.c.bf16 %v581, %v581
    %s588 = scalar_lea.vmem [#allocation7], 4
    %v589 = vld [vmem:[%s588] sm:$0x3]
    %v591 = vsel %vm402, %v586, 0
    %v594 = vsel %vm402, %v587, 0
    %v597 = vand.u32 %v589, %v411
    %599 = vmatprep.subr.bf16.mxu0 0
    %600 = vmatpush1.bf16.msra.mxu0 %v597
    %601 = vmatprep.subr.bf16.mxu0 0
    %602 = vmatpush1.bf16.msra.mxu0 0
    %603 = vmatprep.subr.bf16.mxu0 0
    %604 = vmatpush1.bf16.msra.mxu0 0
    %605 = vmatprep.subr.bf16.mxu0 0
    %606 = vmatpush1.bf16.msra.mxu0 0
    %607 = vmatprep.subr.bf16.mxu0 0
    %608 = vmatpush1.bf16.msra.mxu0 0
    %609 = vmatprep.subr.bf16.mxu0 0
    %610 = vmatpush1.bf16.msra.mxu0 0
    %611 = vmatprep.subr.bf16.mxu0 0
    %612 = vmatpush1.bf16.msra.mxu0 0
    %613 = vmatprep.subr.bf16.mxu0 0
    %614 = vmatpush1.bf16.msra.mxu0 0
    %615 = vmatprep.subr.bf16.mxu0 0
    %616 = vmatpush1.bf16.msra.mxu0 0
    %617 = vmatprep.subr.bf16.mxu0 0
    %618 = vmatpush1.bf16.msra.mxu0 0
    %619 = vmatprep.subr.bf16.mxu0 0
    %620 = vmatpush1.bf16.msra.mxu0 0
    %621 = vmatprep.subr.bf16.mxu0 0
    %622 = vmatpush1.bf16.msra.mxu0 0
    %623 = vmatprep.subr.bf16.mxu0 0
    %624 = vmatpush1.bf16.msra.mxu0 0
    %625 = vmatprep.subr.bf16.mxu0 0
    %626 = vmatpush1.bf16.msra.mxu0 0
    %627 = vmatprep.subr.bf16.mxu0 0
    %628 = vmatpush1.bf16.msra.mxu0 0
    %629 = vmatprep.subr.bf16.mxu0 0
    %630 = vmatpush1.bf16.msra.mxu0 0
    %631 = vmatprep.mubr.bf16.mxu0 0
    %632 = vmatmul.mubr.bf16.gmra.mrb[0].mxu0 %v591
    %v633 = vpop.f32.mrb[0].mxu0
    %v634 = vadd.f32 0.0, %v633
    %v635 = vpop.f32.mrb[0].mxu0
    %v636 = vpop.f32.mrb[0].mxu0
    %v637 = vadd.f32 0.0, %v636
    %v638 = vpop.f32.mrb[0].mxu0
    %639 = vmatprep.mubr.bf16.mxu0 0
    %640 = vmatmul.mubr.bf16.gmra.mrb[0].mxu0 %v594
    %v641 = vpop.f32.mrb[0].mxu0
    %v642 = vadd.f32 0.0, %v641
    %v643 = vpop.f32.mrb[0].mxu0
    %v644 = vpop.f32.mrb[0].mxu0
    %v645 = vpop.f32.mrb[0].mxu0
    %646 = vdwg.mxu0
    %v647 = vadd.f32 %v507, %v634
    %v648 = vadd.f32 %v510, %v637
    %v649 = vadd.f32 %v515, %v642
    %s650 = scalar_lea.vmem [#allocation2], 36
    %v651 = vld [vmem:[%s650] sm:$0xf]
    %v652 = vld [vmem:[%s650 + $0x4] sm:$0xf]
    %v653 = vld [vmem:[%s650 + $0x8] sm:$0x1]
    %v657 = vunpack.c.l.b16 %v651
    %v658 = vunpack.c.l.b16 %v652
    %v659 = vunpack.c.l.b16 %v653
    %v660 = vpack.c.b16 %v658, %v657
    %v661 = vpack.c.b16 %v659, %v659
    %v663 = vsel %vm270, %v660, 0
    %v666 = vsel %vm270, %v661, 0
    %668 = vmatprep.subr.bf16.mxu0 0
    %669 = vmatpush1.bf16.msra.mxu0 %v267
    %670 = vmatprep.subr.bf16.mxu0 0
    %671 = vmatpush1.bf16.msra.mxu0 %v279
    %672 = vmatprep.subr.bf16.mxu0 0
    %673 = vmatpush1.bf16.msra.mxu0 0
    %674 = vmatprep.subr.bf16.mxu0 0
    %675 = vmatpush1.bf16.msra.mxu0 0
    %676 = vmatprep.subr.bf16.mxu0 0
    %677 = vmatpush1.bf16.msra.mxu0 0
    %678 = vmatprep.subr.bf16.mxu0 0
    %679 = vmatpush1.bf16.msra.mxu0 0
    %680 = vmatprep.subr.bf16.mxu0 0
    %681 = vmatpush1.bf16.msra.mxu0 0
    %682 = vmatprep.subr.bf16.mxu0 0
    %683 = vmatpush1.bf16.msra.mxu0 0
    %684 = vmatprep.subr.bf16.mxu0 0
    %685 = vmatpush1.bf16.msra.mxu0 0
    %686 = vmatprep.subr.bf16.mxu0 0
    %687 = vmatpush1.bf16.msra.mxu0 0
    %688 = vmatprep.subr.bf16.mxu0 0
    %689 = vmatpush1.bf16.msra.mxu0 0
    %690 = vmatprep.subr.bf16.mxu0 0
    %691 = vmatpush1.bf16.msra.mxu0 0
    %692 = vmatprep.subr.bf16.mxu0 0
    %693 = vmatpush1.bf16.msra.mxu0 0
    %694 = vmatprep.subr.bf16.mxu0 0
    %695 = vmatpush1.bf16.msra.mxu0 0
    %696 = vmatprep.subr.bf16.mxu0 0
    %697 = vmatpush1.bf16.msra.mxu0 0
    %698 = vmatprep.subr.bf16.mxu0 0
    %699 = vmatpush1.bf16.msra.mxu0 0
    %700 = vmatprep.mubr.bf16.mxu0 0
    %701 = vmatmul.mubr.bf16.gmra.mrb[0].mxu0 %v663
    %v702 = vpop.f32.mrb[0].mxu0
    %v703 = vadd.f32 0.0, %v702
    %v704 = vpop.f32.mrb[0].mxu0
    %v705 = vpop.f32.mrb[0].mxu0
    %v706 = vadd.f32 0.0, %v705
    %v707 = vpop.f32.mrb[0].mxu0
    %708 = vmatprep.mubr.bf16.mxu0 0
    %709 = vmatmul.mubr.bf16.gmra.mrb[0].mxu0 %v666
    %v710 = vpop.f32.mrb[0].mxu0
    %v711 = vadd.f32 0.0, %v710
    %v712 = vpop.f32.mrb[0].mxu0
    %v713 = vpop.f32.mrb[0].mxu0
    %v714 = vpop.f32.mrb[0].mxu0
    %715 = vdwg.mxu0
    %v716 = vpack.c.bf16 %v706, %v703
    %v717 = vpack.c.bf16 %v711, %v711
    %s718 = scalar_lea.vmem [#allocation7], 6
    %v719 = vld [vmem:[%s718] sm:$0x3]
    %v721 = vsel %vm402, %v716, 0
    %v724 = vsel %vm402, %v717, 0
    %v727 = vand.u32 %v719, %v411
    %729 = vmatprep.subr.bf16.mxu0 0
    %730 = vmatpush1.bf16.msra.mxu0 %v727
    %731 = vmatprep.subr.bf16.mxu0 0
    %732 = vmatpush1.bf16.msra.mxu0 0
    %733 = vmatprep.subr.bf16.mxu0 0
    %734 = vmatpush1.bf16.msra.mxu0 0
    %735 = vmatprep.subr.bf16.mxu0 0
    %736 = vmatpush1.bf16.msra.mxu0 0
    %737 = vmatprep.subr.bf16.mxu0 0
    %738 = vmatpush1.bf16.msra.mxu0 0
    %739 = vmatprep.subr.bf16.mxu0 0
    %740 = vmatpush1.bf16.msra.mxu0 0
    %741 = vmatprep.subr.bf16.mxu0 0
    %742 = vmatpush1.bf16.msra.mxu0 0
    %743 = vmatprep.subr.bf16.mxu0 0
    %744 = vmatpush1.bf16.msra.mxu0 0
    %745 = vmatprep.subr.bf16.mxu0 0
    %746 = vmatpush1.bf16.msra.mxu0 0
    %747 = vmatprep.subr.bf16.mxu0 0
    %748 = vmatpush1.bf16.msra.mxu0 0
    %749 = vmatprep.subr.bf16.mxu0 0
    %750 = vmatpush1.bf16.msra.mxu0 0
    %751 = vmatprep.subr.bf16.mxu0 0
    %752 = vmatpush1.bf16.msra.mxu0 0
    %753 = vmatprep.subr.bf16.mxu0 0
    %754 = vmatpush1.bf16.msra.mxu0 0
    %755 = vmatprep.subr.bf16.mxu0 0
    %756 = vmatpush1.bf16.msra.mxu0 0
    %757 = vmatprep.subr.bf16.mxu0 0
    %758 = vmatpush1.bf16.msra.mxu0 0
    %759 = vmatprep.subr.bf16.mxu0 0
    %760 = vmatpush1.bf16.msra.mxu0 0
    %761 = vmatprep.mubr.bf16.mxu0 0
    %762 = vmatmul.mubr.bf16.gmra.mrb[0].mxu0 %v721
    %v763 = vpop.f32.mrb[0].mxu0
    %v764 = vadd.f32 0.0, %v763
    %v765 = vpop.f32.mrb[0].mxu0
    %v766 = vpop.f32.mrb[0].mxu0
    %v767 = vadd.f32 0.0, %v766
    %v768 = vpop.f32.mrb[0].mxu0
    %769 = vmatprep.mubr.bf16.mxu0 0
    %770 = vmatmul.mubr.bf16.gmra.mrb[0].mxu0 %v724
    %v771 = vpop.f32.mrb[0].mxu0
    %v772 = vadd.f32 0.0, %v771
    %v773 = vpop.f32.mrb[0].mxu0
    %v774 = vpop.f32.mrb[0].mxu0
    %v775 = vpop.f32.mrb[0].mxu0
    %776 = vdwg.mxu0
    %v777 = vadd.f32 %v647, %v764
    %v778 = vadd.f32 %v648, %v767
    %v779 = vadd.f32 %v649, %v772
    %s780 = scalar_lea.vmem [#allocation2], 48
    %v781 = vld [vmem:[%s780] sm:$0xf]
    %v782 = vld [vmem:[%s780 + $0x4] sm:$0xf]
    %v783 = vld [vmem:[%s780 + $0x8] sm:$0x1]
    %v787 = vunpack.c.l.b16 %v781
    %v788 = vunpack.c.l.b16 %v782
    %v789 = vunpack.c.l.b16 %v783
    %v790 = vpack.c.b16 %v788, %v787
    %v791 = vpack.c.b16 %v789, %v789
    %v793 = vsel %vm270, %v790, 0
    %v796 = vsel %vm270, %v791, 0
    %798 = vmatprep.subr.bf16.mxu0 0
    %799 = vmatpush1.bf16.msra.mxu0 %v267
    %800 = vmatprep.subr.bf16.mxu0 0
    %801 = vmatpush1.bf16.msra.mxu0 %v279
    %802 = vmatprep.subr.bf16.mxu0 0
    %803 = vmatpush1.bf16.msra.mxu0 0
    %804 = vmatprep.subr.bf16.mxu0 0
    %805 = vmatpush1.bf16.msra.mxu0 0
    %806 = vmatprep.subr.bf16.mxu0 0
    %807 = vmatpush1.bf16.msra.mxu0 0
    %808 = vmatprep.subr.bf16.mxu0 0
    %809 = vmatpush1.bf16.msra.mxu0 0
    %810 = vmatprep.subr.bf16.mxu0 0
    %811 = vmatpush1.bf16.msra.mxu0 0
    %812 = vmatprep.subr.bf16.mxu0 0
    %813 = vmatpush1.bf16.msra.mxu0 0
    %814 = vmatprep.subr.bf16.mxu0 0
    %815 = vmatpush1.bf16.msra.mxu0 0
    %816 = vmatprep.subr.bf16.mxu0 0
    %817 = vmatpush1.bf16.msra.mxu0 0
    %818 = vmatprep.subr.bf16.mxu0 0
    %819 = vmatpush1.bf16.msra.mxu0 0
    %820 = vmatprep.subr.bf16.mxu0 0
    %821 = vmatpush1.bf16.msra.mxu0 0
    %822 = vmatprep.subr.bf16.mxu0 0
    %823 = vmatpush1.bf16.msra.mxu0 0
    %824 = vmatprep.subr.bf16.mxu0 0
    %825 = vmatpush1.bf16.msra.mxu0 0
    %826 = vmatprep.subr.bf16.mxu0 0
    %827 = vmatpush1.bf16.msra.mxu0 0
    %828 = vmatprep.subr.bf16.mxu0 0
    %829 = vmatpush1.bf16.msra.mxu0 0
    %830 = vmatprep.mubr.bf16.mxu0 0
    %831 = vmatmul.mubr.bf16.gmra.mrb[0].mxu0 %v793
    %v832 = vpop.f32.mrb[0].mxu0
    %v833 = vadd.f32 0.0, %v832
    %v834 = vpop.f32.mrb[0].mxu0
    %v835 = vpop.f32.mrb[0].mxu0
    %v836 = vadd.f32 0.0, %v835
    %v837 = vpop.f32.mrb[0].mxu0
    %838 = vmatprep.mubr.bf16.mxu0 0
    %839 = vmatmul.mubr.bf16.gmra.mrb[0].mxu0 %v796
    %v840 = vpop.f32.mrb[0].mxu0
    %v841 = vadd.f32 0.0, %v840
    %v842 = vpop.f32.mrb[0].mxu0
    %v843 = vpop.f32.mrb[0].mxu0
    %v844 = vpop.f32.mrb[0].mxu0
    %845 = vdwg.mxu0
    %v846 = vpack.c.bf16 %v836, %v833
    %v847 = vpack.c.bf16 %v841, %v841
    %s848 = scalar_lea.vmem [#allocation7], 8
    %v849 = vld [vmem:[%s848] sm:$0x3]
    %v851 = vsel %vm402, %v846, 0
    %v854 = vsel %vm402, %v847, 0
    %v857 = vand.u32 %v849, %v411
    %859 = vmatprep.subr.bf16.mxu0 0
    %860 = vmatpush1.bf16.msra.mxu0 %v857
    %861 = vmatprep.subr.bf16.mxu0 0
    %862 = vmatpush1.bf16.msra.mxu0 0
    %863 = vmatprep.subr.bf16.mxu0 0
    %864 = vmatpush1.bf16.msra.mxu0 0
    %865 = vmatprep.subr.bf16.mxu0 0
    %866 = vmatpush1.bf16.msra.mxu0 0
    %867 = vmatprep.subr.bf16.mxu0 0
    %868 = vmatpush1.bf16.msra.mxu0 0
    %869 = vmatprep.subr.bf16.mxu0 0
    %870 = vmatpush1.bf16.msra.mxu0 0
    %871 = vmatprep.subr.bf16.mxu0 0
    %872 = vmatpush1.bf16.msra.mxu0 0
    %873 = vmatprep.subr.bf16.mxu0 0
    %874 = vmatpush1.bf16.msra.mxu0 0
    %875 = vmatprep.subr.bf16.mxu0 0
    %876 = vmatpush1.bf16.msra.mxu0 0
    %877 = vmatprep.subr.bf16.mxu0 0
    %878 = vmatpush1.bf16.msra.mxu0 0
    %879 = vmatprep.subr.bf16.mxu0 0
    %880 = vmatpush1.bf16.msra.mxu0 0
    %881 = vmatprep.subr.bf16.mxu0 0
    %882 = vmatpush1.bf16.msra.mxu0 0
    %883 = vmatprep.subr.bf16.mxu0 0
    %884 = vmatpush1.bf16.msra.mxu0 0
    %885 = vmatprep.subr.bf16.mxu0 0
    %886 = vmatpush1.bf16.msra.mxu0 0
    %887 = vmatprep.subr.bf16.mxu0 0
    %888 = vmatpush1.bf16.msra.mxu0 0
    %889 = vmatprep.subr.bf16.mxu0 0
    %890 = vmatpush1.bf16.msra.mxu0 0
    %891 = vmatprep.mubr.bf16.mxu0 0
    %892 = vmatmul.mubr.bf16.gmra.mrb[0].mxu0 %v851
    %v893 = vpop.f32.mrb[0].mxu0
    %v894 = vadd.f32 0.0, %v893
    %v895 = vpop.f32.mrb[0].mxu0
    %v896 = vpop.f32.mrb[0].mxu0
    %v897 = vadd.f32 0.0, %v896
    %v898 = vpop.f32.mrb[0].mxu0
    %899 = vmatprep.mubr.bf16.mxu0 0
    %900 = vmatmul.mubr.bf16.gmra.mrb[0].mxu0 %v854
    %v901 = vpop.f32.mrb[0].mxu0
    %v902 = vadd.f32 0.0, %v901
    %v903 = vpop.f32.mrb[0].mxu0
    %v904 = vpop.f32.mrb[0].mxu0
    %v905 = vpop.f32.mrb[0].mxu0
    %906 = vdwg.mxu0
    %v907 = vadd.f32 %v777, %v894
    %v908 = vadd.f32 %v778, %v897
    %v909 = vadd.f32 %v779, %v902
    %s910 = scalar_lea.vmem [#allocation2], 60
    %v911 = vld [vmem:[%s910] sm:$0xf]
    %v912 = vld [vmem:[%s910 + $0x4] sm:$0xf]
    %v913 = vld [vmem:[%s910 + $0x8] sm:$0x1]
    %v917 = vunpack.c.l.b16 %v911
    %v918 = vunpack.c.l.b16 %v912
    %v919 = vunpack.c.l.b16 %v913
    %v920 = vpack.c.b16 %v918, %v917
    %v921 = vpack.c.b16 %v919, %v919
    %v923 = vsel %vm270, %v920, 0
    %v926 = vsel %vm270, %v921, 0
    %928 = vmatprep.subr.bf16.mxu0 0
    %929 = vmatpush1.bf16.msra.mxu0 %v267
    %930 = vmatprep.subr.bf16.mxu0 0
    %931 = vmatpush1.bf16.msra.mxu0 %v279
    %932 = vmatprep.subr.bf16.mxu0 0
    %933 = vmatpush1.bf16.msra.mxu0 0
    %934 = vmatprep.subr.bf16.mxu0 0
    %935 = vmatpush1.bf16.msra.mxu0 0
    %936 = vmatprep.subr.bf16.mxu0 0
    %937 = vmatpush1.bf16.msra.mxu0 0
    %938 = vmatprep.subr.bf16.mxu0 0
    %939 = vmatpush1.bf16.msra.mxu0 0
    %940 = vmatprep.subr.bf16.mxu0 0
    %941 = vmatpush1.bf16.msra.mxu0 0
    %942 = vmatprep.subr.bf16.mxu0 0
    %943 = vmatpush1.bf16.msra.mxu0 0
    %944 = vmatprep.subr.bf16.mxu0 0
    %945 = vmatpush1.bf16.msra.mxu0 0
    %946 = vmatprep.subr.bf16.mxu0 0
    %947 = vmatpush1.bf16.msra.mxu0 0
    %948 = vmatprep.subr.bf16.mxu0 0
    %949 = vmatpush1.bf16.msra.mxu0 0
    %950 = vmatprep.subr.bf16.mxu0 0
    %951 = vmatpush1.bf16.msra.mxu0 0
    %952 = vmatprep.subr.bf16.mxu0 0
    %953 = vmatpush1.bf16.msra.mxu0 0
    %954 = vmatprep.subr.bf16.mxu0 0
    %955 = vmatpush1.bf16.msra.mxu0 0
    %956 = vmatprep.subr.bf16.mxu0 0
    %957 = vmatpush1.bf16.msra.mxu0 0
    %958 = vmatprep.subr.bf16.mxu0 0
    %959 = vmatpush1.bf16.msra.mxu0 0
    %960 = vmatprep.mubr.bf16.mxu0 0
    %961 = vmatmul.mubr.bf16.gmra.mrb[0].mxu0 %v923
    %v962 = vpop.f32.mrb[0].mxu0
    %v963 = vadd.f32 0.0, %v962
    %v964 = vpop.f32.mrb[0].mxu0
    %v965 = vpop.f32.mrb[0].mxu0
    %v966 = vadd.f32 0.0, %v965
    %v967 = vpop.f32.mrb[0].mxu0
    %968 = vmatprep.mubr.bf16.mxu0 0
    %969 = vmatmul.mubr.bf16.gmra.mrb[0].mxu0 %v926
    %v970 = vpop.f32.mrb[0].mxu0
    %v971 = vadd.f32 0.0, %v970
    %v972 = vpop.f32.mrb[0].mxu0
    %v973 = vpop.f32.mrb[0].mxu0
    %v974 = vpop.f32.mrb[0].mxu0
    %975 = vdwg.mxu0
    %v976 = vpack.c.bf16 %v966, %v963
    %v977 = vpack.c.bf16 %v971, %v971
    %s978 = scalar_lea.vmem [#allocation7], 10
    %v979 = vld [vmem:[%s978] sm:$0x3]
    %v981 = vsel %vm402, %v976, 0
    %v984 = vsel %vm402, %v977, 0
    %v987 = vand.u32 %v979, %v411
    %989 = vmatprep.subr.bf16.mxu0 0
    %990 = vmatpush1.bf16.msra.mxu0 %v987
    %991 = vmatprep.subr.bf16.mxu0 0
    %992 = vmatpush1.bf16.msra.mxu0 0
    %993 = vmatprep.subr.bf16.mxu0 0
    %994 = vmatpush1.bf16.msra.mxu0 0
    %995 = vmatprep.subr.bf16.mxu0 0
    %996 = vmatpush1.bf16.msra.mxu0 0
    %997 = vmatprep.subr.bf16.mxu0 0
    %998 = vmatpush1.bf16.msra.mxu0 0
    %999 = vmatprep.subr.bf16.mxu0 0
    %1000 = vmatpush1.bf16.msra.mxu0 0
    %1001 = vmatprep.subr.bf16.mxu0 0
    %1002 = vmatpush1.bf16.msra.mxu0 0
    %1003 = vmatprep.subr.bf16.mxu0 0
    %1004 = vmatpush1.bf16.msra.mxu0 0
    %1005 = vmatprep.subr.bf16.mxu0 0
    %1006 = vmatpush1.bf16.msra.mxu0 0
    %1007 = vmatprep.subr.bf16.mxu0 0
    %1008 = vmatpush1.bf16.msra.mxu0 0
    %1009 = vmatprep.subr.bf16.mxu0 0
    %1010 = vmatpush1.bf16.msra.mxu0 0
    %1011 = vmatprep.subr.bf16.mxu0 0
    %1012 = vmatpush1.bf16.msra.mxu0 0
    %1013 = vmatprep.subr.bf16.mxu0 0
    %1014 = vmatpush1.bf16.msra.mxu0 0
    %1015 = vmatprep.subr.bf16.mxu0 0
    %1016 = vmatpush1.bf16.msra.mxu0 0
    %1017 = vmatprep.subr.bf16.mxu0 0
    %1018 = vmatpush1.bf16.msra.mxu0 0
    %1019 = vmatprep.subr.bf16.mxu0 0
    %1020 = vmatpush1.bf16.msra.mxu0 0
    %1021 = vmatprep.mubr.bf16.mxu0 0
    %1022 = vmatmul.mubr.bf16.gmra.mrb[0].mxu0 %v981
    %v1023 = vpop.f32.mrb[0].mxu0
    %v1024 = vadd.f32 0.0, %v1023
    %v1025 = vpop.f32.mrb[0].mxu0
    %v1026 = vpop.f32.mrb[0].mxu0
    %v1027 = vadd.f32 0.0, %v1026
    %v1028 = vpop.f32.mrb[0].mxu0
    %1029 = vmatprep.mubr.bf16.mxu0 0
    %1030 = vmatmul.mubr.bf16.gmra.mrb[0].mxu0 %v984
    %v1031 = vpop.f32.mrb[0].mxu0
    %v1032 = vadd.f32 0.0, %v1031
    %v1033 = vpop.f32.mrb[0].mxu0
    %v1034 = vpop.f32.mrb[0].mxu0
    %v1035 = vpop.f32.mrb[0].mxu0
    %1036 = vdwg.mxu0
    %v1037 = vadd.f32 %v907, %v1024
    %v1038 = vadd.f32 %v908, %v1027
    %v1039 = vadd.f32 %v909, %v1032
    %s1040 = scalar_lea.vmem [#allocation2], 72
    %v1041 = vld [vmem:[%s1040] sm:$0xf]
    %v1042 = vld [vmem:[%s1040 + $0x4] sm:$0xf]
    %v1043 = vld [vmem:[%s1040 + $0x8] sm:$0x1]
    %v1047 = vunpack.c.l.b16 %v1041
    %v1048 = vunpack.c.l.b16 %v1042
    %v1049 = vunpack.c.l.b16 %v1043
    %v1050 = vpack.c.b16 %v1048, %v1047
    %v1051 = vpack.c.b16 %v1049, %v1049
    %v1053 = vsel %vm270, %v1050, 0
    %v1056 = vsel %vm270, %v1051, 0
    %1058 = vmatprep.subr.bf16.mxu0 0
    %1059 = vmatpush1.bf16.msra.mxu0 %v267
    %1060 = vmatprep.subr.bf16.mxu0 0
    %1061 = vmatpush1.bf16.msra.mxu0 %v279
    %1062 = vmatprep.subr.bf16.mxu0 0
    %1063 = vmatpush1.bf16.msra.mxu0 0
    %1064 = vmatprep.subr.bf16.mxu0 0
    %1065 = vmatpush1.bf16.msra.mxu0 0
    %1066 = vmatprep.subr.bf16.mxu0 0
    %1067 = vmatpush1.bf16.msra.mxu0 0
    %1068 = vmatprep.subr.bf16.mxu0 0
    %1069 = vmatpush1.bf16.msra.mxu0 0
    %1070 = vmatprep.subr.bf16.mxu0 0
    %1071 = vmatpush1.bf16.msra.mxu0 0
    %1072 = vmatprep.subr.bf16.mxu0 0
    %1073 = vmatpush1.bf16.msra.mxu0 0
    %1074 = vmatprep.subr.bf16.mxu0 0
    %1075 = vmatpush1.bf16.msra.mxu0 0
    %1076 = vmatprep.subr.bf16.mxu0 0
    %1077 = vmatpush1.bf16.msra.mxu0 0
    %1078 = vmatprep.subr.bf16.mxu0 0
    %1079 = vmatpush1.bf16.msra.mxu0 0
    %1080 = vmatprep.subr.bf16.mxu0 0
    %1081 = vmatpush1.bf16.msra.mxu0 0
    %1082 = vmatprep.subr.bf16.mxu0 0
    %1083 = vmatpush1.bf16.msra.mxu0 0
    %1084 = vmatprep.subr.bf16.mxu0 0
    %1085 = vmatpush1.bf16.msra.mxu0 0
    %1086 = vmatprep.subr.bf16.mxu0 0
    %1087 = vmatpush1.bf16.msra.mxu0 0
    %1088 = vmatprep.subr.bf16.mxu0 0
    %1089 = vmatpush1.bf16.msra.mxu0 0
    %1090 = vmatprep.mubr.bf16.mxu0 0
    %1091 = vmatmul.mubr.bf16.gmra.mrb[0].mxu0 %v1053
    %v1092 = vpop.f32.mrb[0].mxu0
    %v1093 = vadd.f32 0.0, %v1092
    %v1094 = vpop.f32.mrb[0].mxu0
    %v1095 = vpop.f32.mrb[0].mxu0
    %v1096 = vadd.f32 0.0, %v1095
    %v1097 = vpop.f32.mrb[0].mxu0
    %1098 = vmatprep.mubr.bf16.mxu0 0
    %1099 = vmatmul.mubr.bf16.gmra.mrb[0].mxu0 %v1056
    %v1100 = vpop.f32.mrb[0].mxu0
    %v1101 = vadd.f32 0.0, %v1100
    %v1102 = vpop.f32.mrb[0].mxu0
    %v1103 = vpop.f32.mrb[0].mxu0
    %v1104 = vpop.f32.mrb[0].mxu0
    %1105 = vdwg.mxu0
    %v1106 = vpack.c.bf16 %v1096, %v1093
    %v1107 = vpack.c.bf16 %v1101, %v1101
    %s1108 = scalar_lea.vmem [#allocation7], 12
    %v1109 = vld [vmem:[%s1108] sm:$0x3]
    %v1111 = vsel %vm402, %v1106, 0
    %v1114 = vsel %vm402, %v1107, 0
    %v1117 = vand.u32 %v1109, %v411
    %1119 = vmatprep.subr.bf16.mxu0 0
    %1120 = vmatpush1.bf16.msra.mxu0 %v1117
    %1121 = vmatprep.subr.bf16.mxu0 0
    %1122 = vmatpush1.bf16.msra.mxu0 0
    %1123 = vmatprep.subr.bf16.mxu0 0
    %1124 = vmatpush1.bf16.msra.mxu0 0
    %1125 = vmatprep.subr.bf16.mxu0 0
    %1126 = vmatpush1.bf16.msra.mxu0 0
    %1127 = vmatprep.subr.bf16.mxu0 0
    %1128 = vmatpush1.bf16.msra.mxu0 0
    %1129 = vmatprep.subr.bf16.mxu0 0
    %1130 = vmatpush1.bf16.msra.mxu0 0
    %1131 = vmatprep.subr.bf16.mxu0 0
    %1132 = vmatpush1.bf16.msra.mxu0 0
    %1133 = vmatprep.subr.bf16.mxu0 0
    %1134 = vmatpush1.bf16.msra.mxu0 0
    %1135 = vmatprep.subr.bf16.mxu0 0
    %1136 = vmatpush1.bf16.msra.mxu0 0
    %1137 = vmatprep.subr.bf16.mxu0 0
    %1138 = vmatpush1.bf16.msra.mxu0 0
    %1139 = vmatprep.subr.bf16.mxu0 0
    %1140 = vmatpush1.bf16.msra.mxu0 0
    %1141 = vmatprep.subr.bf16.mxu0 0
    %1142 = vmatpush1.bf16.msra.mxu0 0
    %1143 = vmatprep.subr.bf16.mxu0 0
    %1144 = vmatpush1.bf16.msra.mxu0 0
    %1145 = vmatprep.subr.bf16.mxu0 0
    %1146 = vmatpush1.bf16.msra.mxu0 0
    %1147 = vmatprep.subr.bf16.mxu0 0
    %1148 = vmatpush1.bf16.msra.mxu0 0
    %1149 = vmatprep.subr.bf16.mxu0 0
    %1150 = vmatpush1.bf16.msra.mxu0 0
    %1151 = vmatprep.mubr.bf16.mxu0 0
    %1152 = vmatmul.mubr.bf16.gmra.mrb[0].mxu0 %v1111
    %v1153 = vpop.f32.mrb[0].mxu0
    %v1154 = vadd.f32 0.0, %v1153
    %v1155 = vpop.f32.mrb[0].mxu0
    %v1156 = vpop.f32.mrb[0].mxu0
    %v1157 = vadd.f32 0.0, %v1156
    %v1158 = vpop.f32.mrb[0].mxu0
    %1159 = vmatprep.mubr.bf16.mxu0 0
    %1160 = vmatmul.mubr.bf16.gmra.mrb[0].mxu0 %v1114
    %v1161 = vpop.f32.mrb[0].mxu0
    %v1162 = vadd.f32 0.0, %v1161
    %v1163 = vpop.f32.mrb[0].mxu0
    %v1164 = vpop.f32.mrb[0].mxu0
    %v1165 = vpop.f32.mrb[0].mxu0
    %1166 = vdwg.mxu0
    %v1167 = vadd.f32 %v1037, %v1154
    %v1168 = vadd.f32 %v1038, %v1157
    %v1169 = vadd.f32 %v1039, %v1162
    %s1170 = scalar_lea.vmem [#allocation2], 84
    %v1171 = vld [vmem:[%s1170] sm:$0xf]
    %v1172 = vld [vmem:[%s1170 + $0x4] sm:$0xf]
    %v1173 = vld [vmem:[%s1170 + $0x8] sm:$0x1]
    %v1177 = vunpack.c.l.b16 %v1171
    %v1178 = vunpack.c.l.b16 %v1172
    %v1179 = vunpack.c.l.b16 %v1173
    %v1180 = vpack.c.b16 %v1178, %v1177
    %v1181 = vpack.c.b16 %v1179, %v1179
    %v1183 = vsel %vm270, %v1180, 0
    %v1186 = vsel %vm270, %v1181, 0
    %1188 = vmatprep.subr.bf16.mxu0 0
    %1189 = vmatpush1.bf16.msra.mxu0 %v267
    %1190 = vmatprep.subr.bf16.mxu0 0
    %1191 = vmatpush1.bf16.msra.mxu0 %v279
    %1192 = vmatprep.subr.bf16.mxu0 0
    %1193 = vmatpush1.bf16.msra.mxu0 0
    %1194 = vmatprep.subr.bf16.mxu0 0
    %1195 = vmatpush1.bf16.msra.mxu0 0
    %1196 = vmatprep.subr.bf16.mxu0 0
    %1197 = vmatpush1.bf16.msra.mxu0 0
    %1198 = vmatprep.subr.bf16.mxu0 0
    %1199 = vmatpush1.bf16.msra.mxu0 0
    %1200 = vmatprep.subr.bf16.mxu0 0
    %1201 = vmatpush1.bf16.msra.mxu0 0
    %1202 = vmatprep.subr.bf16.mxu0 0
    %1203 = vmatpush1.bf16.msra.mxu0 0
    %1204 = vmatprep.subr.bf16.mxu0 0
    %1205 = vmatpush1.bf16.msra.mxu0 0
    %1206 = vmatprep.subr.bf16.mxu0 0
    %1207 = vmatpush1.bf16.msra.mxu0 0
    %1208 = vmatprep.subr.bf16.mxu0 0
    %1209 = vmatpush1.bf16.msra.mxu0 0
    %1210 = vmatprep.subr.bf16.mxu0 0
    %1211 = vmatpush1.bf16.msra.mxu0 0
    %1212 = vmatprep.subr.bf16.mxu0 0
    %1213 = vmatpush1.bf16.msra.mxu0 0
    %1214 = vmatprep.subr.bf16.mxu0 0
    %1215 = vmatpush1.bf16.msra.mxu0 0
    %1216 = vmatprep.subr.bf16.mxu0 0
    %1217 = vmatpush1.bf16.msra.mxu0 0
    %1218 = vmatprep.subr.bf16.mxu0 0
    %1219 = vmatpush1.bf16.msra.mxu0 0
    %1220 = vmatprep.mubr.bf16.mxu0 0
    %1221 = vmatmul.mubr.bf16.gmra.mrb[0].mxu0 %v1183
    %v1222 = vpop.f32.mrb[0].mxu0
    %v1223 = vadd.f32 0.0, %v1222
    %v1224 = vpop.f32.mrb[0].mxu0
    %v1225 = vpop.f32.mrb[0].mxu0
    %v1226 = vadd.f32 0.0, %v1225
    %v1227 = vpop.f32.mrb[0].mxu0
    %1228 = vmatprep.mubr.bf16.mxu0 0
    %1229 = vmatmul.mubr.bf16.gmra.mrb[0].mxu0 %v1186
    %v1230 = vpop.f32.mrb[0].mxu0
    %v1231 = vadd.f32 0.0, %v1230
    %v1232 = vpop.f32.mrb[0].mxu0
    %v1233 = vpop.f32.mrb[0].mxu0
    %v1234 = vpop.f32.mrb[0].mxu0
    %1235 = vdwg.mxu0
    %v1236 = vpack.c.bf16 %v1226, %v1223
    %v1237 = vpack.c.bf16 %v1231, %v1231
    %s1238 = scalar_lea.vmem [#allocation7], 14
    %v1239 = vld [vmem:[%s1238] sm:$0x3]
    %v1241 = vsel %vm402, %v1236, 0
    %v1244 = vsel %vm402, %v1237, 0
    %v1247 = vand.u32 %v1239, %v411
    %1249 = vmatprep.subr.bf16.mxu0 0
    %1250 = vmatpush1.bf16.msra.mxu0 %v1247
    %1251 = vmatprep.subr.bf16.mxu0 0
    %1252 = vmatpush1.bf16.msra.mxu0 0
    %1253 = vmatprep.subr.bf16.mxu0 0
    %1254 = vmatpush1.bf16.msra.mxu0 0
    %1255 = vmatprep.subr.bf16.mxu0 0
    %1256 = vmatpush1.bf16.msra.mxu0 0
    %1257 = vmatprep.subr.bf16.mxu0 0
    %1258 = vmatpush1.bf16.msra.mxu0 0
    %1259 = vmatprep.subr.bf16.mxu0 0
    %1260 = vmatpush1.bf16.msra.mxu0 0
    %1261 = vmatprep.subr.bf16.mxu0 0
    %1262 = vmatpush1.bf16.msra.mxu0 0
    %1263 = vmatprep.subr.bf16.mxu0 0
    %1264 = vmatpush1.bf16.msra.mxu0 0
    %1265 = vmatprep.subr.bf16.mxu0 0
    %1266 = vmatpush1.bf16.msra.mxu0 0
    %1267 = vmatprep.subr.bf16.mxu0 0
    %1268 = vmatpush1.bf16.msra.mxu0 0
    %1269 = vmatprep.subr.bf16.mxu0 0
    %1270 = vmatpush1.bf16.msra.mxu0 0
    %1271 = vmatprep.subr.bf16.mxu0 0
    %1272 = vmatpush1.bf16.msra.mxu0 0
    %1273 = vmatprep.subr.bf16.mxu0 0
    %1274 = vmatpush1.bf16.msra.mxu0 0
    %1275 = vmatprep.subr.bf16.mxu0 0
    %1276 = vmatpush1.bf16.msra.mxu0 0
    %1277 = vmatprep.subr.bf16.mxu0 0
    %1278 = vmatpush1.bf16.msra.mxu0 0
    %1279 = vmatprep.subr.bf16.mxu0 0
    %1280 = vmatpush1.bf16.msra.mxu0 0
    %1281 = vmatprep.mubr.bf16.mxu0 0
    %1282 = vmatmul.mubr.bf16.gmra.mrb[0].mxu0 %v1241
    %v1283 = vpop.f32.mrb[0].mxu0
    %v1284 = vadd.f32 0.0, %v1283
    %v1285 = vpop.f32.mrb[0].mxu0
    %v1286 = vpop.f32.mrb[0].mxu0
    %v1287 = vadd.f32 0.0, %v1286
    %v1288 = vpop.f32.mrb[0].mxu0
    %1289 = vmatprep.mubr.bf16.mxu0 0
    %1290 = vmatmul.mubr.bf16.gmra.mrb[0].mxu0 %v1244
    %v1291 = vpop.f32.mrb[0].mxu0
    %v1292 = vadd.f32 0.0, %v1291
    %v1293 = vpop.f32.mrb[0].mxu0
    %v1294 = vpop.f32.mrb[0].mxu0
    %v1295 = vpop.f32.mrb[0].mxu0
    %1296 = vdwg.mxu0
    %v1297 = vadd.f32 %v1167, %v1284
    %v1298 = vadd.f32 %v1168, %v1287
    %v1299 = vadd.f32 %v1169, %v1292
    %s1300 = scalar_lea.vmem [#allocation2], 96
    %v1301 = vld [vmem:[%s1300] sm:$0xf]
    %v1302 = vld [vmem:[%s1300 + $0x4] sm:$0xf]
    %v1303 = vld [vmem:[%s1300 + $0x8] sm:$0x1]
    %v1307 = vunpack.c.l.b16 %v1301
    %v1308 = vunpack.c.l.b16 %v1302
    %v1309 = vunpack.c.l.b16 %v1303
    %v1310 = vpack.c.b16 %v1308, %v1307
    %v1311 = vpack.c.b16 %v1309, %v1309
    %v1313 = vsel %vm270, %v1310, 0
    %v1316 = vsel %vm270, %v1311, 0
    %1318 = vmatprep.subr.bf16.mxu0 0
    %1319 = vmatpush1.bf16.msra.mxu0 %v267
    %1320 = vmatprep.subr.bf16.mxu0 0
    %1321 = vmatpush1.bf16.msra.mxu0 %v279
    %1322 = vmatprep.subr.bf16.mxu0 0
    %1323 = vmatpush1.bf16.msra.mxu0 0
    %1324 = vmatprep.subr.bf16.mxu0 0
    %1325 = vmatpush1.bf16.msra.mxu0 0
    %1326 = vmatprep.subr.bf16.mxu0 0
    %1327 = vmatpush1.bf16.msra.mxu0 0
    %1328 = vmatprep.subr.bf16.mxu0 0
    %1329 = vmatpush1.bf16.msra.mxu0 0
    %1330 = vmatprep.subr.bf16.mxu0 0
    %1331 = vmatpush1.bf16.msra.mxu0 0
    %1332 = vmatprep.subr.bf16.mxu0 0
    %1333 = vmatpush1.bf16.msra.mxu0 0
    %1334 = vmatprep.subr.bf16.mxu0 0
    %1335 = vmatpush1.bf16.msra.mxu0 0
    %1336 = vmatprep.subr.bf16.mxu0 0
    %1337 = vmatpush1.bf16.msra.mxu0 0
    %1338 = vmatprep.subr.bf16.mxu0 0
    %1339 = vmatpush1.bf16.msra.mxu0 0
    %1340 = vmatprep.subr.bf16.mxu0 0
    %1341 = vmatpush1.bf16.msra.mxu0 0
    %1342 = vmatprep.subr.bf16.mxu0 0
    %1343 = vmatpush1.bf16.msra.mxu0 0
    %1344 = vmatprep.subr.bf16.mxu0 0
    %1345 = vmatpush1.bf16.msra.mxu0 0
    %1346 = vmatprep.subr.bf16.mxu0 0
    %1347 = vmatpush1.bf16.msra.mxu0 0
    %1348 = vmatprep.subr.bf16.mxu0 0
    %1349 = vmatpush1.bf16.msra.mxu0 0
    %1350 = vmatprep.mubr.bf16.mxu0 0
    %1351 = vmatmul.mubr.bf16.gmra.mrb[0].mxu0 %v1313
    %v1352 = vpop.f32.mrb[0].mxu0
    %v1353 = vadd.f32 0.0, %v1352
    %v1354 = vpop.f32.mrb[0].mxu0
    %v1355 = vpop.f32.mrb[0].mxu0
    %v1356 = vadd.f32 0.0, %v1355
    %v1357 = vpop.f32.mrb[0].mxu0
    %1358 = vmatprep.mubr.bf16.mxu0 0
    %1359 = vmatmul.mubr.bf16.gmra.mrb[0].mxu0 %v1316
    %v1360 = vpop.f32.mrb[0].mxu0
    %v1361 = vadd.f32 0.0, %v1360
    %v1362 = vpop.f32.mrb[0].mxu0
    %v1363 = vpop.f32.mrb[0].mxu0
    %v1364 = vpop.f32.mrb[0].mxu0
    %1365 = vdwg.mxu0
    %v1366 = vpack.c.bf16 %v1356, %v1353
    %v1367 = vpack.c.bf16 %v1361, %v1361
    %s1368 = scalar_lea.vmem [#allocation7], 16
    %v1369 = vld [vmem:[%s1368] sm:$0x3]
    %v1371 = vsel %vm402, %v1366, 0
    %v1374 = vsel %vm402, %v1367, 0
    %v1377 = vand.u32 %v1369, %v411
    %1379 = vmatprep.subr.bf16.mxu0 0
    %1380 = vmatpush1.bf16.msra.mxu0 %v1377
    %1381 = vmatprep.subr.bf16.mxu0 0
    %1382 = vmatpush1.bf16.msra.mxu0 0
    %1383 = vmatprep.subr.bf16.mxu0 0
    %1384 = vmatpush1.bf16.msra.mxu0 0
    %1385 = vmatprep.subr.bf16.mxu0 0
    %1386 = vmatpush1.bf16.msra.mxu0 0
    %1387 = vmatprep.subr.bf16.mxu0 0
    %1388 = vmatpush1.bf16.msra.mxu0 0
    %1389 = vmatprep.subr.bf16.mxu0 0
    %1390 = vmatpush1.bf16.msra.mxu0 0
    %1391 = vmatprep.subr.bf16.mxu0 0
    %1392 = vmatpush1.bf16.msra.mxu0 0
    %1393 = vmatprep.subr.bf16.mxu0 0
    %1394 = vmatpush1.bf16.msra.mxu0 0
    %1395 = vmatprep.subr.bf16.mxu0 0
    %1396 = vmatpush1.bf16.msra.mxu0 0
    %1397 = vmatprep.subr.bf16.mxu0 0
    %1398 = vmatpush1.bf16.msra.mxu0 0
    %1399 = vmatprep.subr.bf16.mxu0 0
    %1400 = vmatpush1.bf16.msra.mxu0 0
    %1401 = vmatprep.subr.bf16.mxu0 0
    %1402 = vmatpush1.bf16.msra.mxu0 0
    %1403 = vmatprep.subr.bf16.mxu0 0
    %1404 = vmatpush1.bf16.msra.mxu0 0
    %1405 = vmatprep.subr.bf16.mxu0 0
    %1406 = vmatpush1.bf16.msra.mxu0 0
    %1407 = vmatprep.subr.bf16.mxu0 0
    %1408 = vmatpush1.bf16.msra.mxu0 0
    %1409 = vmatprep.subr.bf16.mxu0 0
    %1410 = vmatpush1.bf16.msra.mxu0 0
    %1411 = vmatprep.mubr.bf16.mxu0 0
    %1412 = vmatmul.mubr.bf16.gmra.mrb[0].mxu0 %v1371
    %v1413 = vpop.f32.mrb[0].mxu0
    %v1414 = vadd.f32 0.0, %v1413
    %v1415 = vpop.f32.mrb[0].mxu0
    %v1416 = vpop.f32.mrb[0].mxu0
    %v1417 = vadd.f32 0.0, %v1416
    %v1418 = vpop.f32.mrb[0].mxu0
    %1419 = vmatprep.mubr.bf16.mxu0 0
    %1420 = vmatmul.mubr.bf16.gmra.mrb[0].mxu0 %v1374
    %v1421 = vpop.f32.mrb[0].mxu0
    %v1422 = vadd.f32 0.0, %v1421
    %v1423 = vpop.f32.mrb[0].mxu0
    %v1424 = vpop.f32.mrb[0].mxu0
    %v1425 = vpop.f32.mrb[0].mxu0
    %1426 = vdwg.mxu0
    %v1427 = vadd.f32 %v1297, %v1414
    %v1428 = vadd.f32 %v1298, %v1417
    %v1429 = vadd.f32 %v1299, %v1422
    %v1430 = vld [vmem:[#allocation8] sm:$0x1]
    %v1432 = vlaneseq
    %v1433 = vshrl.u32 %v1432, 7
    %v1434 = vsub.s32 0, %v1433
    %v1435 = vrot.slane %v1430, %v1434
    %v1437 = vadd.f32 %v1427, %v1435
    %v1438 = vadd.f32 %v1428, %v1435
    %v1439 = vadd.f32 %v1429, %v1435
    %v1440 = vmax.f32 %v1437, 0.0
    %v1441 = vmax.f32 %v1438, 0.0
    %v1442 = vmax.f32 %v1439, 0.0
    %v1443 = vpack.c.bf16 %v1441, %v1440
    %v1444 = vpack.c.bf16 %v1442, %v1442
    %v1446 = vsel %vm277, %v1444, 0
    %1448 = vmatprep.subr.bf16.mxu0 0
    %1449 = vmatpush1.bf16.msra.mxu0 %v1443
    %1450 = vmatprep.subr.bf16.mxu0 0
    %1451 = vmatpush1.bf16.msra.mxu0 %v1446
    %1452 = vmatprep.subr.bf16.mxu0 0
    %1453 = vmatpush1.bf16.msra.mxu0 0
    %1454 = vmatprep.subr.bf16.mxu0 0
    %1455 = vmatpush1.bf16.msra.mxu0 0
    %1456 = vmatprep.subr.bf16.mxu0 0
    %1457 = vmatpush1.bf16.msra.mxu0 0
    %1458 = vmatprep.subr.bf16.mxu0 0
    %1459 = vmatpush1.bf16.msra.mxu0 0
    %1460 = vmatprep.subr.bf16.mxu0 0
    %1461 = vmatpush1.bf16.msra.mxu0 0
    %1462 = vmatprep.subr.bf16.mxu0 0
    %1463 = vmatpush1.bf16.msra.mxu0 0
    %1464 = vmatprep.subr.bf16.mxu0 0
    %1465 = vmatpush1.bf16.msra.mxu0 0
    %1466 = vmatprep.subr.bf16.mxu0 0
    %1467 = vmatpush1.bf16.msra.mxu0 0
    %1468 = vmatprep.subr.bf16.mxu0 0
    %1469 = vmatpush1.bf16.msra.mxu0 0
    %1470 = vmatprep.subr.bf16.mxu0 0
    %1471 = vmatpush1.bf16.msra.mxu0 0
    %1472 = vmatprep.subr.bf16.mxu0 0
    %1473 = vmatpush1.bf16.msra.mxu0 0
    %1474 = vmatprep.subr.bf16.mxu0 0
    %1475 = vmatpush1.bf16.msra.mxu0 0
    %1476 = vmatprep.subr.bf16.mxu0 0
    %1477 = vmatpush1.bf16.msra.mxu0 0
    %1478 = vmatprep.subr.bf16.mxu0 0
    %1479 = vmatpush1.bf16.msra.mxu0 0
    %1480 = vmatprep.mubr.bf16.mxu0 0
    %1481 = vmatmul.mubr.bf16.gmra.mrb[0].mxu0 %v272
    %v1482 = vpop.f32.mrb[0].mxu0
    %v1483 = vadd.f32 0.0, %v1482
    %v1484 = vpop.f32.mrb[0].mxu0
    %v1485 = vpop.f32.mrb[0].mxu0
    %v1486 = vadd.f32 0.0, %v1485
    %v1487 = vpop.f32.mrb[0].mxu0
    %1488 = vmatprep.mubr.bf16.mxu0 0
    %1489 = vmatmul.mubr.bf16.gmra.mrb[0].mxu0 %v275
    %v1490 = vpop.f32.mrb[0].mxu0
    %v1491 = vadd.f32 0.0, %v1490
    %v1492 = vpop.f32.mrb[0].mxu0
    %v1493 = vpop.f32.mrb[0].mxu0
    %v1494 = vpop.f32.mrb[0].mxu0
    %1495 = vdwg.mxu0
    %v1496 = vpack.c.bf16 %v1486, %v1483
    %v1497 = vpack.c.bf16 %v1491, %v1491
    %v1498 = vld [vmem:[#allocation10] sm:$0xf]
    %v1499 = vld [vmem:[#allocation10 + $0x4] sm:$0xf]
    %v1500 = vld [vmem:[#allocation10 + $0x8] sm:$0xf]
    %v1501 = vld [vmem:[#allocation10 + $0xc] sm:$0xf]
    %1502 = vmatprep.subr.bf16.mxu0 0
    %1503 = vmatpush1.bf16.msra.mxu0 %v1443
    %1504 = vmatprep.subr.bf16.mxu0 0
    %1505 = vmatpush1.bf16.msra.mxu0 %v1446
    %1506 = vmatprep.subr.bf16.mxu0 0
    %1507 = vmatpush1.bf16.msra.mxu0 0
    %1508 = vmatprep.subr.bf16.mxu0 0
    %1509 = vmatpush1.bf16.msra.mxu0 0
    %1510 = vmatprep.subr.bf16.mxu0 0
    %1511 = vmatpush1.bf16.msra.mxu0 0
    %1512 = vmatprep.subr.bf16.mxu0 0
    %1513 = vmatpush1.bf16.msra.mxu0 0
    %1514 = vmatprep.subr.bf16.mxu0 0
    %1515 = vmatpush1.bf16.msra.mxu0 0
    %1516 = vmatprep.subr.bf16.mxu0 0
    %1517 = vmatpush1.bf16.msra.mxu0 0
    %1518 = vmatprep.subr.bf16.mxu0 0
    %1519 = vmatpush1.bf16.msra.mxu0 0
    %1520 = vmatprep.subr.bf16.mxu0 0
    %1521 = vmatpush1.bf16.msra.mxu0 0
    %1522 = vmatprep.subr.bf16.mxu0 0
    %1523 = vmatpush1.bf16.msra.mxu0 0
    %1524 = vmatprep.subr.bf16.mxu0 0
    %1525 = vmatpush1.bf16.msra.mxu0 0
    %1526 = vmatprep.subr.bf16.mxu0 0
    %1527 = vmatpush1.bf16.msra.mxu0 0
    %1528 = vmatprep.subr.bf16.mxu0 0
    %1529 = vmatpush1.bf16.msra.mxu0 0
    %1530 = vmatprep.subr.bf16.mxu0 0
    %1531 = vmatpush1.bf16.msra.mxu0 0
    %1532 = vmatprep.subr.bf16.mxu0 0
    %1533 = vmatpush1.bf16.msra.mxu0 0
    %1534 = vmatprep.mubr.bf16.mxu0 0
    %1535 = vmatmul.mubr.bf16.gmra.mrb[0].mxu0 %v345
    %v1536 = vpop.f32.mrb[0].mxu0
    %v1537 = vadd.f32 0.0, %v1536
    %v1538 = vpop.f32.mrb[0].mxu0
    %v1539 = vpop.f32.mrb[0].mxu0
    %v1540 = vadd.f32 0.0, %v1539
    %v1541 = vpop.f32.mrb[0].mxu0
    %1542 = vmatprep.mubr.bf16.mxu0 0
    %1543 = vmatmul.mubr.bf16.gmra.mrb[0].mxu0 %v348
    %v1544 = vpop.f32.mrb[0].mxu0
    %v1545 = vadd.f32 0.0, %v1544
    %v1546 = vpop.f32.mrb[0].mxu0
    %v1547 = vpop.f32.mrb[0].mxu0
    %v1548 = vpop.f32.mrb[0].mxu0
    %1549 = vdwg.mxu0
    %v1550 = vpack.c.bf16 %v1540, %v1537
    %v1551 = vpack.c.bf16 %v1545, %v1545
    %s1552 = scalar_lea.vmem [#allocation10], 16
    %v1553 = vld [vmem:[%s1552] sm:$0xf]
    %v1554 = vld [vmem:[%s1552 + $0x4] sm:$0xf]
    %v1555 = vld [vmem:[%s1552 + $0x8] sm:$0xf]
    %v1556 = vld [vmem:[%s1552 + $0xc] sm:$0xf]
    %v1561 = vunpack.c.l.b16 %v1553
    %v1562 = vunpack.c.l.b16 %v1554
    %v1563 = vunpack.c.l.b16 %v1555
    %v1564 = vunpack.c.l.b16 %v1556
    %v1565 = vpack.c.b16 %v1562, %v1561
    %v1566 = vpack.c.b16 %v1564, %v1563
    %vm1569 = vcmask 261120
    %v1571 = vsel %vm1569, %v1550, 0
    %v1574 = vsel %vm1569, %v1551, 0
    %1576 = vmatprep.subr.bf16.mxu0 0
    %1577 = vmatpush1.bf16.msra.mxu0 %v1565
    %1578 = vmatprep.subr.bf16.mxu0 0
    %1579 = vmatpush1.bf16.msra.mxu0 %v1566
    %1580 = vmatprep.subr.bf16.mxu0 0
    %1581 = vmatpush1.bf16.msra.mxu0 0
    %1582 = vmatprep.subr.bf16.mxu0 0
    %1583 = vmatpush1.bf16.msra.mxu0 0
    %1584 = vmatprep.subr.bf16.mxu0 0
    %1585 = vmatpush1.bf16.msra.mxu0 0
    %1586 = vmatprep.subr.bf16.mxu0 0
    %1587 = vmatpush1.bf16.msra.mxu0 0
    %1588 = vmatprep.subr.bf16.mxu0 0
    %1589 = vmatpush1.bf16.msra.mxu0 0
    %1590 = vmatprep.subr.bf16.mxu0 0
    %1591 = vmatpush1.bf16.msra.mxu0 0
    %1592 = vmatprep.subr.bf16.mxu0 0
    %1593 = vmatpush1.bf16.msra.mxu0 0
    %1594 = vmatprep.subr.bf16.mxu0 0
    %1595 = vmatpush1.bf16.msra.mxu0 0
    %1596 = vmatprep.subr.bf16.mxu0 0
    %1597 = vmatpush1.bf16.msra.mxu0 0
    %1598 = vmatprep.subr.bf16.mxu0 0
    %1599 = vmatpush1.bf16.msra.mxu0 0
    %1600 = vmatprep.subr.bf16.mxu0 0
    %1601 = vmatpush1.bf16.msra.mxu0 0
    %1602 = vmatprep.subr.bf16.mxu0 0
    %1603 = vmatpush1.bf16.msra.mxu0 0
    %1604 = vmatprep.subr.bf16.mxu0 0
    %1605 = vmatpush1.bf16.msra.mxu0 0
    %1606 = vmatprep.subr.bf16.mxu0 0
    %1607 = vmatpush1.bf16.msra.mxu0 0
    %1608 = vmatprep.mubr.bf16.mxu0 0
    %1609 = vmatmul.mubr.bf16.gmra.mrb[0].mxu0 %v1571
    %v1610 = vpop.f32.mrb[0].mxu0
    %v1611 = vadd.f32 0.0, %v1610
    %v1612 = vpop.f32.mrb[0].mxu0
    %v1613 = vpop.f32.mrb[0].mxu0
    %v1614 = vadd.f32 0.0, %v1613
    %v1615 = vpop.f32.mrb[0].mxu0
    %1616 = vmatprep.mubr.bf16.mxu0 0
    %1617 = vmatmul.mubr.bf16.gmra.mrb[0].mxu0 %v1574
    %v1618 = vpop.f32.mrb[0].mxu0
    %v1619 = vadd.f32 0.0, %v1618
    %v1620 = vpop.f32.mrb[0].mxu0
    %v1621 = vpop.f32.mrb[0].mxu0
    %v1622 = vpop.f32.mrb[0].mxu0
    %1623 = vdwg.mxu0
    %v1628 = vunpack.c.l.b16 %v1498
    %v1629 = vunpack.c.l.b16 %v1499
    %v1630 = vunpack.c.l.b16 %v1500
    %v1631 = vunpack.c.l.b16 %v1501
    %v1632 = vpack.c.b16 %v1629, %v1628
    %v1633 = vpack.c.b16 %v1631, %v1630
    %v1637 = vsel %vm1569, %v1496, 0
    %v1640 = vsel %vm1569, %v1497, 0
    %1642 = vmatprep.subr.bf16.mxu0 0
    %1643 = vmatpush1.bf16.msra.mxu0 %v1632
    %1644 = vmatprep.subr.bf16.mxu0 0
    %1645 = vmatpush1.bf16.msra.mxu0 %v1633
    %1646 = vmatprep.subr.bf16.mxu0 0
    %1647 = vmatpush1.bf16.msra.mxu0 0
    %1648 = vmatprep.subr.bf16.mxu0 0
    %1649 = vmatpush1.bf16.msra.mxu0 0
    %1650 = vmatprep.subr.bf16.mxu0 0
    %1651 = vmatpush1.bf16.msra.mxu0 0
    %1652 = vmatprep.subr.bf16.mxu0 0
    %1653 = vmatpush1.bf16.msra.mxu0 0
    %1654 = vmatprep.subr.bf16.mxu0 0
    %1655 = vmatpush1.bf16.msra.mxu0 0
    %1656 = vmatprep.subr.bf16.mxu0 0
    %1657 = vmatpush1.bf16.msra.mxu0 0
    %1658 = vmatprep.subr.bf16.mxu0 0
    %1659 = vmatpush1.bf16.msra.mxu0 0
    %1660 = vmatprep.subr.bf16.mxu0 0
    %1661 = vmatpush1.bf16.msra.mxu0 0
    %1662 = vmatprep.subr.bf16.mxu0 0
    %1663 = vmatpush1.bf16.msra.mxu0 0
    %1664 = vmatprep.subr.bf16.mxu0 0
    %1665 = vmatpush1.bf16.msra.mxu0 0
    %1666 = vmatprep.subr.bf16.mxu0 0
    %1667 = vmatpush1.bf16.msra.mxu0 0
    %1668 = vmatprep.subr.bf16.mxu0 0
    %1669 = vmatpush1.bf16.msra.mxu0 0
    %1670 = vmatprep.subr.bf16.mxu0 0
    %1671 = vmatpush1.bf16.msra.mxu0 0
    %1672 = vmatprep.subr.bf16.mxu0 0
    %1673 = vmatpush1.bf16.msra.mxu0 0
    %1674 = vmatprep.mubr.bf16.mxu0 0
    %1675 = vmatmul.mubr.bf16.gmra.mrb[0].mxu0 %v1637
    %v1676 = vpop.f32.mrb[0].mxu0
    %v1677 = vadd.f32 %v1611, %v1676
    %v1678 = vpop.f32.mrb[0].mxu0
    %v1679 = vpop.f32.mrb[0].mxu0
    %v1680 = vadd.f32 %v1614, %v1679
    %v1681 = vpop.f32.mrb[0].mxu0
    %1682 = vmatprep.mubr.bf16.mxu0 0
    %1683 = vmatmul.mubr.bf16.gmra.mrb[0].mxu0 %v1640
    %v1684 = vpop.f32.mrb[0].mxu0
    %v1685 = vadd.f32 %v1619, %v1684
    %v1686 = vpop.f32.mrb[0].mxu0
    %v1687 = vpop.f32.mrb[0].mxu0
    %v1688 = vpop.f32.mrb[0].mxu0
    %1689 = vdwg.mxu0
    %1690 = vmatprep.subr.bf16.mxu0 0
    %1691 = vmatpush1.bf16.msra.mxu0 %v1443
    %1692 = vmatprep.subr.bf16.mxu0 0
    %1693 = vmatpush1.bf16.msra.mxu0 %v1446
    %1694 = vmatprep.subr.bf16.mxu0 0
    %1695 = vmatpush1.bf16.msra.mxu0 0
    %1696 = vmatprep.subr.bf16.mxu0 0
    %1697 = vmatpush1.bf16.msra.mxu0 0
    %1698 = vmatprep.subr.bf16.mxu0 0
    %1699 = vmatpush1.bf16.msra.mxu0 0
    %1700 = vmatprep.subr.bf16.mxu0 0
    %1701 = vmatpush1.bf16.msra.mxu0 0
    %1702 = vmatprep.subr.bf16.mxu0 0
    %1703 = vmatpush1.bf16.msra.mxu0 0
    %1704 = vmatprep.subr.bf16.mxu0 0
    %1705 = vmatpush1.bf16.msra.mxu0 0
    %1706 = vmatprep.subr.bf16.mxu0 0
    %1707 = vmatpush1.bf16.msra.mxu0 0
    %1708 = vmatprep.subr.bf16.mxu0 0
    %1709 = vmatpush1.bf16.msra.mxu0 0
    %1710 = vmatprep.subr.bf16.mxu0 0
    %1711 = vmatpush1.bf16.msra.mxu0 0
    %1712 = vmatprep.subr.bf16.mxu0 0
    %1713 = vmatpush1.bf16.msra.mxu0 0
    %1714 = vmatprep.subr.bf16.mxu0 0
    %1715 = vmatpush1.bf16.msra.mxu0 0
    %1716 = vmatprep.subr.bf16.mxu0 0
    %1717 = vmatpush1.bf16.msra.mxu0 0
    %1718 = vmatprep.subr.bf16.mxu0 0
    %1719 = vmatpush1.bf16.msra.mxu0 0
    %1720 = vmatprep.subr.bf16.mxu0 0
    %1721 = vmatpush1.bf16.msra.mxu0 0
    %1722 = vmatprep.mubr.bf16.mxu0 0
    %1723 = vmatmul.mubr.bf16.gmra.mrb[0].mxu0 %v533
    %v1724 = vpop.f32.mrb[0].mxu0
    %v1725 = vadd.f32 0.0, %v1724
    %v1726 = vpop.f32.mrb[0].mxu0
    %v1727 = vpop.f32.mrb[0].mxu0
    %v1728 = vadd.f32 0.0, %v1727
    %v1729 = vpop.f32.mrb[0].mxu0
    %1730 = vmatprep.mubr.bf16.mxu0 0
    %1731 = vmatmul.mubr.bf16.gmra.mrb[0].mxu0 %v536
    %v1732 = vpop.f32.mrb[0].mxu0
    %v1733 = vadd.f32 0.0, %v1732
    %v1734 = vpop.f32.mrb[0].mxu0
    %v1735 = vpop.f32.mrb[0].mxu0
    %v1736 = vpop.f32.mrb[0].mxu0
    %1737 = vdwg.mxu0
    %v1738 = vpack.c.bf16 %v1728, %v1725
    %v1739 = vpack.c.bf16 %v1733, %v1733
    %s1740 = scalar_lea.vmem [#allocation10], 32
    %v1741 = vld [vmem:[%s1740] sm:$0xf]
    %v1742 = vld [vmem:[%s1740 + $0x4] sm:$0xf]
    %v1743 = vld [vmem:[%s1740 + $0x8] sm:$0xf]
    %v1744 = vld [vmem:[%s1740 + $0xc] sm:$0xf]
    %v1749 = vunpack.c.l.b16 %v1741
    %v1750 = vunpack.c.l.b16 %v1742
    %v1751 = vunpack.c.l.b16 %v1743
    %v1752 = vunpack.c.l.b16 %v1744
    %v1753 = vpack.c.b16 %v1750, %v1749
    %v1754 = vpack.c.b16 %v1752, %v1751
    %v1758 = vsel %vm1569, %v1738, 0
    %v1761 = vsel %vm1569, %v1739, 0
    %1763 = vmatprep.subr.bf16.mxu0 0
    %1764 = vmatpush1.bf16.msra.mxu0 %v1753
    %1765 = vmatprep.subr.bf16.mxu0 0
    %1766 = vmatpush1.bf16.msra.mxu0 %v1754
    %1767 = vmatprep.subr.bf16.mxu0 0
    %1768 = vmatpush1.bf16.msra.mxu0 0
    %1769 = vmatprep.subr.bf16.mxu0 0
    %1770 = vmatpush1.bf16.msra.mxu0 0
    %1771 = vmatprep.subr.bf16.mxu0 0
    %1772 = vmatpush1.bf16.msra.mxu0 0
    %1773 = vmatprep.subr.bf16.mxu0 0
    %1774 = vmatpush1.bf16.msra.mxu0 0
    %1775 = vmatprep.subr.bf16.mxu0 0
    %1776 = vmatpush1.bf16.msra.mxu0 0
    %1777 = vmatprep.subr.bf16.mxu0 0
    %1778 = vmatpush1.bf16.msra.mxu0 0
    %1779 = vmatprep.subr.bf16.mxu0 0
    %1780 = vmatpush1.bf16.msra.mxu0 0
    %1781 = vmatprep.subr.bf16.mxu0 0
    %1782 = vmatpush1.bf16.msra.mxu0 0
    %1783 = vmatprep.subr.bf16.mxu0 0
    %1784 = vmatpush1.bf16.msra.mxu0 0
    %1785 = vmatprep.subr.bf16.mxu0 0
    %1786 = vmatpush1.bf16.msra.mxu0 0
    %1787 = vmatprep.subr.bf16.mxu0 0
    %1788 = vmatpush1.bf16.msra.mxu0 0
    %1789 = vmatprep.subr.bf16.mxu0 0
    %1790 = vmatpush1.bf16.msra.mxu0 0
    %1791 = vmatprep.subr.bf16.mxu0 0
    %1792 = vmatpush1.bf16.msra.mxu0 0
    %1793 = vmatprep.subr.bf16.mxu0 0
    %1794 = vmatpush1.bf16.msra.mxu0 0
    %1795 = vmatprep.mubr.bf16.mxu0 0
    %1796 = vmatmul.mubr.bf16.gmra.mrb[0].mxu0 %v1758
    %v1797 = vpop.f32.mrb[0].mxu0
    %v1798 = vadd.f32 0.0, %v1797
    %v1799 = vpop.f32.mrb[0].mxu0
    %v1800 = vpop.f32.mrb[0].mxu0
    %v1801 = vadd.f32 0.0, %v1800
    %v1802 = vpop.f32.mrb[0].mxu0
    %1803 = vmatprep.mubr.bf16.mxu0 0
    %1804 = vmatmul.mubr.bf16.gmra.mrb[0].mxu0 %v1761
    %v1805 = vpop.f32.mrb[0].mxu0
    %v1806 = vadd.f32 0.0, %v1805
    %v1807 = vpop.f32.mrb[0].mxu0
    %v1808 = vpop.f32.mrb[0].mxu0
    %v1809 = vpop.f32.mrb[0].mxu0
    %1810 = vdwg.mxu0
    %v1811 = vadd.f32 %v1677, %v1798
    %v1812 = vadd.f32 %v1680, %v1801
    %v1813 = vadd.f32 %v1685, %v1806
    %1814 = vmatprep.subr.bf16.mxu0 0
    %1815 = vmatpush1.bf16.msra.mxu0 %v1443
    %1816 = vmatprep.subr.bf16.mxu0 0
    %1817 = vmatpush1.bf16.msra.mxu0 %v1446
    %1818 = vmatprep.subr.bf16.mxu0 0
    %1819 = vmatpush1.bf16.msra.mxu0 0
    %1820 = vmatprep.subr.bf16.mxu0 0
    %1821 = vmatpush1.bf16.msra.mxu0 0
    %1822 = vmatprep.subr.bf16.mxu0 0
    %1823 = vmatpush1.bf16.msra.mxu0 0
    %1824 = vmatprep.subr.bf16.mxu0 0
    %1825 = vmatpush1.bf16.msra.mxu0 0
    %1826 = vmatprep.subr.bf16.mxu0 0
    %1827 = vmatpush1.bf16.msra.mxu0 0
    %1828 = vmatprep.subr.bf16.mxu0 0
    %1829 = vmatpush1.bf16.msra.mxu0 0
    %1830 = vmatprep.subr.bf16.mxu0 0
    %1831 = vmatpush1.bf16.msra.mxu0 0
    %1832 = vmatprep.subr.bf16.mxu0 0
    %1833 = vmatpush1.bf16.msra.mxu0 0
    %1834 = vmatprep.subr.bf16.mxu0 0
    %1835 = vmatpush1.bf16.msra.mxu0 0
    %1836 = vmatprep.subr.bf16.mxu0 0
    %1837 = vmatpush1.bf16.msra.mxu0 0
    %1838 = vmatprep.subr.bf16.mxu0 0
    %1839 = vmatpush1.bf16.msra.mxu0 0
    %1840 = vmatprep.subr.bf16.mxu0 0
    %1841 = vmatpush1.bf16.msra.mxu0 0
    %1842 = vmatprep.subr.bf16.mxu0 0
    %1843 = vmatpush1.bf16.msra.mxu0 0
    %1844 = vmatprep.subr.bf16.mxu0 0
    %1845 = vmatpush1.bf16.msra.mxu0 0
    %1846 = vmatprep.mubr.bf16.mxu0 0
    %1847 = vmatmul.mubr.bf16.gmra.mrb[0].mxu0 %v663
    %v1848 = vpop.f32.mrb[0].mxu0
    %v1849 = vadd.f32 0.0, %v1848
    %v1850 = vpop.f32.mrb[0].mxu0
    %v1851 = vpop.f32.mrb[0].mxu0
    %v1852 = vadd.f32 0.0, %v1851
    %v1853 = vpop.f32.mrb[0].mxu0
    %1854 = vmatprep.mubr.bf16.mxu0 0
    %1855 = vmatmul.mubr.bf16.gmra.mrb[0].mxu0 %v666
    %v1856 = vpop.f32.mrb[0].mxu0
    %v1857 = vadd.f32 0.0, %v1856
    %v1858 = vpop.f32.mrb[0].mxu0
    %v1859 = vpop.f32.mrb[0].mxu0
    %v1860 = vpop.f32.mrb[0].mxu0
    %1861 = vdwg.mxu0
    %v1862 = vpack.c.bf16 %v1852, %v1849
    %v1863 = vpack.c.bf16 %v1857, %v1857
    %s1864 = scalar_lea.vmem [#allocation10], 48
    %v1865 = vld [vmem:[%s1864] sm:$0xf]
    %v1866 = vld [vmem:[%s1864 + $0x4] sm:$0xf]
    %v1867 = vld [vmem:[%s1864 + $0x8] sm:$0xf]
    %v1868 = vld [vmem:[%s1864 + $0xc] sm:$0xf]
    %v1873 = vunpack.c.l.b16 %v1865
    %v1874 = vunpack.c.l.b16 %v1866
    %v1875 = vunpack.c.l.b16 %v1867
    %v1876 = vunpack.c.l.b16 %v1868
    %v1877 = vpack.c.b16 %v1874, %v1873
    %v1878 = vpack.c.b16 %v1876, %v1875
    %v1882 = vsel %vm1569, %v1862, 0
    %v1885 = vsel %vm1569, %v1863, 0
    %1887 = vmatprep.subr.bf16.mxu0 0
    %1888 = vmatpush1.bf16.msra.mxu0 %v1877
    %1889 = vmatprep.subr.bf16.mxu0 0
    %1890 = vmatpush1.bf16.msra.mxu0 %v1878
    %1891 = vmatprep.subr.bf16.mxu0 0
    %1892 = vmatpush1.bf16.msra.mxu0 0
    %1893 = vmatprep.subr.bf16.mxu0 0
    %1894 = vmatpush1.bf16.msra.mxu0 0
    %1895 = vmatprep.subr.bf16.mxu0 0
    %1896 = vmatpush1.bf16.msra.mxu0 0
    %1897 = vmatprep.subr.bf16.mxu0 0
    %1898 = vmatpush1.bf16.msra.mxu0 0
    %1899 = vmatprep.subr.bf16.mxu0 0
    %1900 = vmatpush1.bf16.msra.mxu0 0
    %1901 = vmatprep.subr.bf16.mxu0 0
    %1902 = vmatpush1.bf16.msra.mxu0 0
    %1903 = vmatprep.subr.bf16.mxu0 0
    %1904 = vmatpush1.bf16.msra.mxu0 0
    %1905 = vmatprep.subr.bf16.mxu0 0
    %1906 = vmatpush1.bf16.msra.mxu0 0
    %1907 = vmatprep.subr.bf16.mxu0 0
    %1908 = vmatpush1.bf16.msra.mxu0 0
    %1909 = vmatprep.subr.bf16.mxu0 0
    %1910 = vmatpush1.bf16.msra.mxu0 0
    %1911 = vmatprep.subr.bf16.mxu0 0
    %1912 = vmatpush1.bf16.msra.mxu0 0
    %1913 = vmatprep.subr.bf16.mxu0 0
    %1914 = vmatpush1.bf16.msra.mxu0 0
    %1915 = vmatprep.subr.bf16.mxu0 0
    %1916 = vmatpush1.bf16.msra.mxu0 0
    %1917 = vmatprep.subr.bf16.mxu0 0
    %1918 = vmatpush1.bf16.msra.mxu0 0
    %1919 = vmatprep.mubr.bf16.mxu0 0
    %1920 = vmatmul.mubr.bf16.gmra.mrb[0].mxu0 %v1882
    %v1921 = vpop.f32.mrb[0].mxu0
    %v1922 = vadd.f32 0.0, %v1921
    %v1923 = vpop.f32.mrb[0].mxu0
    %v1924 = vpop.f32.mrb[0].mxu0
    %v1925 = vadd.f32 0.0, %v1924
    %v1926 = vpop.f32.mrb[0].mxu0
    %1927 = vmatprep.mubr.bf16.mxu0 0
    %1928 = vmatmul.mubr.bf16.gmra.mrb[0].mxu0 %v1885
    %v1929 = vpop.f32.mrb[0].mxu0
    %v1930 = vadd.f32 0.0, %v1929
    %v1931 = vpop.f32.mrb[0].mxu0
    %v1932 = vpop.f32.mrb[0].mxu0
    %v1933 = vpop.f32.mrb[0].mxu0
    %1934 = vdwg.mxu0
    %v1935 = vadd.f32 %v1811, %v1922
    %v1936 = vadd.f32 %v1812, %v1925
    %v1937 = vadd.f32 %v1813, %v1930
    %1938 = vmatprep.subr.bf16.mxu0 0
    %1939 = vmatpush1.bf16.msra.mxu0 %v1443
    %1940 = vmatprep.subr.bf16.mxu0 0
    %1941 = vmatpush1.bf16.msra.mxu0 %v1446
    %1942 = vmatprep.subr.bf16.mxu0 0
    %1943 = vmatpush1.bf16.msra.mxu0 0
    %1944 = vmatprep.subr.bf16.mxu0 0
    %1945 = vmatpush1.bf16.msra.mxu0 0
    %1946 = vmatprep.subr.bf16.mxu0 0
    %1947 = vmatpush1.bf16.msra.mxu0 0
    %1948 = vmatprep.subr.bf16.mxu0 0
    %1949 = vmatpush1.bf16.msra.mxu0 0
    %1950 = vmatprep.subr.bf16.mxu0 0
    %1951 = vmatpush1.bf16.msra.mxu0 0
    %1952 = vmatprep.subr.bf16.mxu0 0
    %1953 = vmatpush1.bf16.msra.mxu0 0
    %1954 = vmatprep.subr.bf16.mxu0 0
    %1955 = vmatpush1.bf16.msra.mxu0 0
    %1956 = vmatprep.subr.bf16.mxu0 0
    %1957 = vmatpush1.bf16.msra.mxu0 0
    %1958 = vmatprep.subr.bf16.mxu0 0
    %1959 = vmatpush1.bf16.msra.mxu0 0
    %1960 = vmatprep.subr.bf16.mxu0 0
    %1961 = vmatpush1.bf16.msra.mxu0 0
    %1962 = vmatprep.subr.bf16.mxu0 0
    %1963 = vmatpush1.bf16.msra.mxu0 0
    %1964 = vmatprep.subr.bf16.mxu0 0
    %1965 = vmatpush1.bf16.msra.mxu0 0
    %1966 = vmatprep.subr.bf16.mxu0 0
    %1967 = vmatpush1.bf16.msra.mxu0 0
    %1968 = vmatprep.subr.bf16.mxu0 0
    %1969 = vmatpush1.bf16.msra.mxu0 0
    %1970 = vmatprep.mubr.bf16.mxu0 0
    %1971 = vmatmul.mubr.bf16.gmra.mrb[0].mxu0 %v793
    %v1972 = vpop.f32.mrb[0].mxu0
    %v1973 = vadd.f32 0.0, %v1972
    %v1974 = vpop.f32.mrb[0].mxu0
    %v1975 = vpop.f32.mrb[0].mxu0
    %v1976 = vadd.f32 0.0, %v1975
    %v1977 = vpop.f32.mrb[0].mxu0
    %1978 = vmatprep.mubr.bf16.mxu0 0
    %1979 = vmatmul.mubr.bf16.gmra.mrb[0].mxu0 %v796
    %v1980 = vpop.f32.mrb[0].mxu0
    %v1981 = vadd.f32 0.0, %v1980
    %v1982 = vpop.f32.mrb[0].mxu0
    %v1983 = vpop.f32.mrb[0].mxu0
    %v1984 = vpop.f32.mrb[0].mxu0
    %1985 = vdwg.mxu0
    %v1986 = vpack.c.bf16 %v1976, %v1973
    %v1987 = vpack.c.bf16 %v1981, %v1981
    %s1988 = scalar_lea.vmem [#allocation10], 64
    %v1989 = vld [vmem:[%s1988] sm:$0xf]
    %v1990 = vld [vmem:[%s1988 + $0x4] sm:$0xf]
    %v1991 = vld [vmem:[%s1988 + $0x8] sm:$0xf]
    %v1992 = vld [vmem:[%s1988 + $0xc] sm:$0xf]
    %v1997 = vunpack.c.l.b16 %v1989
    %v1998 = vunpack.c.l.b16 %v1990
    %v1999 = vunpack.c.l.b16 %v1991
    %v2000 = vunpack.c.l.b16 %v1992
    %v2001 = vpack.c.b16 %v1998, %v1997
    %v2002 = vpack.c.b16 %v2000, %v1999
    %v2006 = vsel %vm1569, %v1986, 0
    %v2009 = vsel %vm1569, %v1987, 0
    %2011 = vmatprep.subr.bf16.mxu0 0
    %2012 = vmatpush1.bf16.msra.mxu0 %v2001
    %2013 = vmatprep.subr.bf16.mxu0 0
    %2014 = vmatpush1.bf16.msra.mxu0 %v2002
    %2015 = vmatprep.subr.bf16.mxu0 0
    %2016 = vmatpush1.bf16.msra.mxu0 0
    %2017 = vmatprep.subr.bf16.mxu0 0
    %2018 = vmatpush1.bf16.msra.mxu0 0
    %2019 = vmatprep.subr.bf16.mxu0 0
    %2020 = vmatpush1.bf16.msra.mxu0 0
    %2021 = vmatprep.subr.bf16.mxu0 0
    %2022 = vmatpush1.bf16.msra.mxu0 0
    %2023 = vmatprep.subr.bf16.mxu0 0
    %2024 = vmatpush1.bf16.msra.mxu0 0
    %2025 = vmatprep.subr.bf16.mxu0 0
    %2026 = vmatpush1.bf16.msra.mxu0 0
    %2027 = vmatprep.subr.bf16.mxu0 0
    %2028 = vmatpush1.bf16.msra.mxu0 0
    %2029 = vmatprep.subr.bf16.mxu0 0
    %2030 = vmatpush1.bf16.msra.mxu0 0
    %2031 = vmatprep.subr.bf16.mxu0 0
    %2032 = vmatpush1.bf16.msra.mxu0 0
    %2033 = vmatprep.subr.bf16.mxu0 0
    %2034 = vmatpush1.bf16.msra.mxu0 0
    %2035 = vmatprep.subr.bf16.mxu0 0
    %2036 = vmatpush1.bf16.msra.mxu0 0
    %2037 = vmatprep.subr.bf16.mxu0 0
    %2038 = vmatpush1.bf16.msra.mxu0 0
    %2039 = vmatprep.subr.bf16.mxu0 0
    %2040 = vmatpush1.bf16.msra.mxu0 0
    %2041 = vmatprep.subr.bf16.mxu0 0
    %2042 = vmatpush1.bf16.msra.mxu0 0
    %2043 = vmatprep.mubr.bf16.mxu0 0
    %2044 = vmatmul.mubr.bf16.gmra.mrb[0].mxu0 %v2006
    %v2045 = vpop.f32.mrb[0].mxu0
    %v2046 = vadd.f32 0.0, %v2045
    %v2047 = vpop.f32.mrb[0].mxu0
    %v2048 = vpop.f32.mrb[0].mxu0
    %v2049 = vadd.f32 0.0, %v2048
    %v2050 = vpop.f32.mrb[0].mxu0
    %2051 = vmatprep.mubr.bf16.mxu0 0
    %2052 = vmatmul.mubr.bf16.gmra.mrb[0].mxu0 %v2009
    %v2053 = vpop.f32.mrb[0].mxu0
    %v2054 = vadd.f32 0.0, %v2053
    %v2055 = vpop.f32.mrb[0].mxu0
    %v2056 = vpop.f32.mrb[0].mxu0
    %v2057 = vpop.f32.mrb[0].mxu0
    %2058 = vdwg.mxu0
    %v2059 = vadd.f32 %v1935, %v2046
    %v2060 = vadd.f32 %v1936, %v2049
    %v2061 = vadd.f32 %v1937, %v2054
    %2062 = vmatprep.subr.bf16.mxu0 0
    %2063 = vmatpush1.bf16.msra.mxu0 %v1443
    %2064 = vmatprep.subr.bf16.mxu0 0
    %2065 = vmatpush1.bf16.msra.mxu0 %v1446
    %2066 = vmatprep.subr.bf16.mxu0 0
    %2067 = vmatpush1.bf16.msra.mxu0 0
    %2068 = vmatprep.subr.bf16.mxu0 0
    %2069 = vmatpush1.bf16.msra.mxu0 0
    %2070 = vmatprep.subr.bf16.mxu0 0
    %2071 = vmatpush1.bf16.msra.mxu0 0
    %2072 = vmatprep.subr.bf16.mxu0 0
    %2073 = vmatpush1.bf16.msra.mxu0 0
    %2074 = vmatprep.subr.bf16.mxu0 0
    %2075 = vmatpush1.bf16.msra.mxu0 0
    %2076 = vmatprep.subr.bf16.mxu0 0
    %2077 = vmatpush1.bf16.msra.mxu0 0
    %2078 = vmatprep.subr.bf16.mxu0 0
    %2079 = vmatpush1.bf16.msra.mxu0 0
    %2080 = vmatprep.subr.bf16.mxu0 0
    %2081 = vmatpush1.bf16.msra.mxu0 0
    %2082 = vmatprep.subr.bf16.mxu0 0
    %2083 = vmatpush1.bf16.msra.mxu0 0
    %2084 = vmatprep.subr.bf16.mxu0 0
    %2085 = vmatpush1.bf16.msra.mxu0 0
    %2086 = vmatprep.subr.bf16.mxu0 0
    %2087 = vmatpush1.bf16.msra.mxu0 0
    %2088 = vmatprep.subr.bf16.mxu0 0
    %2089 = vmatpush1.bf16.msra.mxu0 0
    %2090 = vmatprep.subr.bf16.mxu0 0
    %2091 = vmatpush1.bf16.msra.mxu0 0
    %2092 = vmatprep.subr.bf16.mxu0 0
    %2093 = vmatpush1.bf16.msra.mxu0 0
    %2094 = vmatprep.mubr.bf16.mxu0 0
    %2095 = vmatmul.mubr.bf16.gmra.mrb[0].mxu0 %v923
    %v2096 = vpop.f32.mrb[0].mxu0
    %v2097 = vadd.f32 0.0, %v2096
    %v2098 = vpop.f32.mrb[0].mxu0
    %v2099 = vpop.f32.mrb[0].mxu0
    %v2100 = vadd.f32 0.0, %v2099
    %v2101 = vpop.f32.mrb[0].mxu0
    %2102 = vmatprep.mubr.bf16.mxu0 0
    %2103 = vmatmul.mubr.bf16.gmra.mrb[0].mxu0 %v926
    %v2104 = vpop.f32.mrb[0].mxu0
    %v2105 = vadd.f32 0.0, %v2104
    %v2106 = vpop.f32.mrb[0].mxu0
    %v2107 = vpop.f32.mrb[0].mxu0
    %v2108 = vpop.f32.mrb[0].mxu0
    %2109 = vdwg.mxu0
    %v2110 = vpack.c.bf16 %v2100, %v2097
    %v2111 = vpack.c.bf16 %v2105, %v2105
    %s2112 = scalar_lea.vmem [#allocation10], 80
    %v2113 = vld [vmem:[%s2112] sm:$0xf]
    %v2114 = vld [vmem:[%s2112 + $0x4] sm:$0xf]
    %v2115 = vld [vmem:[%s2112 + $0x8] sm:$0xf]
    %v2116 = vld [vmem:[%s2112 + $0xc] sm:$0xf]
    %v2121 = vunpack.c.l.b16 %v2113
    %v2122 = vunpack.c.l.b16 %v2114
    %v2123 = vunpack.c.l.b16 %v2115
    %v2124 = vunpack.c.l.b16 %v2116
    %v2125 = vpack.c.b16 %v2122, %v2121
    %v2126 = vpack.c.b16 %v2124, %v2123
    %v2130 = vsel %vm1569, %v2110, 0
    %v2133 = vsel %vm1569, %v2111, 0
    %2135 = vmatprep.subr.bf16.mxu0 0
    %2136 = vmatpush1.bf16.msra.mxu0 %v2125
    %2137 = vmatprep.subr.bf16.mxu0 0
    %2138 = vmatpush1.bf16.msra.mxu0 %v2126
    %2139 = vmatprep.subr.bf16.mxu0 0
    %2140 = vmatpush1.bf16.msra.mxu0 0
    %2141 = vmatprep.subr.bf16.mxu0 0
    %2142 = vmatpush1.bf16.msra.mxu0 0
    %2143 = vmatprep.subr.bf16.mxu0 0
    %2144 = vmatpush1.bf16.msra.mxu0 0
    %2145 = vmatprep.subr.bf16.mxu0 0
    %2146 = vmatpush1.bf16.msra.mxu0 0
    %2147 = vmatprep.subr.bf16.mxu0 0
    %2148 = vmatpush1.bf16.msra.mxu0 0
    %2149 = vmatprep.subr.bf16.mxu0 0
    %2150 = vmatpush1.bf16.msra.mxu0 0
    %2151 = vmatprep.subr.bf16.mxu0 0
    %2152 = vmatpush1.bf16.msra.mxu0 0
    %2153 = vmatprep.subr.bf16.mxu0 0
    %2154 = vmatpush1.bf16.msra.mxu0 0
    %2155 = vmatprep.subr.bf16.mxu0 0
    %2156 = vmatpush1.bf16.msra.mxu0 0
    %2157 = vmatprep.subr.bf16.mxu0 0
    %2158 = vmatpush1.bf16.msra.mxu0 0
    %2159 = vmatprep.subr.bf16.mxu0 0
    %2160 = vmatpush1.bf16.msra.mxu0 0
    %2161 = vmatprep.subr.bf16.mxu0 0
    %2162 = vmatpush1.bf16.msra.mxu0 0
    %2163 = vmatprep.subr.bf16.mxu0 0
    %2164 = vmatpush1.bf16.msra.mxu0 0
    %2165 = vmatprep.subr.bf16.mxu0 0
    %2166 = vmatpush1.bf16.msra.mxu0 0
    %2167 = vmatprep.mubr.bf16.mxu0 0
    %2168 = vmatmul.mubr.bf16.gmra.mrb[0].mxu0 %v2130
    %v2169 = vpop.f32.mrb[0].mxu0
    %v2170 = vadd.f32 0.0, %v2169
    %v2171 = vpop.f32.mrb[0].mxu0
    %v2172 = vpop.f32.mrb[0].mxu0
    %v2173 = vadd.f32 0.0, %v2172
    %v2174 = vpop.f32.mrb[0].mxu0
    %2175 = vmatprep.mubr.bf16.mxu0 0
    %2176 = vmatmul.mubr.bf16.gmra.mrb[0].mxu0 %v2133
    %v2177 = vpop.f32.mrb[0].mxu0
    %v2178 = vadd.f32 0.0, %v2177
    %v2179 = vpop.f32.mrb[0].mxu0
    %v2180 = vpop.f32.mrb[0].mxu0
    %v2181 = vpop.f32.mrb[0].mxu0
    %2182 = vdwg.mxu0
    %v2183 = vadd.f32 %v2059, %v2170
    %v2184 = vadd.f32 %v2060, %v2173
    %v2185 = vadd.f32 %v2061, %v2178
    %2186 = vmatprep.subr.bf16.mxu0 0
    %2187 = vmatpush1.bf16.msra.mxu0 %v1443
    %2188 = vmatprep.subr.bf16.mxu0 0
    %2189 = vmatpush1.bf16.msra.mxu0 %v1446
    %2190 = vmatprep.subr.bf16.mxu0 0
    %2191 = vmatpush1.bf16.msra.mxu0 0
    %2192 = vmatprep.subr.bf16.mxu0 0
    %2193 = vmatpush1.bf16.msra.mxu0 0
    %2194 = vmatprep.subr.bf16.mxu0 0
    %2195 = vmatpush1.bf16.msra.mxu0 0
    %2196 = vmatprep.subr.bf16.mxu0 0
    %2197 = vmatpush1.bf16.msra.mxu0 0
    %2198 = vmatprep.subr.bf16.mxu0 0
    %2199 = vmatpush1.bf16.msra.mxu0 0
    %2200 = vmatprep.subr.bf16.mxu0 0
    %2201 = vmatpush1.bf16.msra.mxu0 0
    %2202 = vmatprep.subr.bf16.mxu0 0
    %2203 = vmatpush1.bf16.msra.mxu0 0
    %2204 = vmatprep.subr.bf16.mxu0 0
    %2205 = vmatpush1.bf16.msra.mxu0 0
    %2206 = vmatprep.subr.bf16.mxu0 0
    %2207 = vmatpush1.bf16.msra.mxu0 0
    %2208 = vmatprep.subr.bf16.mxu0 0
    %2209 = vmatpush1.bf16.msra.mxu0 0
    %2210 = vmatprep.subr.bf16.mxu0 0
    %2211 = vmatpush1.bf16.msra.mxu0 0
    %2212 = vmatprep.subr.bf16.mxu0 0
    %2213 = vmatpush1.bf16.msra.mxu0 0
    %2214 = vmatprep.subr.bf16.mxu0 0
    %2215 = vmatpush1.bf16.msra.mxu0 0
    %2216 = vmatprep.subr.bf16.mxu0 0
    %2217 = vmatpush1.bf16.msra.mxu0 0
    %2218 = vmatprep.mubr.bf16.mxu0 0
    %2219 = vmatmul.mubr.bf16.gmra.mrb[0].mxu0 %v1053
    %v2220 = vpop.f32.mrb[0].mxu0
    %v2221 = vadd.f32 0.0, %v2220
    %v2222 = vpop.f32.mrb[0].mxu0
    %v2223 = vpop.f32.mrb[0].mxu0
    %v2224 = vadd.f32 0.0, %v2223
    %v2225 = vpop.f32.mrb[0].mxu0
    %2226 = vmatprep.mubr.bf16.mxu0 0
    %2227 = vmatmul.mubr.bf16.gmra.mrb[0].mxu0 %v1056
    %v2228 = vpop.f32.mrb[0].mxu0
    %v2229 = vadd.f32 0.0, %v2228
    %v2230 = vpop.f32.mrb[0].mxu0
    %v2231 = vpop.f32.mrb[0].mxu0
    %v2232 = vpop.f32.mrb[0].mxu0
    %2233 = vdwg.mxu0
    %v2234 = vpack.c.bf16 %v2224, %v2221
    %v2235 = vpack.c.bf16 %v2229, %v2229
    %s2236 = scalar_lea.vmem [#allocation10], 96
    %v2237 = vld [vmem:[%s2236] sm:$0xf]
    %v2238 = vld [vmem:[%s2236 + $0x4] sm:$0xf]
    %v2239 = vld [vmem:[%s2236 + $0x8] sm:$0xf]
    %v2240 = vld [vmem:[%s2236 + $0xc] sm:$0xf]
    %v2245 = vunpack.c.l.b16 %v2237
    %v2246 = vunpack.c.l.b16 %v2238
    %v2247 = vunpack.c.l.b16 %v2239
    %v2248 = vunpack.c.l.b16 %v2240
    %v2249 = vpack.c.b16 %v2246, %v2245
    %v2250 = vpack.c.b16 %v2248, %v2247
    %v2254 = vsel %vm1569, %v2234, 0
    %v2257 = vsel %vm1569, %v2235, 0
    %2259 = vmatprep.subr.bf16.mxu0 0
    %2260 = vmatpush1.bf16.msra.mxu0 %v2249
    %2261 = vmatprep.subr.bf16.mxu0 0
    %2262 = vmatpush1.bf16.msra.mxu0 %v2250
    %2263 = vmatprep.subr.bf16.mxu0 0
    %2264 = vmatpush1.bf16.msra.mxu0 0
    %2265 = vmatprep.subr.bf16.mxu0 0
    %2266 = vmatpush1.bf16.msra.mxu0 0
    %2267 = vmatprep.subr.bf16.mxu0 0
    %2268 = vmatpush1.bf16.msra.mxu0 0
    %2269 = vmatprep.subr.bf16.mxu0 0
    %2270 = vmatpush1.bf16.msra.mxu0 0
    %2271 = vmatprep.subr.bf16.mxu0 0
    %2272 = vmatpush1.bf16.msra.mxu0 0
    %2273 = vmatprep.subr.bf16.mxu0 0
    %2274 = vmatpush1.bf16.msra.mxu0 0
    %2275 = vmatprep.subr.bf16.mxu0 0
    %2276 = vmatpush1.bf16.msra.mxu0 0
    %2277 = vmatprep.subr.bf16.mxu0 0
    %2278 = vmatpush1.bf16.msra.mxu0 0
    %2279 = vmatprep.subr.bf16.mxu0 0
    %2280 = vmatpush1.bf16.msra.mxu0 0
    %2281 = vmatprep.subr.bf16.mxu0 0
    %2282 = vmatpush1.bf16.msra.mxu0 0
    %2283 = vmatprep.subr.bf16.mxu0 0
    %2284 = vmatpush1.bf16.msra.mxu0 0
    %2285 = vmatprep.subr.bf16.mxu0 0
    %2286 = vmatpush1.bf16.msra.mxu0 0
    %2287 = vmatprep.subr.bf16.mxu0 0
    %2288 = vmatpush1.bf16.msra.mxu0 0
    %2289 = vmatprep.subr.bf16.mxu0 0
    %2290 = vmatpush1.bf16.msra.mxu0 0
    %2291 = vmatprep.mubr.bf16.mxu0 0
    %2292 = vmatmul.mubr.bf16.gmra.mrb[0].mxu0 %v2254
    %v2293 = vpop.f32.mrb[0].mxu0
    %v2294 = vadd.f32 0.0, %v2293
    %v2295 = vpop.f32.mrb[0].mxu0
    %v2296 = vpop.f32.mrb[0].mxu0
    %v2297 = vadd.f32 0.0, %v2296
    %v2298 = vpop.f32.mrb[0].mxu0
    %2299 = vmatprep.mubr.bf16.mxu0 0
    %2300 = vmatmul.mubr.bf16.gmra.mrb[0].mxu0 %v2257
    %v2301 = vpop.f32.mrb[0].mxu0
    %v2302 = vadd.f32 0.0, %v2301
    %v2303 = vpop.f32.mrb[0].mxu0
    %v2304 = vpop.f32.mrb[0].mxu0
    %v2305 = vpop.f32.mrb[0].mxu0
    %2306 = vdwg.mxu0
    %v2307 = vadd.f32 %v2183, %v2294
    %v2308 = vadd.f32 %v2184, %v2297
    %v2309 = vadd.f32 %v2185, %v2302
    %2310 = vmatprep.subr.bf16.mxu0 0
    %2311 = vmatpush1.bf16.msra.mxu0 %v1443
    %2312 = vmatprep.subr.bf16.mxu0 0
    %2313 = vmatpush1.bf16.msra.mxu0 %v1446
    %2314 = vmatprep.subr.bf16.mxu0 0
    %2315 = vmatpush1.bf16.msra.mxu0 0
    %2316 = vmatprep.subr.bf16.mxu0 0
    %2317 = vmatpush1.bf16.msra.mxu0 0
    %2318 = vmatprep.subr.bf16.mxu0 0
    %2319 = vmatpush1.bf16.msra.mxu0 0
    %2320 = vmatprep.subr.bf16.mxu0 0
    %2321 = vmatpush1.bf16.msra.mxu0 0
    %2322 = vmatprep.subr.bf16.mxu0 0
    %2323 = vmatpush1.bf16.msra.mxu0 0
    %2324 = vmatprep.subr.bf16.mxu0 0
    %2325 = vmatpush1.bf16.msra.mxu0 0
    %2326 = vmatprep.subr.bf16.mxu0 0
    %2327 = vmatpush1.bf16.msra.mxu0 0
    %2328 = vmatprep.subr.bf16.mxu0 0
    %2329 = vmatpush1.bf16.msra.mxu0 0
    %2330 = vmatprep.subr.bf16.mxu0 0
    %2331 = vmatpush1.bf16.msra.mxu0 0
    %2332 = vmatprep.subr.bf16.mxu0 0
    %2333 = vmatpush1.bf16.msra.mxu0 0
    %2334 = vmatprep.subr.bf16.mxu0 0
    %2335 = vmatpush1.bf16.msra.mxu0 0
    %2336 = vmatprep.subr.bf16.mxu0 0
    %2337 = vmatpush1.bf16.msra.mxu0 0
    %2338 = vmatprep.subr.bf16.mxu0 0
    %2339 = vmatpush1.bf16.msra.mxu0 0
    %2340 = vmatprep.subr.bf16.mxu0 0
    %2341 = vmatpush1.bf16.msra.mxu0 0
    %2342 = vmatprep.mubr.bf16.mxu0 0
    %2343 = vmatmul.mubr.bf16.gmra.mrb[0].mxu0 %v1183
    %v2344 = vpop.f32.mrb[0].mxu0
    %v2345 = vadd.f32 0.0, %v2344
    %v2346 = vpop.f32.mrb[0].mxu0
    %v2347 = vpop.f32.mrb[0].mxu0
    %v2348 = vadd.f32 0.0, %v2347
    %v2349 = vpop.f32.mrb[0].mxu0
    %2350 = vmatprep.mubr.bf16.mxu0 0
    %2351 = vmatmul.mubr.bf16.gmra.mrb[0].mxu0 %v1186
    %v2352 = vpop.f32.mrb[0].mxu0
    %v2353 = vadd.f32 0.0, %v2352
    %v2354 = vpop.f32.mrb[0].mxu0
    %v2355 = vpop.f32.mrb[0].mxu0
    %v2356 = vpop.f32.mrb[0].mxu0
    %2357 = vdwg.mxu0
    %v2358 = vpack.c.bf16 %v2348, %v2345
    %v2359 = vpack.c.bf16 %v2353, %v2353
    %s2360 = scalar_lea.vmem [#allocation10], 112
    %v2361 = vld [vmem:[%s2360] sm:$0xf]
    %v2362 = vld [vmem:[%s2360 + $0x4] sm:$0xf]
    %v2363 = vld [vmem:[%s2360 + $0x8] sm:$0xf]
    %v2364 = vld [vmem:[%s2360 + $0xc] sm:$0xf]
    %v2369 = vunpack.c.l.b16 %v2361
    %v2370 = vunpack.c.l.b16 %v2362
    %v2371 = vunpack.c.l.b16 %v2363
    %v2372 = vunpack.c.l.b16 %v2364
    %v2373 = vpack.c.b16 %v2370, %v2369
    %v2374 = vpack.c.b16 %v2372, %v2371
    %v2378 = vsel %vm1569, %v2358, 0
    %v2381 = vsel %vm1569, %v2359, 0
    %2383 = vmatprep.subr.bf16.mxu0 0
    %2384 = vmatpush1.bf16.msra.mxu0 %v2373
    %2385 = vmatprep.subr.bf16.mxu0 0
    %2386 = vmatpush1.bf16.msra.mxu0 %v2374
    %2387 = vmatprep.subr.bf16.mxu0 0
    %2388 = vmatpush1.bf16.msra.mxu0 0
    %2389 = vmatprep.subr.bf16.mxu0 0
    %2390 = vmatpush1.bf16.msra.mxu0 0
    %2391 = vmatprep.subr.bf16.mxu0 0
    %2392 = vmatpush1.bf16.msra.mxu0 0
    %2393 = vmatprep.subr.bf16.mxu0 0
    %2394 = vmatpush1.bf16.msra.mxu0 0
    %2395 = vmatprep.subr.bf16.mxu0 0
    %2396 = vmatpush1.bf16.msra.mxu0 0
    %2397 = vmatprep.subr.bf16.mxu0 0
    %2398 = vmatpush1.bf16.msra.mxu0 0
    %2399 = vmatprep.subr.bf16.mxu0 0
    %2400 = vmatpush1.bf16.msra.mxu0 0
    %2401 = vmatprep.subr.bf16.mxu0 0
    %2402 = vmatpush1.bf16.msra.mxu0 0
    %2403 = vmatprep.subr.bf16.mxu0 0
    %2404 = vmatpush1.bf16.msra.mxu0 0
    %2405 = vmatprep.subr.bf16.mxu0 0
    %2406 = vmatpush1.bf16.msra.mxu0 0
    %2407 = vmatprep.subr.bf16.mxu0 0
    %2408 = vmatpush1.bf16.msra.mxu0 0
    %2409 = vmatprep.subr.bf16.mxu0 0
    %2410 = vmatpush1.bf16.msra.mxu0 0
    %2411 = vmatprep.subr.bf16.mxu0 0
    %2412 = vmatpush1.bf16.msra.mxu0 0
    %2413 = vmatprep.subr.bf16.mxu0 0
    %2414 = vmatpush1.bf16.msra.mxu0 0
    %2415 = vmatprep.mubr.bf16.mxu0 0
    %2416 = vmatmul.mubr.bf16.gmra.mrb[0].mxu0 %v2378
    %v2417 = vpop.f32.mrb[0].mxu0
    %v2418 = vadd.f32 0.0, %v2417
    %v2419 = vpop.f32.mrb[0].mxu0
    %v2420 = vpop.f32.mrb[0].mxu0
    %v2421 = vadd.f32 0.0, %v2420
    %v2422 = vpop.f32.mrb[0].mxu0
    %2423 = vmatprep.mubr.bf16.mxu0 0
    %2424 = vmatmul.mubr.bf16.gmra.mrb[0].mxu0 %v2381
    %v2425 = vpop.f32.mrb[0].mxu0
    %v2426 = vadd.f32 0.0, %v2425
    %v2427 = vpop.f32.mrb[0].mxu0
    %v2428 = vpop.f32.mrb[0].mxu0
    %v2429 = vpop.f32.mrb[0].mxu0
    %2430 = vdwg.mxu0
    %v2431 = vadd.f32 %v2307, %v2418
    %v2432 = vadd.f32 %v2308, %v2421
    %v2433 = vadd.f32 %v2309, %v2426
    %2434 = vmatprep.subr.bf16.mxu0 0
    %2435 = vmatpush1.bf16.msra.mxu0 %v1443
    %2436 = vmatprep.subr.bf16.mxu0 0
    %2437 = vmatpush1.bf16.msra.mxu0 %v1446
    %2438 = vmatprep.subr.bf16.mxu0 0
    %2439 = vmatpush1.bf16.msra.mxu0 0
    %2440 = vmatprep.subr.bf16.mxu0 0
    %2441 = vmatpush1.bf16.msra.mxu0 0
    %2442 = vmatprep.subr.bf16.mxu0 0
    %2443 = vmatpush1.bf16.msra.mxu0 0
    %2444 = vmatprep.subr.bf16.mxu0 0
    %2445 = vmatpush1.bf16.msra.mxu0 0
    %2446 = vmatprep.subr.bf16.mxu0 0
    %2447 = vmatpush1.bf16.msra.mxu0 0
    %2448 = vmatprep.subr.bf16.mxu0 0
    %2449 = vmatpush1.bf16.msra.mxu0 0
    %2450 = vmatprep.subr.bf16.mxu0 0
    %2451 = vmatpush1.bf16.msra.mxu0 0
    %2452 = vmatprep.subr.bf16.mxu0 0
    %2453 = vmatpush1.bf16.msra.mxu0 0
    %2454 = vmatprep.subr.bf16.mxu0 0
    %2455 = vmatpush1.bf16.msra.mxu0 0
    %2456 = vmatprep.subr.bf16.mxu0 0
    %2457 = vmatpush1.bf16.msra.mxu0 0
    %2458 = vmatprep.subr.bf16.mxu0 0
    %2459 = vmatpush1.bf16.msra.mxu0 0
    %2460 = vmatprep.subr.bf16.mxu0 0
    %2461 = vmatpush1.bf16.msra.mxu0 0
    %2462 = vmatprep.subr.bf16.mxu0 0
    %2463 = vmatpush1.bf16.msra.mxu0 0
    %2464 = vmatprep.subr.bf16.mxu0 0
    %2465 = vmatpush1.bf16.msra.mxu0 0
    %2466 = vmatprep.mubr.bf16.mxu0 0
    %2467 = vmatmul.mubr.bf16.gmra.mrb[0].mxu0 %v1313
    %v2468 = vpop.f32.mrb[0].mxu0
    %v2469 = vadd.f32 0.0, %v2468
    %v2470 = vpop.f32.mrb[0].mxu0
    %v2471 = vpop.f32.mrb[0].mxu0
    %v2472 = vadd.f32 0.0, %v2471
    %v2473 = vpop.f32.mrb[0].mxu0
    %2474 = vmatprep.mubr.bf16.mxu0 0
    %2475 = vmatmul.mubr.bf16.gmra.mrb[0].mxu0 %v1316
    %v2476 = vpop.f32.mrb[0].mxu0
    %v2477 = vadd.f32 0.0, %v2476
    %v2478 = vpop.f32.mrb[0].mxu0
    %v2479 = vpop.f32.mrb[0].mxu0
    %v2480 = vpop.f32.mrb[0].mxu0
    %2481 = vdwg.mxu0
    %v2482 = vpack.c.bf16 %v2472, %v2469
    %v2483 = vpack.c.bf16 %v2477, %v2477
    %s2484 = scalar_lea.vmem [#allocation10], 128
    %v2485 = vld [vmem:[%s2484] sm:$0xf]
    %v2486 = vld [vmem:[%s2484 + $0x4] sm:$0xf]
    %v2487 = vld [vmem:[%s2484 + $0x8] sm:$0xf]
    %v2488 = vld [vmem:[%s2484 + $0xc] sm:$0xf]
    %v2493 = vunpack.c.l.b16 %v2485
    %v2494 = vunpack.c.l.b16 %v2486
    %v2495 = vunpack.c.l.b16 %v2487
    %v2496 = vunpack.c.l.b16 %v2488
    %v2497 = vpack.c.b16 %v2494, %v2493
    %v2498 = vpack.c.b16 %v2496, %v2495
    %v2502 = vsel %vm1569, %v2482, 0
    %v2505 = vsel %vm1569, %v2483, 0
    %2507 = vmatprep.subr.bf16.mxu0 0
    %2508 = vmatpush1.bf16.msra.mxu0 %v2497
    %2509 = vmatprep.subr.bf16.mxu0 0
    %2510 = vmatpush1.bf16.msra.mxu0 %v2498
    %2511 = vmatprep.subr.bf16.mxu0 0
    %2512 = vmatpush1.bf16.msra.mxu0 0
    %2513 = vmatprep.subr.bf16.mxu0 0
    %2514 = vmatpush1.bf16.msra.mxu0 0
    %2515 = vmatprep.subr.bf16.mxu0 0
    %2516 = vmatpush1.bf16.msra.mxu0 0
    %2517 = vmatprep.subr.bf16.mxu0 0
    %2518 = vmatpush1.bf16.msra.mxu0 0
    %2519 = vmatprep.subr.bf16.mxu0 0
    %2520 = vmatpush1.bf16.msra.mxu0 0
    %2521 = vmatprep.subr.bf16.mxu0 0
    %2522 = vmatpush1.bf16.msra.mxu0 0
    %2523 = vmatprep.subr.bf16.mxu0 0
    %2524 = vmatpush1.bf16.msra.mxu0 0
    %2525 = vmatprep.subr.bf16.mxu0 0
    %2526 = vmatpush1.bf16.msra.mxu0 0
    %2527 = vmatprep.subr.bf16.mxu0 0
    %2528 = vmatpush1.bf16.msra.mxu0 0
    %2529 = vmatprep.subr.bf16.mxu0 0
    %2530 = vmatpush1.bf16.msra.mxu0 0
    %2531 = vmatprep.subr.bf16.mxu0 0
    %2532 = vmatpush1.bf16.msra.mxu0 0
    %2533 = vmatprep.subr.bf16.mxu0 0
    %2534 = vmatpush1.bf16.msra.mxu0 0
    %2535 = vmatprep.subr.bf16.mxu0 0
    %2536 = vmatpush1.bf16.msra.mxu0 0
    %2537 = vmatprep.subr.bf16.mxu0 0
    %2538 = vmatpush1.bf16.msra.mxu0 0
    %2539 = vmatprep.mubr.bf16.mxu0 0
    %2540 = vmatmul.mubr.bf16.gmra.mrb[0].mxu0 %v2502
    %v2541 = vpop.f32.mrb[0].mxu0
    %v2542 = vadd.f32 0.0, %v2541
    %v2543 = vpop.f32.mrb[0].mxu0
    %v2544 = vpop.f32.mrb[0].mxu0
    %v2545 = vadd.f32 0.0, %v2544
    %v2546 = vpop.f32.mrb[0].mxu0
    %2547 = vmatprep.mubr.bf16.mxu0 0
    %2548 = vmatmul.mubr.bf16.gmra.mrb[0].mxu0 %v2505
    %v2549 = vpop.f32.mrb[0].mxu0
    %v2550 = vadd.f32 0.0, %v2549
    %v2551 = vpop.f32.mrb[0].mxu0
    %v2552 = vpop.f32.mrb[0].mxu0
    %v2553 = vpop.f32.mrb[0].mxu0
    %2554 = vdwg.mxu0
    %v2555 = vadd.f32 %v2431, %v2542
    %v2556 = vadd.f32 %v2432, %v2545
    %v2557 = vadd.f32 %v2433, %v2550
    %v2558 = vld [vmem:[#allocation11] sm:$0x1]
    %v2560 = vlaneseq
    %v2561 = vshrl.u32 %v2560, 7
    %v2562 = vsub.s32 0, %v2561
    %v2563 = vrot.slane %v2558, %v2562
    %v2565 = vadd.f32 %v2555, %v2563
    %v2566 = vadd.f32 %v2556, %v2563
    %v2567 = vadd.f32 %v2557, %v2563
    %v2568 = vmax.f32 %v2565, 0.0
    %v2569 = vmax.f32 %v2566, 0.0
    %v2570 = vmax.f32 %v2567, 0.0
    %v2571 = vpack.c.bf16 %v2569, %v2568
    %v2572 = vpack.c.bf16 %v2570, %v2570
    %v2574 = vsel %vm277, %v2572, 0
    %2576 = vmatprep.subr.bf16.mxu0 0
    %2577 = vmatpush1.bf16.msra.mxu0 %v2571
    %2578 = vmatprep.subr.bf16.mxu0 0
    %2579 = vmatpush1.bf16.msra.mxu0 %v2574
    %2580 = vmatprep.subr.bf16.mxu0 0
    %2581 = vmatpush1.bf16.msra.mxu0 0
    %2582 = vmatprep.subr.bf16.mxu0 0
    %2583 = vmatpush1.bf16.msra.mxu0 0
    %2584 = vmatprep.subr.bf16.mxu0 0
    %2585 = vmatpush1.bf16.msra.mxu0 0
    %2586 = vmatprep.subr.bf16.mxu0 0
    %2587 = vmatpush1.bf16.msra.mxu0 0
    %2588 = vmatprep.subr.bf16.mxu0 0
    %2589 = vmatpush1.bf16.msra.mxu0 0
    %2590 = vmatprep.subr.bf16.mxu0 0
    %2591 = vmatpush1.bf16.msra.mxu0 0
    %2592 = vmatprep.subr.bf16.mxu0 0
    %2593 = vmatpush1.bf16.msra.mxu0 0
    %2594 = vmatprep.subr.bf16.mxu0 0
    %2595 = vmatpush1.bf16.msra.mxu0 0
    %2596 = vmatprep.subr.bf16.mxu0 0
    %2597 = vmatpush1.bf16.msra.mxu0 0
    %2598 = vmatprep.subr.bf16.mxu0 0
    %2599 = vmatpush1.bf16.msra.mxu0 0
    %2600 = vmatprep.subr.bf16.mxu0 0
    %2601 = vmatpush1.bf16.msra.mxu0 0
    %2602 = vmatprep.subr.bf16.mxu0 0
    %2603 = vmatpush1.bf16.msra.mxu0 0
    %2604 = vmatprep.subr.bf16.mxu0 0
    %2605 = vmatpush1.bf16.msra.mxu0 0
    %2606 = vmatprep.subr.bf16.mxu0 0
    %2607 = vmatpush1.bf16.msra.mxu0 0
    %2608 = vmatprep.mubr.bf16.mxu0 0
    %2609 = vmatmul.mubr.bf16.gmra.mrb[0].mxu0 %v272
    %v2610 = vpop.f32.mrb[0].mxu0
    %v2611 = vadd.f32 0.0, %v2610
    %v2612 = vpop.f32.mrb[0].mxu0
    %v2613 = vpop.f32.mrb[0].mxu0
    %v2614 = vadd.f32 0.0, %v2613
    %v2615 = vpop.f32.mrb[0].mxu0
    %2616 = vmatprep.mubr.bf16.mxu0 0
    %2617 = vmatmul.mubr.bf16.gmra.mrb[0].mxu0 %v275
    %v2618 = vpop.f32.mrb[0].mxu0
    %v2619 = vadd.f32 0.0, %v2618
    %v2620 = vpop.f32.mrb[0].mxu0
    %v2621 = vpop.f32.mrb[0].mxu0
    %v2622 = vpop.f32.mrb[0].mxu0
    %2623 = vdwg.mxu0
    %v2624 = vpack.c.bf16 %v2614, %v2611
    %v2625 = vpack.c.bf16 %v2619, %v2619
    %v2626 = vld [vmem:[#allocation13] sm:$0xf]
    %v2627 = vld [vmem:[#allocation13 + $0x4] sm:$0xf]
    %v2628 = vld [vmem:[#allocation13 + $0x8] sm:$0xf]
    %v2629 = vld [vmem:[#allocation13 + $0xc] sm:$0xf]
    %v2630 = vld [vmem:[#allocation13 + $0x10] sm:$0xf]
    %v2631 = vld [vmem:[#allocation13 + $0x14] sm:$0xf]
    %v2632 = vld [vmem:[#allocation13 + $0x18] sm:$0xf]
    %v2633 = vld [vmem:[#allocation13 + $0x1c] sm:$0xf]
    %2634 = vmatprep.subr.bf16.mxu0 0
    %2635 = vmatpush1.bf16.msra.mxu0 %v2571
    %2636 = vmatprep.subr.bf16.mxu0 0
    %2637 = vmatpush1.bf16.msra.mxu0 %v2574
    %2638 = vmatprep.subr.bf16.mxu0 0
    %2639 = vmatpush1.bf16.msra.mxu0 0
    %2640 = vmatprep.subr.bf16.mxu0 0
    %2641 = vmatpush1.bf16.msra.mxu0 0
    %2642 = vmatprep.subr.bf16.mxu0 0
    %2643 = vmatpush1.bf16.msra.mxu0 0
    %2644 = vmatprep.subr.bf16.mxu0 0
    %2645 = vmatpush1.bf16.msra.mxu0 0
    %2646 = vmatprep.subr.bf16.mxu0 0
    %2647 = vmatpush1.bf16.msra.mxu0 0
    %2648 = vmatprep.subr.bf16.mxu0 0
    %2649 = vmatpush1.bf16.msra.mxu0 0
    %2650 = vmatprep.subr.bf16.mxu0 0
    %2651 = vmatpush1.bf16.msra.mxu0 0
    %2652 = vmatprep.subr.bf16.mxu0 0
    %2653 = vmatpush1.bf16.msra.mxu0 0
    %2654 = vmatprep.subr.bf16.mxu0 0
    %2655 = vmatpush1.bf16.msra.mxu0 0
    %2656 = vmatprep.subr.bf16.mxu0 0
    %2657 = vmatpush1.bf16.msra.mxu0 0
    %2658 = vmatprep.subr.bf16.mxu0 0
    %2659 = vmatpush1.bf16.msra.mxu0 0
    %2660 = vmatprep.subr.bf16.mxu0 0
    %2661 = vmatpush1.bf16.msra.mxu0 0
    %2662 = vmatprep.subr.bf16.mxu0 0
    %2663 = vmatpush1.bf16.msra.mxu0 0
    %2664 = vmatprep.subr.bf16.mxu0 0
    %2665 = vmatpush1.bf16.msra.mxu0 0
    %2666 = vmatprep.mubr.bf16.mxu0 0
    %2667 = vmatmul.mubr.bf16.gmra.mrb[0].mxu0 %v345
    %v2668 = vpop.f32.mrb[0].mxu0
    %v2669 = vadd.f32 0.0, %v2668
    %v2670 = vpop.f32.mrb[0].mxu0
    %v2671 = vpop.f32.mrb[0].mxu0
    %v2672 = vadd.f32 0.0, %v2671
    %v2673 = vpop.f32.mrb[0].mxu0
    %2674 = vmatprep.mubr.bf16.mxu0 0
    %2675 = vmatmul.mubr.bf16.gmra.mrb[0].mxu0 %v348
    %v2676 = vpop.f32.mrb[0].mxu0
    %v2677 = vadd.f32 0.0, %v2676
    %v2678 = vpop.f32.mrb[0].mxu0
    %v2679 = vpop.f32.mrb[0].mxu0
    %v2680 = vpop.f32.mrb[0].mxu0
    %2681 = vdwg.mxu0
    %v2682 = vpack.c.bf16 %v2672, %v2669
    %v2683 = vpack.c.bf16 %v2677, %v2677
    %s2684 = scalar_lea.vmem [#allocation13], 32
    %v2685 = vld [vmem:[%s2684] sm:$0xf]
    %v2686 = vld [vmem:[%s2684 + $0x4] sm:$0xf]
    %v2687 = vld [vmem:[%s2684 + $0x8] sm:$0xf]
    %v2688 = vld [vmem:[%s2684 + $0xc] sm:$0xf]
    %v2689 = vld [vmem:[%s2684 + $0x10] sm:$0xf]
    %v2690 = vld [vmem:[%s2684 + $0x14] sm:$0xf]
    %v2691 = vld [vmem:[%s2684 + $0x18] sm:$0xf]
    %v2692 = vld [vmem:[%s2684 + $0x1c] sm:$0xf]
    %v2701 = vunpack.c.l.b16 %v2685
    %v2702 = vunpack.c.l.b16 %v2686
    %v2703 = vunpack.c.l.b16 %v2687
    %v2704 = vunpack.c.l.b16 %v2688
    %v2705 = vunpack.c.l.b16 %v2689
    %v2706 = vunpack.c.l.b16 %v2690
    %v2707 = vunpack.c.l.b16 %v2691
    %v2708 = vunpack.c.l.b16 %v2692
    %v2709 = vpack.c.b16 %v2702, %v2701
    %v2710 = vpack.c.b16 %v2704, %v2703
    %v2711 = vpack.c.b16 %v2706, %v2705
    %v2712 = vpack.c.b16 %v2708, %v2707
    %vm2717 = vcmask 523264
    %v2719 = vsel %vm2717, %v2682, 0
    %v2722 = vsel %vm2717, %v2683, 0
    %2724 = vmatprep.subr.bf16.mxu0 0
    %2725 = vmatpush1.bf16.msra.mxu0 %v2709
    %2726 = vmatprep.subr.bf16.mxu0 0
    %2727 = vmatpush1.bf16.msra.mxu0 %v2710
    %2728 = vmatprep.subr.bf16.mxu0 0
    %2729 = vmatpush1.bf16.msra.mxu0 %v2711
    %2730 = vmatprep.subr.bf16.mxu0 0
    %2731 = vmatpush1.bf16.msra.mxu0 %v2712
    %2732 = vmatprep.subr.bf16.mxu0 0
    %2733 = vmatpush1.bf16.msra.mxu0 0
    %2734 = vmatprep.subr.bf16.mxu0 0
    %2735 = vmatpush1.bf16.msra.mxu0 0
    %2736 = vmatprep.subr.bf16.mxu0 0
    %2737 = vmatpush1.bf16.msra.mxu0 0
    %2738 = vmatprep.subr.bf16.mxu0 0
    %2739 = vmatpush1.bf16.msra.mxu0 0
    %2740 = vmatprep.subr.bf16.mxu0 0
    %2741 = vmatpush1.bf16.msra.mxu0 0
    %2742 = vmatprep.subr.bf16.mxu0 0
    %2743 = vmatpush1.bf16.msra.mxu0 0
    %2744 = vmatprep.subr.bf16.mxu0 0
    %2745 = vmatpush1.bf16.msra.mxu0 0
    %2746 = vmatprep.subr.bf16.mxu0 0
    %2747 = vmatpush1.bf16.msra.mxu0 0
    %2748 = vmatprep.subr.bf16.mxu0 0
    %2749 = vmatpush1.bf16.msra.mxu0 0
    %2750 = vmatprep.subr.bf16.mxu0 0
    %2751 = vmatpush1.bf16.msra.mxu0 0
    %2752 = vmatprep.subr.bf16.mxu0 0
    %2753 = vmatpush1.bf16.msra.mxu0 0
    %2754 = vmatprep.subr.bf16.mxu0 0
    %2755 = vmatpush1.bf16.msra.mxu0 0
    %2756 = vmatprep.mubr.bf16.mxu0 0
    %2757 = vmatmul.mubr.bf16.gmra.mrb[0].mxu0 %v2719
    %v2758 = vpop.f32.mrb[0].mxu0
    %v2759 = vadd.f32 0.0, %v2758
    %v2760 = vpop.f32.mrb[0].mxu0
    %v2761 = vpop.f32.mrb[0].mxu0
    %v2762 = vadd.f32 0.0, %v2761
    %v2763 = vpop.f32.mrb[0].mxu0
    %2764 = vmatprep.mubr.bf16.mxu0 0
    %2765 = vmatmul.mubr.bf16.gmra.mrb[0].mxu0 %v2722
    %v2766 = vpop.f32.mrb[0].mxu0
    %v2767 = vadd.f32 0.0, %v2766
    %v2768 = vpop.f32.mrb[0].mxu0
    %v2769 = vpop.f32.mrb[0].mxu0
    %v2770 = vpop.f32.mrb[0].mxu0
    %2771 = vdwg.mxu0
    %v2780 = vunpack.c.l.b16 %v2626
    %v2781 = vunpack.c.l.b16 %v2627
    %v2782 = vunpack.c.l.b16 %v2628
    %v2783 = vunpack.c.l.b16 %v2629
    %v2784 = vunpack.c.l.b16 %v2630
    %v2785 = vunpack.c.l.b16 %v2631
    %v2786 = vunpack.c.l.b16 %v2632
    %v2787 = vunpack.c.l.b16 %v2633
    %v2788 = vpack.c.b16 %v2781, %v2780
    %v2789 = vpack.c.b16 %v2783, %v2782
    %v2790 = vpack.c.b16 %v2785, %v2784
    %v2791 = vpack.c.b16 %v2787, %v2786
    %v2797 = vsel %vm2717, %v2624, 0
    %v2800 = vsel %vm2717, %v2625, 0
    %2802 = vmatprep.subr.bf16.mxu0 0
    %2803 = vmatpush1.bf16.msra.mxu0 %v2788
    %2804 = vmatprep.subr.bf16.mxu0 0
    %2805 = vmatpush1.bf16.msra.mxu0 %v2789
    %2806 = vmatprep.subr.bf16.mxu0 0
    %2807 = vmatpush1.bf16.msra.mxu0 %v2790
    %2808 = vmatprep.subr.bf16.mxu0 0
    %2809 = vmatpush1.bf16.msra.mxu0 %v2791
    %2810 = vmatprep.subr.bf16.mxu0 0
    %2811 = vmatpush1.bf16.msra.mxu0 0
    %2812 = vmatprep.subr.bf16.mxu0 0
    %2813 = vmatpush1.bf16.msra.mxu0 0
    %2814 = vmatprep.subr.bf16.mxu0 0
    %2815 = vmatpush1.bf16.msra.mxu0 0
    %2816 = vmatprep.subr.bf16.mxu0 0
    %2817 = vmatpush1.bf16.msra.mxu0 0
    %2818 = vmatprep.subr.bf16.mxu0 0
    %2819 = vmatpush1.bf16.msra.mxu0 0
    %2820 = vmatprep.subr.bf16.mxu0 0
    %2821 = vmatpush1.bf16.msra.mxu0 0
    %2822 = vmatprep.subr.bf16.mxu0 0
    %2823 = vmatpush1.bf16.msra.mxu0 0
    %2824 = vmatprep.subr.bf16.mxu0 0
    %2825 = vmatpush1.bf16.msra.mxu0 0
    %2826 = vmatprep.subr.bf16.mxu0 0
    %2827 = vmatpush1.bf16.msra.mxu0 0
    %2828 = vmatprep.subr.bf16.mxu0 0
    %2829 = vmatpush1.bf16.msra.mxu0 0
    %2830 = vmatprep.subr.bf16.mxu0 0
    %2831 = vmatpush1.bf16.msra.mxu0 0
    %2832 = vmatprep.subr.bf16.mxu0 0
    %2833 = vmatpush1.bf16.msra.mxu0 0
    %2834 = vmatprep.mubr.bf16.mxu0 0
    %2835 = vmatmul.mubr.bf16.gmra.mrb[0].mxu0 %v2797
    %v2836 = vpop.f32.mrb[0].mxu0
    %v2837 = vadd.f32 %v2759, %v2836
    %v2838 = vpop.f32.mrb[0].mxu0
    %v2839 = vpop.f32.mrb[0].mxu0
    %v2840 = vadd.f32 %v2762, %v2839
    %v2841 = vpop.f32.mrb[0].mxu0
    %2842 = vmatprep.mubr.bf16.mxu0 0
    %2843 = vmatmul.mubr.bf16.gmra.mrb[0].mxu0 %v2800
    %v2844 = vpop.f32.mrb[0].mxu0
    %v2845 = vadd.f32 %v2767, %v2844
    %v2846 = vpop.f32.mrb[0].mxu0
    %v2847 = vpop.f32.mrb[0].mxu0
    %v2848 = vpop.f32.mrb[0].mxu0
    %2849 = vdwg.mxu0
    %2850 = vmatprep.subr.bf16.mxu0 0
    %2851 = vmatpush1.bf16.msra.mxu0 %v2571
    %2852 = vmatprep.subr.bf16.mxu0 0
    %2853 = vmatpush1.bf16.msra.mxu0 %v2574
    %2854 = vmatprep.subr.bf16.mxu0 0
    %2855 = vmatpush1.bf16.msra.mxu0 0
    %2856 = vmatprep.subr.bf16.mxu0 0
    %2857 = vmatpush1.bf16.msra.mxu0 0
    %2858 = vmatprep.subr.bf16.mxu0 0
    %2859 = vmatpush1.bf16.msra.mxu0 0
    %2860 = vmatprep.subr.bf16.mxu0 0
    %2861 = vmatpush1.bf16.msra.mxu0 0
    %2862 = vmatprep.subr.bf16.mxu0 0
    %2863 = vmatpush1.bf16.msra.mxu0 0
    %2864 = vmatprep.subr.bf16.mxu0 0
    %2865 = vmatpush1.bf16.msra.mxu0 0
    %2866 = vmatprep.subr.bf16.mxu0 0
    %2867 = vmatpush1.bf16.msra.mxu0 0
    %2868 = vmatprep.subr.bf16.mxu0 0
    %2869 = vmatpush1.bf16.msra.mxu0 0
    %2870 = vmatprep.subr.bf16.mxu0 0
    %2871 = vmatpush1.bf16.msra.mxu0 0
    %2872 = vmatprep.subr.bf16.mxu0 0
    %2873 = vmatpush1.bf16.msra.mxu0 0
    %2874 = vmatprep.subr.bf16.mxu0 0
    %2875 = vmatpush1.bf16.msra.mxu0 0
    %2876 = vmatprep.subr.bf16.mxu0 0
    %2877 = vmatpush1.bf16.msra.mxu0 0
    %2878 = vmatprep.subr.bf16.mxu0 0
    %2879 = vmatpush1.bf16.msra.mxu0 0
    %2880 = vmatprep.subr.bf16.mxu0 0
    %2881 = vmatpush1.bf16.msra.mxu0 0
    %2882 = vmatprep.mubr.bf16.mxu0 0
    %2883 = vmatmul.mubr.bf16.gmra.mrb[0].mxu0 %v533
    %v2884 = vpop.f32.mrb[0].mxu0
    %v2885 = vadd.f32 0.0, %v2884
    %v2886 = vpop.f32.mrb[0].mxu0
    %v2887 = vpop.f32.mrb[0].mxu0
    %v2888 = vadd.f32 0.0, %v2887
    %v2889 = vpop.f32.mrb[0].mxu0
    %2890 = vmatprep.mubr.bf16.mxu0 0
    %2891 = vmatmul.mubr.bf16.gmra.mrb[0].mxu0 %v536
    %v2892 = vpop.f32.mrb[0].mxu0
    %v2893 = vadd.f32 0.0, %v2892
    %v2894 = vpop.f32.mrb[0].mxu0
    %v2895 = vpop.f32.mrb[0].mxu0
    %v2896 = vpop.f32.mrb[0].mxu0
    %2897 = vdwg.mxu0
    %v2898 = vpack.c.bf16 %v2888, %v2885
    %v2899 = vpack.c.bf16 %v2893, %v2893
    %s2900 = scalar_lea.vmem [#allocation13], 64
    %v2901 = vld [vmem:[%s2900] sm:$0xf]
    %v2902 = vld [vmem:[%s2900 + $0x4] sm:$0xf]
    %v2903 = vld [vmem:[%s2900 + $0x8] sm:$0xf]
    %v2904 = vld [vmem:[%s2900 + $0xc] sm:$0xf]
    %v2905 = vld [vmem:[%s2900 + $0x10] sm:$0xf]
    %v2906 = vld [vmem:[%s2900 + $0x14] sm:$0xf]
    %v2907 = vld [vmem:[%s2900 + $0x18] sm:$0xf]
    %v2908 = vld [vmem:[%s2900 + $0x1c] sm:$0xf]
    %v2917 = vunpack.c.l.b16 %v2901
    %v2918 = vunpack.c.l.b16 %v2902
    %v2919 = vunpack.c.l.b16 %v2903
    %v2920 = vunpack.c.l.b16 %v2904
    %v2921 = vunpack.c.l.b16 %v2905
    %v2922 = vunpack.c.l.b16 %v2906
    %v2923 = vunpack.c.l.b16 %v2907
    %v2924 = vunpack.c.l.b16 %v2908
    %v2925 = vpack.c.b16 %v2918, %v2917
    %v2926 = vpack.c.b16 %v2920, %v2919
    %v2927 = vpack.c.b16 %v2922, %v2921
    %v2928 = vpack.c.b16 %v2924, %v2923
    %v2934 = vsel %vm2717, %v2898, 0
    %v2937 = vsel %vm2717, %v2899, 0
    %2939 = vmatprep.subr.bf16.mxu0 0
    %2940 = vmatpush1.bf16.msra.mxu0 %v2925
    %2941 = vmatprep.subr.bf16.mxu0 0
    %2942 = vmatpush1.bf16.msra.mxu0 %v2926
    %2943 = vmatprep.subr.bf16.mxu0 0
    %2944 = vmatpush1.bf16.msra.mxu0 %v2927
    %2945 = vmatprep.subr.bf16.mxu0 0
    %2946 = vmatpush1.bf16.msra.mxu0 %v2928
    %2947 = vmatprep.subr.bf16.mxu0 0
    %2948 = vmatpush1.bf16.msra.mxu0 0
    %2949 = vmatprep.subr.bf16.mxu0 0
    %2950 = vmatpush1.bf16.msra.mxu0 0
    %2951 = vmatprep.subr.bf16.mxu0 0
    %2952 = vmatpush1.bf16.msra.mxu0 0
    %2953 = vmatprep.subr.bf16.mxu0 0
    %2954 = vmatpush1.bf16.msra.mxu0 0
    %2955 = vmatprep.subr.bf16.mxu0 0
    %2956 = vmatpush1.bf16.msra.mxu0 0
    %2957 = vmatprep.subr.bf16.mxu0 0
    %2958 = vmatpush1.bf16.msra.mxu0 0
    %2959 = vmatprep.subr.bf16.mxu0 0
    %2960 = vmatpush1.bf16.msra.mxu0 0
    %2961 = vmatprep.subr.bf16.mxu0 0
    %2962 = vmatpush1.bf16.msra.mxu0 0
    %2963 = vmatprep.subr.bf16.mxu0 0
    %2964 = vmatpush1.bf16.msra.mxu0 0
    %2965 = vmatprep.subr.bf16.mxu0 0
    %2966 = vmatpush1.bf16.msra.mxu0 0
    %2967 = vmatprep.subr.bf16.mxu0 0
    %2968 = vmatpush1.bf16.msra.mxu0 0
    %2969 = vmatprep.subr.bf16.mxu0 0
    %2970 = vmatpush1.bf16.msra.mxu0 0
    %2971 = vmatprep.mubr.bf16.mxu0 0
    %2972 = vmatmul.mubr.bf16.gmra.mrb[0].mxu0 %v2934
    %v2973 = vpop.f32.mrb[0].mxu0
    %v2974 = vadd.f32 0.0, %v2973
    %v2975 = vpop.f32.mrb[0].mxu0
    %v2976 = vpop.f32.mrb[0].mxu0
    %v2977 = vadd.f32 0.0, %v2976
    %v2978 = vpop.f32.mrb[0].mxu0
    %2979 = vmatprep.mubr.bf16.mxu0 0
    %2980 = vmatmul.mubr.bf16.gmra.mrb[0].mxu0 %v2937
    %v2981 = vpop.f32.mrb[0].mxu0
    %v2982 = vadd.f32 0.0, %v2981
    %v2983 = vpop.f32.mrb[0].mxu0
    %v2984 = vpop.f32.mrb[0].mxu0
    %v2985 = vpop.f32.mrb[0].mxu0
    %2986 = vdwg.mxu0
    %v2987 = vadd.f32 %v2837, %v2974
    %v2988 = vadd.f32 %v2840, %v2977
    %v2989 = vadd.f32 %v2845, %v2982
    %2990 = vmatprep.subr.bf16.mxu0 0
    %2991 = vmatpush1.bf16.msra.mxu0 %v2571
    %2992 = vmatprep.subr.bf16.mxu0 0
    %2993 = vmatpush1.bf16.msra.mxu0 %v2574
    %2994 = vmatprep.subr.bf16.mxu0 0
    %2995 = vmatpush1.bf16.msra.mxu0 0
    %2996 = vmatprep.subr.bf16.mxu0 0
    %2997 = vmatpush1.bf16.msra.mxu0 0
    %2998 = vmatprep.subr.bf16.mxu0 0
    %2999 = vmatpush1.bf16.msra.mxu0 0
    %3000 = vmatprep.subr.bf16.mxu0 0
    %3001 = vmatpush1.bf16.msra.mxu0 0
    %3002 = vmatprep.subr.bf16.mxu0 0
    %3003 = vmatpush1.bf16.msra.mxu0 0
    %3004 = vmatprep.subr.bf16.mxu0 0
    %3005 = vmatpush1.bf16.msra.mxu0 0
    %3006 = vmatprep.subr.bf16.mxu0 0
    %3007 = vmatpush1.bf16.msra.mxu0 0
    %3008 = vmatprep.subr.bf16.mxu0 0
    %3009 = vmatpush1.bf16.msra.mxu0 0
    %3010 = vmatprep.subr.bf16.mxu0 0
    %3011 = vmatpush1.bf16.msra.mxu0 0
    %3012 = vmatprep.subr.bf16.mxu0 0
    %3013 = vmatpush1.bf16.msra.mxu0 0
    %3014 = vmatprep.subr.bf16.mxu0 0
    %3015 = vmatpush1.bf16.msra.mxu0 0
    %3016 = vmatprep.subr.bf16.mxu0 0
    %3017 = vmatpush1.bf16.msra.mxu0 0
    %3018 = vmatprep.subr.bf16.mxu0 0
    %3019 = vmatpush1.bf16.msra.mxu0 0
    %3020 = vmatprep.subr.bf16.mxu0 0
    %3021 = vmatpush1.bf16.msra.mxu0 0
    %3022 = vmatprep.mubr.bf16.mxu0 0
    %3023 = vmatmul.mubr.bf16.gmra.mrb[0].mxu0 %v663
    %v3024 = vpop.f32.mrb[0].mxu0
    %v3025 = vadd.f32 0.0, %v3024
    %v3026 = vpop.f32.mrb[0].mxu0
    %v3027 = vpop.f32.mrb[0].mxu0
    %v3028 = vadd.f32 0.0, %v3027
    %v3029 = vpop.f32.mrb[0].mxu0
    %3030 = vmatprep.mubr.bf16.mxu0 0
    %3031 = vmatmul.mubr.bf16.gmra.mrb[0].mxu0 %v666
    %v3032 = vpop.f32.mrb[0].mxu0
    %v3033 = vadd.f32 0.0, %v3032
    %v3034 = vpop.f32.mrb[0].mxu0
    %v3035 = vpop.f32.mrb[0].mxu0
    %v3036 = vpop.f32.mrb[0].mxu0
    %3037 = vdwg.mxu0
    %v3038 = vpack.c.bf16 %v3028, %v3025
    %v3039 = vpack.c.bf16 %v3033, %v3033
    %s3040 = scalar_lea.vmem [#allocation13], 96
    %v3041 = vld [vmem:[%s3040] sm:$0xf]
    %v3042 = vld [vmem:[%s3040 + $0x4] sm:$0xf]
    %v3043 = vld [vmem:[%s3040 + $0x8] sm:$0xf]
    %v3044 = vld [vmem:[%s3040 + $0xc] sm:$0xf]
    %v3045 = vld [vmem:[%s3040 + $0x10] sm:$0xf]
    %v3046 = vld [vmem:[%s3040 + $0x14] sm:$0xf]
    %v3047 = vld [vmem:[%s3040 + $0x18] sm:$0xf]
    %v3048 = vld [vmem:[%s3040 + $0x1c] sm:$0xf]
    %v3057 = vunpack.c.l.b16 %v3041
    %v3058 = vunpack.c.l.b16 %v3042
    %v3059 = vunpack.c.l.b16 %v3043
    %v3060 = vunpack.c.l.b16 %v3044
    %v3061 = vunpack.c.l.b16 %v3045
    %v3062 = vunpack.c.l.b16 %v3046
    %v3063 = vunpack.c.l.b16 %v3047
    %v3064 = vunpack.c.l.b16 %v3048
    %v3065 = vpack.c.b16 %v3058, %v3057
    %v3066 = vpack.c.b16 %v3060, %v3059
    %v3067 = vpack.c.b16 %v3062, %v3061
    %v3068 = vpack.c.b16 %v3064, %v3063
    %v3074 = vsel %vm2717, %v3038, 0
    %v3077 = vsel %vm2717, %v3039, 0
    %3079 = vmatprep.subr.bf16.mxu0 0
    %3080 = vmatpush1.bf16.msra.mxu0 %v3065
    %3081 = vmatprep.subr.bf16.mxu0 0
    %3082 = vmatpush1.bf16.msra.mxu0 %v3066
    %3083 = vmatprep.subr.bf16.mxu0 0
    %3084 = vmatpush1.bf16.msra.mxu0 %v3067
    %3085 = vmatprep.subr.bf16.mxu0 0
    %3086 = vmatpush1.bf16.msra.mxu0 %v3068
    %3087 = vmatprep.subr.bf16.mxu0 0
    %3088 = vmatpush1.bf16.msra.mxu0 0
    %3089 = vmatprep.subr.bf16.mxu0 0
    %3090 = vmatpush1.bf16.msra.mxu0 0
    %3091 = vmatprep.subr.bf16.mxu0 0
    %3092 = vmatpush1.bf16.msra.mxu0 0
    %3093 = vmatprep.subr.bf16.mxu0 0
    %3094 = vmatpush1.bf16.msra.mxu0 0
    %3095 = vmatprep.subr.bf16.mxu0 0
    %3096 = vmatpush1.bf16.msra.mxu0 0
    %3097 = vmatprep.subr.bf16.mxu0 0
    %3098 = vmatpush1.bf16.msra.mxu0 0
    %3099 = vmatprep.subr.bf16.mxu0 0
    %3100 = vmatpush1.bf16.msra.mxu0 0
    %3101 = vmatprep.subr.bf16.mxu0 0
    %3102 = vmatpush1.bf16.msra.mxu0 0
    %3103 = vmatprep.subr.bf16.mxu0 0
    %3104 = vmatpush1.bf16.msra.mxu0 0
    %3105 = vmatprep.subr.bf16.mxu0 0
    %3106 = vmatpush1.bf16.msra.mxu0 0
    %3107 = vmatprep.subr.bf16.mxu0 0
    %3108 = vmatpush1.bf16.msra.mxu0 0
    %3109 = vmatprep.subr.bf16.mxu0 0
    %3110 = vmatpush1.bf16.msra.mxu0 0
    %3111 = vmatprep.mubr.bf16.mxu0 0
    %3112 = vmatmul.mubr.bf16.gmra.mrb[0].mxu0 %v3074
    %v3113 = vpop.f32.mrb[0].mxu0
    %v3114 = vadd.f32 0.0, %v3113
    %v3115 = vpop.f32.mrb[0].mxu0
    %v3116 = vpop.f32.mrb[0].mxu0
    %v3117 = vadd.f32 0.0, %v3116
    %v3118 = vpop.f32.mrb[0].mxu0
    %3119 = vmatprep.mubr.bf16.mxu0 0
    %3120 = vmatmul.mubr.bf16.gmra.mrb[0].mxu0 %v3077
    %v3121 = vpop.f32.mrb[0].mxu0
    %v3122 = vadd.f32 0.0, %v3121
    %v3123 = vpop.f32.mrb[0].mxu0
    %v3124 = vpop.f32.mrb[0].mxu0
    %v3125 = vpop.f32.mrb[0].mxu0
    %3126 = vdwg.mxu0
    %v3127 = vadd.f32 %v2987, %v3114
    %v3128 = vadd.f32 %v2988, %v3117
    %v3129 = vadd.f32 %v2989, %v3122
    %3130 = vmatprep.subr.bf16.mxu0 0
    %3131 = vmatpush1.bf16.msra.mxu0 %v2571
    %3132 = vmatprep.subr.bf16.mxu0 0
    %3133 = vmatpush1.bf16.msra.mxu0 %v2574
    %3134 = vmatprep.subr.bf16.mxu0 0
    %3135 = vmatpush1.bf16.msra.mxu0 0
    %3136 = vmatprep.subr.bf16.mxu0 0
    %3137 = vmatpush1.bf16.msra.mxu0 0
    %3138 = vmatprep.subr.bf16.mxu0 0
    %3139 = vmatpush1.bf16.msra.mxu0 0
    %3140 = vmatprep.subr.bf16.mxu0 0
    %3141 = vmatpush1.bf16.msra.mxu0 0
    %3142 = vmatprep.subr.bf16.mxu0 0
    %3143 = vmatpush1.bf16.msra.mxu0 0
    %3144 = vmatprep.subr.bf16.mxu0 0
    %3145 = vmatpush1.bf16.msra.mxu0 0
    %3146 = vmatprep.subr.bf16.mxu0 0
    %3147 = vmatpush1.bf16.msra.mxu0 0
    %3148 = vmatprep.subr.bf16.mxu0 0
    %3149 = vmatpush1.bf16.msra.mxu0 0
    %3150 = vmatprep.subr.bf16.mxu0 0
    %3151 = vmatpush1.bf16.msra.mxu0 0
    %3152 = vmatprep.subr.bf16.mxu0 0
    %3153 = vmatpush1.bf16.msra.mxu0 0
    %3154 = vmatprep.subr.bf16.mxu0 0
    %3155 = vmatpush1.bf16.msra.mxu0 0
    %3156 = vmatprep.subr.bf16.mxu0 0
    %3157 = vmatpush1.bf16.msra.mxu0 0
    %3158 = vmatprep.subr.bf16.mxu0 0
    %3159 = vmatpush1.bf16.msra.mxu0 0
    %3160 = vmatprep.subr.bf16.mxu0 0
    %3161 = vmatpush1.bf16.msra.mxu0 0
    %3162 = vmatprep.mubr.bf16.mxu0 0
    %3163 = vmatmul.mubr.bf16.gmra.mrb[0].mxu0 %v793
    %v3164 = vpop.f32.mrb[0].mxu0
    %v3165 = vadd.f32 0.0, %v3164
    %v3166 = vpop.f32.mrb[0].mxu0
    %v3167 = vpop.f32.mrb[0].mxu0
    %v3168 = vadd.f32 0.0, %v3167
    %v3169 = vpop.f32.mrb[0].mxu0
    %3170 = vmatprep.mubr.bf16.mxu0 0
    %3171 = vmatmul.mubr.bf16.gmra.mrb[0].mxu0 %v796
    %v3172 = vpop.f32.mrb[0].mxu0
    %v3173 = vadd.f32 0.0, %v3172
    %v3174 = vpop.f32.mrb[0].mxu0
    %v3175 = vpop.f32.mrb[0].mxu0
    %v3176 = vpop.f32.mrb[0].mxu0
    %3177 = vdwg.mxu0
    %v3178 = vpack.c.bf16 %v3168, %v3165
    %v3179 = vpack.c.bf16 %v3173, %v3173
    %s3180 = scalar_lea.vmem [#allocation13], 128
    %v3181 = vld [vmem:[%s3180] sm:$0xf]
    %v3182 = vld [vmem:[%s3180 + $0x4] sm:$0xf]
    %v3183 = vld [vmem:[%s3180 + $0x8] sm:$0xf]
    %v3184 = vld [vmem:[%s3180 + $0xc] sm:$0xf]
    %v3185 = vld [vmem:[%s3180 + $0x10] sm:$0xf]
    %v3186 = vld [vmem:[%s3180 + $0x14] sm:$0xf]
    %v3187 = vld [vmem:[%s3180 + $0x18] sm:$0xf]
    %v3188 = vld [vmem:[%s3180 + $0x1c] sm:$0xf]
    %v3197 = vunpack.c.l.b16 %v3181
    %v3198 = vunpack.c.l.b16 %v3182
    %v3199 = vunpack.c.l.b16 %v3183
    %v3200 = vunpack.c.l.b16 %v3184
    %v3201 = vunpack.c.l.b16 %v3185
    %v3202 = vunpack.c.l.b16 %v3186
    %v3203 = vunpack.c.l.b16 %v3187
    %v3204 = vunpack.c.l.b16 %v3188
    %v3205 = vpack.c.b16 %v3198, %v3197
    %v3206 = vpack.c.b16 %v3200, %v3199
    %v3207 = vpack.c.b16 %v3202, %v3201
    %v3208 = vpack.c.b16 %v3204, %v3203
    %v3214 = vsel %vm2717, %v3178, 0
    %v3217 = vsel %vm2717, %v3179, 0
    %3219 = vmatprep.subr.bf16.mxu0 0
    %3220 = vmatpush1.bf16.msra.mxu0 %v3205
    %3221 = vmatprep.subr.bf16.mxu0 0
    %3222 = vmatpush1.bf16.msra.mxu0 %v3206
    %3223 = vmatprep.subr.bf16.mxu0 0
    %3224 = vmatpush1.bf16.msra.mxu0 %v3207
    %3225 = vmatprep.subr.bf16.mxu0 0
    %3226 = vmatpush1.bf16.msra.mxu0 %v3208
    %3227 = vmatprep.subr.bf16.mxu0 0
    %3228 = vmatpush1.bf16.msra.mxu0 0
    %3229 = vmatprep.subr.bf16.mxu0 0
    %3230 = vmatpush1.bf16.msra.mxu0 0
    %3231 = vmatprep.subr.bf16.mxu0 0
    %3232 = vmatpush1.bf16.msra.mxu0 0
    %3233 = vmatprep.subr.bf16.mxu0 0
    %3234 = vmatpush1.bf16.msra.mxu0 0
    %3235 = vmatprep.subr.bf16.mxu0 0
    %3236 = vmatpush1.bf16.msra.mxu0 0
    %3237 = vmatprep.subr.bf16.mxu0 0
    %3238 = vmatpush1.bf16.msra.mxu0 0
    %3239 = vmatprep.subr.bf16.mxu0 0
    %3240 = vmatpush1.bf16.msra.mxu0 0
    %3241 = vmatprep.subr.bf16.mxu0 0
    %3242 = vmatpush1.bf16.msra.mxu0 0
    %3243 = vmatprep.subr.bf16.mxu0 0
    %3244 = vmatpush1.bf16.msra.mxu0 0
    %3245 = vmatprep.subr.bf16.mxu0 0
    %3246 = vmatpush1.bf16.msra.mxu0 0
    %3247 = vmatprep.subr.bf16.mxu0 0
    %3248 = vmatpush1.bf16.msra.mxu0 0
    %3249 = vmatprep.subr.bf16.mxu0 0
    %3250 = vmatpush1.bf16.msra.mxu0 0
    %3251 = vmatprep.mubr.bf16.mxu0 0
    %3252 = vmatmul.mubr.bf16.gmra.mrb[0].mxu0 %v3214
    %v3253 = vpop.f32.mrb[0].mxu0
    %v3254 = vadd.f32 0.0, %v3253
    %v3255 = vpop.f32.mrb[0].mxu0
    %v3256 = vpop.f32.mrb[0].mxu0
    %v3257 = vadd.f32 0.0, %v3256
    %v3258 = vpop.f32.mrb[0].mxu0
    %3259 = vmatprep.mubr.bf16.mxu0 0
    %3260 = vmatmul.mubr.bf16.gmra.mrb[0].mxu0 %v3217
    %v3261 = vpop.f32.mrb[0].mxu0
    %v3262 = vadd.f32 0.0, %v3261
    %v3263 = vpop.f32.mrb[0].mxu0
    %v3264 = vpop.f32.mrb[0].mxu0
    %v3265 = vpop.f32.mrb[0].mxu0
    %3266 = vdwg.mxu0
    %v3267 = vadd.f32 %v3127, %v3254
    %v3268 = vadd.f32 %v3128, %v3257
    %v3269 = vadd.f32 %v3129, %v3262
    %3270 = vmatprep.subr.bf16.mxu0 0
    %3271 = vmatpush1.bf16.msra.mxu0 %v2571
    %3272 = vmatprep.subr.bf16.mxu0 0
    %3273 = vmatpush1.bf16.msra.mxu0 %v2574
    %3274 = vmatprep.subr.bf16.mxu0 0
    %3275 = vmatpush1.bf16.msra.mxu0 0
    %3276 = vmatprep.subr.bf16.mxu0 0
    %3277 = vmatpush1.bf16.msra.mxu0 0
    %3278 = vmatprep.subr.bf16.mxu0 0
    %3279 = vmatpush1.bf16.msra.mxu0 0
    %3280 = vmatprep.subr.bf16.mxu0 0
    %3281 = vmatpush1.bf16.msra.mxu0 0
    %3282 = vmatprep.subr.bf16.mxu0 0
    %3283 = vmatpush1.bf16.msra.mxu0 0
    %3284 = vmatprep.subr.bf16.mxu0 0
    %3285 = vmatpush1.bf16.msra.mxu0 0
    %3286 = vmatprep.subr.bf16.mxu0 0
    %3287 = vmatpush1.bf16.msra.mxu0 0
    %3288 = vmatprep.subr.bf16.mxu0 0
    %3289 = vmatpush1.bf16.msra.mxu0 0
    %3290 = vmatprep.subr.bf16.mxu0 0
    %3291 = vmatpush1.bf16.msra.mxu0 0
    %3292 = vmatprep.subr.bf16.mxu0 0
    %3293 = vmatpush1.bf16.msra.mxu0 0
    %3294 = vmatprep.subr.bf16.mxu0 0
    %3295 = vmatpush1.bf16.msra.mxu0 0
    %3296 = vmatprep.subr.bf16.mxu0 0
    %3297 = vmatpush1.bf16.msra.mxu0 0
    %3298 = vmatprep.subr.bf16.mxu0 0
    %3299 = vmatpush1.bf16.msra.mxu0 0
    %3300 = vmatprep.subr.bf16.mxu0 0
    %3301 = vmatpush1.bf16.msra.mxu0 0
    %3302 = vmatprep.mubr.bf16.mxu0 0
    %3303 = vmatmul.mubr.bf16.gmra.mrb[0].mxu0 %v923
    %v3304 = vpop.f32.mrb[0].mxu0
    %v3305 = vadd.f32 0.0, %v3304
    %v3306 = vpop.f32.mrb[0].mxu0
    %v3307 = vpop.f32.mrb[0].mxu0
    %v3308 = vadd.f32 0.0, %v3307
    %v3309 = vpop.f32.mrb[0].mxu0
    %3310 = vmatprep.mubr.bf16.mxu0 0
    %3311 = vmatmul.mubr.bf16.gmra.mrb[0].mxu0 %v926
    %v3312 = vpop.f32.mrb[0].mxu0
    %v3313 = vadd.f32 0.0, %v3312
    %v3314 = vpop.f32.mrb[0].mxu0
    %v3315 = vpop.f32.mrb[0].mxu0
    %v3316 = vpop.f32.mrb[0].mxu0
    %3317 = vdwg.mxu0
    %v3318 = vpack.c.bf16 %v3308, %v3305
    %v3319 = vpack.c.bf16 %v3313, %v3313
    %s3320 = scalar_lea.vmem [#allocation13], 160
    %v3321 = vld [vmem:[%s3320] sm:$0xf]
    %v3322 = vld [vmem:[%s3320 + $0x4] sm:$0xf]
    %v3323 = vld [vmem:[%s3320 + $0x8] sm:$0xf]
    %v3324 = vld [vmem:[%s3320 + $0xc] sm:$0xf]
    %v3325 = vld [vmem:[%s3320 + $0x10] sm:$0xf]
    %v3326 = vld [vmem:[%s3320 + $0x14] sm:$0xf]
    %v3327 = vld [vmem:[%s3320 + $0x18] sm:$0xf]
    %v3328 = vld [vmem:[%s3320 + $0x1c] sm:$0xf]
    %v3337 = vunpack.c.l.b16 %v3321
    %v3338 = vunpack.c.l.b16 %v3322
    %v3339 = vunpack.c.l.b16 %v3323
    %v3340 = vunpack.c.l.b16 %v3324
    %v3341 = vunpack.c.l.b16 %v3325
    %v3342 = vunpack.c.l.b16 %v3326
    %v3343 = vunpack.c.l.b16 %v3327
    %v3344 = vunpack.c.l.b16 %v3328
    %v3345 = vpack.c.b16 %v3338, %v3337
    %v3346 = vpack.c.b16 %v3340, %v3339
    %v3347 = vpack.c.b16 %v3342, %v3341
    %v3348 = vpack.c.b16 %v3344, %v3343
    %v3354 = vsel %vm2717, %v3318, 0
    %v3357 = vsel %vm2717, %v3319, 0
    %3359 = vmatprep.subr.bf16.mxu0 0
    %3360 = vmatpush1.bf16.msra.mxu0 %v3345
    %3361 = vmatprep.subr.bf16.mxu0 0
    %3362 = vmatpush1.bf16.msra.mxu0 %v3346
    %3363 = vmatprep.subr.bf16.mxu0 0
    %3364 = vmatpush1.bf16.msra.mxu0 %v3347
    %3365 = vmatprep.subr.bf16.mxu0 0
    %3366 = vmatpush1.bf16.msra.mxu0 %v3348
    %3367 = vmatprep.subr.bf16.mxu0 0
    %3368 = vmatpush1.bf16.msra.mxu0 0
    %3369 = vmatprep.subr.bf16.mxu0 0
    %3370 = vmatpush1.bf16.msra.mxu0 0
    %3371 = vmatprep.subr.bf16.mxu0 0
    %3372 = vmatpush1.bf16.msra.mxu0 0
    %3373 = vmatprep.subr.bf16.mxu0 0
    %3374 = vmatpush1.bf16.msra.mxu0 0
    %3375 = vmatprep.subr.bf16.mxu0 0
    %3376 = vmatpush1.bf16.msra.mxu0 0
    %3377 = vmatprep.subr.bf16.mxu0 0
    %3378 = vmatpush1.bf16.msra.mxu0 0
    %3379 = vmatprep.subr.bf16.mxu0 0
    %3380 = vmatpush1.bf16.msra.mxu0 0
    %3381 = vmatprep.subr.bf16.mxu0 0
    %3382 = vmatpush1.bf16.msra.mxu0 0
    %3383 = vmatprep.subr.bf16.mxu0 0
    %3384 = vmatpush1.bf16.msra.mxu0 0
    %3385 = vmatprep.subr.bf16.mxu0 0
    %3386 = vmatpush1.bf16.msra.mxu0 0
    %3387 = vmatprep.subr.bf16.mxu0 0
    %3388 = vmatpush1.bf16.msra.mxu0 0
    %3389 = vmatprep.subr.bf16.mxu0 0
    %3390 = vmatpush1.bf16.msra.mxu0 0
    %3391 = vmatprep.mubr.bf16.mxu0 0
    %3392 = vmatmul.mubr.bf16.gmra.mrb[0].mxu0 %v3354
    %v3393 = vpop.f32.mrb[0].mxu0
    %v3394 = vadd.f32 0.0, %v3393
    %v3395 = vpop.f32.mrb[0].mxu0
    %v3396 = vpop.f32.mrb[0].mxu0
    %v3397 = vadd.f32 0.0, %v3396
    %v3398 = vpop.f32.mrb[0].mxu0
    %3399 = vmatprep.mubr.bf16.mxu0 0
    %3400 = vmatmul.mubr.bf16.gmra.mrb[0].mxu0 %v3357
    %v3401 = vpop.f32.mrb[0].mxu0
    %v3402 = vadd.f32 0.0, %v3401
    %v3403 = vpop.f32.mrb[0].mxu0
    %v3404 = vpop.f32.mrb[0].mxu0
    %v3405 = vpop.f32.mrb[0].mxu0
    %3406 = vdwg.mxu0
    %v3407 = vadd.f32 %v3267, %v3394
    %v3408 = vadd.f32 %v3268, %v3397
    %v3409 = vadd.f32 %v3269, %v3402
    %3410 = vmatprep.subr.bf16.mxu0 0
    %3411 = vmatpush1.bf16.msra.mxu0 %v2571
    %3412 = vmatprep.subr.bf16.mxu0 0
    %3413 = vmatpush1.bf16.msra.mxu0 %v2574
    %3414 = vmatprep.subr.bf16.mxu0 0
    %3415 = vmatpush1.bf16.msra.mxu0 0
    %3416 = vmatprep.subr.bf16.mxu0 0
    %3417 = vmatpush1.bf16.msra.mxu0 0
    %3418 = vmatprep.subr.bf16.mxu0 0
    %3419 = vmatpush1.bf16.msra.mxu0 0
    %3420 = vmatprep.subr.bf16.mxu0 0
    %3421 = vmatpush1.bf16.msra.mxu0 0
    %3422 = vmatprep.subr.bf16.mxu0 0
    %3423 = vmatpush1.bf16.msra.mxu0 0
    %3424 = vmatprep.subr.bf16.mxu0 0
    %3425 = vmatpush1.bf16.msra.mxu0 0
    %3426 = vmatprep.subr.bf16.mxu0 0
    %3427 = vmatpush1.bf16.msra.mxu0 0
    %3428 = vmatprep.subr.bf16.mxu0 0
    %3429 = vmatpush1.bf16.msra.mxu0 0
    %3430 = vmatprep.subr.bf16.mxu0 0
    %3431 = vmatpush1.bf16.msra.mxu0 0
    %3432 = vmatprep.subr.bf16.mxu0 0
    %3433 = vmatpush1.bf16.msra.mxu0 0
    %3434 = vmatprep.subr.bf16.mxu0 0
    %3435 = vmatpush1.bf16.msra.mxu0 0
    %3436 = vmatprep.subr.bf16.mxu0 0
    %3437 = vmatpush1.bf16.msra.mxu0 0
    %3438 = vmatprep.subr.bf16.mxu0 0
    %3439 = vmatpush1.bf16.msra.mxu0 0
    %3440 = vmatprep.subr.bf16.mxu0 0
    %3441 = vmatpush1.bf16.msra.mxu0 0
    %3442 = vmatprep.mubr.bf16.mxu0 0
    %3443 = vmatmul.mubr.bf16.gmra.mrb[0].mxu0 %v1053
    %v3444 = vpop.f32.mrb[0].mxu0
    %v3445 = vadd.f32 0.0, %v3444
    %v3446 = vpop.f32.mrb[0].mxu0
    %v3447 = vpop.f32.mrb[0].mxu0
    %v3448 = vadd.f32 0.0, %v3447
    %v3449 = vpop.f32.mrb[0].mxu0
    %3450 = vmatprep.mubr.bf16.mxu0 0
    %3451 = vmatmul.mubr.bf16.gmra.mrb[0].mxu0 %v1056
    %v3452 = vpop.f32.mrb[0].mxu0
    %v3453 = vadd.f32 0.0, %v3452
    %v3454 = vpop.f32.mrb[0].mxu0
    %v3455 = vpop.f32.mrb[0].mxu0
    %v3456 = vpop.f32.mrb[0].mxu0
    %3457 = vdwg.mxu0
    %v3458 = vpack.c.bf16 %v3448, %v3445
    %v3459 = vpack.c.bf16 %v3453, %v3453
    %s3460 = scalar_lea.vmem [#allocation13], 192
    %v3461 = vld [vmem:[%s3460] sm:$0xf]
    %v3462 = vld [vmem:[%s3460 + $0x4] sm:$0xf]
    %v3463 = vld [vmem:[%s3460 + $0x8] sm:$0xf]
    %v3464 = vld [vmem:[%s3460 + $0xc] sm:$0xf]
    %v3465 = vld [vmem:[%s3460 + $0x10] sm:$0xf]
    %v3466 = vld [vmem:[%s3460 + $0x14] sm:$0xf]
    %v3467 = vld [vmem:[%s3460 + $0x18] sm:$0xf]
    %v3468 = vld [vmem:[%s3460 + $0x1c] sm:$0xf]
    %v3477 = vunpack.c.l.b16 %v3461
    %v3478 = vunpack.c.l.b16 %v3462
    %v3479 = vunpack.c.l.b16 %v3463
    %v3480 = vunpack.c.l.b16 %v3464
    %v3481 = vunpack.c.l.b16 %v3465
    %v3482 = vunpack.c.l.b16 %v3466
    %v3483 = vunpack.c.l.b16 %v3467
    %v3484 = vunpack.c.l.b16 %v3468
    %v3485 = vpack.c.b16 %v3478, %v3477
    %v3486 = vpack.c.b16 %v3480, %v3479
    %v3487 = vpack.c.b16 %v3482, %v3481
    %v3488 = vpack.c.b16 %v3484, %v3483
    %v3494 = vsel %vm2717, %v3458, 0
    %v3497 = vsel %vm2717, %v3459, 0
    %3499 = vmatprep.subr.bf16.mxu0 0
    %3500 = vmatpush1.bf16.msra.mxu0 %v3485
    %3501 = vmatprep.subr.bf16.mxu0 0
    %3502 = vmatpush1.bf16.msra.mxu0 %v3486
    %3503 = vmatprep.subr.bf16.mxu0 0
    %3504 = vmatpush1.bf16.msra.mxu0 %v3487
    %3505 = vmatprep.subr.bf16.mxu0 0
    %3506 = vmatpush1.bf16.msra.mxu0 %v3488
    %3507 = vmatprep.subr.bf16.mxu0 0
    %3508 = vmatpush1.bf16.msra.mxu0 0
    %3509 = vmatprep.subr.bf16.mxu0 0
    %3510 = vmatpush1.bf16.msra.mxu0 0
    %3511 = vmatprep.subr.bf16.mxu0 0
    %3512 = vmatpush1.bf16.msra.mxu0 0
    %3513 = vmatprep.subr.bf16.mxu0 0
    %3514 = vmatpush1.bf16.msra.mxu0 0
    %3515 = vmatprep.subr.bf16.mxu0 0
    %3516 = vmatpush1.bf16.msra.mxu0 0
    %3517 = vmatprep.subr.bf16.mxu0 0
    %3518 = vmatpush1.bf16.msra.mxu0 0
    %3519 = vmatprep.subr.bf16.mxu0 0
    %3520 = vmatpush1.bf16.msra.mxu0 0
    %3521 = vmatprep.subr.bf16.mxu0 0
    %3522 = vmatpush1.bf16.msra.mxu0 0
    %3523 = vmatprep.subr.bf16.mxu0 0
    %3524 = vmatpush1.bf16.msra.mxu0 0
    %3525 = vmatprep.subr.bf16.mxu0 0
    %3526 = vmatpush1.bf16.msra.mxu0 0
    %3527 = vmatprep.subr.bf16.mxu0 0
    %3528 = vmatpush1.bf16.msra.mxu0 0
    %3529 = vmatprep.subr.bf16.mxu0 0
    %3530 = vmatpush1.bf16.msra.mxu0 0
    %3531 = vmatprep.mubr.bf16.mxu0 0
    %3532 = vmatmul.mubr.bf16.gmra.mrb[0].mxu0 %v3494
    %v3533 = vpop.f32.mrb[0].mxu0
    %v3534 = vadd.f32 0.0, %v3533
    %v3535 = vpop.f32.mrb[0].mxu0
    %v3536 = vpop.f32.mrb[0].mxu0
    %v3537 = vadd.f32 0.0, %v3536
    %v3538 = vpop.f32.mrb[0].mxu0
    %3539 = vmatprep.mubr.bf16.mxu0 0
    %3540 = vmatmul.mubr.bf16.gmra.mrb[0].mxu0 %v3497
    %v3541 = vpop.f32.mrb[0].mxu0
    %v3542 = vadd.f32 0.0, %v3541
    %v3543 = vpop.f32.mrb[0].mxu0
    %v3544 = vpop.f32.mrb[0].mxu0
    %v3545 = vpop.f32.mrb[0].mxu0
    %3546 = vdwg.mxu0
    %v3547 = vadd.f32 %v3407, %v3534
    %v3548 = vadd.f32 %v3408, %v3537
    %v3549 = vadd.f32 %v3409, %v3542
    %3550 = vmatprep.subr.bf16.mxu0 0
    %3551 = vmatpush1.bf16.msra.mxu0 %v2571
    %3552 = vmatprep.subr.bf16.mxu0 0
    %3553 = vmatpush1.bf16.msra.mxu0 %v2574
    %3554 = vmatprep.subr.bf16.mxu0 0
    %3555 = vmatpush1.bf16.msra.mxu0 0
    %3556 = vmatprep.subr.bf16.mxu0 0
    %3557 = vmatpush1.bf16.msra.mxu0 0
    %3558 = vmatprep.subr.bf16.mxu0 0
    %3559 = vmatpush1.bf16.msra.mxu0 0
    %3560 = vmatprep.subr.bf16.mxu0 0
    %3561 = vmatpush1.bf16.msra.mxu0 0
    %3562 = vmatprep.subr.bf16.mxu0 0
    %3563 = vmatpush1.bf16.msra.mxu0 0
    %3564 = vmatprep.subr.bf16.mxu0 0
    %3565 = vmatpush1.bf16.msra.mxu0 0
    %3566 = vmatprep.subr.bf16.mxu0 0
    %3567 = vmatpush1.bf16.msra.mxu0 0
    %3568 = vmatprep.subr.bf16.mxu0 0
    %3569 = vmatpush1.bf16.msra.mxu0 0
    %3570 = vmatprep.subr.bf16.mxu0 0
    %3571 = vmatpush1.bf16.msra.mxu0 0
    %3572 = vmatprep.subr.bf16.mxu0 0
    %3573 = vmatpush1.bf16.msra.mxu0 0
    %3574 = vmatprep.subr.bf16.mxu0 0
    %3575 = vmatpush1.bf16.msra.mxu0 0
    %3576 = vmatprep.subr.bf16.mxu0 0
    %3577 = vmatpush1.bf16.msra.mxu0 0
    %3578 = vmatprep.subr.bf16.mxu0 0
    %3579 = vmatpush1.bf16.msra.mxu0 0
    %3580 = vmatprep.subr.bf16.mxu0 0
    %3581 = vmatpush1.bf16.msra.mxu0 0
    %3582 = vmatprep.mubr.bf16.mxu0 0
    %3583 = vmatmul.mubr.bf16.gmra.mrb[0].mxu0 %v1183
    %v3584 = vpop.f32.mrb[0].mxu0
    %v3585 = vadd.f32 0.0, %v3584
    %v3586 = vpop.f32.mrb[0].mxu0
    %v3587 = vpop.f32.mrb[0].mxu0
    %v3588 = vadd.f32 0.0, %v3587
    %v3589 = vpop.f32.mrb[0].mxu0
    %3590 = vmatprep.mubr.bf16.mxu0 0
    %3591 = vmatmul.mubr.bf16.gmra.mrb[0].mxu0 %v1186
    %v3592 = vpop.f32.mrb[0].mxu0
    %v3593 = vadd.f32 0.0, %v3592
    %v3594 = vpop.f32.mrb[0].mxu0
    %v3595 = vpop.f32.mrb[0].mxu0
    %v3596 = vpop.f32.mrb[0].mxu0
    %3597 = vdwg.mxu0
    %v3598 = vpack.c.bf16 %v3588, %v3585
    %v3599 = vpack.c.bf16 %v3593, %v3593
    %s3600 = scalar_lea.vmem [#allocation13], 224
    %v3601 = vld [vmem:[%s3600] sm:$0xf]
    %v3602 = vld [vmem:[%s3600 + $0x4] sm:$0xf]
    %v3603 = vld [vmem:[%s3600 + $0x8] sm:$0xf]
    %v3604 = vld [vmem:[%s3600 + $0xc] sm:$0xf]
    %v3605 = vld [vmem:[%s3600 + $0x10] sm:$0xf]
    %v3606 = vld [vmem:[%s3600 + $0x14] sm:$0xf]
    %v3607 = vld [vmem:[%s3600 + $0x18] sm:$0xf]
    %v3608 = vld [vmem:[%s3600 + $0x1c] sm:$0xf]
    %v3617 = vunpack.c.l.b16 %v3601
    %v3618 = vunpack.c.l.b16 %v3602
    %v3619 = vunpack.c.l.b16 %v3603
    %v3620 = vunpack.c.l.b16 %v3604
    %v3621 = vunpack.c.l.b16 %v3605
    %v3622 = vunpack.c.l.b16 %v3606
    %v3623 = vunpack.c.l.b16 %v3607
    %v3624 = vunpack.c.l.b16 %v3608
    %v3625 = vpack.c.b16 %v3618, %v3617
    %v3626 = vpack.c.b16 %v3620, %v3619
    %v3627 = vpack.c.b16 %v3622, %v3621
    %v3628 = vpack.c.b16 %v3624, %v3623
    %v3634 = vsel %vm2717, %v3598, 0
    %v3637 = vsel %vm2717, %v3599, 0
    %3639 = vmatprep.subr.bf16.mxu0 0
    %3640 = vmatpush1.bf16.msra.mxu0 %v3625
    %3641 = vmatprep.subr.bf16.mxu0 0
    %3642 = vmatpush1.bf16.msra.mxu0 %v3626
    %3643 = vmatprep.subr.bf16.mxu0 0
    %3644 = vmatpush1.bf16.msra.mxu0 %v3627
    %3645 = vmatprep.subr.bf16.mxu0 0
    %3646 = vmatpush1.bf16.msra.mxu0 %v3628
    %3647 = vmatprep.subr.bf16.mxu0 0
    %3648 = vmatpush1.bf16.msra.mxu0 0
    %3649 = vmatprep.subr.bf16.mxu0 0
    %3650 = vmatpush1.bf16.msra.mxu0 0
    %3651 = vmatprep.subr.bf16.mxu0 0
    %3652 = vmatpush1.bf16.msra.mxu0 0
    %3653 = vmatprep.subr.bf16.mxu0 0
    %3654 = vmatpush1.bf16.msra.mxu0 0
    %3655 = vmatprep.subr.bf16.mxu0 0
    %3656 = vmatpush1.bf16.msra.mxu0 0
    %3657 = vmatprep.subr.bf16.mxu0 0
    %3658 = vmatpush1.bf16.msra.mxu0 0
    %3659 = vmatprep.subr.bf16.mxu0 0
    %3660 = vmatpush1.bf16.msra.mxu0 0
    %3661 = vmatprep.subr.bf16.mxu0 0
    %3662 = vmatpush1.bf16.msra.mxu0 0
    %3663 = vmatprep.subr.bf16.mxu0 0
    %3664 = vmatpush1.bf16.msra.mxu0 0
    %3665 = vmatprep.subr.bf16.mxu0 0
    %3666 = vmatpush1.bf16.msra.mxu0 0
    %3667 = vmatprep.subr.bf16.mxu0 0
    %3668 = vmatpush1.bf16.msra.mxu0 0
    %3669 = vmatprep.subr.bf16.mxu0 0
    %3670 = vmatpush1.bf16.msra.mxu0 0
    %3671 = vmatprep.mubr.bf16.mxu0 0
    %3672 = vmatmul.mubr.bf16.gmra.mrb[0].mxu0 %v3634
    %v3673 = vpop.f32.mrb[0].mxu0
    %v3674 = vadd.f32 0.0, %v3673
    %v3675 = vpop.f32.mrb[0].mxu0
    %v3676 = vpop.f32.mrb[0].mxu0
    %v3677 = vadd.f32 0.0, %v3676
    %v3678 = vpop.f32.mrb[0].mxu0
    %3679 = vmatprep.mubr.bf16.mxu0 0
    %3680 = vmatmul.mubr.bf16.gmra.mrb[0].mxu0 %v3637
    %v3681 = vpop.f32.mrb[0].mxu0
    %v3682 = vadd.f32 0.0, %v3681
    %v3683 = vpop.f32.mrb[0].mxu0
    %v3684 = vpop.f32.mrb[0].mxu0
    %v3685 = vpop.f32.mrb[0].mxu0
    %3686 = vdwg.mxu0
    %v3687 = vadd.f32 %v3547, %v3674
    %v3688 = vadd.f32 %v3548, %v3677
    %v3689 = vadd.f32 %v3549, %v3682
    %3690 = vmatprep.subr.bf16.mxu0 0
    %3691 = vmatpush1.bf16.msra.mxu0 %v2571
    %3692 = vmatprep.subr.bf16.mxu0 0
    %3693 = vmatpush1.bf16.msra.mxu0 %v2574
    %3694 = vmatprep.subr.bf16.mxu0 0
    %3695 = vmatpush1.bf16.msra.mxu0 0
    %3696 = vmatprep.subr.bf16.mxu0 0
    %3697 = vmatpush1.bf16.msra.mxu0 0
    %3698 = vmatprep.subr.bf16.mxu0 0
    %3699 = vmatpush1.bf16.msra.mxu0 0
    %3700 = vmatprep.subr.bf16.mxu0 0
    %3701 = vmatpush1.bf16.msra.mxu0 0
    %3702 = vmatprep.subr.bf16.mxu0 0
    %3703 = vmatpush1.bf16.msra.mxu0 0
    %3704 = vmatprep.subr.bf16.mxu0 0
    %3705 = vmatpush1.bf16.msra.mxu0 0
    %3706 = vmatprep.subr.bf16.mxu0 0
    %3707 = vmatpush1.bf16.msra.mxu0 0
    %3708 = vmatprep.subr.bf16.mxu0 0
    %3709 = vmatpush1.bf16.msra.mxu0 0
    %3710 = vmatprep.subr.bf16.mxu0 0
    %3711 = vmatpush1.bf16.msra.mxu0 0
    %3712 = vmatprep.subr.bf16.mxu0 0
    %3713 = vmatpush1.bf16.msra.mxu0 0
    %3714 = vmatprep.subr.bf16.mxu0 0
    %3715 = vmatpush1.bf16.msra.mxu0 0
    %3716 = vmatprep.subr.bf16.mxu0 0
    %3717 = vmatpush1.bf16.msra.mxu0 0
    %3718 = vmatprep.subr.bf16.mxu0 0
    %3719 = vmatpush1.bf16.msra.mxu0 0
    %3720 = vmatprep.subr.bf16.mxu0 0
    %3721 = vmatpush1.bf16.msra.mxu0 0
    %3722 = vmatprep.mubr.bf16.mxu0 0
    %3723 = vmatmul.mubr.bf16.gmra.mrb[0].mxu0 %v1313
    %v3724 = vpop.f32.mrb[0].mxu0
    %v3725 = vadd.f32 0.0, %v3724
    %v3726 = vpop.f32.mrb[0].mxu0
    %v3727 = vpop.f32.mrb[0].mxu0
    %v3728 = vadd.f32 0.0, %v3727
    %v3729 = vpop.f32.mrb[0].mxu0
    %3730 = vmatprep.mubr.bf16.mxu0 0
    %3731 = vmatmul.mubr.bf16.gmra.mrb[0].mxu0 %v1316
    %v3732 = vpop.f32.mrb[0].mxu0
    %v3733 = vadd.f32 0.0, %v3732
    %v3734 = vpop.f32.mrb[0].mxu0
    %v3735 = vpop.f32.mrb[0].mxu0
    %v3736 = vpop.f32.mrb[0].mxu0
    %3737 = vdwg.mxu0
    %v3738 = vpack.c.bf16 %v3728, %v3725
    %v3739 = vpack.c.bf16 %v3733, %v3733
    %s3740 = scalar_lea.vmem [#allocation13], 256
    %v3741 = vld [vmem:[%s3740] sm:$0xf]
    %v3742 = vld [vmem:[%s3740 + $0x4] sm:$0xf]
    %v3743 = vld [vmem:[%s3740 + $0x8] sm:$0xf]
    %v3744 = vld [vmem:[%s3740 + $0xc] sm:$0xf]
    %v3745 = vld [vmem:[%s3740 + $0x10] sm:$0xf]
    %v3746 = vld [vmem:[%s3740 + $0x14] sm:$0xf]
    %v3747 = vld [vmem:[%s3740 + $0x18] sm:$0xf]
    %v3748 = vld [vmem:[%s3740 + $0x1c] sm:$0xf]
    %v3757 = vunpack.c.l.b16 %v3741
    %v3758 = vunpack.c.l.b16 %v3742
    %v3759 = vunpack.c.l.b16 %v3743
    %v3760 = vunpack.c.l.b16 %v3744
    %v3761 = vunpack.c.l.b16 %v3745
    %v3762 = vunpack.c.l.b16 %v3746
    %v3763 = vunpack.c.l.b16 %v3747
    %v3764 = vunpack.c.l.b16 %v3748
    %v3765 = vpack.c.b16 %v3758, %v3757
    %v3766 = vpack.c.b16 %v3760, %v3759
    %v3767 = vpack.c.b16 %v3762, %v3761
    %v3768 = vpack.c.b16 %v3764, %v3763
    %v3774 = vsel %vm2717, %v3738, 0
    %v3777 = vsel %vm2717, %v3739, 0
    %3779 = vmatprep.subr.bf16.mxu0 0
    %3780 = vmatpush1.bf16.msra.mxu0 %v3765
    %3781 = vmatprep.subr.bf16.mxu0 0
    %3782 = vmatpush1.bf16.msra.mxu0 %v3766
    %3783 = vmatprep.subr.bf16.mxu0 0
    %3784 = vmatpush1.bf16.msra.mxu0 %v3767
    %3785 = vmatprep.subr.bf16.mxu0 0
    %3786 = vmatpush1.bf16.msra.mxu0 %v3768
    %3787 = vmatprep.subr.bf16.mxu0 0
    %3788 = vmatpush1.bf16.msra.mxu0 0
    %3789 = vmatprep.subr.bf16.mxu0 0
    %3790 = vmatpush1.bf16.msra.mxu0 0
    %3791 = vmatprep.subr.bf16.mxu0 0
    %3792 = vmatpush1.bf16.msra.mxu0 0
    %3793 = vmatprep.subr.bf16.mxu0 0
    %3794 = vmatpush1.bf16.msra.mxu0 0
    %3795 = vmatprep.subr.bf16.mxu0 0
    %3796 = vmatpush1.bf16.msra.mxu0 0
    %3797 = vmatprep.subr.bf16.mxu0 0
    %3798 = vmatpush1.bf16.msra.mxu0 0
    %3799 = vmatprep.subr.bf16.mxu0 0
    %3800 = vmatpush1.bf16.msra.mxu0 0
    %3801 = vmatprep.subr.bf16.mxu0 0
    %3802 = vmatpush1.bf16.msra.mxu0 0
    %3803 = vmatprep.subr.bf16.mxu0 0
    %3804 = vmatpush1.bf16.msra.mxu0 0
    %3805 = vmatprep.subr.bf16.mxu0 0
    %3806 = vmatpush1.bf16.msra.mxu0 0
    %3807 = vmatprep.subr.bf16.mxu0 0
    %3808 = vmatpush1.bf16.msra.mxu0 0
    %3809 = vmatprep.subr.bf16.mxu0 0
    %3810 = vmatpush1.bf16.msra.mxu0 0
    %3811 = vmatprep.mubr.bf16.mxu0 0
    %3812 = vmatmul.mubr.bf16.gmra.mrb[0].mxu0 %v3774
    %v3813 = vpop.f32.mrb[0].mxu0
    %v3814 = vadd.f32 0.0, %v3813
    %v3815 = vpop.f32.mrb[0].mxu0
    %v3816 = vpop.f32.mrb[0].mxu0
    %v3817 = vadd.f32 0.0, %v3816
    %v3818 = vpop.f32.mrb[0].mxu0
    %3819 = vmatprep.mubr.bf16.mxu0 0
    %3820 = vmatmul.mubr.bf16.gmra.mrb[0].mxu0 %v3777
    %v3821 = vpop.f32.mrb[0].mxu0
    %v3822 = vadd.f32 0.0, %v3821
    %v3823 = vpop.f32.mrb[0].mxu0
    %v3824 = vpop.f32.mrb[0].mxu0
    %v3825 = vpop.f32.mrb[0].mxu0
    %3826 = vdwg.mxu0
    %v3827 = vadd.f32 %v3687, %v3814
    %v3828 = vadd.f32 %v3688, %v3817
    %v3829 = vadd.f32 %v3689, %v3822
    %v3830 = vld [vmem:[#allocation14] sm:$0x1]
    %v3832 = vlaneseq
    %v3833 = vshrl.u32 %v3832, 7
    %v3834 = vsub.s32 0, %v3833
    %v3835 = vrot.slane %v3830, %v3834
    %v3837 = vadd.f32 %v3827, %v3835
    %v3838 = vadd.f32 %v3828, %v3835
    %v3839 = vadd.f32 %v3829, %v3835
    %v3840 = vmax.f32 %v3837, 0.0
    %v3841 = vmax.f32 %v3838, 0.0
    %v3842 = vmax.f32 %v3839, 0.0
    %v3843 = vpack.c.bf16 %v3841, %v3840
    %v3844 = vpack.c.bf16 %v3842, %v3842
    %v3845 = vld [vmem:[#allocation5] sm:$0x1]
    %v3847 = vsel %vm270, %v3845, 0
    %v3850 = vsel %vm277, %v3844, 0
    %3852 = vmatprep.subr.bf16.mxu0 0
    %3853 = vmatpush1.bf16.msra.mxu0 %v3843
    %3854 = vmatprep.subr.bf16.mxu0 0
    %3855 = vmatpush1.bf16.msra.mxu0 %v3850
    %3856 = vmatprep.subr.bf16.mxu0 0
    %3857 = vmatpush1.bf16.msra.mxu0 0
    %3858 = vmatprep.subr.bf16.mxu0 0
    %3859 = vmatpush1.bf16.msra.mxu0 0
    %3860 = vmatprep.subr.bf16.mxu0 0
    %3861 = vmatpush1.bf16.msra.mxu0 0
    %3862 = vmatprep.subr.bf16.mxu0 0
    %3863 = vmatpush1.bf16.msra.mxu0 0
    %3864 = vmatprep.subr.bf16.mxu0 0
    %3865 = vmatpush1.bf16.msra.mxu0 0
    %3866 = vmatprep.subr.bf16.mxu0 0
    %3867 = vmatpush1.bf16.msra.mxu0 0
    %3868 = vmatprep.subr.bf16.mxu0 0
    %3869 = vmatpush1.bf16.msra.mxu0 0
    %3870 = vmatprep.subr.bf16.mxu0 0
    %3871 = vmatpush1.bf16.msra.mxu0 0
    %3872 = vmatprep.subr.bf16.mxu0 0
    %3873 = vmatpush1.bf16.msra.mxu0 0
    %3874 = vmatprep.subr.bf16.mxu0 0
    %3875 = vmatpush1.bf16.msra.mxu0 0
    %3876 = vmatprep.subr.bf16.mxu0 0
    %3877 = vmatpush1.bf16.msra.mxu0 0
    %3878 = vmatprep.subr.bf16.mxu0 0
    %3879 = vmatpush1.bf16.msra.mxu0 0
    %3880 = vmatprep.subr.bf16.mxu0 0
    %3881 = vmatpush1.bf16.msra.mxu0 0
    %3882 = vmatprep.subr.bf16.mxu0 0
    %3883 = vmatpush1.bf16.msra.mxu0 0
    %3884 = vmatprep.mubr.bf16.mxu0 0
    %3885 = vmatmul.mubr.bf16.gmra.mrb[0].mxu0 %v3847
    %v3886 = vpop.f32.mrb[0].mxu0
    %v3887 = vadd.f32 0.0, %v3886
    %v3888 = vpop.f32.mrb[0].mxu0
    %v3889 = vpop.f32.mrb[0].mxu0
    %v3890 = vpop.f32.mrb[0].mxu0
    %3891 = vdwg.mxu0
    %v3892 = vpack.c.bf16 %v3887, %v3887
    %s3893 = scalar_lea.vmem [#allocation5], 1
    %v3894 = vld [vmem:[%s3893] sm:$0x1]
    %v3896 = vsel %vm270, %v3894, 0
    %3898 = vmatprep.subr.bf16.mxu0 0
    %3899 = vmatpush1.bf16.msra.mxu0 %v3843
    %3900 = vmatprep.subr.bf16.mxu0 0
    %3901 = vmatpush1.bf16.msra.mxu0 %v3850
    %3902 = vmatprep.subr.bf16.mxu0 0
    %3903 = vmatpush1.bf16.msra.mxu0 0
    %3904 = vmatprep.subr.bf16.mxu0 0
    %3905 = vmatpush1.bf16.msra.mxu0 0
    %3906 = vmatprep.subr.bf16.mxu0 0
    %3907 = vmatpush1.bf16.msra.mxu0 0
    %3908 = vmatprep.subr.bf16.mxu0 0
    %3909 = vmatpush1.bf16.msra.mxu0 0
    %3910 = vmatprep.subr.bf16.mxu0 0
    %3911 = vmatpush1.bf16.msra.mxu0 0
    %3912 = vmatprep.subr.bf16.mxu0 0
    %3913 = vmatpush1.bf16.msra.mxu0 0
    %3914 = vmatprep.subr.bf16.mxu0 0
    %3915 = vmatpush1.bf16.msra.mxu0 0
    %3916 = vmatprep.subr.bf16.mxu0 0
    %3917 = vmatpush1.bf16.msra.mxu0 0
    %3918 = vmatprep.subr.bf16.mxu0 0
    %3919 = vmatpush1.bf16.msra.mxu0 0
    %3920 = vmatprep.subr.bf16.mxu0 0
    %3921 = vmatpush1.bf16.msra.mxu0 0
    %3922 = vmatprep.subr.bf16.mxu0 0
    %3923 = vmatpush1.bf16.msra.mxu0 0
    %3924 = vmatprep.subr.bf16.mxu0 0
    %3925 = vmatpush1.bf16.msra.mxu0 0
    %3926 = vmatprep.subr.bf16.mxu0 0
    %3927 = vmatpush1.bf16.msra.mxu0 0
    %3928 = vmatprep.subr.bf16.mxu0 0
    %3929 = vmatpush1.bf16.msra.mxu0 0
    %3930 = vmatprep.mubr.bf16.mxu0 0
    %3931 = vmatmul.mubr.bf16.gmra.mrb[0].mxu0 %v3896
    %v3932 = vpop.f32.mrb[0].mxu0
    %v3933 = vadd.f32 0.0, %v3932
    %v3934 = vpop.f32.mrb[0].mxu0
    %v3935 = vpop.f32.mrb[0].mxu0
    %v3936 = vpop.f32.mrb[0].mxu0
    %3937 = vdwg.mxu0
    %v3938 = vpack.c.bf16 %v3933, %v3933
    %s3939 = scalar_lea.vmem [#allocation5], 2
    %v3940 = vld [vmem:[%s3939] sm:$0x1]
    %v3942 = vsel %vm270, %v3940, 0
    %3944 = vmatprep.subr.bf16.mxu0 0
    %3945 = vmatpush1.bf16.msra.mxu0 %v3843
    %3946 = vmatprep.subr.bf16.mxu0 0
    %3947 = vmatpush1.bf16.msra.mxu0 %v3850
    %3948 = vmatprep.subr.bf16.mxu0 0
    %3949 = vmatpush1.bf16.msra.mxu0 0
    %3950 = vmatprep.subr.bf16.mxu0 0
    %3951 = vmatpush1.bf16.msra.mxu0 0
    %3952 = vmatprep.subr.bf16.mxu0 0
    %3953 = vmatpush1.bf16.msra.mxu0 0
    %3954 = vmatprep.subr.bf16.mxu0 0
    %3955 = vmatpush1.bf16.msra.mxu0 0
    %3956 = vmatprep.subr.bf16.mxu0 0
    %3957 = vmatpush1.bf16.msra.mxu0 0
    %3958 = vmatprep.subr.bf16.mxu0 0
    %3959 = vmatpush1.bf16.msra.mxu0 0
    %3960 = vmatprep.subr.bf16.mxu0 0
    %3961 = vmatpush1.bf16.msra.mxu0 0
    %3962 = vmatprep.subr.bf16.mxu0 0
    %3963 = vmatpush1.bf16.msra.mxu0 0
    %3964 = vmatprep.subr.bf16.mxu0 0
    %3965 = vmatpush1.bf16.msra.mxu0 0
    %3966 = vmatprep.subr.bf16.mxu0 0
    %3967 = vmatpush1.bf16.msra.mxu0 0
    %3968 = vmatprep.subr.bf16.mxu0 0
    %3969 = vmatpush1.bf16.msra.mxu0 0
    %3970 = vmatprep.subr.bf16.mxu0 0
    %3971 = vmatpush1.bf16.msra.mxu0 0
    %3972 = vmatprep.subr.bf16.mxu0 0
    %3973 = vmatpush1.bf16.msra.mxu0 0
    %3974 = vmatprep.subr.bf16.mxu0 0
    %3975 = vmatpush1.bf16.msra.mxu0 0
    %3976 = vmatprep.mubr.bf16.mxu0 0
    %3977 = vmatmul.mubr.bf16.gmra.mrb[0].mxu0 %v3942
    %v3978 = vpop.f32.mrb[0].mxu0
    %v3979 = vadd.f32 0.0, %v3978
    %v3980 = vpop.f32.mrb[0].mxu0
    %v3981 = vpop.f32.mrb[0].mxu0
    %v3982 = vpop.f32.mrb[0].mxu0
    %3983 = vdwg.mxu0
    %v3984 = vpack.c.bf16 %v3979, %v3979
    %s3985 = scalar_lea.vmem [#allocation5], 3
    %v3986 = vld [vmem:[%s3985] sm:$0x1]
    %v3988 = vsel %vm270, %v3986, 0
    %3990 = vmatprep.subr.bf16.mxu0 0
    %3991 = vmatpush1.bf16.msra.mxu0 %v3843
    %3992 = vmatprep.subr.bf16.mxu0 0
    %3993 = vmatpush1.bf16.msra.mxu0 %v3850
    %3994 = vmatprep.subr.bf16.mxu0 0
    %3995 = vmatpush1.bf16.msra.mxu0 0
    %3996 = vmatprep.subr.bf16.mxu0 0
    %3997 = vmatpush1.bf16.msra.mxu0 0
    %3998 = vmatprep.subr.bf16.mxu0 0
    %3999 = vmatpush1.bf16.msra.mxu0 0
    %4000 = vmatprep.subr.bf16.mxu0 0
    %4001 = vmatpush1.bf16.msra.mxu0 0
    %4002 = vmatprep.subr.bf16.mxu0 0
    %4003 = vmatpush1.bf16.msra.mxu0 0
    %4004 = vmatprep.subr.bf16.mxu0 0
    %4005 = vmatpush1.bf16.msra.mxu0 0
    %4006 = vmatprep.subr.bf16.mxu0 0
    %4007 = vmatpush1.bf16.msra.mxu0 0
    %4008 = vmatprep.subr.bf16.mxu0 0
    %4009 = vmatpush1.bf16.msra.mxu0 0
    %4010 = vmatprep.subr.bf16.mxu0 0
    %4011 = vmatpush1.bf16.msra.mxu0 0
    %4012 = vmatprep.subr.bf16.mxu0 0
    %4013 = vmatpush1.bf16.msra.mxu0 0
    %4014 = vmatprep.subr.bf16.mxu0 0
    %4015 = vmatpush1.bf16.msra.mxu0 0
    %4016 = vmatprep.subr.bf16.mxu0 0
    %4017 = vmatpush1.bf16.msra.mxu0 0
    %4018 = vmatprep.subr.bf16.mxu0 0
    %4019 = vmatpush1.bf16.msra.mxu0 0
    %4020 = vmatprep.subr.bf16.mxu0 0
    %4021 = vmatpush1.bf16.msra.mxu0 0
    %4022 = vmatprep.mubr.bf16.mxu0 0
    %4023 = vmatmul.mubr.bf16.gmra.mrb[0].mxu0 %v3988
    %v4024 = vpop.f32.mrb[0].mxu0
    %v4025 = vadd.f32 0.0, %v4024
    %v4026 = vpop.f32.mrb[0].mxu0
    %v4027 = vpop.f32.mrb[0].mxu0
    %v4028 = vpop.f32.mrb[0].mxu0
    %4029 = vdwg.mxu0
    %v4030 = vpack.c.bf16 %v4025, %v4025
    %s4031 = scalar_lea.vmem [#allocation5], 4
    %v4032 = vld [vmem:[%s4031] sm:$0x1]
    %v4034 = vsel %vm270, %v4032, 0
    %4036 = vmatprep.subr.bf16.mxu0 0
    %4037 = vmatpush1.bf16.msra.mxu0 %v3843
    %4038 = vmatprep.subr.bf16.mxu0 0
    %4039 = vmatpush1.bf16.msra.mxu0 %v3850
    %4040 = vmatprep.subr.bf16.mxu0 0
    %4041 = vmatpush1.bf16.msra.mxu0 0
    %4042 = vmatprep.subr.bf16.mxu0 0
    %4043 = vmatpush1.bf16.msra.mxu0 0
    %4044 = vmatprep.subr.bf16.mxu0 0
    %4045 = vmatpush1.bf16.msra.mxu0 0
    %4046 = vmatprep.subr.bf16.mxu0 0
    %4047 = vmatpush1.bf16.msra.mxu0 0
    %4048 = vmatprep.subr.bf16.mxu0 0
    %4049 = vmatpush1.bf16.msra.mxu0 0
    %4050 = vmatprep.subr.bf16.mxu0 0
    %4051 = vmatpush1.bf16.msra.mxu0 0
    %4052 = vmatprep.subr.bf16.mxu0 0
    %4053 = vmatpush1.bf16.msra.mxu0 0
    %4054 = vmatprep.subr.bf16.mxu0 0
    %4055 = vmatpush1.bf16.msra.mxu0 0
    %4056 = vmatprep.subr.bf16.mxu0 0
    %4057 = vmatpush1.bf16.msra.mxu0 0
    %4058 = vmatprep.subr.bf16.mxu0 0
    %4059 = vmatpush1.bf16.msra.mxu0 0
    %4060 = vmatprep.subr.bf16.mxu0 0
    %4061 = vmatpush1.bf16.msra.mxu0 0
    %4062 = vmatprep.subr.bf16.mxu0 0
    %4063 = vmatpush1.bf16.msra.mxu0 0
    %4064 = vmatprep.subr.bf16.mxu0 0
    %4065 = vmatpush1.bf16.msra.mxu0 0
    %4066 = vmatprep.subr.bf16.mxu0 0
    %4067 = vmatpush1.bf16.msra.mxu0 0
    %4068 = vmatprep.mubr.bf16.mxu0 0
    %4069 = vmatmul.mubr.bf16.gmra.mrb[0].mxu0 %v4034
    %v4070 = vpop.f32.mrb[0].mxu0
    %v4071 = vadd.f32 0.0, %v4070
    %v4072 = vpop.f32.mrb[0].mxu0
    %v4073 = vpop.f32.mrb[0].mxu0
    %v4074 = vpop.f32.mrb[0].mxu0
    %4075 = vdwg.mxu0
    %v4076 = vpack.c.bf16 %v4071, %v4071
    %s4077 = scalar_lea.vmem [#allocation5], 5
    %v4078 = vld [vmem:[%s4077] sm:$0x1]
    %v4080 = vsel %vm270, %v4078, 0
    %4082 = vmatprep.subr.bf16.mxu0 0
    %4083 = vmatpush1.bf16.msra.mxu0 %v3843
    %4084 = vmatprep.subr.bf16.mxu0 0
    %4085 = vmatpush1.bf16.msra.mxu0 %v3850
    %4086 = vmatprep.subr.bf16.mxu0 0
    %4087 = vmatpush1.bf16.msra.mxu0 0
    %4088 = vmatprep.subr.bf16.mxu0 0
    %4089 = vmatpush1.bf16.msra.mxu0 0
    %4090 = vmatprep.subr.bf16.mxu0 0
    %4091 = vmatpush1.bf16.msra.mxu0 0
    %4092 = vmatprep.subr.bf16.mxu0 0
    %4093 = vmatpush1.bf16.msra.mxu0 0
    %4094 = vmatprep.subr.bf16.mxu0 0
    %4095 = vmatpush1.bf16.msra.mxu0 0
    %4096 = vmatprep.subr.bf16.mxu0 0
    %4097 = vmatpush1.bf16.msra.mxu0 0
    %4098 = vmatprep.subr.bf16.mxu0 0
    %4099 = vmatpush1.bf16.msra.mxu0 0
    %4100 = vmatprep.subr.bf16.mxu0 0
    %4101 = vmatpush1.bf16.msra.mxu0 0
    %4102 = vmatprep.subr.bf16.mxu0 0
    %4103 = vmatpush1.bf16.msra.mxu0 0
    %4104 = vmatprep.subr.bf16.mxu0 0
    %4105 = vmatpush1.bf16.msra.mxu0 0
    %4106 = vmatprep.subr.bf16.mxu0 0
    %4107 = vmatpush1.bf16.msra.mxu0 0
    %4108 = vmatprep.subr.bf16.mxu0 0
    %4109 = vmatpush1.bf16.msra.mxu0 0
    %4110 = vmatprep.subr.bf16.mxu0 0
    %4111 = vmatpush1.bf16.msra.mxu0 0
    %4112 = vmatprep.subr.bf16.mxu0 0
    %4113 = vmatpush1.bf16.msra.mxu0 0
    %4114 = vmatprep.mubr.bf16.mxu0 0
    %4115 = vmatmul.mubr.bf16.gmra.mrb[0].mxu0 %v4080
    %v4116 = vpop.f32.mrb[0].mxu0
    %v4117 = vadd.f32 0.0, %v4116
    %v4118 = vpop.f32.mrb[0].mxu0
    %v4119 = vpop.f32.mrb[0].mxu0
    %v4120 = vpop.f32.mrb[0].mxu0
    %4121 = vdwg.mxu0
    %v4122 = vpack.c.bf16 %v4117, %v4117
    %s4123 = scalar_lea.vmem [#allocation5], 6
    %v4124 = vld [vmem:[%s4123] sm:$0x1]
    %v4126 = vsel %vm270, %v4124, 0
    %4128 = vmatprep.subr.bf16.mxu0 0
    %4129 = vmatpush1.bf16.msra.mxu0 %v3843
    %4130 = vmatprep.subr.bf16.mxu0 0
    %4131 = vmatpush1.bf16.msra.mxu0 %v3850
    %4132 = vmatprep.subr.bf16.mxu0 0
    %4133 = vmatpush1.bf16.msra.mxu0 0
    %4134 = vmatprep.subr.bf16.mxu0 0
    %4135 = vmatpush1.bf16.msra.mxu0 0
    %4136 = vmatprep.subr.bf16.mxu0 0
    %4137 = vmatpush1.bf16.msra.mxu0 0
    %4138 = vmatprep.subr.bf16.mxu0 0
    %4139 = vmatpush1.bf16.msra.mxu0 0
    %4140 = vmatprep.subr.bf16.mxu0 0
    %4141 = vmatpush1.bf16.msra.mxu0 0
    %4142 = vmatprep.subr.bf16.mxu0 0
    %4143 = vmatpush1.bf16.msra.mxu0 0
    %4144 = vmatprep.subr.bf16.mxu0 0
    %4145 = vmatpush1.bf16.msra.mxu0 0
    %4146 = vmatprep.subr.bf16.mxu0 0
    %4147 = vmatpush1.bf16.msra.mxu0 0
    %4148 = vmatprep.subr.bf16.mxu0 0
    %4149 = vmatpush1.bf16.msra.mxu0 0
    %4150 = vmatprep.subr.bf16.mxu0 0
    %4151 = vmatpush1.bf16.msra.mxu0 0
    %4152 = vmatprep.subr.bf16.mxu0 0
    %4153 = vmatpush1.bf16.msra.mxu0 0
    %4154 = vmatprep.subr.bf16.mxu0 0
    %4155 = vmatpush1.bf16.msra.mxu0 0
    %4156 = vmatprep.subr.bf16.mxu0 0
    %4157 = vmatpush1.bf16.msra.mxu0 0
    %4158 = vmatprep.subr.bf16.mxu0 0
    %4159 = vmatpush1.bf16.msra.mxu0 0
    %4160 = vmatprep.mubr.bf16.mxu0 0
    %4161 = vmatmul.mubr.bf16.gmra.mrb[0].mxu0 %v4126
    %v4162 = vpop.f32.mrb[0].mxu0
    %v4163 = vadd.f32 0.0, %v4162
    %v4164 = vpop.f32.mrb[0].mxu0
    %v4165 = vpop.f32.mrb[0].mxu0
    %v4166 = vpop.f32.mrb[0].mxu0
    %4167 = vdwg.mxu0
    %v4168 = vpack.c.bf16 %v4163, %v4163
    %s4169 = scalar_lea.vmem [#allocation5], 7
    %v4170 = vld [vmem:[%s4169] sm:$0x1]
    %v4172 = vsel %vm270, %v4170, 0
    %4174 = vmatprep.subr.bf16.mxu0 0
    %4175 = vmatpush1.bf16.msra.mxu0 %v3843
    %4176 = vmatprep.subr.bf16.mxu0 0
    %4177 = vmatpush1.bf16.msra.mxu0 %v3850
    %4178 = vmatprep.subr.bf16.mxu0 0
    %4179 = vmatpush1.bf16.msra.mxu0 0
    %4180 = vmatprep.subr.bf16.mxu0 0
    %4181 = vmatpush1.bf16.msra.mxu0 0
    %4182 = vmatprep.subr.bf16.mxu0 0
    %4183 = vmatpush1.bf16.msra.mxu0 0
    %4184 = vmatprep.subr.bf16.mxu0 0
    %4185 = vmatpush1.bf16.msra.mxu0 0
    %4186 = vmatprep.subr.bf16.mxu0 0
    %4187 = vmatpush1.bf16.msra.mxu0 0
    %4188 = vmatprep.subr.bf16.mxu0 0
    %4189 = vmatpush1.bf16.msra.mxu0 0
    %4190 = vmatprep.subr.bf16.mxu0 0
    %4191 = vmatpush1.bf16.msra.mxu0 0
    %4192 = vmatprep.subr.bf16.mxu0 0
    %4193 = vmatpush1.bf16.msra.mxu0 0
    %4194 = vmatprep.subr.bf16.mxu0 0
    %4195 = vmatpush1.bf16.msra.mxu0 0
    %4196 = vmatprep.subr.bf16.mxu0 0
    %4197 = vmatpush1.bf16.msra.mxu0 0
    %4198 = vmatprep.subr.bf16.mxu0 0
    %4199 = vmatpush1.bf16.msra.mxu0 0
    %4200 = vmatprep.subr.bf16.mxu0 0
    %4201 = vmatpush1.bf16.msra.mxu0 0
    %4202 = vmatprep.subr.bf16.mxu0 0
    %4203 = vmatpush1.bf16.msra.mxu0 0
    %4204 = vmatprep.subr.bf16.mxu0 0
    %4205 = vmatpush1.bf16.msra.mxu0 0
    %4206 = vmatprep.mubr.bf16.mxu0 0
    %4207 = vmatmul.mubr.bf16.gmra.mrb[0].mxu0 %v4172
    %v4208 = vpop.f32.mrb[0].mxu0
    %v4209 = vadd.f32 0.0, %v4208
    %v4210 = vpop.f32.mrb[0].mxu0
    %v4211 = vpop.f32.mrb[0].mxu0
    %v4212 = vpop.f32.mrb[0].mxu0
    %4213 = vdwg.mxu0
    %v4214 = vpack.c.bf16 %v4209, %v4209
    %s4215 = scalar_lea.vmem [#allocation5], 8
    %v4216 = vld [vmem:[%s4215] sm:$0x1]
    %v4218 = vsel %vm270, %v4216, 0
    %4220 = vmatprep.subr.bf16.mxu0 0
    %4221 = vmatpush1.bf16.msra.mxu0 %v3843
    %4222 = vmatprep.subr.bf16.mxu0 0
    %4223 = vmatpush1.bf16.msra.mxu0 %v3850
    %4224 = vmatprep.subr.bf16.mxu0 0
    %4225 = vmatpush1.bf16.msra.mxu0 0
    %4226 = vmatprep.subr.bf16.mxu0 0
    %4227 = vmatpush1.bf16.msra.mxu0 0
    %4228 = vmatprep.subr.bf16.mxu0 0
    %4229 = vmatpush1.bf16.msra.mxu0 0
    %4230 = vmatprep.subr.bf16.mxu0 0
    %4231 = vmatpush1.bf16.msra.mxu0 0
    %4232 = vmatprep.subr.bf16.mxu0 0
    %4233 = vmatpush1.bf16.msra.mxu0 0
    %4234 = vmatprep.subr.bf16.mxu0 0
    %4235 = vmatpush1.bf16.msra.mxu0 0
    %4236 = vmatprep.subr.bf16.mxu0 0
    %4237 = vmatpush1.bf16.msra.mxu0 0
    %4238 = vmatprep.subr.bf16.mxu0 0
    %4239 = vmatpush1.bf16.msra.mxu0 0
    %4240 = vmatprep.subr.bf16.mxu0 0
    %4241 = vmatpush1.bf16.msra.mxu0 0
    %4242 = vmatprep.subr.bf16.mxu0 0
    %4243 = vmatpush1.bf16.msra.mxu0 0
    %4244 = vmatprep.subr.bf16.mxu0 0
    %4245 = vmatpush1.bf16.msra.mxu0 0
    %4246 = vmatprep.subr.bf16.mxu0 0
    %4247 = vmatpush1.bf16.msra.mxu0 0
    %4248 = vmatprep.subr.bf16.mxu0 0
    %4249 = vmatpush1.bf16.msra.mxu0 0
    %4250 = vmatprep.subr.bf16.mxu0 0
    %4251 = vmatpush1.bf16.msra.mxu0 0
    %4252 = vmatprep.mubr.bf16.mxu0 0
    %4253 = vmatmul.mubr.bf16.gmra.mrb[0].mxu0 %v4218
    %v4254 = vpop.f32.mrb[0].mxu0
    %v4255 = vadd.f32 0.0, %v4254
    %v4256 = vpop.f32.mrb[0].mxu0
    %v4257 = vpop.f32.mrb[0].mxu0
    %v4258 = vpop.f32.mrb[0].mxu0
    %4259 = vdwg.mxu0
    %v4260 = vpack.c.bf16 %v4255, %v4255
    %v4261 = vld [vmem:[#allocation16] sm:$0xff]
    %v4262 = vld [vmem:[#allocation16 + $0x8] sm:$0xff]
    %v4263 = vld [vmem:[#allocation16 + $0x10] sm:$0xff]
    %v4264 = vld [vmem:[#allocation16 + $0x18] sm:$0xff]
    %v4265 = vld [vmem:[#allocation16 + $0x20] sm:$0xff]
    %v4266 = vld [vmem:[#allocation16 + $0x28] sm:$0xff]
    %v4267 = vld [vmem:[#allocation16 + $0x30] sm:$0xff]
    %v4268 = vld [vmem:[#allocation16 + $0x38] sm:$0xff]
    %v4269 = vld [vmem:[#allocation16 + $0x40] sm:$0xff]
    %v4270 = vld [vmem:[#allocation16 + $0x48] sm:$0xff]
    %v4271 = vld [vmem:[#allocation16 + $0x50] sm:$0xff]
    %v4272 = vld [vmem:[#allocation16 + $0x58] sm:$0xff]
    %v4273 = vld [vmem:[#allocation16 + $0x60] sm:$0xff]
    %v4274 = vld [vmem:[#allocation16 + $0x68] sm:$0xff]
    %v4275 = vld [vmem:[#allocation16 + $0x70] sm:$0xff]
    %v4276 = vld [vmem:[#allocation16 + $0x78] sm:$0xff]
    %v4277 = vld [vmem:[#allocation16 + $0x80] sm:$0xff]
    %v4278 = vld [vmem:[#allocation16 + $0x88] sm:$0xff]
    %v4279 = vld [vmem:[#allocation16 + $0x90] sm:$0xff]
    %v4280 = vld [vmem:[#allocation16 + $0x98] sm:$0xff]
    %v4281 = vld [vmem:[#allocation16 + $0xa0] sm:$0xff]
    %v4282 = vld [vmem:[#allocation16 + $0xa8] sm:$0xff]
    %v4283 = vld [vmem:[#allocation16 + $0xb0] sm:$0xff]
    %v4284 = vld [vmem:[#allocation16 + $0xb8] sm:$0xff]
    %v4285 = vld [vmem:[#allocation16 + $0xc0] sm:$0xff]
    %v4286 = vld [vmem:[#allocation16 + $0xc8] sm:$0xff]
    %v4287 = vld [vmem:[#allocation16 + $0xd0] sm:$0xff]
    %v4288 = vld [vmem:[#allocation16 + $0xd8] sm:$0xff]
    %v4289 = vld [vmem:[#allocation16 + $0xe0] sm:$0xff]
    %v4290 = vld [vmem:[#allocation16 + $0xe8] sm:$0xff]
    %v4291 = vld [vmem:[#allocation16 + $0xf0] sm:$0xff]
    %v4292 = vld [vmem:[#allocation16 + $0xf8] sm:$0xff]
    %v4293 = vld [vmem:[#allocation16 + $0x100] sm:$0xff]
    %v4294 = vld [vmem:[#allocation16 + $0x108] sm:$0xff]
    %v4295 = vld [vmem:[#allocation16 + $0x110] sm:$0xff]
    %v4296 = vld [vmem:[#allocation16 + $0x118] sm:$0xff]
    %v4297 = vld [vmem:[#allocation16 + $0x120] sm:$0xff]
    %v4298 = vld [vmem:[#allocation16 + $0x128] sm:$0xff]
    %v4299 = vld [vmem:[#allocation16 + $0x130] sm:$0xff]
    %v4300 = vld [vmem:[#allocation16 + $0x138] sm:$0xff]
    %v4301 = vld [vmem:[#allocation16 + $0x140] sm:$0xff]
    %v4302 = vld [vmem:[#allocation16 + $0x148] sm:$0xff]
    %v4303 = vld [vmem:[#allocation16 + $0x150] sm:$0xff]
    %v4304 = vld [vmem:[#allocation16 + $0x158] sm:$0xff]
    %v4305 = vld [vmem:[#allocation16 + $0x160] sm:$0xff]
    %v4306 = vld [vmem:[#allocation16 + $0x168] sm:$0xff]
    %v4307 = vld [vmem:[#allocation16 + $0x170] sm:$0xff]
    %v4308 = vld [vmem:[#allocation16 + $0x178] sm:$0xff]
    %v4309 = vld [vmem:[#allocation16 + $0x180] sm:$0xff]
    %v4310 = vld [vmem:[#allocation16 + $0x188] sm:$0xff]
    %v4311 = vld [vmem:[#allocation16 + $0x190] sm:$0xff]
    %v4312 = vld [vmem:[#allocation16 + $0x198] sm:$0xff]
    %v4313 = vld [vmem:[#allocation16 + $0x1a0] sm:$0xff]
    %v4314 = vld [vmem:[#allocation16 + $0x1a8] sm:$0xff]
    %v4315 = vld [vmem:[#allocation16 + $0x1b0] sm:$0xff]
    %v4316 = vld [vmem:[#allocation16 + $0x1b8] sm:$0xff]
    %v4317 = vld [vmem:[#allocation16 + $0x1c0] sm:$0xff]
    %v4318 = vld [vmem:[#allocation16 + $0x1c8] sm:$0xff]
    %v4319 = vld [vmem:[#allocation16 + $0x1d0] sm:$0xff]
    %v4320 = vld [vmem:[#allocation16 + $0x1d8] sm:$0xff]
    %v4321 = vld [vmem:[#allocation16 + $0x1e0] sm:$0xff]
    %v4322 = vld [vmem:[#allocation16 + $0x1e8] sm:$0xff]
    %v4323 = vld [vmem:[#allocation16 + $0x1f0] sm:$0xff]
    %v4324 = vld [vmem:[#allocation16 + $0x1f8] sm:$0xff]
    %v4325 = vld [vmem:[#allocation16 + $0x200] sm:$0xff]
    %v4326 = vld [vmem:[#allocation16 + $0x208] sm:$0xff]
    %v4327 = vld [vmem:[#allocation16 + $0x210] sm:$0xff]
    %v4328 = vld [vmem:[#allocation16 + $0x218] sm:$0xff]
    %v4329 = vld [vmem:[#allocation16 + $0x220] sm:$0xff]
    %v4330 = vld [vmem:[#allocation16 + $0x228] sm:$0xff]
    %v4331 = vld [vmem:[#allocation16 + $0x230] sm:$0xff]
    %v4332 = vld [vmem:[#allocation16 + $0x238] sm:$0xff]
    %v4333 = vld [vmem:[#allocation16 + $0x240] sm:$0xff]
    %v4334 = vld [vmem:[#allocation16 + $0x248] sm:$0xff]
    %v4335 = vld [vmem:[#allocation16 + $0x250] sm:$0xff]
    %v4336 = vld [vmem:[#allocation16 + $0x258] sm:$0xff]
    %v4337 = vld [vmem:[#allocation16 + $0x260] sm:$0xff]
    %v4338 = vld [vmem:[#allocation16 + $0x268] sm:$0xff]
    %v4339 = vld [vmem:[#allocation16 + $0x270] sm:$0xff]
    %v4340 = vld [vmem:[#allocation16 + $0x278] sm:$0xff]
    %v4341 = vld [vmem:[#allocation16 + $0x280] sm:$0xff]
    %v4342 = vld [vmem:[#allocation16 + $0x288] sm:$0xff]
    %v4343 = vld [vmem:[#allocation16 + $0x290] sm:$0xff]
    %v4344 = vld [vmem:[#allocation16 + $0x298] sm:$0xff]
    %v4345 = vld [vmem:[#allocation16 + $0x2a0] sm:$0xff]
    %v4346 = vld [vmem:[#allocation16 + $0x2a8] sm:$0xff]
    %v4347 = vld [vmem:[#allocation16 + $0x2b0] sm:$0xff]
    %v4348 = vld [vmem:[#allocation16 + $0x2b8] sm:$0xff]
    %v4349 = vld [vmem:[#allocation16 + $0x2c0] sm:$0xff]
    %v4350 = vld [vmem:[#allocation16 + $0x2c8] sm:$0xff]
    %v4351 = vld [vmem:[#allocation16 + $0x2d0] sm:$0xff]
    %v4352 = vld [vmem:[#allocation16 + $0x2d8] sm:$0xff]
    %v4353 = vld [vmem:[#allocation16 + $0x2e0] sm:$0xff]
    %v4354 = vld [vmem:[#allocation16 + $0x2e8] sm:$0xff]
    %v4355 = vld [vmem:[#allocation16 + $0x2f0] sm:$0xff]
    %v4356 = vld [vmem:[#allocation16 + $0x2f8] sm:$0xff]
    %v4357 = vld [vmem:[#allocation16 + $0x300] sm:$0xff]
    %v4358 = vld [vmem:[#allocation16 + $0x308] sm:$0xff]
    %v4359 = vld [vmem:[#allocation16 + $0x310] sm:$0xff]
    %v4360 = vld [vmem:[#allocation16 + $0x318] sm:$0xff]
    %v4361 = vld [vmem:[#allocation16 + $0x320] sm:$0xff]
    %v4362 = vld [vmem:[#allocation16 + $0x328] sm:$0xff]
    %v4363 = vld [vmem:[#allocation16 + $0x330] sm:$0xff]
    %v4364 = vld [vmem:[#allocation16 + $0x338] sm:$0xff]
    %v4365 = vld [vmem:[#allocation16 + $0x340] sm:$0xff]
    %v4366 = vld [vmem:[#allocation16 + $0x348] sm:$0xff]
    %v4367 = vld [vmem:[#allocation16 + $0x350] sm:$0xff]
    %v4368 = vld [vmem:[#allocation16 + $0x358] sm:$0xff]
    %v4369 = vld [vmem:[#allocation16 + $0x360] sm:$0xff]
    %v4370 = vld [vmem:[#allocation16 + $0x368] sm:$0xff]
    %v4371 = vld [vmem:[#allocation16 + $0x370] sm:$0xff]
    %v4372 = vld [vmem:[#allocation16 + $0x378] sm:$0xff]
    %v4373 = vld [vmem:[#allocation16 + $0x380] sm:$0xff]
    %v4374 = vld [vmem:[#allocation16 + $0x388] sm:$0xff]
    %v4375 = vld [vmem:[#allocation16 + $0x390] sm:$0xff]
    %v4376 = vld [vmem:[#allocation16 + $0x398] sm:$0xff]
    %v4377 = vld [vmem:[#allocation16 + $0x3a0] sm:$0xff]
    %v4378 = vld [vmem:[#allocation16 + $0x3a8] sm:$0xff]
    %v4379 = vld [vmem:[#allocation16 + $0x3b0] sm:$0xff]
    %v4380 = vld [vmem:[#allocation16 + $0x3b8] sm:$0xff]
    %v4381 = vld [vmem:[#allocation16 + $0x3c0] sm:$0xff]
    %v4382 = vld [vmem:[#allocation16 + $0x3c8] sm:$0xff]
    %v4383 = vld [vmem:[#allocation16 + $0x3d0] sm:$0xff]
    %v4384 = vld [vmem:[#allocation16 + $0x3d8] sm:$0xff]
    %v4385 = vld [vmem:[#allocation16 + $0x3e0] sm:$0xff]
    %v4386 = vld [vmem:[#allocation16 + $0x3e8] sm:$0xff]
    %v4387 = vld [vmem:[#allocation16 + $0x3f0] sm:$0xff]
    %v4388 = vld [vmem:[#allocation16 + $0x3f8] sm:$0xff]
    %v4389 = vld [vmem:[#allocation16 + $0x400] sm:$0xff]
    %v4390 = vld [vmem:[#allocation16 + $0x408] sm:$0xff]
    %v4391 = vld [vmem:[#allocation16 + $0x410] sm:$0xff]
    %v4392 = vld [vmem:[#allocation16 + $0x418] sm:$0xff]
    %v4393 = vld [vmem:[#allocation16 + $0x420] sm:$0xff]
    %v4394 = vld [vmem:[#allocation16 + $0x428] sm:$0xff]
    %v4395 = vld [vmem:[#allocation16 + $0x430] sm:$0xff]
    %v4396 = vld [vmem:[#allocation16 + $0x438] sm:$0xff]
    %v4397 = vld [vmem:[#allocation16 + $0x440] sm:$0xff]
    %v4398 = vld [vmem:[#allocation16 + $0x448] sm:$0xff]
    %v4399 = vld [vmem:[#allocation16 + $0x450] sm:$0xff]
    %v4400 = vld [vmem:[#allocation16 + $0x458] sm:$0xff]
    %v4401 = vld [vmem:[#allocation16 + $0x460] sm:$0xff]
    %v4402 = vld [vmem:[#allocation16 + $0x468] sm:$0xff]
    %v4403 = vld [vmem:[#allocation16 + $0x470] sm:$0xff]
    %v4404 = vld [vmem:[#allocation16 + $0x478] sm:$0xff]
    %v4405 = vld [vmem:[#allocation16 + $0x480] sm:$0xff]
    %v4406 = vld [vmem:[#allocation16 + $0x488] sm:$0xff]
    %v4407 = vld [vmem:[#allocation16 + $0x490] sm:$0xff]
    %v4408 = vld [vmem:[#allocation16 + $0x498] sm:$0xff]
    %v4409 = vld [vmem:[#allocation16 + $0x4a0] sm:$0xff]
    %v4410 = vld [vmem:[#allocation16 + $0x4a8] sm:$0xff]
    %v4411 = vld [vmem:[#allocation16 + $0x4b0] sm:$0xff]
    %v4412 = vld [vmem:[#allocation16 + $0x4b8] sm:$0xff]
    %v4413 = vld [vmem:[#allocation16 + $0x4c0] sm:$0xff]
    %v4414 = vld [vmem:[#allocation16 + $0x4c8] sm:$0xff]
    %v4415 = vld [vmem:[#allocation16 + $0x4d0] sm:$0xff]
    %v4416 = vld [vmem:[#allocation16 + $0x4d8] sm:$0xff]
    %v4417 = vld [vmem:[#allocation16 + $0x4e0] sm:$0xff]
    %v4418 = vld [vmem:[#allocation16 + $0x4e8] sm:$0xff]
    %v4419 = vld [vmem:[#allocation16 + $0x4f0] sm:$0xff]
    %v4420 = vld [vmem:[#allocation16 + $0x4f8] sm:$0xff]
    %v4421 = vld [vmem:[#allocation16 + $0x500] sm:$0xff]
    %v4422 = vld [vmem:[#allocation16 + $0x508] sm:$0xff]
    %v4423 = vld [vmem:[#allocation16 + $0x510] sm:$0xff]
    %v4424 = vld [vmem:[#allocation16 + $0x518] sm:$0xff]
    %v4425 = vld [vmem:[#allocation16 + $0x520] sm:$0xff]
    %v4426 = vld [vmem:[#allocation16 + $0x528] sm:$0xff]
    %v4427 = vld [vmem:[#allocation16 + $0x530] sm:$0xff]
    %v4428 = vld [vmem:[#allocation16 + $0x538] sm:$0xff]
    %v4429 = vld [vmem:[#allocation16 + $0x540] sm:$0xff]
    %v4430 = vld [vmem:[#allocation16 + $0x548] sm:$0xff]
    %v4431 = vld [vmem:[#allocation16 + $0x550] sm:$0xff]
    %v4432 = vld [vmem:[#allocation16 + $0x558] sm:$0xff]
    %v4433 = vld [vmem:[#allocation16 + $0x560] sm:$0xff]
    %v4434 = vld [vmem:[#allocation16 + $0x568] sm:$0xff]
    %v4435 = vld [vmem:[#allocation16 + $0x570] sm:$0xff]
    %v4436 = vld [vmem:[#allocation16 + $0x578] sm:$0xff]
    %v4437 = vld [vmem:[#allocation16 + $0x580] sm:$0xff]
    %v4438 = vld [vmem:[#allocation16 + $0x588] sm:$0xff]
    %v4439 = vld [vmem:[#allocation16 + $0x590] sm:$0xff]
    %v4440 = vld [vmem:[#allocation16 + $0x598] sm:$0xff]
    %v4441 = vld [vmem:[#allocation16 + $0x5a0] sm:$0xff]
    %v4442 = vld [vmem:[#allocation16 + $0x5a8] sm:$0xff]
    %v4443 = vld [vmem:[#allocation16 + $0x5b0] sm:$0xff]
    %v4444 = vld [vmem:[#allocation16 + $0x5b8] sm:$0xff]
    %v4445 = vld [vmem:[#allocation16 + $0x5c0] sm:$0xff]
    %v4446 = vld [vmem:[#allocation16 + $0x5c8] sm:$0xff]
    %v4447 = vld [vmem:[#allocation16 + $0x5d0] sm:$0xff]
    %v4448 = vld [vmem:[#allocation16 + $0x5d8] sm:$0xff]
    %v4449 = vld [vmem:[#allocation16 + $0x5e0] sm:$0xff]
    %v4450 = vld [vmem:[#allocation16 + $0x5e8] sm:$0xff]
    %v4451 = vld [vmem:[#allocation16 + $0x5f0] sm:$0xff]
    %v4452 = vld [vmem:[#allocation16 + $0x5f8] sm:$0xff]
    %v4453 = vld [vmem:[#allocation16 + $0x600] sm:$0xff]
    %v4454 = vld [vmem:[#allocation16 + $0x608] sm:$0xff]
    %v4455 = vld [vmem:[#allocation16 + $0x610] sm:$0xff]
    %v4456 = vld [vmem:[#allocation16 + $0x618] sm:$0xff]
    %v4457 = vld [vmem:[#allocation16 + $0x620] sm:$0xff]
    %v4458 = vld [vmem:[#allocation16 + $0x628] sm:$0xff]
    %v4459 = vld [vmem:[#allocation16 + $0x630] sm:$0xff]
    %v4460 = vld [vmem:[#allocation16 + $0x638] sm:$0xff]
    %v4461 = vld [vmem:[#allocation16 + $0x640] sm:$0xff]
    %v4462 = vld [vmem:[#allocation16 + $0x648] sm:$0xff]
    %v4463 = vld [vmem:[#allocation16 + $0x650] sm:$0xff]
    %v4464 = vld [vmem:[#allocation16 + $0x658] sm:$0xff]
    %v4465 = vld [vmem:[#allocation16 + $0x660] sm:$0xff]
    %v4466 = vld [vmem:[#allocation16 + $0x668] sm:$0xff]
    %v4467 = vld [vmem:[#allocation16 + $0x670] sm:$0xff]
    %v4468 = vld [vmem:[#allocation16 + $0x678] sm:$0xff]
    %v4469 = vld [vmem:[#allocation16 + $0x680] sm:$0xff]
    %v4470 = vld [vmem:[#allocation16 + $0x688] sm:$0xff]
    %v4471 = vld [vmem:[#allocation16 + $0x690] sm:$0xff]
    %v4472 = vld [vmem:[#allocation16 + $0x698] sm:$0xff]
    %v4473 = vld [vmem:[#allocation16 + $0x6a0] sm:$0xff]
    %v4474 = vld [vmem:[#allocation16 + $0x6a8] sm:$0xff]
    %v4475 = vld [vmem:[#allocation16 + $0x6b0] sm:$0xff]
    %v4476 = vld [vmem:[#allocation16 + $0x6b8] sm:$0xff]
    %v4477 = vld [vmem:[#allocation16 + $0x6c0] sm:$0xff]
    %v4478 = vld [vmem:[#allocation16 + $0x6c8] sm:$0xff]
    %v4479 = vld [vmem:[#allocation16 + $0x6d0] sm:$0xff]
    %v4480 = vld [vmem:[#allocation16 + $0x6d8] sm:$0xff]
    %v4481 = vld [vmem:[#allocation16 + $0x6e0] sm:$0xff]
    %v4482 = vld [vmem:[#allocation16 + $0x6e8] sm:$0xff]
    %v4483 = vld [vmem:[#allocation16 + $0x6f0] sm:$0xff]
    %v4484 = vld [vmem:[#allocation16 + $0x6f8] sm:$0xff]
    %v4485 = vld [vmem:[#allocation16 + $0x700] sm:$0xff]
    %v4486 = vld [vmem:[#allocation16 + $0x708] sm:$0xff]
    %v4487 = vld [vmem:[#allocation16 + $0x710] sm:$0xff]
    %v4488 = vld [vmem:[#allocation16 + $0x718] sm:$0xff]
    %v4489 = vld [vmem:[#allocation16 + $0x720] sm:$0xff]
    %v4490 = vld [vmem:[#allocation16 + $0x728] sm:$0xff]
    %v4491 = vld [vmem:[#allocation16 + $0x730] sm:$0xff]
    %v4492 = vld [vmem:[#allocation16 + $0x738] sm:$0xff]
    %v4493 = vld [vmem:[#allocation16 + $0x740] sm:$0xff]
    %v4494 = vld [vmem:[#allocation16 + $0x748] sm:$0xff]
    %v4495 = vld [vmem:[#allocation16 + $0x750] sm:$0xff]
    %v4496 = vld [vmem:[#allocation16 + $0x758] sm:$0xff]
    %v4497 = vld [vmem:[#allocation16 + $0x760] sm:$0xff]
    %v4498 = vld [vmem:[#allocation16 + $0x768] sm:$0xff]
    %v4499 = vld [vmem:[#allocation16 + $0x770] sm:$0xff]
    %v4500 = vld [vmem:[#allocation16 + $0x778] sm:$0xff]
    %v4501 = vld [vmem:[#allocation16 + $0x780] sm:$0xff]
    %v4502 = vld [vmem:[#allocation16 + $0x788] sm:$0xff]
    %v4503 = vld [vmem:[#allocation16 + $0x790] sm:$0xff]
    %v4504 = vld [vmem:[#allocation16 + $0x798] sm:$0xff]
    %v4505 = vld [vmem:[#allocation16 + $0x7a0] sm:$0xff]
    %v4506 = vld [vmem:[#allocation16 + $0x7a8] sm:$0xff]
    %v4507 = vld [vmem:[#allocation16 + $0x7b0] sm:$0xff]
    %v4508 = vld [vmem:[#allocation16 + $0x7b8] sm:$0xff]
    %v4509 = vld [vmem:[#allocation16 + $0x7c0] sm:$0xff]
    %v4510 = vld [vmem:[#allocation16 + $0x7c8] sm:$0xff]
    %v4511 = vld [vmem:[#allocation16 + $0x7d0] sm:$0xff]
    %v4512 = vld [vmem:[#allocation16 + $0x7d8] sm:$0xff]
    %v4513 = vld [vmem:[#allocation16 + $0x7e0] sm:$0xff]
    %v4514 = vld [vmem:[#allocation16 + $0x7e8] sm:$0xff]
    %v4515 = vld [vmem:[#allocation16 + $0x7f0] sm:$0xff]
    %v4516 = vld [vmem:[#allocation16 + $0x7f8] sm:$0xff]
    %v4517 = vld [vmem:[#allocation16 + $0x800] sm:$0xff]
    %v4518 = vld [vmem:[#allocation16 + $0x808] sm:$0xff]
    %v4519 = vld [vmem:[#allocation16 + $0x810] sm:$0xff]
    %v4520 = vld [vmem:[#allocation16 + $0x818] sm:$0xff]
    %v4521 = vld [vmem:[#allocation16 + $0x820] sm:$0xff]
    %v4522 = vld [vmem:[#allocation16 + $0x828] sm:$0xff]
    %v4523 = vld [vmem:[#allocation16 + $0x830] sm:$0xff]
    %v4524 = vld [vmem:[#allocation16 + $0x838] sm:$0xff]
    %v4525 = vld [vmem:[#allocation16 + $0x840] sm:$0xff]
    %v4526 = vld [vmem:[#allocation16 + $0x848] sm:$0xff]
    %v4527 = vld [vmem:[#allocation16 + $0x850] sm:$0xff]
    %v4528 = vld [vmem:[#allocation16 + $0x858] sm:$0xff]
    %v4529 = vld [vmem:[#allocation16 + $0x860] sm:$0xff]
    %v4530 = vld [vmem:[#allocation16 + $0x868] sm:$0xff]
    %v4531 = vld [vmem:[#allocation16 + $0x870] sm:$0xff]
    %v4532 = vld [vmem:[#allocation16 + $0x878] sm:$0xff]
    %v4533 = vld [vmem:[#allocation16 + $0x880] sm:$0xff]
    %v4534 = vld [vmem:[#allocation16 + $0x888] sm:$0xff]
    %v4535 = vld [vmem:[#allocation16 + $0x890] sm:$0xff]
    %v4536 = vld [vmem:[#allocation16 + $0x898] sm:$0xff]
    %v4537 = vld [vmem:[#allocation16 + $0x8a0] sm:$0xff]
    %v4538 = vld [vmem:[#allocation16 + $0x8a8] sm:$0xff]
    %v4539 = vld [vmem:[#allocation16 + $0x8b0] sm:$0xff]
    %v4540 = vld [vmem:[#allocation16 + $0x8b8] sm:$0xff]
    %v4541 = vld [vmem:[#allocation16 + $0x8c0] sm:$0xff]
    %v4542 = vld [vmem:[#allocation16 + $0x8c8] sm:$0xff]
    %v4543 = vld [vmem:[#allocation16 + $0x8d0] sm:$0xff]
    %v4544 = vld [vmem:[#allocation16 + $0x8d8] sm:$0xff]
    %v4545 = vld [vmem:[#allocation16 + $0x8e0] sm:$0xff]
    %v4546 = vld [vmem:[#allocation16 + $0x8e8] sm:$0xff]
    %v4547 = vld [vmem:[#allocation16 + $0x8f0] sm:$0xff]
    %v4548 = vld [vmem:[#allocation16 + $0x8f8] sm:$0xff]
    %v4549 = vld [vmem:[#allocation17] sm:$0xf]
    %v4551 = vlaneseq
    %v4552 = vshrl.u32 %v4551, 7
    %v4553 = vsub.s32 0, %v4552
    %v4554 = vrot.slane %v4549, %v4553
    %v4555 = vlaneseq
    %v4556 = vshrl.u32 %v4555, 7
    %v4557 = vsub.s32 1, %v4556
    %v4558 = vrot.slane %v4549, %v4557
    %v4559 = vlaneseq
    %v4560 = vshrl.u32 %v4559, 7
    %v4561 = vsub.s32 2, %v4560
    %v4562 = vrot.slane %v4549, %v4561
    %v4563 = vlaneseq
    %v4564 = vshrl.u32 %v4563, 7
    %v4565 = vsub.s32 3, %v4564
    %v4566 = vrot.slane %v4549, %v4565
    %v4859 = vunpack.c.l.b16 %v4261
    %v4860 = vunpack.c.h.b16 %v4261
    %v4861 = vunpack.c.l.b16 %v4262
    %v4862 = vunpack.c.h.b16 %v4262
    %v4863 = vunpack.c.l.b16 %v4263
    %v4864 = vunpack.c.h.b16 %v4263
    %v4865 = vunpack.c.l.b16 %v4264
    %v4866 = vunpack.c.h.b16 %v4264
    %v4867 = vunpack.c.l.b16 %v4265
    %v4868 = vunpack.c.h.b16 %v4265
    %v4869 = vunpack.c.l.b16 %v4266
    %v4870 = vunpack.c.h.b16 %v4266
    %v4871 = vunpack.c.l.b16 %v4267
    %v4872 = vunpack.c.h.b16 %v4267
    %v4873 = vunpack.c.l.b16 %v4268
    %v4874 = vunpack.c.h.b16 %v4268
    %v4875 = vunpack.c.l.b16 %v4269
    %v4876 = vunpack.c.h.b16 %v4269
    %v4877 = vunpack.c.l.b16 %v4270
    %v4878 = vunpack.c.h.b16 %v4270
    %v4879 = vunpack.c.l.b16 %v4271
    %v4880 = vunpack.c.h.b16 %v4271
    %v4881 = vunpack.c.l.b16 %v4272
    %v4882 = vunpack.c.h.b16 %v4272
    %v4883 = vunpack.c.l.b16 %v4273
    %v4884 = vunpack.c.h.b16 %v4273
    %v4885 = vunpack.c.l.b16 %v4274
    %v4886 = vunpack.c.h.b16 %v4274
    %v4887 = vunpack.c.l.b16 %v4275
    %v4888 = vunpack.c.h.b16 %v4275
    %v4889 = vunpack.c.l.b16 %v4276
    %v4890 = vunpack.c.h.b16 %v4276
    %v4891 = vunpack.c.l.b16 %v4277
    %v4892 = vunpack.c.h.b16 %v4277
    %v4893 = vunpack.c.l.b16 %v4278
    %v4894 = vunpack.c.h.b16 %v4278
    %v4895 = vunpack.c.l.b16 %v4279
    %v4896 = vunpack.c.h.b16 %v4279
    %v4897 = vunpack.c.l.b16 %v4280
    %v4898 = vunpack.c.h.b16 %v4280
    %v4899 = vunpack.c.l.b16 %v4281
    %v4900 = vunpack.c.h.b16 %v4281
    %v4901 = vunpack.c.l.b16 %v4282
    %v4902 = vunpack.c.h.b16 %v4282
    %v4903 = vunpack.c.l.b16 %v4283
    %v4904 = vunpack.c.h.b16 %v4283
    %v4905 = vunpack.c.l.b16 %v4284
    %v4906 = vunpack.c.h.b16 %v4284
    %v4907 = vunpack.c.l.b16 %v4285
    %v4908 = vunpack.c.h.b16 %v4285
    %v4909 = vunpack.c.l.b16 %v4286
    %v4910 = vunpack.c.h.b16 %v4286
    %v4911 = vunpack.c.l.b16 %v4287
    %v4912 = vunpack.c.h.b16 %v4287
    %v4913 = vunpack.c.l.b16 %v4288
    %v4914 = vunpack.c.h.b16 %v4288
    %v4915 = vunpack.c.l.b16 %v4289
    %v4916 = vunpack.c.h.b16 %v4289
    %v4917 = vunpack.c.l.b16 %v4290
    %v4918 = vunpack.c.h.b16 %v4290
    %v4919 = vunpack.c.l.b16 %v4291
    %v4920 = vunpack.c.h.b16 %v4291
    %v4921 = vunpack.c.l.b16 %v4292
    %v4922 = vunpack.c.h.b16 %v4292
    %v4923 = vunpack.c.l.b16 %v4293
    %v4924 = vunpack.c.h.b16 %v4293
    %v4925 = vunpack.c.l.b16 %v4294
    %v4926 = vunpack.c.h.b16 %v4294
    %v4927 = vunpack.c.l.b16 %v4295
    %v4928 = vunpack.c.h.b16 %v4295
    %v4929 = vunpack.c.l.b16 %v4296
    %v4930 = vunpack.c.h.b16 %v4296
    %v4931 = vunpack.c.l.b16 %v4297
    %v4932 = vunpack.c.h.b16 %v4297
    %v4933 = vunpack.c.l.b16 %v4298
    %v4934 = vunpack.c.h.b16 %v4298
    %v4935 = vunpack.c.l.b16 %v4299
    %v4936 = vunpack.c.h.b16 %v4299
    %v4937 = vunpack.c.l.b16 %v4300
    %v4938 = vunpack.c.h.b16 %v4300
    %v4939 = vunpack.c.l.b16 %v4301
    %v4940 = vunpack.c.h.b16 %v4301
    %v4941 = vunpack.c.l.b16 %v4302
    %v4942 = vunpack.c.h.b16 %v4302
    %v4943 = vunpack.c.l.b16 %v4303
    %v4944 = vunpack.c.h.b16 %v4303
    %v4945 = vunpack.c.l.b16 %v4304
    %v4946 = vunpack.c.h.b16 %v4304
    %v4947 = vunpack.c.l.b16 %v4305
    %v4948 = vunpack.c.h.b16 %v4305
    %v4949 = vunpack.c.l.b16 %v4306
    %v4950 = vunpack.c.h.b16 %v4306
    %v4951 = vunpack.c.l.b16 %v4307
    %v4952 = vunpack.c.h.b16 %v4307
    %v4953 = vunpack.c.l.b16 %v4308
    %v4954 = vunpack.c.h.b16 %v4308
    %v4955 = vunpack.c.l.b16 %v4309
    %v4956 = vunpack.c.h.b16 %v4309
    %v4957 = vunpack.c.l.b16 %v4310
    %v4958 = vunpack.c.h.b16 %v4310
    %v4959 = vunpack.c.l.b16 %v4311
    %v4960 = vunpack.c.h.b16 %v4311
    %v4961 = vunpack.c.l.b16 %v4312
    %v4962 = vunpack.c.h.b16 %v4312
    %v4963 = vunpack.c.l.b16 %v4313
    %v4964 = vunpack.c.h.b16 %v4313
    %v4965 = vunpack.c.l.b16 %v4314
    %v4966 = vunpack.c.h.b16 %v4314
    %v4967 = vunpack.c.l.b16 %v4315
    %v4968 = vunpack.c.h.b16 %v4315
    %v4969 = vunpack.c.l.b16 %v4316
    %v4970 = vunpack.c.h.b16 %v4316
    %v4971 = vunpack.c.l.b16 %v4317
    %v4972 = vunpack.c.h.b16 %v4317
    %v4973 = vunpack.c.l.b16 %v4318
    %v4974 = vunpack.c.h.b16 %v4318
    %v4975 = vunpack.c.l.b16 %v4319
    %v4976 = vunpack.c.h.b16 %v4319
    %v4977 = vunpack.c.l.b16 %v4320
    %v4978 = vunpack.c.h.b16 %v4320
    %v4979 = vunpack.c.l.b16 %v4321
    %v4980 = vunpack.c.h.b16 %v4321
    %v4981 = vunpack.c.l.b16 %v4322
    %v4982 = vunpack.c.h.b16 %v4322
    %v4983 = vunpack.c.l.b16 %v4323
    %v4984 = vunpack.c.h.b16 %v4323
    %v4985 = vunpack.c.l.b16 %v4324
    %v4986 = vunpack.c.h.b16 %v4324
    %v4987 = vunpack.c.l.b16 %v4325
    %v4988 = vunpack.c.h.b16 %v4325
    %v4989 = vunpack.c.l.b16 %v4326
    %v4990 = vunpack.c.h.b16 %v4326
    %v4991 = vunpack.c.l.b16 %v4327
    %v4992 = vunpack.c.h.b16 %v4327
    %v4993 = vunpack.c.l.b16 %v4328
    %v4994 = vunpack.c.h.b16 %v4328
    %v4995 = vunpack.c.l.b16 %v4329
    %v4996 = vunpack.c.h.b16 %v4329
    %v4997 = vunpack.c.l.b16 %v4330
    %v4998 = vunpack.c.h.b16 %v4330
    %v4999 = vunpack.c.l.b16 %v4331
    %v5000 = vunpack.c.h.b16 %v4331
    %v5001 = vunpack.c.l.b16 %v4332
    %v5002 = vunpack.c.h.b16 %v4332
    %v5003 = vunpack.c.l.b16 %v4333
    %v5004 = vunpack.c.h.b16 %v4333
    %v5005 = vunpack.c.l.b16 %v4334
    %v5006 = vunpack.c.h.b16 %v4334
    %v5007 = vunpack.c.l.b16 %v4335
    %v5008 = vunpack.c.h.b16 %v4335
    %v5009 = vunpack.c.l.b16 %v4336
    %v5010 = vunpack.c.h.b16 %v4336
    %v5011 = vunpack.c.l.b16 %v4337
    %v5012 = vunpack.c.h.b16 %v4337
    %v5013 = vunpack.c.l.b16 %v4338
    %v5014 = vunpack.c.h.b16 %v4338
    %v5015 = vunpack.c.l.b16 %v4339
    %v5016 = vunpack.c.h.b16 %v4339
    %v5017 = vunpack.c.l.b16 %v4340
    %v5018 = vunpack.c.h.b16 %v4340
    %v5019 = vunpack.c.l.b16 %v4341
    %v5020 = vunpack.c.h.b16 %v4341
    %v5021 = vunpack.c.l.b16 %v4342
    %v5022 = vunpack.c.h.b16 %v4342
    %v5023 = vunpack.c.l.b16 %v4343
    %v5024 = vunpack.c.h.b16 %v4343
    %v5025 = vunpack.c.l.b16 %v4344
    %v5026 = vunpack.c.h.b16 %v4344
    %v5027 = vunpack.c.l.b16 %v4345
    %v5028 = vunpack.c.h.b16 %v4345
    %v5029 = vunpack.c.l.b16 %v4346
    %v5030 = vunpack.c.h.b16 %v4346
    %v5031 = vunpack.c.l.b16 %v4347
    %v5032 = vunpack.c.h.b16 %v4347
    %v5033 = vunpack.c.l.b16 %v4348
    %v5034 = vunpack.c.h.b16 %v4348
    %v5035 = vunpack.c.l.b16 %v4349
    %v5036 = vunpack.c.h.b16 %v4349
    %v5037 = vunpack.c.l.b16 %v4350
    %v5038 = vunpack.c.h.b16 %v4350
    %v5039 = vunpack.c.l.b16 %v4351
    %v5040 = vunpack.c.h.b16 %v4351
    %v5041 = vunpack.c.l.b16 %v4352
    %v5042 = vunpack.c.h.b16 %v4352
    %v5043 = vunpack.c.l.b16 %v4353
    %v5044 = vunpack.c.h.b16 %v4353
    %v5045 = vunpack.c.l.b16 %v4354
    %v5046 = vunpack.c.h.b16 %v4354
    %v5047 = vunpack.c.l.b16 %v4355
    %v5048 = vunpack.c.h.b16 %v4355
    %v5049 = vunpack.c.l.b16 %v4356
    %v5050 = vunpack.c.h.b16 %v4356
    %v5051 = vunpack.c.l.b16 %v4357
    %v5052 = vunpack.c.h.b16 %v4357
    %v5053 = vunpack.c.l.b16 %v4358
    %v5054 = vunpack.c.h.b16 %v4358
    %v5055 = vunpack.c.l.b16 %v4359
    %v5056 = vunpack.c.h.b16 %v4359
    %v5057 = vunpack.c.l.b16 %v4360
    %v5058 = vunpack.c.h.b16 %v4360
    %v5059 = vunpack.c.l.b16 %v4361
    %v5060 = vunpack.c.h.b16 %v4361
    %v5061 = vunpack.c.l.b16 %v4362
    %v5062 = vunpack.c.h.b16 %v4362
    %v5063 = vunpack.c.l.b16 %v4363
    %v5064 = vunpack.c.h.b16 %v4363
    %v5065 = vunpack.c.l.b16 %v4364
    %v5066 = vunpack.c.h.b16 %v4364
    %v5067 = vunpack.c.l.b16 %v4365
    %v5068 = vunpack.c.h.b16 %v4365
    %v5069 = vunpack.c.l.b16 %v4366
    %v5070 = vunpack.c.h.b16 %v4366
    %v5071 = vunpack.c.l.b16 %v4367
    %v5072 = vunpack.c.h.b16 %v4367
    %v5073 = vunpack.c.l.b16 %v4368
    %v5074 = vunpack.c.h.b16 %v4368
    %v5075 = vunpack.c.l.b16 %v4369
    %v5076 = vunpack.c.h.b16 %v4369
    %v5077 = vunpack.c.l.b16 %v4370
    %v5078 = vunpack.c.h.b16 %v4370
    %v5079 = vunpack.c.l.b16 %v4371
    %v5080 = vunpack.c.h.b16 %v4371
    %v5081 = vunpack.c.l.b16 %v4372
    %v5082 = vunpack.c.h.b16 %v4372
    %v5083 = vunpack.c.l.b16 %v4373
    %v5084 = vunpack.c.h.b16 %v4373
    %v5085 = vunpack.c.l.b16 %v4374
    %v5086 = vunpack.c.h.b16 %v4374
    %v5087 = vunpack.c.l.b16 %v4375
    %v5088 = vunpack.c.h.b16 %v4375
    %v5089 = vunpack.c.l.b16 %v4376
    %v5090 = vunpack.c.h.b16 %v4376
    %v5091 = vunpack.c.l.b16 %v4377
    %v5092 = vunpack.c.h.b16 %v4377
    %v5093 = vunpack.c.l.b16 %v4378
    %v5094 = vunpack.c.h.b16 %v4378
    %v5095 = vunpack.c.l.b16 %v4379
    %v5096 = vunpack.c.h.b16 %v4379
    %v5097 = vunpack.c.l.b16 %v4380
    %v5098 = vunpack.c.h.b16 %v4380
    %v5099 = vunpack.c.l.b16 %v4381
    %v5100 = vunpack.c.h.b16 %v4381
    %v5101 = vunpack.c.l.b16 %v4382
    %v5102 = vunpack.c.h.b16 %v4382
    %v5103 = vunpack.c.l.b16 %v4383
    %v5104 = vunpack.c.h.b16 %v4383
    %v5105 = vunpack.c.l.b16 %v4384
    %v5106 = vunpack.c.h.b16 %v4384
    %v5107 = vunpack.c.l.b16 %v4385
    %v5108 = vunpack.c.h.b16 %v4385
    %v5109 = vunpack.c.l.b16 %v4386
    %v5110 = vunpack.c.h.b16 %v4386
    %v5111 = vunpack.c.l.b16 %v4387
    %v5112 = vunpack.c.h.b16 %v4387
    %v5113 = vunpack.c.l.b16 %v4388
    %v5114 = vunpack.c.h.b16 %v4388
    %v5115 = vunpack.c.l.b16 %v4389
    %v5116 = vunpack.c.h.b16 %v4389
    %v5117 = vunpack.c.l.b16 %v4390
    %v5118 = vunpack.c.h.b16 %v4390
    %v5119 = vunpack.c.l.b16 %v4391
    %v5120 = vunpack.c.h.b16 %v4391
    %v5121 = vunpack.c.l.b16 %v4392
    %v5122 = vunpack.c.h.b16 %v4392
    %v5123 = vunpack.c.l.b16 %v4393
    %v5124 = vunpack.c.h.b16 %v4393
    %v5125 = vunpack.c.l.b16 %v4394
    %v5126 = vunpack.c.h.b16 %v4394
    %v5127 = vunpack.c.l.b16 %v4395
    %v5128 = vunpack.c.h.b16 %v4395
    %v5129 = vunpack.c.l.b16 %v4396
    %v5130 = vunpack.c.h.b16 %v4396
    %v5131 = vunpack.c.l.b16 %v4397
    %v5132 = vunpack.c.h.b16 %v4397
    %v5133 = vunpack.c.l.b16 %v4398
    %v5134 = vunpack.c.h.b16 %v4398
    %v5135 = vunpack.c.l.b16 %v4399
    %v5136 = vunpack.c.h.b16 %v4399
    %v5137 = vunpack.c.l.b16 %v4400
    %v5138 = vunpack.c.h.b16 %v4400
    %v5139 = vunpack.c.l.b16 %v4401
    %v5140 = vunpack.c.h.b16 %v4401
    %v5141 = vunpack.c.l.b16 %v4402
    %v5142 = vunpack.c.h.b16 %v4402
    %v5143 = vunpack.c.l.b16 %v4403
    %v5144 = vunpack.c.h.b16 %v4403
    %v5145 = vunpack.c.l.b16 %v4404
    %v5146 = vunpack.c.h.b16 %v4404
    %v5147 = vunpack.c.l.b16 %v4405
    %v5148 = vunpack.c.h.b16 %v4405
    %v5149 = vunpack.c.l.b16 %v4406
    %v5150 = vunpack.c.h.b16 %v4406
    %v5151 = vunpack.c.l.b16 %v4407
    %v5152 = vunpack.c.h.b16 %v4407
    %v5153 = vunpack.c.l.b16 %v4408
    %v5154 = vunpack.c.h.b16 %v4408
    %v5155 = vunpack.c.l.b16 %v4409
    %v5156 = vunpack.c.h.b16 %v4409
    %v5157 = vunpack.c.l.b16 %v4410
    %v5158 = vunpack.c.h.b16 %v4410
    %v5159 = vunpack.c.l.b16 %v4411
    %v5160 = vunpack.c.h.b16 %v4411
    %v5161 = vunpack.c.l.b16 %v4412
    %v5162 = vunpack.c.h.b16 %v4412
    %v5163 = vunpack.c.l.b16 %v4413
    %v5164 = vunpack.c.h.b16 %v4413
    %v5165 = vunpack.c.l.b16 %v4414
    %v5166 = vunpack.c.h.b16 %v4414
    %v5167 = vunpack.c.l.b16 %v4415
    %v5168 = vunpack.c.h.b16 %v4415
    %v5169 = vunpack.c.l.b16 %v4416
    %v5170 = vunpack.c.h.b16 %v4416
    %v5171 = vunpack.c.l.b16 %v4417
    %v5172 = vunpack.c.h.b16 %v4417
    %v5173 = vunpack.c.l.b16 %v4418
    %v5174 = vunpack.c.h.b16 %v4418
    %v5175 = vunpack.c.l.b16 %v4419
    %v5176 = vunpack.c.h.b16 %v4419
    %v5177 = vunpack.c.l.b16 %v4420
    %v5178 = vunpack.c.h.b16 %v4420
    %v5179 = vunpack.c.l.b16 %v4421
    %v5180 = vunpack.c.h.b16 %v4421
    %v5181 = vunpack.c.l.b16 %v4422
    %v5182 = vunpack.c.h.b16 %v4422
    %v5183 = vunpack.c.l.b16 %v4423
    %v5184 = vunpack.c.h.b16 %v4423
    %v5185 = vunpack.c.l.b16 %v4424
    %v5186 = vunpack.c.h.b16 %v4424
    %v5187 = vunpack.c.l.b16 %v4425
    %v5188 = vunpack.c.h.b16 %v4425
    %v5189 = vunpack.c.l.b16 %v4426
    %v5190 = vunpack.c.h.b16 %v4426
    %v5191 = vunpack.c.l.b16 %v4427
    %v5192 = vunpack.c.h.b16 %v4427
    %v5193 = vunpack.c.l.b16 %v4428
    %v5194 = vunpack.c.h.b16 %v4428
    %v5195 = vunpack.c.l.b16 %v4429
    %v5196 = vunpack.c.h.b16 %v4429
    %v5197 = vunpack.c.l.b16 %v4430
    %v5198 = vunpack.c.h.b16 %v4430
    %v5199 = vunpack.c.l.b16 %v4431
    %v5200 = vunpack.c.h.b16 %v4431
    %v5201 = vunpack.c.l.b16 %v4432
    %v5202 = vunpack.c.h.b16 %v4432
    %v5203 = vunpack.c.l.b16 %v4433
    %v5204 = vunpack.c.h.b16 %v4433
    %v5205 = vunpack.c.l.b16 %v4434
    %v5206 = vunpack.c.h.b16 %v4434
    %v5207 = vunpack.c.l.b16 %v4435
    %v5208 = vunpack.c.h.b16 %v4435
    %v5209 = vunpack.c.l.b16 %v4436
    %v5210 = vunpack.c.h.b16 %v4436
    %v5211 = vunpack.c.l.b16 %v4437
    %v5212 = vunpack.c.h.b16 %v4437
    %v5213 = vunpack.c.l.b16 %v4438
    %v5214 = vunpack.c.h.b16 %v4438
    %v5215 = vunpack.c.l.b16 %v4439
    %v5216 = vunpack.c.h.b16 %v4439
    %v5217 = vunpack.c.l.b16 %v4440
    %v5218 = vunpack.c.h.b16 %v4440
    %v5219 = vunpack.c.l.b16 %v4441
    %v5220 = vunpack.c.h.b16 %v4441
    %v5221 = vunpack.c.l.b16 %v4442
    %v5222 = vunpack.c.h.b16 %v4442
    %v5223 = vunpack.c.l.b16 %v4443
    %v5224 = vunpack.c.h.b16 %v4443
    %v5225 = vunpack.c.l.b16 %v4444
    %v5226 = vunpack.c.h.b16 %v4444
    %v5227 = vunpack.c.l.b16 %v4445
    %v5228 = vunpack.c.h.b16 %v4445
    %v5229 = vunpack.c.l.b16 %v4446
    %v5230 = vunpack.c.h.b16 %v4446
    %v5231 = vunpack.c.l.b16 %v4447
    %v5232 = vunpack.c.h.b16 %v4447
    %v5233 = vunpack.c.l.b16 %v4448
    %v5234 = vunpack.c.h.b16 %v4448
    %v5235 = vunpack.c.l.b16 %v4449
    %v5236 = vunpack.c.h.b16 %v4449
    %v5237 = vunpack.c.l.b16 %v4450
    %v5238 = vunpack.c.h.b16 %v4450
    %v5239 = vunpack.c.l.b16 %v4451
    %v5240 = vunpack.c.h.b16 %v4451
    %v5241 = vunpack.c.l.b16 %v4452
    %v5242 = vunpack.c.h.b16 %v4452
    %v5243 = vunpack.c.l.b16 %v4453
    %v5244 = vunpack.c.h.b16 %v4453
    %v5245 = vunpack.c.l.b16 %v4454
    %v5246 = vunpack.c.h.b16 %v4454
    %v5247 = vunpack.c.l.b16 %v4455
    %v5248 = vunpack.c.h.b16 %v4455
    %v5249 = vunpack.c.l.b16 %v4456
    %v5250 = vunpack.c.h.b16 %v4456
    %v5251 = vunpack.c.l.b16 %v4457
    %v5252 = vunpack.c.h.b16 %v4457
    %v5253 = vunpack.c.l.b16 %v4458
    %v5254 = vunpack.c.h.b16 %v4458
    %v5255 = vunpack.c.l.b16 %v4459
    %v5256 = vunpack.c.h.b16 %v4459
    %v5257 = vunpack.c.l.b16 %v4460
    %v5258 = vunpack.c.h.b16 %v4460
    %v5259 = vunpack.c.l.b16 %v4461
    %v5260 = vunpack.c.h.b16 %v4461
    %v5261 = vunpack.c.l.b16 %v4462
    %v5262 = vunpack.c.h.b16 %v4462
    %v5263 = vunpack.c.l.b16 %v4463
    %v5264 = vunpack.c.h.b16 %v4463
    %v5265 = vunpack.c.l.b16 %v4464
    %v5266 = vunpack.c.h.b16 %v4464
    %v5267 = vunpack.c.l.b16 %v4465
    %v5268 = vunpack.c.h.b16 %v4465
    %v5269 = vunpack.c.l.b16 %v4466
    %v5270 = vunpack.c.h.b16 %v4466
    %v5271 = vunpack.c.l.b16 %v4467
    %v5272 = vunpack.c.h.b16 %v4467
    %v5273 = vunpack.c.l.b16 %v4468
    %v5274 = vunpack.c.h.b16 %v4468
    %v5275 = vunpack.c.l.b16 %v4469
    %v5276 = vunpack.c.h.b16 %v4469
    %v5277 = vunpack.c.l.b16 %v4470
    %v5278 = vunpack.c.h.b16 %v4470
    %v5279 = vunpack.c.l.b16 %v4471
    %v5280 = vunpack.c.h.b16 %v4471
    %v5281 = vunpack.c.l.b16 %v4472
    %v5282 = vunpack.c.h.b16 %v4472
    %v5283 = vunpack.c.l.b16 %v4473
    %v5284 = vunpack.c.h.b16 %v4473
    %v5285 = vunpack.c.l.b16 %v4474
    %v5286 = vunpack.c.h.b16 %v4474
    %v5287 = vunpack.c.l.b16 %v4475
    %v5288 = vunpack.c.h.b16 %v4475
    %v5289 = vunpack.c.l.b16 %v4476
    %v5290 = vunpack.c.h.b16 %v4476
    %v5291 = vunpack.c.l.b16 %v4477
    %v5292 = vunpack.c.h.b16 %v4477
    %v5293 = vunpack.c.l.b16 %v4478
    %v5294 = vunpack.c.h.b16 %v4478
    %v5295 = vunpack.c.l.b16 %v4479
    %v5296 = vunpack.c.h.b16 %v4479
    %v5297 = vunpack.c.l.b16 %v4480
    %v5298 = vunpack.c.h.b16 %v4480
    %v5299 = vunpack.c.l.b16 %v4481
    %v5300 = vunpack.c.h.b16 %v4481
    %v5301 = vunpack.c.l.b16 %v4482
    %v5302 = vunpack.c.h.b16 %v4482
    %v5303 = vunpack.c.l.b16 %v4483
    %v5304 = vunpack.c.h.b16 %v4483
    %v5305 = vunpack.c.l.b16 %v4484
    %v5306 = vunpack.c.h.b16 %v4484
    %v5307 = vunpack.c.l.b16 %v4485
    %v5308 = vunpack.c.h.b16 %v4485
    %v5309 = vunpack.c.l.b16 %v4486
    %v5310 = vunpack.c.h.b16 %v4486
    %v5311 = vunpack.c.l.b16 %v4487
    %v5312 = vunpack.c.h.b16 %v4487
    %v5313 = vunpack.c.l.b16 %v4488
    %v5314 = vunpack.c.h.b16 %v4488
    %v5315 = vunpack.c.l.b16 %v4489
    %v5316 = vunpack.c.h.b16 %v4489
    %v5317 = vunpack.c.l.b16 %v4490
    %v5318 = vunpack.c.h.b16 %v4490
    %v5319 = vunpack.c.l.b16 %v4491
    %v5320 = vunpack.c.h.b16 %v4491
    %v5321 = vunpack.c.l.b16 %v4492
    %v5322 = vunpack.c.h.b16 %v4492
    %v5323 = vunpack.c.l.b16 %v4493
    %v5324 = vunpack.c.h.b16 %v4493
    %v5325 = vunpack.c.l.b16 %v4494
    %v5326 = vunpack.c.h.b16 %v4494
    %v5327 = vunpack.c.l.b16 %v4495
    %v5328 = vunpack.c.h.b16 %v4495
    %v5329 = vunpack.c.l.b16 %v4496
    %v5330 = vunpack.c.h.b16 %v4496
    %v5331 = vunpack.c.l.b16 %v4497
    %v5332 = vunpack.c.h.b16 %v4497
    %v5333 = vunpack.c.l.b16 %v4498
    %v5334 = vunpack.c.h.b16 %v4498
    %v5335 = vunpack.c.l.b16 %v4499
    %v5336 = vunpack.c.h.b16 %v4499
    %v5337 = vunpack.c.l.b16 %v4500
    %v5338 = vunpack.c.h.b16 %v4500
    %v5339 = vunpack.c.l.b16 %v4501
    %v5340 = vunpack.c.h.b16 %v4501
    %v5341 = vunpack.c.l.b16 %v4502
    %v5342 = vunpack.c.h.b16 %v4502
    %v5343 = vunpack.c.l.b16 %v4503
    %v5344 = vunpack.c.h.b16 %v4503
    %v5345 = vunpack.c.l.b16 %v4504
    %v5346 = vunpack.c.h.b16 %v4504
    %v5347 = vunpack.c.l.b16 %v4505
    %v5348 = vunpack.c.h.b16 %v4505
    %v5349 = vunpack.c.l.b16 %v4506
    %v5350 = vunpack.c.h.b16 %v4506
    %v5351 = vunpack.c.l.b16 %v4507
    %v5352 = vunpack.c.h.b16 %v4507
    %v5353 = vunpack.c.l.b16 %v4508
    %v5354 = vunpack.c.h.b16 %v4508
    %v5355 = vunpack.c.l.b16 %v4509
    %v5356 = vunpack.c.h.b16 %v4509
    %v5357 = vunpack.c.l.b16 %v4510
    %v5358 = vunpack.c.h.b16 %v4510
    %v5359 = vunpack.c.l.b16 %v4511
    %v5360 = vunpack.c.h.b16 %v4511
    %v5361 = vunpack.c.l.b16 %v4512
    %v5362 = vunpack.c.h.b16 %v4512
    %v5363 = vunpack.c.l.b16 %v4513
    %v5364 = vunpack.c.h.b16 %v4513
    %v5365 = vunpack.c.l.b16 %v4514
    %v5366 = vunpack.c.h.b16 %v4514
    %v5367 = vunpack.c.l.b16 %v4515
    %v5368 = vunpack.c.h.b16 %v4515
    %v5369 = vunpack.c.l.b16 %v4516
    %v5370 = vunpack.c.h.b16 %v4516
    %v5371 = vunpack.c.l.b16 %v4517
    %v5372 = vunpack.c.h.b16 %v4517
    %v5373 = vunpack.c.l.b16 %v4518
    %v5374 = vunpack.c.h.b16 %v4518
    %v5375 = vunpack.c.l.b16 %v4519
    %v5376 = vunpack.c.h.b16 %v4519
    %v5377 = vunpack.c.l.b16 %v4520
    %v5378 = vunpack.c.h.b16 %v4520
    %v5379 = vunpack.c.l.b16 %v4521
    %v5380 = vunpack.c.h.b16 %v4521
    %v5381 = vunpack.c.l.b16 %v4522
    %v5382 = vunpack.c.h.b16 %v4522
    %v5383 = vunpack.c.l.b16 %v4523
    %v5384 = vunpack.c.h.b16 %v4523
    %v5385 = vunpack.c.l.b16 %v4524
    %v5386 = vunpack.c.h.b16 %v4524
    %v5387 = vunpack.c.l.b16 %v4525
    %v5388 = vunpack.c.h.b16 %v4525
    %v5389 = vunpack.c.l.b16 %v4526
    %v5390 = vunpack.c.h.b16 %v4526
    %v5391 = vunpack.c.l.b16 %v4527
    %v5392 = vunpack.c.h.b16 %v4527
    %v5393 = vunpack.c.l.b16 %v4528
    %v5394 = vunpack.c.h.b16 %v4528
    %v5395 = vunpack.c.l.b16 %v4529
    %v5396 = vunpack.c.h.b16 %v4529
    %v5397 = vunpack.c.l.b16 %v4530
    %v5398 = vunpack.c.h.b16 %v4530
    %v5399 = vunpack.c.l.b16 %v4531
    %v5400 = vunpack.c.h.b16 %v4531
    %v5401 = vunpack.c.l.b16 %v4532
    %v5402 = vunpack.c.h.b16 %v4532
    %v5403 = vunpack.c.l.b16 %v4533
    %v5404 = vunpack.c.h.b16 %v4533
    %v5405 = vunpack.c.l.b16 %v4534
    %v5406 = vunpack.c.h.b16 %v4534
    %v5407 = vunpack.c.l.b16 %v4535
    %v5408 = vunpack.c.h.b16 %v4535
    %v5409 = vunpack.c.l.b16 %v4536
    %v5410 = vunpack.c.h.b16 %v4536
    %v5411 = vunpack.c.l.b16 %v4537
    %v5412 = vunpack.c.h.b16 %v4537
    %v5413 = vunpack.c.l.b16 %v4538
    %v5414 = vunpack.c.h.b16 %v4538
    %v5415 = vunpack.c.l.b16 %v4539
    %v5416 = vunpack.c.h.b16 %v4539
    %v5417 = vunpack.c.l.b16 %v4540
    %v5418 = vunpack.c.h.b16 %v4540
    %v5419 = vunpack.c.l.b16 %v4541
    %v5420 = vunpack.c.h.b16 %v4541
    %v5421 = vunpack.c.l.b16 %v4542
    %v5422 = vunpack.c.h.b16 %v4542
    %v5423 = vunpack.c.l.b16 %v4543
    %v5424 = vunpack.c.h.b16 %v4543
    %v5425 = vunpack.c.l.b16 %v4544
    %v5426 = vunpack.c.h.b16 %v4544
    %v5427 = vunpack.c.l.b16 %v4545
    %v5428 = vunpack.c.h.b16 %v4545
    %v5429 = vunpack.c.l.b16 %v4546
    %v5430 = vunpack.c.h.b16 %v4546
    %v5431 = vunpack.c.l.b16 %v4547
    %v5432 = vunpack.c.h.b16 %v4547
    %v5433 = vunpack.c.l.b16 %v4548
    %v5434 = vunpack.c.h.b16 %v4548
    %v5435 = vpack.c.b16 %v4863, %v4859
    %v5436 = vpack.c.b16 %v4864, %v4860
    %v5437 = vpack.c.b16 %v4865, %v4861
    %v5438 = vpack.c.b16 %v4866, %v4862
    %v5439 = vpack.c.b16 %v4871, %v4867
    %v5440 = vpack.c.b16 %v4872, %v4868
    %v5441 = vpack.c.b16 %v4873, %v4869
    %v5442 = vpack.c.b16 %v4874, %v4870
    %v5443 = vpack.c.b16 %v4879, %v4875
    %v5444 = vpack.c.b16 %v4880, %v4876
    %v5445 = vpack.c.b16 %v4881, %v4877
    %v5446 = vpack.c.b16 %v4882, %v4878
    %v5447 = vpack.c.b16 %v4887, %v4883
    %v5448 = vpack.c.b16 %v4888, %v4884
    %v5449 = vpack.c.b16 %v4889, %v4885
    %v5450 = vpack.c.b16 %v4890, %v4886
    %v5451 = vpack.c.b16 %v4895, %v4891
    %v5452 = vpack.c.b16 %v4896, %v4892
    %v5453 = vpack.c.b16 %v4897, %v4893
    %v5454 = vpack.c.b16 %v4898, %v4894
    %v5455 = vpack.c.b16 %v4903, %v4899
    %v5456 = vpack.c.b16 %v4904, %v4900
    %v5457 = vpack.c.b16 %v4905, %v4901
    %v5458 = vpack.c.b16 %v4906, %v4902
    %v5459 = vpack.c.b16 %v4911, %v4907
    %v5460 = vpack.c.b16 %v4912, %v4908
    %v5461 = vpack.c.b16 %v4913, %v4909
    %v5462 = vpack.c.b16 %v4914, %v4910
    %v5463 = vpack.c.b16 %v4919, %v4915
    %v5464 = vpack.c.b16 %v4920, %v4916
    %v5465 = vpack.c.b16 %v4921, %v4917
    %v5466 = vpack.c.b16 %v4922, %v4918
    %v5467 = vpack.c.b16 %v4927, %v4923
    %v5468 = vpack.c.b16 %v4928, %v4924
    %v5469 = vpack.c.b16 %v4929, %v4925
    %v5470 = vpack.c.b16 %v4930, %v4926
    %v5471 = vpack.c.b16 %v4935, %v4931
    %v5472 = vpack.c.b16 %v4936, %v4932
    %v5473 = vpack.c.b16 %v4937, %v4933
    %v5474 = vpack.c.b16 %v4938, %v4934
    %v5475 = vpack.c.b16 %v4943, %v4939
    %v5476 = vpack.c.b16 %v4944, %v4940
    %v5477 = vpack.c.b16 %v4945, %v4941
    %v5478 = vpack.c.b16 %v4946, %v4942
    %v5479 = vpack.c.b16 %v4951, %v4947
    %v5480 = vpack.c.b16 %v4952, %v4948
    %v5481 = vpack.c.b16 %v4953, %v4949
    %v5482 = vpack.c.b16 %v4954, %v4950
    %v5483 = vpack.c.b16 %v4959, %v4955
    %v5484 = vpack.c.b16 %v4960, %v4956
    %v5485 = vpack.c.b16 %v4961, %v4957
    %v5486 = vpack.c.b16 %v4962, %v4958
    %v5487 = vpack.c.b16 %v4967, %v4963
    %v5488 = vpack.c.b16 %v4968, %v4964
    %v5489 = vpack.c.b16 %v4969, %v4965
    %v5490 = vpack.c.b16 %v4970, %v4966
    %v5491 = vpack.c.b16 %v4975, %v4971
    %v5492 = vpack.c.b16 %v4976, %v4972
    %v5493 = vpack.c.b16 %v4977, %v4973
    %v5494 = vpack.c.b16 %v4978, %v4974
    %v5495 = vpack.c.b16 %v4983, %v4979
    %v5496 = vpack.c.b16 %v4984, %v4980
    %v5497 = vpack.c.b16 %v4985, %v4981
    %v5498 = vpack.c.b16 %v4986, %v4982
    %v5499 = vpack.c.b16 %v4991, %v4987
    %v5500 = vpack.c.b16 %v4992, %v4988
    %v5501 = vpack.c.b16 %v4993, %v4989
    %v5502 = vpack.c.b16 %v4994, %v4990
    %v5503 = vpack.c.b16 %v4999, %v4995
    %v5504 = vpack.c.b16 %v5000, %v4996
    %v5505 = vpack.c.b16 %v5001, %v4997
    %v5506 = vpack.c.b16 %v5002, %v4998
    %v5507 = vpack.c.b16 %v5007, %v5003
    %v5508 = vpack.c.b16 %v5008, %v5004
    %v5509 = vpack.c.b16 %v5009, %v5005
    %v5510 = vpack.c.b16 %v5010, %v5006
    %v5511 = vpack.c.b16 %v5015, %v5011
    %v5512 = vpack.c.b16 %v5016, %v5012
    %v5513 = vpack.c.b16 %v5017, %v5013
    %v5514 = vpack.c.b16 %v5018, %v5014
    %v5515 = vpack.c.b16 %v5023, %v5019
    %v5516 = vpack.c.b16 %v5024, %v5020
    %v5517 = vpack.c.b16 %v5025, %v5021
    %v5518 = vpack.c.b16 %v5026, %v5022
    %v5519 = vpack.c.b16 %v5031, %v5027
    %v5520 = vpack.c.b16 %v5032, %v5028
    %v5521 = vpack.c.b16 %v5033, %v5029
    %v5522 = vpack.c.b16 %v5034, %v5030
    %v5523 = vpack.c.b16 %v5039, %v5035
    %v5524 = vpack.c.b16 %v5040, %v5036
    %v5525 = vpack.c.b16 %v5041, %v5037
    %v5526 = vpack.c.b16 %v5042, %v5038
    %v5527 = vpack.c.b16 %v5047, %v5043
    %v5528 = vpack.c.b16 %v5048, %v5044
    %v5529 = vpack.c.b16 %v5049, %v5045
    %v5530 = vpack.c.b16 %v5050, %v5046
    %v5531 = vpack.c.b16 %v5055, %v5051
    %v5532 = vpack.c.b16 %v5056, %v5052
    %v5533 = vpack.c.b16 %v5057, %v5053
    %v5534 = vpack.c.b16 %v5058, %v5054
    %v5535 = vpack.c.b16 %v5063, %v5059
    %v5536 = vpack.c.b16 %v5064, %v5060
    %v5537 = vpack.c.b16 %v5065, %v5061
    %v5538 = vpack.c.b16 %v5066, %v5062
    %v5539 = vpack.c.b16 %v5071, %v5067
    %v5540 = vpack.c.b16 %v5072, %v5068
    %v5541 = vpack.c.b16 %v5073, %v5069
    %v5542 = vpack.c.b16 %v5074, %v5070
    %v5543 = vpack.c.b16 %v5079, %v5075
    %v5544 = vpack.c.b16 %v5080, %v5076
    %v5545 = vpack.c.b16 %v5081, %v5077
    %v5546 = vpack.c.b16 %v5082, %v5078
    %v5547 = vpack.c.b16 %v5087, %v5083
    %v5548 = vpack.c.b16 %v5088, %v5084
    %v5549 = vpack.c.b16 %v5089, %v5085
    %v5550 = vpack.c.b16 %v5090, %v5086
    %v5551 = vpack.c.b16 %v5095, %v5091
    %v5552 = vpack.c.b16 %v5096, %v5092
    %v5553 = vpack.c.b16 %v5097, %v5093
    %v5554 = vpack.c.b16 %v5098, %v5094
    %v5555 = vpack.c.b16 %v5103, %v5099
    %v5556 = vpack.c.b16 %v5104, %v5100
    %v5557 = vpack.c.b16 %v5105, %v5101
    %v5558 = vpack.c.b16 %v5106, %v5102
    %v5559 = vpack.c.b16 %v5111, %v5107
    %v5560 = vpack.c.b16 %v5112, %v5108
    %v5561 = vpack.c.b16 %v5113, %v5109
    %v5562 = vpack.c.b16 %v5114, %v5110
    %v5563 = vpack.c.b16 %v5119, %v5115
    %v5564 = vpack.c.b16 %v5120, %v5116
    %v5565 = vpack.c.b16 %v5121, %v5117
    %v5566 = vpack.c.b16 %v5122, %v5118
    %v5567 = vpack.c.b16 %v5127, %v5123
    %v5568 = vpack.c.b16 %v5128, %v5124
    %v5569 = vpack.c.b16 %v5129, %v5125
    %v5570 = vpack.c.b16 %v5130, %v5126
    %v5571 = vpack.c.b16 %v5135, %v5131
    %v5572 = vpack.c.b16 %v5136, %v5132
    %v5573 = vpack.c.b16 %v5137, %v5133
    %v5574 = vpack.c.b16 %v5138, %v5134
    %v5575 = vpack.c.b16 %v5143, %v5139
    %v5576 = vpack.c.b16 %v5144, %v5140
    %v5577 = vpack.c.b16 %v5145, %v5141
    %v5578 = vpack.c.b16 %v5146, %v5142
    %v5579 = vpack.c.b16 %v5151, %v5147
    %v5580 = vpack.c.b16 %v5152, %v5148
    %v5581 = vpack.c.b16 %v5153, %v5149
    %v5582 = vpack.c.b16 %v5154, %v5150
    %v5583 = vpack.c.b16 %v5159, %v5155
    %v5584 = vpack.c.b16 %v5160, %v5156
    %v5585 = vpack.c.b16 %v5161, %v5157
    %v5586 = vpack.c.b16 %v5162, %v5158
    %v5587 = vpack.c.b16 %v5167, %v5163
    %v5588 = vpack.c.b16 %v5168, %v5164
    %v5589 = vpack.c.b16 %v5169, %v5165
    %v5590 = vpack.c.b16 %v5170, %v5166
    %v5591 = vpack.c.b16 %v5175, %v5171
    %v5592 = vpack.c.b16 %v5176, %v5172
    %v5593 = vpack.c.b16 %v5177, %v5173
    %v5594 = vpack.c.b16 %v5178, %v5174
    %v5595 = vpack.c.b16 %v5183, %v5179
    %v5596 = vpack.c.b16 %v5184, %v5180
    %v5597 = vpack.c.b16 %v5185, %v5181
    %v5598 = vpack.c.b16 %v5186, %v5182
    %v5599 = vpack.c.b16 %v5191, %v5187
    %v5600 = vpack.c.b16 %v5192, %v5188
    %v5601 = vpack.c.b16 %v5193, %v5189
    %v5602 = vpack.c.b16 %v5194, %v5190
    %v5603 = vpack.c.b16 %v5199, %v5195
    %v5604 = vpack.c.b16 %v5200, %v5196
    %v5605 = vpack.c.b16 %v5201, %v5197
    %v5606 = vpack.c.b16 %v5202, %v5198
    %v5607 = vpack.c.b16 %v5207, %v5203
    %v5608 = vpack.c.b16 %v5208, %v5204
    %v5609 = vpack.c.b16 %v5209, %v5205
    %v5610 = vpack.c.b16 %v5210, %v5206
    %v5611 = vpack.c.b16 %v5215, %v5211
    %v5612 = vpack.c.b16 %v5216, %v5212
    %v5613 = vpack.c.b16 %v5217, %v5213
    %v5614 = vpack.c.b16 %v5218, %v5214
    %v5615 = vpack.c.b16 %v5223, %v5219
    %v5616 = vpack.c.b16 %v5224, %v5220
    %v5617 = vpack.c.b16 %v5225, %v5221
    %v5618 = vpack.c.b16 %v5226, %v5222
    %v5619 = vpack.c.b16 %v5231, %v5227
    %v5620 = vpack.c.b16 %v5232, %v5228
    %v5621 = vpack.c.b16 %v5233, %v5229
    %v5622 = vpack.c.b16 %v5234, %v5230
    %v5623 = vpack.c.b16 %v5239, %v5235
    %v5624 = vpack.c.b16 %v5240, %v5236
    %v5625 = vpack.c.b16 %v5241, %v5237
    %v5626 = vpack.c.b16 %v5242, %v5238
    %v5627 = vpack.c.b16 %v5247, %v5243
    %v5628 = vpack.c.b16 %v5248, %v5244
    %v5629 = vpack.c.b16 %v5249, %v5245
    %v5630 = vpack.c.b16 %v5250, %v5246
    %v5631 = vpack.c.b16 %v5255, %v5251
    %v5632 = vpack.c.b16 %v5256, %v5252
    %v5633 = vpack.c.b16 %v5257, %v5253
    %v5634 = vpack.c.b16 %v5258, %v5254
    %v5635 = vpack.c.b16 %v5263, %v5259
    %v5636 = vpack.c.b16 %v5264, %v5260
    %v5637 = vpack.c.b16 %v5265, %v5261
    %v5638 = vpack.c.b16 %v5266, %v5262
    %v5639 = vpack.c.b16 %v5271, %v5267
    %v5640 = vpack.c.b16 %v5272, %v5268
    %v5641 = vpack.c.b16 %v5273, %v5269
    %v5642 = vpack.c.b16 %v5274, %v5270
    %v5643 = vpack.c.b16 %v5279, %v5275
    %v5644 = vpack.c.b16 %v5280, %v5276
    %v5645 = vpack.c.b16 %v5281, %v5277
    %v5646 = vpack.c.b16 %v5282, %v5278
    %v5647 = vpack.c.b16 %v5287, %v5283
    %v5648 = vpack.c.b16 %v5288, %v5284
    %v5649 = vpack.c.b16 %v5289, %v5285
    %v5650 = vpack.c.b16 %v5290, %v5286
    %v5651 = vpack.c.b16 %v5295, %v5291
    %v5652 = vpack.c.b16 %v5296, %v5292
    %v5653 = vpack.c.b16 %v5297, %v5293
    %v5654 = vpack.c.b16 %v5298, %v5294
    %v5655 = vpack.c.b16 %v5303, %v5299
    %v5656 = vpack.c.b16 %v5304, %v5300
    %v5657 = vpack.c.b16 %v5305, %v5301
    %v5658 = vpack.c.b16 %v5306, %v5302
    %v5659 = vpack.c.b16 %v5311, %v5307
    %v5660 = vpack.c.b16 %v5312, %v5308
    %v5661 = vpack.c.b16 %v5313, %v5309
    %v5662 = vpack.c.b16 %v5314, %v5310
    %v5663 = vpack.c.b16 %v5319, %v5315
    %v5664 = vpack.c.b16 %v5320, %v5316
    %v5665 = vpack.c.b16 %v5321, %v5317
    %v5666 = vpack.c.b16 %v5322, %v5318
    %v5667 = vpack.c.b16 %v5327, %v5323
    %v5668 = vpack.c.b16 %v5328, %v5324
    %v5669 = vpack.c.b16 %v5329, %v5325
    %v5670 = vpack.c.b16 %v5330, %v5326
    %v5671 = vpack.c.b16 %v5335, %v5331
    %v5672 = vpack.c.b16 %v5336, %v5332
    %v5673 = vpack.c.b16 %v5337, %v5333
    %v5674 = vpack.c.b16 %v5338, %v5334
    %v5675 = vpack.c.b16 %v5343, %v5339
    %v5676 = vpack.c.b16 %v5344, %v5340
    %v5677 = vpack.c.b16 %v5345, %v5341
    %v5678 = vpack.c.b16 %v5346, %v5342
    %v5679 = vpack.c.b16 %v5351, %v5347
    %v5680 = vpack.c.b16 %v5352, %v5348
    %v5681 = vpack.c.b16 %v5353, %v5349
    %v5682 = vpack.c.b16 %v5354, %v5350
    %v5683 = vpack.c.b16 %v5359, %v5355
    %v5684 = vpack.c.b16 %v5360, %v5356
    %v5685 = vpack.c.b16 %v5361, %v5357
    %v5686 = vpack.c.b16 %v5362, %v5358
    %v5687 = vpack.c.b16 %v5367, %v5363
    %v5688 = vpack.c.b16 %v5368, %v5364
    %v5689 = vpack.c.b16 %v5369, %v5365
    %v5690 = vpack.c.b16 %v5370, %v5366
    %v5691 = vpack.c.b16 %v5375, %v5371
    %v5692 = vpack.c.b16 %v5376, %v5372
    %v5693 = vpack.c.b16 %v5377, %v5373
    %v5694 = vpack.c.b16 %v5378, %v5374
    %v5695 = vpack.c.b16 %v5383, %v5379
    %v5696 = vpack.c.b16 %v5384, %v5380
    %v5697 = vpack.c.b16 %v5385, %v5381
    %v5698 = vpack.c.b16 %v5386, %v5382
    %v5699 = vpack.c.b16 %v5391, %v5387
    %v5700 = vpack.c.b16 %v5392, %v5388
    %v5701 = vpack.c.b16 %v5393, %v5389
    %v5702 = vpack.c.b16 %v5394, %v5390
    %v5703 = vpack.c.b16 %v5399, %v5395
    %v5704 = vpack.c.b16 %v5400, %v5396
    %v5705 = vpack.c.b16 %v5401, %v5397
    %v5706 = vpack.c.b16 %v5402, %v5398
    %v5707 = vpack.c.b16 %v5407, %v5403
    %v5708 = vpack.c.b16 %v5408, %v5404
    %v5709 = vpack.c.b16 %v5409, %v5405
    %v5710 = vpack.c.b16 %v5410, %v5406
    %v5711 = vpack.c.b16 %v5415, %v5411
    %v5712 = vpack.c.b16 %v5416, %v5412
    %v5713 = vpack.c.b16 %v5417, %v5413
    %v5714 = vpack.c.b16 %v5418, %v5414
    %v5715 = vpack.c.b16 %v5423, %v5419
    %v5716 = vpack.c.b16 %v5424, %v5420
    %v5717 = vpack.c.b16 %v5425, %v5421
    %v5718 = vpack.c.b16 %v5426, %v5422
    %v5719 = vpack.c.b16 %v5431, %v5427
    %v5720 = vpack.c.b16 %v5432, %v5428
    %v5721 = vpack.c.b16 %v5433, %v5429
    %v5722 = vpack.c.b16 %v5434, %v5430
    %6011 = vmatprep.subr.bf16.mxu0 %v5436
    %6012 = vmatpush1.bf16.msra.mxu0 %v5435
    %6013 = vmatprep.subr.bf16.mxu0 %v5440
    %6014 = vmatpush1.bf16.msra.mxu0 %v5439
    %6015 = vmatprep.subr.bf16.mxu0 %v5444
    %6016 = vmatpush1.bf16.msra.mxu0 %v5443
    %6017 = vmatprep.subr.bf16.mxu0 %v5448
    %6018 = vmatpush1.bf16.msra.mxu0 %v5447
    %6019 = vmatprep.subr.bf16.mxu0 %v5452
    %6020 = vmatpush1.bf16.msra.mxu0 %v5451
    %6021 = vmatprep.subr.bf16.mxu0 %v5456
    %6022 = vmatpush1.bf16.msra.mxu0 %v5455
    %6023 = vmatprep.subr.bf16.mxu0 %v5460
    %6024 = vmatpush1.bf16.msra.mxu0 %v5459
    %6025 = vmatprep.subr.bf16.mxu0 %v5464
    %6026 = vmatpush1.bf16.msra.mxu0 %v5463
    %6027 = vmatprep.subr.bf16.mxu0 %v5468
    %6028 = vmatpush1.bf16.msra.mxu0 %v5467
    %6029 = vmatprep.subr.bf16.mxu0 %v5472
    %6030 = vmatpush1.bf16.msra.mxu0 %v5471
    %6031 = vmatprep.subr.bf16.mxu0 %v5476
    %6032 = vmatpush1.bf16.msra.mxu0 %v5475
    %6033 = vmatprep.subr.bf16.mxu0 %v5480
    %6034 = vmatpush1.bf16.msra.mxu0 %v5479
    %6035 = vmatprep.subr.bf16.mxu0 %v5484
    %6036 = vmatpush1.bf16.msra.mxu0 %v5483
    %6037 = vmatprep.subr.bf16.mxu0 %v5488
    %6038 = vmatpush1.bf16.msra.mxu0 %v5487
    %6039 = vmatprep.subr.bf16.mxu0 %v5492
    %6040 = vmatpush1.bf16.msra.mxu0 %v5491
    %6041 = vmatprep.subr.bf16.mxu0 %v5496
    %6042 = vmatpush1.bf16.msra.mxu0 %v5495
    %6043 = vmatprep.mubr.bf16.mxu0 %v3938
    %6044 = vmatmul.mubr.bf16.gmra.mrb[0].mxu0 %v3892
    %v6045 = vpop.f32.mrb[0].mxu0
    %v6046 = vadd.f32 %v4554, %v6045
    %v6047 = vpop.f32.mrb[0].mxu0
    %v6048 = vadd.f32 %v4558, %v6047
    %v6049 = vpop.f32.mrb[0].mxu0
    %v6050 = vpop.f32.mrb[0].mxu0
    %6051 = vdwg.mxu0
    %6052 = vmatprep.subr.bf16.mxu0 %v5500
    %6053 = vmatpush1.bf16.msra.mxu0 %v5499
    %6054 = vmatprep.subr.bf16.mxu0 %v5504
    %6055 = vmatpush1.bf16.msra.mxu0 %v5503
    %6056 = vmatprep.subr.bf16.mxu0 %v5508
    %6057 = vmatpush1.bf16.msra.mxu0 %v5507
    %6058 = vmatprep.subr.bf16.mxu0 %v5512
    %6059 = vmatpush1.bf16.msra.mxu0 %v5511
    %6060 = vmatprep.subr.bf16.mxu0 %v5516
    %6061 = vmatpush1.bf16.msra.mxu0 %v5515
    %6062 = vmatprep.subr.bf16.mxu0 %v5520
    %6063 = vmatpush1.bf16.msra.mxu0 %v5519
    %6064 = vmatprep.subr.bf16.mxu0 %v5524
    %6065 = vmatpush1.bf16.msra.mxu0 %v5523
    %6066 = vmatprep.subr.bf16.mxu0 %v5528
    %6067 = vmatpush1.bf16.msra.mxu0 %v5527
    %6068 = vmatprep.subr.bf16.mxu0 %v5532
    %6069 = vmatpush1.bf16.msra.mxu0 %v5531
    %6070 = vmatprep.subr.bf16.mxu0 %v5536
    %6071 = vmatpush1.bf16.msra.mxu0 %v5535
    %6072 = vmatprep.subr.bf16.mxu0 %v5540
    %6073 = vmatpush1.bf16.msra.mxu0 %v5539
    %6074 = vmatprep.subr.bf16.mxu0 %v5544
    %6075 = vmatpush1.bf16.msra.mxu0 %v5543
    %6076 = vmatprep.subr.bf16.mxu0 %v5548
    %6077 = vmatpush1.bf16.msra.mxu0 %v5547
    %6078 = vmatprep.subr.bf16.mxu0 %v5552
    %6079 = vmatpush1.bf16.msra.mxu0 %v5551
    %6080 = vmatprep.subr.bf16.mxu0 %v5556
    %6081 = vmatpush1.bf16.msra.mxu0 %v5555
    %6082 = vmatprep.subr.bf16.mxu0 %v5560
    %6083 = vmatpush1.bf16.msra.mxu0 %v5559
    %6084 = vmatprep.mubr.bf16.mxu0 %v4030
    %6085 = vmatmul.mubr.bf16.gmra.mrb[0].mxu0 %v3984
    %v6086 = vpop.f32.mrb[0].mxu0
    %v6087 = vadd.f32 %v6046, %v6086
    %v6088 = vpop.f32.mrb[0].mxu0
    %v6089 = vadd.f32 %v6048, %v6088
    %v6090 = vpop.f32.mrb[0].mxu0
    %v6091 = vpop.f32.mrb[0].mxu0
    %6092 = vdwg.mxu0
    %6093 = vmatprep.subr.bf16.mxu0 %v5564
    %6094 = vmatpush1.bf16.msra.mxu0 %v5563
    %6095 = vmatprep.subr.bf16.mxu0 %v5568
    %6096 = vmatpush1.bf16.msra.mxu0 %v5567
    %6097 = vmatprep.subr.bf16.mxu0 %v5572
    %6098 = vmatpush1.bf16.msra.mxu0 %v5571
    %6099 = vmatprep.subr.bf16.mxu0 %v5576
    %6100 = vmatpush1.bf16.msra.mxu0 %v5575
    %6101 = vmatprep.subr.bf16.mxu0 %v5580
    %6102 = vmatpush1.bf16.msra.mxu0 %v5579
    %6103 = vmatprep.subr.bf16.mxu0 %v5584
    %6104 = vmatpush1.bf16.msra.mxu0 %v5583
    %6105 = vmatprep.subr.bf16.mxu0 %v5588
    %6106 = vmatpush1.bf16.msra.mxu0 %v5587
    %6107 = vmatprep.subr.bf16.mxu0 %v5592
    %6108 = vmatpush1.bf16.msra.mxu0 %v5591
    %6109 = vmatprep.subr.bf16.mxu0 %v5596
    %6110 = vmatpush1.bf16.msra.mxu0 %v5595
    %6111 = vmatprep.subr.bf16.mxu0 %v5600
    %6112 = vmatpush1.bf16.msra.mxu0 %v5599
    %6113 = vmatprep.subr.bf16.mxu0 %v5604
    %6114 = vmatpush1.bf16.msra.mxu0 %v5603
    %6115 = vmatprep.subr.bf16.mxu0 %v5608
    %6116 = vmatpush1.bf16.msra.mxu0 %v5607
    %6117 = vmatprep.subr.bf16.mxu0 %v5612
    %6118 = vmatpush1.bf16.msra.mxu0 %v5611
    %6119 = vmatprep.subr.bf16.mxu0 %v5616
    %6120 = vmatpush1.bf16.msra.mxu0 %v5615
    %6121 = vmatprep.subr.bf16.mxu0 %v5620
    %6122 = vmatpush1.bf16.msra.mxu0 %v5619
    %6123 = vmatprep.subr.bf16.mxu0 %v5624
    %6124 = vmatpush1.bf16.msra.mxu0 %v5623
    %6125 = vmatprep.mubr.bf16.mxu0 %v4122
    %6126 = vmatmul.mubr.bf16.gmra.mrb[0].mxu0 %v4076
    %v6127 = vpop.f32.mrb[0].mxu0
    %v6128 = vadd.f32 %v6087, %v6127
    %v6129 = vpop.f32.mrb[0].mxu0
    %v6130 = vadd.f32 %v6089, %v6129
    %v6131 = vpop.f32.mrb[0].mxu0
    %v6132 = vpop.f32.mrb[0].mxu0
    %6133 = vdwg.mxu0
    %6134 = vmatprep.subr.bf16.mxu0 %v5628
    %6135 = vmatpush1.bf16.msra.mxu0 %v5627
    %6136 = vmatprep.subr.bf16.mxu0 %v5632
    %6137 = vmatpush1.bf16.msra.mxu0 %v5631
    %6138 = vmatprep.subr.bf16.mxu0 %v5636
    %6139 = vmatpush1.bf16.msra.mxu0 %v5635
    %6140 = vmatprep.subr.bf16.mxu0 %v5640
    %6141 = vmatpush1.bf16.msra.mxu0 %v5639
    %6142 = vmatprep.subr.bf16.mxu0 %v5644
    %6143 = vmatpush1.bf16.msra.mxu0 %v5643
    %6144 = vmatprep.subr.bf16.mxu0 %v5648
    %6145 = vmatpush1.bf16.msra.mxu0 %v5647
    %6146 = vmatprep.subr.bf16.mxu0 %v5652
    %6147 = vmatpush1.bf16.msra.mxu0 %v5651
    %6148 = vmatprep.subr.bf16.mxu0 %v5656
    %6149 = vmatpush1.bf16.msra.mxu0 %v5655
    %6150 = vmatprep.subr.bf16.mxu0 %v5660
    %6151 = vmatpush1.bf16.msra.mxu0 %v5659
    %6152 = vmatprep.subr.bf16.mxu0 %v5664
    %6153 = vmatpush1.bf16.msra.mxu0 %v5663
    %6154 = vmatprep.subr.bf16.mxu0 %v5668
    %6155 = vmatpush1.bf16.msra.mxu0 %v5667
    %6156 = vmatprep.subr.bf16.mxu0 %v5672
    %6157 = vmatpush1.bf16.msra.mxu0 %v5671
    %6158 = vmatprep.subr.bf16.mxu0 %v5676
    %6159 = vmatpush1.bf16.msra.mxu0 %v5675
    %6160 = vmatprep.subr.bf16.mxu0 %v5680
    %6161 = vmatpush1.bf16.msra.mxu0 %v5679
    %6162 = vmatprep.subr.bf16.mxu0 %v5684
    %6163 = vmatpush1.bf16.msra.mxu0 %v5683
    %6164 = vmatprep.subr.bf16.mxu0 %v5688
    %6165 = vmatpush1.bf16.msra.mxu0 %v5687
    %6166 = vmatprep.mubr.bf16.mxu0 %v4214
    %6167 = vmatmul.mubr.bf16.gmra.mrb[0].mxu0 %v4168
    %v6168 = vpop.f32.mrb[0].mxu0
    %v6169 = vadd.f32 %v6128, %v6168
    %v6170 = vpop.f32.mrb[0].mxu0
    %v6171 = vadd.f32 %v6130, %v6170
    %v6172 = vpop.f32.mrb[0].mxu0
    %v6173 = vpop.f32.mrb[0].mxu0
    %6174 = vdwg.mxu0
    %6175 = vmatprep.subr.bf16.mxu0 %v5692
    %6176 = vmatpush1.bf16.msra.mxu0 %v5691
    %6177 = vmatprep.subr.bf16.mxu0 %v5696
    %6178 = vmatpush1.bf16.msra.mxu0 %v5695
    %6179 = vmatprep.subr.bf16.mxu0 %v5700
    %6180 = vmatpush1.bf16.msra.mxu0 %v5699
    %6181 = vmatprep.subr.bf16.mxu0 %v5704
    %6182 = vmatpush1.bf16.msra.mxu0 %v5703
    %6183 = vmatprep.subr.bf16.mxu0 %v5708
    %6184 = vmatpush1.bf16.msra.mxu0 %v5707
    %6185 = vmatprep.subr.bf16.mxu0 %v5712
    %6186 = vmatpush1.bf16.msra.mxu0 %v5711
    %6187 = vmatprep.subr.bf16.mxu0 %v5716
    %6188 = vmatpush1.bf16.msra.mxu0 %v5715
    %6189 = vmatprep.subr.bf16.mxu0 %v5720
    %6190 = vmatpush1.bf16.msra.mxu0 %v5719
    %6191 = vmatprep.subr.bf16.mxu0 0
    %6192 = vmatpush1.bf16.msra.mxu0 0
    %6193 = vmatprep.subr.bf16.mxu0 0
    %6194 = vmatpush1.bf16.msra.mxu0 0
    %6195 = vmatprep.subr.bf16.mxu0 0
    %6196 = vmatpush1.bf16.msra.mxu0 0
    %6197 = vmatprep.subr.bf16.mxu0 0
    %6198 = vmatpush1.bf16.msra.mxu0 0
    %6199 = vmatprep.subr.bf16.mxu0 0
    %6200 = vmatpush1.bf16.msra.mxu0 0
    %6201 = vmatprep.subr.bf16.mxu0 0
    %6202 = vmatpush1.bf16.msra.mxu0 0
    %6203 = vmatprep.subr.bf16.mxu0 0
    %6204 = vmatpush1.bf16.msra.mxu0 0
    %6205 = vmatprep.subr.bf16.mxu0 0
    %6206 = vmatpush1.bf16.msra.mxu0 0
    %6207 = vmatprep.mubr.bf16.mxu0 0
    %6208 = vmatmul.mubr.bf16.gmra.mrb[0].mxu0 %v4260
    %v6209 = vpop.f32.mrb[0].mxu0
    %v6210 = vadd.f32 %v6169, %v6209
    %v6211 = vpop.f32.mrb[0].mxu0
    %v6212 = vadd.f32 %v6171, %v6211
    %v6213 = vpop.f32.mrb[0].mxu0
    %v6214 = vpop.f32.mrb[0].mxu0
    %6215 = vdwg.mxu0
    %6216 = vmatprep.subr.bf16.mxu0 %v5438
    %6217 = vmatpush1.bf16.msra.mxu0 %v5437
    %6218 = vmatprep.subr.bf16.mxu0 %v5442
    %6219 = vmatpush1.bf16.msra.mxu0 %v5441
    %6220 = vmatprep.subr.bf16.mxu0 %v5446
    %6221 = vmatpush1.bf16.msra.mxu0 %v5445
    %6222 = vmatprep.subr.bf16.mxu0 %v5450
    %6223 = vmatpush1.bf16.msra.mxu0 %v5449
    %6224 = vmatprep.subr.bf16.mxu0 %v5454
    %6225 = vmatpush1.bf16.msra.mxu0 %v5453
    %6226 = vmatprep.subr.bf16.mxu0 %v5458
    %6227 = vmatpush1.bf16.msra.mxu0 %v5457
    %6228 = vmatprep.subr.bf16.mxu0 %v5462
    %6229 = vmatpush1.bf16.msra.mxu0 %v5461
    %6230 = vmatprep.subr.bf16.mxu0 %v5466
    %6231 = vmatpush1.bf16.msra.mxu0 %v5465
    %6232 = vmatprep.subr.bf16.mxu0 %v5470
    %6233 = vmatpush1.bf16.msra.mxu0 %v5469
    %6234 = vmatprep.subr.bf16.mxu0 %v5474
    %6235 = vmatpush1.bf16.msra.mxu0 %v5473
    %6236 = vmatprep.subr.bf16.mxu0 %v5478
    %6237 = vmatpush1.bf16.msra.mxu0 %v5477
    %6238 = vmatprep.subr.bf16.mxu0 %v5482
    %6239 = vmatpush1.bf16.msra.mxu0 %v5481
    %6240 = vmatprep.subr.bf16.mxu0 %v5486
    %6241 = vmatpush1.bf16.msra.mxu0 %v5485
    %6242 = vmatprep.subr.bf16.mxu0 %v5490
    %6243 = vmatpush1.bf16.msra.mxu0 %v5489
    %6244 = vmatprep.subr.bf16.mxu0 %v5494
    %6245 = vmatpush1.bf16.msra.mxu0 %v5493
    %6246 = vmatprep.subr.bf16.mxu0 %v5498
    %6247 = vmatpush1.bf16.msra.mxu0 %v5497
    %6248 = vmatprep.mubr.bf16.mxu0 %v3938
    %6249 = vmatmul.mubr.bf16.gmra.mrb[0].mxu0 %v3892
    %v6250 = vpop.f32.mrb[0].mxu0
    %v6251 = vadd.f32 %v4562, %v6250
    %v6252 = vpop.f32.mrb[0].mxu0
    %v6253 = vadd.f32 %v4566, %v6252
    %v6254 = vpop.f32.mrb[0].mxu0
    %v6255 = vpop.f32.mrb[0].mxu0
    %6256 = vdwg.mxu0
    %6257 = vmatprep.subr.bf16.mxu0 %v5502
    %6258 = vmatpush1.bf16.msra.mxu0 %v5501
    %6259 = vmatprep.subr.bf16.mxu0 %v5506
    %6260 = vmatpush1.bf16.msra.mxu0 %v5505
    %6261 = vmatprep.subr.bf16.mxu0 %v5510
    %6262 = vmatpush1.bf16.msra.mxu0 %v5509
    %6263 = vmatprep.subr.bf16.mxu0 %v5514
    %6264 = vmatpush1.bf16.msra.mxu0 %v5513
    %6265 = vmatprep.subr.bf16.mxu0 %v5518
    %6266 = vmatpush1.bf16.msra.mxu0 %v5517
    %6267 = vmatprep.subr.bf16.mxu0 %v5522
    %6268 = vmatpush1.bf16.msra.mxu0 %v5521
    %6269 = vmatprep.subr.bf16.mxu0 %v5526
    %6270 = vmatpush1.bf16.msra.mxu0 %v5525
    %6271 = vmatprep.subr.bf16.mxu0 %v5530
    %6272 = vmatpush1.bf16.msra.mxu0 %v5529
    %6273 = vmatprep.subr.bf16.mxu0 %v5534
    %6274 = vmatpush1.bf16.msra.mxu0 %v5533
    %6275 = vmatprep.subr.bf16.mxu0 %v5538
    %6276 = vmatpush1.bf16.msra.mxu0 %v5537
    %6277 = vmatprep.subr.bf16.mxu0 %v5542
    %6278 = vmatpush1.bf16.msra.mxu0 %v5541
    %6279 = vmatprep.subr.bf16.mxu0 %v5546
    %6280 = vmatpush1.bf16.msra.mxu0 %v5545
    %6281 = vmatprep.subr.bf16.mxu0 %v5550
    %6282 = vmatpush1.bf16.msra.mxu0 %v5549
    %6283 = vmatprep.subr.bf16.mxu0 %v5554
    %6284 = vmatpush1.bf16.msra.mxu0 %v5553
    %6285 = vmatprep.subr.bf16.mxu0 %v5558
    %6286 = vmatpush1.bf16.msra.mxu0 %v5557
    %6287 = vmatprep.subr.bf16.mxu0 %v5562
    %6288 = vmatpush1.bf16.msra.mxu0 %v5561
    %6289 = vmatprep.mubr.bf16.mxu0 %v4030
    %6290 = vmatmul.mubr.bf16.gmra.mrb[0].mxu0 %v3984
    %v6291 = vpop.f32.mrb[0].mxu0
    %v6292 = vadd.f32 %v6251, %v6291
    %v6293 = vpop.f32.mrb[0].mxu0
    %v6294 = vadd.f32 %v6253, %v6293
    %v6295 = vpop.f32.mrb[0].mxu0
    %v6296 = vpop.f32.mrb[0].mxu0
    %6297 = vdwg.mxu0
    %6298 = vmatprep.subr.bf16.mxu0 %v5566
    %6299 = vmatpush1.bf16.msra.mxu0 %v5565
    %6300 = vmatprep.subr.bf16.mxu0 %v5570
    %6301 = vmatpush1.bf16.msra.mxu0 %v5569
    %6302 = vmatprep.subr.bf16.mxu0 %v5574
    %6303 = vmatpush1.bf16.msra.mxu0 %v5573
    %6304 = vmatprep.subr.bf16.mxu0 %v5578
    %6305 = vmatpush1.bf16.msra.mxu0 %v5577
    %6306 = vmatprep.subr.bf16.mxu0 %v5582
    %6307 = vmatpush1.bf16.msra.mxu0 %v5581
    %6308 = vmatprep.subr.bf16.mxu0 %v5586
    %6309 = vmatpush1.bf16.msra.mxu0 %v5585
    %6310 = vmatprep.subr.bf16.mxu0 %v5590
    %6311 = vmatpush1.bf16.msra.mxu0 %v5589
    %6312 = vmatprep.subr.bf16.mxu0 %v5594
    %6313 = vmatpush1.bf16.msra.mxu0 %v5593
    %6314 = vmatprep.subr.bf16.mxu0 %v5598
    %6315 = vmatpush1.bf16.msra.mxu0 %v5597
    %6316 = vmatprep.subr.bf16.mxu0 %v5602
    %6317 = vmatpush1.bf16.msra.mxu0 %v5601
    %6318 = vmatprep.subr.bf16.mxu0 %v5606
    %6319 = vmatpush1.bf16.msra.mxu0 %v5605
    %6320 = vmatprep.subr.bf16.mxu0 %v5610
    %6321 = vmatpush1.bf16.msra.mxu0 %v5609
    %6322 = vmatprep.subr.bf16.mxu0 %v5614
    %6323 = vmatpush1.bf16.msra.mxu0 %v5613
    %6324 = vmatprep.subr.bf16.mxu0 %v5618
    %6325 = vmatpush1.bf16.msra.mxu0 %v5617
    %6326 = vmatprep.subr.bf16.mxu0 %v5622
    %6327 = vmatpush1.bf16.msra.mxu0 %v5621
    %6328 = vmatprep.subr.bf16.mxu0 %v5626
    %6329 = vmatpush1.bf16.msra.mxu0 %v5625
    %6330 = vmatprep.mubr.bf16.mxu0 %v4122
    %6331 = vmatmul.mubr.bf16.gmra.mrb[0].mxu0 %v4076
    %v6332 = vpop.f32.mrb[0].mxu0
    %v6333 = vadd.f32 %v6292, %v6332
    %v6334 = vpop.f32.mrb[0].mxu0
    %v6335 = vadd.f32 %v6294, %v6334
    %v6336 = vpop.f32.mrb[0].mxu0
    %v6337 = vpop.f32.mrb[0].mxu0
    %6338 = vdwg.mxu0
    %6339 = vmatprep.subr.bf16.mxu0 %v5630
    %6340 = vmatpush1.bf16.msra.mxu0 %v5629
    %6341 = vmatprep.subr.bf16.mxu0 %v5634
    %6342 = vmatpush1.bf16.msra.mxu0 %v5633
    %6343 = vmatprep.subr.bf16.mxu0 %v5638
    %6344 = vmatpush1.bf16.msra.mxu0 %v5637
    %6345 = vmatprep.subr.bf16.mxu0 %v5642
    %6346 = vmatpush1.bf16.msra.mxu0 %v5641
    %6347 = vmatprep.subr.bf16.mxu0 %v5646
    %6348 = vmatpush1.bf16.msra.mxu0 %v5645
    %6349 = vmatprep.subr.bf16.mxu0 %v5650
    %6350 = vmatpush1.bf16.msra.mxu0 %v5649
    %6351 = vmatprep.subr.bf16.mxu0 %v5654
    %6352 = vmatpush1.bf16.msra.mxu0 %v5653
    %6353 = vmatprep.subr.bf16.mxu0 %v5658
    %6354 = vmatpush1.bf16.msra.mxu0 %v5657
    %6355 = vmatprep.subr.bf16.mxu0 %v5662
    %6356 = vmatpush1.bf16.msra.mxu0 %v5661
    %6357 = vmatprep.subr.bf16.mxu0 %v5666
    %6358 = vmatpush1.bf16.msra.mxu0 %v5665
    %6359 = vmatprep.subr.bf16.mxu0 %v5670
    %6360 = vmatpush1.bf16.msra.mxu0 %v5669
    %6361 = vmatprep.subr.bf16.mxu0 %v5674
    %6362 = vmatpush1.bf16.msra.mxu0 %v5673
    %6363 = vmatprep.subr.bf16.mxu0 %v5678
    %6364 = vmatpush1.bf16.msra.mxu0 %v5677
    %6365 = vmatprep.subr.bf16.mxu0 %v5682
    %6366 = vmatpush1.bf16.msra.mxu0 %v5681
    %6367 = vmatprep.subr.bf16.mxu0 %v5686
    %6368 = vmatpush1.bf16.msra.mxu0 %v5685
    %6369 = vmatprep.subr.bf16.mxu0 %v5690
    %6370 = vmatpush1.bf16.msra.mxu0 %v5689
    %6371 = vmatprep.mubr.bf16.mxu0 %v4214
    %6372 = vmatmul.mubr.bf16.gmra.mrb[0].mxu0 %v4168
    %v6373 = vpop.f32.mrb[0].mxu0
    %v6374 = vadd.f32 %v6333, %v6373
    %v6375 = vpop.f32.mrb[0].mxu0
    %v6376 = vadd.f32 %v6335, %v6375
    %v6377 = vpop.f32.mrb[0].mxu0
    %v6378 = vpop.f32.mrb[0].mxu0
    %6379 = vdwg.mxu0
    %6380 = vmatprep.subr.bf16.mxu0 %v5694
    %6381 = vmatpush1.bf16.msra.mxu0 %v5693
    %6382 = vmatprep.subr.bf16.mxu0 %v5698
    %6383 = vmatpush1.bf16.msra.mxu0 %v5697
    %6384 = vmatprep.subr.bf16.mxu0 %v5702
    %6385 = vmatpush1.bf16.msra.mxu0 %v5701
    %6386 = vmatprep.subr.bf16.mxu0 %v5706
    %6387 = vmatpush1.bf16.msra.mxu0 %v5705
    %6388 = vmatprep.subr.bf16.mxu0 %v5710
    %6389 = vmatpush1.bf16.msra.mxu0 %v5709
    %6390 = vmatprep.subr.bf16.mxu0 %v5714
    %6391 = vmatpush1.bf16.msra.mxu0 %v5713
    %6392 = vmatprep.subr.bf16.mxu0 %v5718
    %6393 = vmatpush1.bf16.msra.mxu0 %v5717
    %6394 = vmatprep.subr.bf16.mxu0 %v5722
    %6395 = vmatpush1.bf16.msra.mxu0 %v5721
    %6396 = vmatprep.subr.bf16.mxu0 0
    %6397 = vmatpush1.bf16.msra.mxu0 0
    %6398 = vmatprep.subr.bf16.mxu0 0
    %6399 = vmatpush1.bf16.msra.mxu0 0
    %6400 = vmatprep.subr.bf16.mxu0 0
    %6401 = vmatpush1.bf16.msra.mxu0 0
    %6402 = vmatprep.subr.bf16.mxu0 0
    %6403 = vmatpush1.bf16.msra.mxu0 0
    %6404 = vmatprep.subr.bf16.mxu0 0
    %6405 = vmatpush1.bf16.msra.mxu0 0
    %6406 = vmatprep.subr.bf16.mxu0 0
    %6407 = vmatpush1.bf16.msra.mxu0 0
    %6408 = vmatprep.subr.bf16.mxu0 0
    %6409 = vmatpush1.bf16.msra.mxu0 0
    %6410 = vmatprep.subr.bf16.mxu0 0
    %6411 = vmatpush1.bf16.msra.mxu0 0
    %6412 = vmatprep.mubr.bf16.mxu0 0
    %6413 = vmatmul.mubr.bf16.gmra.mrb[0].mxu0 %v4260
    %v6414 = vpop.f32.mrb[0].mxu0
    %v6415 = vadd.f32 %v6374, %v6414
    %v6416 = vpop.f32.mrb[0].mxu0
    %v6417 = vadd.f32 %v6376, %v6416
    %v6418 = vpop.f32.mrb[0].mxu0
    %v6419 = vpop.f32.mrb[0].mxu0
    %6420 = vdwg.mxu0
    %v6421 = vmax.f32 %v6210, 0.0
    %v6422 = vmax.f32 %v6212, 0.0
    %v6423 = vmax.f32 %v6415, 0.0
    %v6424 = vmax.f32 %v6417, 0.0
    %v6425 = vpack.c.bf16 %v6421, %v6421
    %v6426 = vpack.c.bf16 %v6422, %v6422
    %v6427 = vpack.c.bf16 %v6423, %v6423
    %v6428 = vpack.c.bf16 %v6424, %v6424
    %v6429 = vld [vmem:[#allocation19] sm:$0xf]
    %v6430 = vld [vmem:[#allocation19 + $0x4] sm:$0xf]
    %v6431 = vld [vmem:[#allocation19 + $0x8] sm:$0xf]
    %v6432 = vld [vmem:[#allocation19 + $0xc] sm:$0xf]
    %v6433 = vld [vmem:[#allocation19 + $0x10] sm:$0xf]
    %v6434 = vld [vmem:[#allocation19 + $0x14] sm:$0xf]
    %v6435 = vld [vmem:[#allocation19 + $0x18] sm:$0xf]
    %v6436 = vld [vmem:[#allocation19 + $0x1c] sm:$0xf]
    %v6437 = vld [vmem:[#allocation19 + $0x20] sm:$0xf]
    %v6438 = vld [vmem:[#allocation19 + $0x24] sm:$0xf]
    %v6439 = vld [vmem:[#allocation19 + $0x28] sm:$0xf]
    %v6440 = vld [vmem:[#allocation19 + $0x2c] sm:$0xf]
    %v6441 = vld [vmem:[#allocation19 + $0x30] sm:$0xf]
    %v6442 = vld [vmem:[#allocation19 + $0x34] sm:$0xf]
    %v6443 = vld [vmem:[#allocation19 + $0x38] sm:$0xf]
    %v6444 = vld [vmem:[#allocation19 + $0x3c] sm:$0xf]
    %v6445 = vld [vmem:[#allocation19 + $0x40] sm:$0xf]
    %v6446 = vld [vmem:[#allocation19 + $0x44] sm:$0xf]
    %v6447 = vld [vmem:[#allocation19 + $0x48] sm:$0xf]
    %v6448 = vld [vmem:[#allocation19 + $0x4c] sm:$0xf]
    %v6449 = vld [vmem:[#allocation19 + $0x50] sm:$0xf]
    %v6450 = vld [vmem:[#allocation19 + $0x54] sm:$0xf]
    %v6451 = vld [vmem:[#allocation19 + $0x58] sm:$0xf]
    %v6452 = vld [vmem:[#allocation19 + $0x5c] sm:$0xf]
    %v6453 = vld [vmem:[#allocation19 + $0x60] sm:$0xf]
    %v6454 = vld [vmem:[#allocation19 + $0x64] sm:$0xf]
    %v6455 = vld [vmem:[#allocation19 + $0x68] sm:$0xf]
    %v6456 = vld [vmem:[#allocation19 + $0x6c] sm:$0xf]
    %v6457 = vld [vmem:[#allocation19 + $0x70] sm:$0xf]
    %v6458 = vld [vmem:[#allocation19 + $0x74] sm:$0xf]
    %v6459 = vld [vmem:[#allocation19 + $0x78] sm:$0xf]
    %v6460 = vld [vmem:[#allocation19 + $0x7c] sm:$0xf]
    %v6461 = vld [vmem:[#allocation19 + $0x80] sm:$0xf]
    %v6462 = vld [vmem:[#allocation19 + $0x84] sm:$0xf]
    %v6463 = vld [vmem:[#allocation19 + $0x88] sm:$0xf]
    %v6464 = vld [vmem:[#allocation19 + $0x8c] sm:$0xf]
    %v6465 = vld [vmem:[#allocation19 + $0x90] sm:$0xf]
    %v6466 = vld [vmem:[#allocation19 + $0x94] sm:$0xf]
    %v6467 = vld [vmem:[#allocation19 + $0x98] sm:$0xf]
    %v6468 = vld [vmem:[#allocation19 + $0x9c] sm:$0xf]
    %v6469 = vld [vmem:[#allocation19 + $0xa0] sm:$0xf]
    %v6470 = vld [vmem:[#allocation19 + $0xa4] sm:$0xf]
    %v6471 = vld [vmem:[#allocation19 + $0xa8] sm:$0xf]
    %v6472 = vld [vmem:[#allocation19 + $0xac] sm:$0xf]
    %v6473 = vld [vmem:[#allocation19 + $0xb0] sm:$0xf]
    %v6474 = vld [vmem:[#allocation19 + $0xb4] sm:$0xf]
    %v6475 = vld [vmem:[#allocation19 + $0xb8] sm:$0xf]
    %v6476 = vld [vmem:[#allocation19 + $0xbc] sm:$0xf]
    %v6477 = vld [vmem:[#allocation19 + $0xc0] sm:$0xf]
    %v6478 = vld [vmem:[#allocation19 + $0xc4] sm:$0xf]
    %v6479 = vld [vmem:[#allocation19 + $0xc8] sm:$0xf]
    %v6480 = vld [vmem:[#allocation19 + $0xcc] sm:$0xf]
    %v6481 = vld [vmem:[#allocation19 + $0xd0] sm:$0xf]
    %v6482 = vld [vmem:[#allocation19 + $0xd4] sm:$0xf]
    %v6483 = vld [vmem:[#allocation19 + $0xd8] sm:$0xf]
    %v6484 = vld [vmem:[#allocation19 + $0xdc] sm:$0xf]
    %v6485 = vld [vmem:[#allocation19 + $0xe0] sm:$0xf]
    %v6486 = vld [vmem:[#allocation19 + $0xe4] sm:$0xf]
    %v6487 = vld [vmem:[#allocation19 + $0xe8] sm:$0xf]
    %v6488 = vld [vmem:[#allocation19 + $0xec] sm:$0xf]
    %v6489 = vld [vmem:[#allocation19 + $0xf0] sm:$0xf]
    %v6490 = vld [vmem:[#allocation19 + $0xf4] sm:$0xf]
    %v6491 = vld [vmem:[#allocation19 + $0xf8] sm:$0xf]
    %v6492 = vld [vmem:[#allocation19 + $0xfc] sm:$0xf]
    %v6493 = vld [vmem:[#allocation20] sm:$0x1]
    %v6495 = vlaneseq
    %v6496 = vshrl.u32 %v6495, 7
    %v6497 = vsub.s32 0, %v6496
    %v6498 = vrot.slane %v6493, %v6497
    %v6564 = vunpack.c.l.b16 %v6429
    %v6565 = vunpack.c.l.b16 %v6430
    %v6566 = vunpack.c.l.b16 %v6431
    %v6567 = vunpack.c.l.b16 %v6432
    %v6568 = vunpack.c.l.b16 %v6433
    %v6569 = vunpack.c.l.b16 %v6434
    %v6570 = vunpack.c.l.b16 %v6435
    %v6571 = vunpack.c.l.b16 %v6436
    %v6572 = vunpack.c.l.b16 %v6437
    %v6573 = vunpack.c.l.b16 %v6438
    %v6574 = vunpack.c.l.b16 %v6439
    %v6575 = vunpack.c.l.b16 %v6440
    %v6576 = vunpack.c.l.b16 %v6441
    %v6577 = vunpack.c.l.b16 %v6442
    %v6578 = vunpack.c.l.b16 %v6443
    %v6579 = vunpack.c.l.b16 %v6444
    %v6580 = vunpack.c.l.b16 %v6445
    %v6581 = vunpack.c.l.b16 %v6446
    %v6582 = vunpack.c.l.b16 %v6447
    %v6583 = vunpack.c.l.b16 %v6448
    %v6584 = vunpack.c.l.b16 %v6449
    %v6585 = vunpack.c.l.b16 %v6450
    %v6586 = vunpack.c.l.b16 %v6451
    %v6587 = vunpack.c.l.b16 %v6452
    %v6588 = vunpack.c.l.b16 %v6453
    %v6589 = vunpack.c.l.b16 %v6454
    %v6590 = vunpack.c.l.b16 %v6455
    %v6591 = vunpack.c.l.b16 %v6456
    %v6592 = vunpack.c.l.b16 %v6457
    %v6593 = vunpack.c.l.b16 %v6458
    %v6594 = vunpack.c.l.b16 %v6459
    %v6595 = vunpack.c.l.b16 %v6460
    %v6596 = vunpack.c.l.b16 %v6461
    %v6597 = vunpack.c.l.b16 %v6462
    %v6598 = vunpack.c.l.b16 %v6463
    %v6599 = vunpack.c.l.b16 %v6464
    %v6600 = vunpack.c.l.b16 %v6465
    %v6601 = vunpack.c.l.b16 %v6466
    %v6602 = vunpack.c.l.b16 %v6467
    %v6603 = vunpack.c.l.b16 %v6468
    %v6604 = vunpack.c.l.b16 %v6469
    %v6605 = vunpack.c.l.b16 %v6470
    %v6606 = vunpack.c.l.b16 %v6471
    %v6607 = vunpack.c.l.b16 %v6472
    %v6608 = vunpack.c.l.b16 %v6473
    %v6609 = vunpack.c.l.b16 %v6474
    %v6610 = vunpack.c.l.b16 %v6475
    %v6611 = vunpack.c.l.b16 %v6476
    %v6612 = vunpack.c.l.b16 %v6477
    %v6613 = vunpack.c.l.b16 %v6478
    %v6614 = vunpack.c.l.b16 %v6479
    %v6615 = vunpack.c.l.b16 %v6480
    %v6616 = vunpack.c.l.b16 %v6481
    %v6617 = vunpack.c.l.b16 %v6482
    %v6618 = vunpack.c.l.b16 %v6483
    %v6619 = vunpack.c.l.b16 %v6484
    %v6620 = vunpack.c.l.b16 %v6485
    %v6621 = vunpack.c.l.b16 %v6486
    %v6622 = vunpack.c.l.b16 %v6487
    %v6623 = vunpack.c.l.b16 %v6488
    %v6624 = vunpack.c.l.b16 %v6489
    %v6625 = vunpack.c.l.b16 %v6490
    %v6626 = vunpack.c.l.b16 %v6491
    %v6627 = vunpack.c.l.b16 %v6492
    %v6628 = vpack.c.b16 %v6565, %v6564
    %v6629 = vpack.c.b16 %v6567, %v6566
    %v6630 = vpack.c.b16 %v6569, %v6568
    %v6631 = vpack.c.b16 %v6571, %v6570
    %v6632 = vpack.c.b16 %v6573, %v6572
    %v6633 = vpack.c.b16 %v6575, %v6574
    %v6634 = vpack.c.b16 %v6577, %v6576
    %v6635 = vpack.c.b16 %v6579, %v6578
    %v6636 = vpack.c.b16 %v6581, %v6580
    %v6637 = vpack.c.b16 %v6583, %v6582
    %v6638 = vpack.c.b16 %v6585, %v6584
    %v6639 = vpack.c.b16 %v6587, %v6586
    %v6640 = vpack.c.b16 %v6589, %v6588
    %v6641 = vpack.c.b16 %v6591, %v6590
    %v6642 = vpack.c.b16 %v6593, %v6592
    %v6643 = vpack.c.b16 %v6595, %v6594
    %v6644 = vpack.c.b16 %v6597, %v6596
    %v6645 = vpack.c.b16 %v6599, %v6598
    %v6646 = vpack.c.b16 %v6601, %v6600
    %v6647 = vpack.c.b16 %v6603, %v6602
    %v6648 = vpack.c.b16 %v6605, %v6604
    %v6649 = vpack.c.b16 %v6607, %v6606
    %v6650 = vpack.c.b16 %v6609, %v6608
    %v6651 = vpack.c.b16 %v6611, %v6610
    %v6652 = vpack.c.b16 %v6613, %v6612
    %v6653 = vpack.c.b16 %v6615, %v6614
    %v6654 = vpack.c.b16 %v6617, %v6616
    %v6655 = vpack.c.b16 %v6619, %v6618
    %v6656 = vpack.c.b16 %v6621, %v6620
    %v6657 = vpack.c.b16 %v6623, %v6622
    %v6658 = vpack.c.b16 %v6625, %v6624
    %v6659 = vpack.c.b16 %v6627, %v6626
    %6692 = vmatprep.subr.bf16.mxu0 0
    %6693 = vmatpush1.bf16.msra.mxu0 %v6628
    %6694 = vmatprep.subr.bf16.mxu0 0
    %6695 = vmatpush1.bf16.msra.mxu0 %v6629
    %6696 = vmatprep.subr.bf16.mxu0 0
    %6697 = vmatpush1.bf16.msra.mxu0 %v6630
    %6698 = vmatprep.subr.bf16.mxu0 0
    %6699 = vmatpush1.bf16.msra.mxu0 %v6631
    %6700 = vmatprep.subr.bf16.mxu0 0
    %6701 = vmatpush1.bf16.msra.mxu0 %v6632
    %6702 = vmatprep.subr.bf16.mxu0 0
    %6703 = vmatpush1.bf16.msra.mxu0 %v6633
    %6704 = vmatprep.subr.bf16.mxu0 0
    %6705 = vmatpush1.bf16.msra.mxu0 %v6634
    %6706 = vmatprep.subr.bf16.mxu0 0
    %6707 = vmatpush1.bf16.msra.mxu0 %v6635
    %6708 = vmatprep.subr.bf16.mxu0 0
    %6709 = vmatpush1.bf16.msra.mxu0 %v6636
    %6710 = vmatprep.subr.bf16.mxu0 0
    %6711 = vmatpush1.bf16.msra.mxu0 %v6637
    %6712 = vmatprep.subr.bf16.mxu0 0
    %6713 = vmatpush1.bf16.msra.mxu0 %v6638
    %6714 = vmatprep.subr.bf16.mxu0 0
    %6715 = vmatpush1.bf16.msra.mxu0 %v6639
    %6716 = vmatprep.subr.bf16.mxu0 0
    %6717 = vmatpush1.bf16.msra.mxu0 %v6640
    %6718 = vmatprep.subr.bf16.mxu0 0
    %6719 = vmatpush1.bf16.msra.mxu0 %v6641
    %6720 = vmatprep.subr.bf16.mxu0 0
    %6721 = vmatpush1.bf16.msra.mxu0 %v6642
    %6722 = vmatprep.subr.bf16.mxu0 0
    %6723 = vmatpush1.bf16.msra.mxu0 %v6643
    %6724 = vmatprep.mubr.bf16.mxu0 %v6426
    %6725 = vmatmul.mubr.bf16.gmra.mrb[0].mxu0 %v6425
    %v6726 = vpop.f32.mrb[0].mxu0
    %v6727 = vadd.f32 %v6498, %v6726
    %v6728 = vpop.f32.mrb[0].mxu0
    %v6729 = vpop.f32.mrb[0].mxu0
    %v6730 = vpop.f32.mrb[0].mxu0
    %6731 = vdwg.mxu0
    %6732 = vmatprep.subr.bf16.mxu0 0
    %6733 = vmatpush1.bf16.msra.mxu0 %v6644
    %6734 = vmatprep.subr.bf16.mxu0 0
    %6735 = vmatpush1.bf16.msra.mxu0 %v6645
    %6736 = vmatprep.subr.bf16.mxu0 0
    %6737 = vmatpush1.bf16.msra.mxu0 %v6646
    %6738 = vmatprep.subr.bf16.mxu0 0
    %6739 = vmatpush1.bf16.msra.mxu0 %v6647
    %6740 = vmatprep.subr.bf16.mxu0 0
    %6741 = vmatpush1.bf16.msra.mxu0 %v6648
    %6742 = vmatprep.subr.bf16.mxu0 0
    %6743 = vmatpush1.bf16.msra.mxu0 %v6649
    %6744 = vmatprep.subr.bf16.mxu0 0
    %6745 = vmatpush1.bf16.msra.mxu0 %v6650
    %6746 = vmatprep.subr.bf16.mxu0 0
    %6747 = vmatpush1.bf16.msra.mxu0 %v6651
    %6748 = vmatprep.subr.bf16.mxu0 0
    %6749 = vmatpush1.bf16.msra.mxu0 %v6652
    %6750 = vmatprep.subr.bf16.mxu0 0
    %6751 = vmatpush1.bf16.msra.mxu0 %v6653
    %6752 = vmatprep.subr.bf16.mxu0 0
    %6753 = vmatpush1.bf16.msra.mxu0 %v6654
    %6754 = vmatprep.subr.bf16.mxu0 0
    %6755 = vmatpush1.bf16.msra.mxu0 %v6655
    %6756 = vmatprep.subr.bf16.mxu0 0
    %6757 = vmatpush1.bf16.msra.mxu0 %v6656
    %6758 = vmatprep.subr.bf16.mxu0 0
    %6759 = vmatpush1.bf16.msra.mxu0 %v6657
    %6760 = vmatprep.subr.bf16.mxu0 0
    %6761 = vmatpush1.bf16.msra.mxu0 %v6658
    %6762 = vmatprep.subr.bf16.mxu0 0
    %6763 = vmatpush1.bf16.msra.mxu0 %v6659
    %6764 = vmatprep.mubr.bf16.mxu0 %v6428
    %6765 = vmatmul.mubr.bf16.gmra.mrb[0].mxu0 %v6427
    %v6766 = vpop.f32.mrb[0].mxu0
    %v6767 = vadd.f32 %v6727, %v6766
    %v6768 = vpop.f32.mrb[0].mxu0
    %v6769 = vpop.f32.mrb[0].mxu0
    %v6770 = vpop.f32.mrb[0].mxu0
    %6771 = vdwg.mxu0
    %v6772 = vmax.f32 %v6767, 0.0
    %v6773 = vpack.c.bf16 %v6772, %v6772
    %v6774 = vld [vmem:[%s13] sm:$0xf]
    %v6775 = vld [vmem:[%s13 + $0x4] sm:$0xf]
    %v6776 = vld [vmem:[%s13 + $0x8] sm:$0xf]
    %v6777 = vld [vmem:[%s13 + $0xc] sm:$0xf]
    %v6778 = vld [vmem:[%s13 + $0x10] sm:$0xf]
    %v6779 = vld [vmem:[%s13 + $0x14] sm:$0xf]
    %v6780 = vld [vmem:[%s13 + $0x18] sm:$0xf]
    %v6781 = vld [vmem:[%s13 + $0x1c] sm:$0xf]
    %v6782 = vld [vmem:[%s13 + $0x20] sm:$0xf]
    %v6783 = vld [vmem:[%s13 + $0x24] sm:$0xf]
    %v6784 = vld [vmem:[%s13 + $0x28] sm:$0xf]
    %v6785 = vld [vmem:[%s13 + $0x2c] sm:$0xf]
    %v6786 = vld [vmem:[%s13 + $0x30] sm:$0xf]
    %v6787 = vld [vmem:[%s13 + $0x34] sm:$0xf]
    %v6788 = vld [vmem:[%s13 + $0x38] sm:$0xf]
    %v6789 = vld [vmem:[%s13 + $0x3c] sm:$0xf]
    %v6790 = vld [vmem:[#allocation22] sm:$0x1]
    %v6792 = vlaneseq
    %v6793 = vshrl.u32 %v6792, 7
    %v6794 = vsub.s32 0, %v6793
    %v6795 = vrot.slane %v6790, %v6794
    %v6813 = vunpack.c.l.b16 %v6774
    %v6814 = vunpack.c.l.b16 %v6775
    %v6815 = vunpack.c.l.b16 %v6776
    %v6816 = vunpack.c.l.b16 %v6777
    %v6817 = vunpack.c.l.b16 %v6778
    %v6818 = vunpack.c.l.b16 %v6779
    %v6819 = vunpack.c.l.b16 %v6780
    %v6820 = vunpack.c.l.b16 %v6781
    %v6821 = vunpack.c.l.b16 %v6782
    %v6822 = vunpack.c.l.b16 %v6783
    %v6823 = vunpack.c.l.b16 %v6784
    %v6824 = vunpack.c.l.b16 %v6785
    %v6825 = vunpack.c.l.b16 %v6786
    %v6826 = vunpack.c.l.b16 %v6787
    %v6827 = vunpack.c.l.b16 %v6788
    %v6828 = vunpack.c.l.b16 %v6789
    %v6829 = vpack.c.b16 %v6814, %v6813
    %v6830 = vpack.c.b16 %v6816, %v6815
    %v6831 = vpack.c.b16 %v6818, %v6817
    %v6832 = vpack.c.b16 %v6820, %v6819
    %v6833 = vpack.c.b16 %v6822, %v6821
    %v6834 = vpack.c.b16 %v6824, %v6823
    %v6835 = vpack.c.b16 %v6826, %v6825
    %v6836 = vpack.c.b16 %v6828, %v6827
    %6845 = vmatprep.subr.bf16.mxu0 0
    %6846 = vmatpush1.bf16.msra.mxu0 %v6829
    %6847 = vmatprep.subr.bf16.mxu0 0
    %6848 = vmatpush1.bf16.msra.mxu0 %v6830
    %6849 = vmatprep.subr.bf16.mxu0 0
    %6850 = vmatpush1.bf16.msra.mxu0 %v6831
    %6851 = vmatprep.subr.bf16.mxu0 0
    %6852 = vmatpush1.bf16.msra.mxu0 %v6832
    %6853 = vmatprep.subr.bf16.mxu0 0
    %6854 = vmatpush1.bf16.msra.mxu0 %v6833
    %6855 = vmatprep.subr.bf16.mxu0 0
    %6856 = vmatpush1.bf16.msra.mxu0 %v6834
    %6857 = vmatprep.subr.bf16.mxu0 0
    %6858 = vmatpush1.bf16.msra.mxu0 %v6835
    %6859 = vmatprep.subr.bf16.mxu0 0
    %6860 = vmatpush1.bf16.msra.mxu0 %v6836
    %6861 = vmatprep.subr.bf16.mxu0 0
    %6862 = vmatpush1.bf16.msra.mxu0 0
    %6863 = vmatprep.subr.bf16.mxu0 0
    %6864 = vmatpush1.bf16.msra.mxu0 0
    %6865 = vmatprep.subr.bf16.mxu0 0
    %6866 = vmatpush1.bf16.msra.mxu0 0
    %6867 = vmatprep.subr.bf16.mxu0 0
    %6868 = vmatpush1.bf16.msra.mxu0 0
    %6869 = vmatprep.subr.bf16.mxu0 0
    %6870 = vmatpush1.bf16.msra.mxu0 0
    %6871 = vmatprep.subr.bf16.mxu0 0
    %6872 = vmatpush1.bf16.msra.mxu0 0
    %6873 = vmatprep.subr.bf16.mxu0 0
    %6874 = vmatpush1.bf16.msra.mxu0 0
    %6875 = vmatprep.subr.bf16.mxu0 0
    %6876 = vmatpush1.bf16.msra.mxu0 0
    %6877 = vmatprep.mubr.bf16.mxu0 0
    %6878 = vmatmul.mubr.bf16.gmra.mrb[0].mxu0 %v6773
    %v6879 = vpop.f32.mrb[0].mxu0
    %v6880 = vadd.f32 %v6795, %v6879
    %v6881 = vpop.f32.mrb[0].mxu0
    %v6882 = vpop.f32.mrb[0].mxu0
    %v6883 = vpop.f32.mrb[0].mxu0
    %6884 = vdwg.mxu0
    %v6885 = vmax.f32 %v6880, 0.0
    %v6886 = vpack.c.bf16 %v6885, %v6885
    %v6887 = vld [vmem:[#allocation23] sm:$0xf]
    %v6888 = vld [vmem:[#allocation23 + $0x4] sm:$0xf]
    %v6889 = vld [vmem:[#allocation23 + $0x8] sm:$0xf]
    %v6890 = vld [vmem:[#allocation23 + $0xc] sm:$0xf]
    %v6891 = vld [vmem:[#allocation25] sm:$0x1]
    %v6893 = vlaneseq
    %v6894 = vshrl.u32 %v6893, 7
    %v6895 = vsub.s32 0, %v6894
    %v6896 = vrot.slane %v6891, %v6895
    %v6902 = vunpack.c.l.b16 %v6887
    %v6903 = vunpack.c.l.b16 %v6888
    %v6904 = vunpack.c.l.b16 %v6889
    %v6905 = vunpack.c.l.b16 %v6890
    %v6906 = vpack.c.b16 %v6903, %v6902
    %v6907 = vpack.c.b16 %v6905, %v6904
    %v6911 = vsel %vm1569, %v6886, 0
    %6913 = vmatprep.subr.bf16.mxu0 0
    %6914 = vmatpush1.bf16.msra.mxu0 %v6906
    %6915 = vmatprep.subr.bf16.mxu0 0
    %6916 = vmatpush1.bf16.msra.mxu0 %v6907
    %6917 = vmatprep.subr.bf16.mxu0 0
    %6918 = vmatpush1.bf16.msra.mxu0 0
    %6919 = vmatprep.subr.bf16.mxu0 0
    %6920 = vmatpush1.bf16.msra.mxu0 0
    %6921 = vmatprep.subr.bf16.mxu0 0
    %6922 = vmatpush1.bf16.msra.mxu0 0
    %6923 = vmatprep.subr.bf16.mxu0 0
    %6924 = vmatpush1.bf16.msra.mxu0 0
    %6925 = vmatprep.subr.bf16.mxu0 0
    %6926 = vmatpush1.bf16.msra.mxu0 0
    %6927 = vmatprep.subr.bf16.mxu0 0
    %6928 = vmatpush1.bf16.msra.mxu0 0
    %6929 = vmatprep.subr.bf16.mxu0 0
    %6930 = vmatpush1.bf16.msra.mxu0 0
    %6931 = vmatprep.subr.bf16.mxu0 0
    %6932 = vmatpush1.bf16.msra.mxu0 0
    %6933 = vmatprep.subr.bf16.mxu0 0
    %6934 = vmatpush1.bf16.msra.mxu0 0
    %6935 = vmatprep.subr.bf16.mxu0 0
    %6936 = vmatpush1.bf16.msra.mxu0 0
    %6937 = vmatprep.subr.bf16.mxu0 0
    %6938 = vmatpush1.bf16.msra.mxu0 0
    %6939 = vmatprep.subr.bf16.mxu0 0
    %6940 = vmatpush1.bf16.msra.mxu0 0
    %6941 = vmatprep.subr.bf16.mxu0 0
    %6942 = vmatpush1.bf16.msra.mxu0 0
    %6943 = vmatprep.subr.bf16.mxu0 0
    %6944 = vmatpush1.bf16.msra.mxu0 0
    %6945 = vmatprep.mubr.bf16.mxu0 0
    %6946 = vmatmul.mubr.bf16.gmra.mrb[0].mxu0 %v6911
    %v6947 = vpop.f32.mrb[0].mxu0
    %v6948 = vadd.f32 %v6896, %v6947
    %v6949 = vpop.f32.mrb[0].mxu0
    %v6950 = vpop.f32.mrb[0].mxu0
    %v6951 = vpop.f32.mrb[0].mxu0
    %6952 = vdwg.mxu0
    %v6953 = vsel %vm409, %v6948, -inf
    %6954 = vmax.xlane.f32.xlu0 %v6953
    %v6955 = vpop.xlane.xlu0 %6954
    %v6956 = vsub.f32 %v6948, %v6955
    %v6957 = vmul.f32 %v6956, 1.442695
    %v6958 = vpow.pop %v6957
    %v6959 = vsel %vm409, %v6958, 0.0
    %6960 = vadd.xlane.f32.xlu0 %v6959
    %v6961 = vpop.xlane.xlu0 %6960
    %v6962 = vrcp.pop %v6961
    %v6963 = vmul.f32 %v6958, %v6962
    %6964 = vst [vmem:[#allocation26] sm:$0x3] %v6963
    // Predicated region
    $region130: #{convnet_big_forward.1} parent=1 // pred_check
      _
    $region131: #{convnet_big_forward.1} parent=1 // pred_check_branch
      %6966 = sbr.rel (0) target = $region133
    $region132: #{convnet_big_forward.1} parent=1 // pred_region
      %s6968 = ssub.s32 32, 32
      %6969 = vsyncadd [#allocation4], %s6968
      %s6971 = sshll.u32 [#allocation26], 4
      %s6972 = int_to_ptr.vmem [resolvable:$true] %s6971
      %6974 = dma.vmem_to_hbm [thread:$0]  %s6972, 32, %s17, [#allocation4]
    $region133: #{convnet_big_forward.1} parent=1 // pred_fallthru
      _
    // Predicated region
    $region134: #{convnet_big_forward.1} parent=1 // pred_check
      _
    $region135: #{convnet_big_forward.1} parent=1 // pred_check_branch
      %6976 = sbr.rel (0) target = $region137
    $region136: #{convnet_big_forward.1} parent=1 // pred_region
      %6977 = dma.done [#allocation4], 32
    $region137: #{convnet_big_forward.1} parent=1 // pred_fallthru
      _
    %6978 = vsyncpa [#allocation3], 1
    %6979 = vsyncpa [#allocation6], 1
    %6980 = vsyncpa [#allocation9], 1
    %6981 = vsyncpa [#allocation12], 1
    %6982 = vsyncpa [#allocation15], 1
    %6983 = vsyncpa [#allocation18], 1
    %6984 = vsyncpa [#allocation21], 1
    %6985 = vsyncpa [#allocation24], 1
    %6986 = vsyncpa [#allocation4], 1

</llo_original>
